<compile_context>
chip_gen: v6e
topology: v6e:2x2x1
jax: 0.10.0
libtpu: 0.0.40
codegen_flags: <defaults>
</compile_context>

<pallas_src>
import functools

import jax
import jax.numpy as jnp
from jax.experimental import pallas as pl
from jax.experimental.pallas import tpu as pltpu

_LANE = 128


def _round_up(v, m):
    return (v + m - 1) // m * m


def _vmem_limit(needed_bytes):
    """Footprint-derived scoped-VMEM limit, clamped to the chip's capacity."""
    try:
        cap = pltpu.get_tpu_info().vmem_capacity_bytes
    except Exception:  # pragma: no cover - conservative fallback (v7x per-TC)
        cap = 64 * 1024 * 1024
    want = int(needed_bytes * 1.5) + (8 << 20)        # compiler-internal headroom
    return int(max(32 << 20, min(want, cap - (8 << 20))))


# ------------------------------ fused kernel --------------------------------

def _make_fused_kernel(Ho, Wo, Hq, cin_p, cout_p, stride, has_skip_conv):
    """conv3x3(stride)+BN1+ReLU -> conv3x3+BN2 -> +skip -> ReLU, one image/step."""
    HWo = Ho * Wo
    s = stride

    def kernel(xp_ref, w1_ref, b1_ref, w2_ref, b2_ref, *rest):
        if has_skip_conv:
            ws_ref, bs_ref, o_ref, y1_ref = rest
        else:
            o_ref, y1_ref = rest

        def xwin(dy, dx):
            # Tap (dy, dx) window of the phase-split padded input, flattened to
            # (HWo, cin_p).  All offsets are static; stride-1 slices only.
            py, px = dy % s, dx % s
            r0 = (py * s + px) * Hq + dy // s
            j0 = dx // s
            return xp_ref[r0:r0 + Ho, j0:j0 + Wo, :].reshape(HWo, cin_p)

        def ywin(dy, dx):
            return y1_ref[dy:dy + Ho, dx:dx + Wo, :].reshape(HWo, cout_p)

        # ---- conv1 (3x3, stride) + BN1: 3 bf16 matmuls at K = 3*cin_p -------
        acc = None
        for dy in range(3):
            patch = jnp.concatenate([xwin(dy, 0), xwin(dy, 1), xwin(dy, 2)],
                                    axis=-1)
            d = jnp.dot(patch, w1_ref[dy], preferred_element_type=jnp.float32)
            acc = d + b1_ref[...] if dy == 0 else acc + d
        y1 = jnp.maximum(acc, 0.0)

        # Keep y1 in VMEM (bf16, 1-pixel zero halo) for conv2 - no HBM trip.
        # Zero only the halo ring, every step (scratch is per-core).
        zrow = jnp.zeros((1, Wo + 2, cout_p), jnp.bfloat16)
        zcol = jnp.zeros((Ho, 1, cout_p), jnp.bfloat16)
        y1_ref[0:1, :, :] = zrow
        y1_ref[Ho + 1:Ho + 2, :, :] = zrow
        y1_ref[1:Ho + 1, 0:1, :] = zcol
        y1_ref[1:Ho + 1, Wo + 1:Wo + 2, :] = zcol
        y1_ref[1:Ho + 1, 1:Wo + 1, :] = (
            y1.reshape(Ho, Wo, cout_p).astype(jnp.bfloat16))

        # ---- conv2 (3x3, stride 1) + BN2: 3 matmuls at K = 3*cout_p ---------
        acc = None
        for dy in range(3):
            patch = jnp.concatenate([ywin(dy, 0), ywin(dy, 1), ywin(dy, 2)],
                                    axis=-1)
            d = jnp.dot(patch, w2_ref[dy], preferred_element_type=jnp.float32)
            acc = d + b2_ref[...] if dy == 0 else acc + d

        # ---- skip branch ----------------------------------------------------
        if has_skip_conv:      # 1x1 conv (stride) + folded BN -> one matmul
            acc = acc + jnp.dot(xwin(1, 1), ws_ref[...],
                                preferred_element_type=jnp.float32) + bs_ref[...]
        else:                  # identity skip: direct add (center-tap window)
            acc = acc + xwin(1, 1).astype(jnp.float32)

        o_ref[...] = jnp.maximum(acc, 0.0).astype(o_ref.dtype)

    return kernel


# ------------------------------ param folding --------------------------------

def _fold_bn_conv(w_oihw, conv_bias, gamma, beta, mean, var, eps, cin_p, cout_p):
    """Fold eval-mode BN into conv weights.
    Returns w: (kh, kw*cin_p, cout_p) bf16 (kernel-row grouped) and
            b: (1, cout_p) f32."""
    o, i, kh, kw = w_oihw.shape
    scale = gamma / jnp.sqrt(var + eps)                         # (O,)
    w = jnp.transpose(w_oihw, (2, 3, 1, 0)) * scale             # (kh, kw, I, O)
    b = jnp.zeros_like(mean) if conv_bias is None else conv_bias
    b = (b - mean) * scale + beta
    w = jnp.pad(w, ((0, 0), (0, 0), (0, cin_p - i), (0, cout_p - o)))
    b = jnp.pad(b, (0, cout_p - o))
    return (w.reshape(kh, kw * cin_p, cout_p).astype(jnp.bfloat16),
            b.reshape(1, cout_p).astype(jnp.float32))


# ------------------------------ forward wrapper -------------------------------

def residual_block_forward(x_nchw, params, stride=1, eps=1e-5):
    """Forward pass equivalent to ResidualBlock.forward (eval-mode BN)."""
    x = jnp.transpose(x_nchw, (0, 2, 3, 1)).astype(jnp.float32)      # NHWC
    N, H, W, cin = x.shape
    cout = params["w1"].shape[0]
    has_skip_conv = "ws" in params
    if not has_skip_conv:
        assert stride == 1 and cin == cout

    s = stride
    Ho = (H - 1) // s + 1
    Wo = (W - 1) // s + 1
    HWo = Ho * Wo
    cin_p = _round_up(cin, _LANE)
    cout_p = _round_up(cout, _LANE)
    Hq = Ho + 2 // s
    Wq = Wo + 2 // s
    R = s * s * Hq

    # 1-pixel spatial halo + channel pad to a lane multiple, in bf16.
    # Phase-split (stride-parity decomposition) so every 3x3 tap of a strided
    # conv is a plain stride-1 slice inside the kernel.  For stride=1 this is
    # a no-op reshape.
    xp = jnp.pad(x.astype(jnp.bfloat16),
                 ((0, 0), (1, s * Hq - H - 1), (1, s * Wq - W - 1),
                  (0, cin_p - cin)))
    xph = (xp.reshape(N, Hq, s, Wq, s, cin_p)
             .transpose(0, 2, 4, 1, 3, 5)
             .reshape(N, R, Wq, cin_p))

    w1, b1 = _fold_bn_conv(params["w1"], params["b1"],
                           params["bn1_gamma"], params["bn1_beta"],
                           params["bn1_mean"], params["bn1_var"],
                           eps, cin_p, cout_p)
    w2, b2 = _fold_bn_conv(params["w2"], params["b2"],
                           params["bn2_gamma"], params["bn2_beta"],
                           params["bn2_mean"], params["bn2_var"],
                           eps, cout_p, cout_p)

    args = [xph, w1, b1, w2, b2]
    in_specs = [
        pl.BlockSpec((None, R, Wq, cin_p), lambda n: (n, 0, 0, 0)),
        pl.BlockSpec((3, 3 * cin_p, cout_p), lambda n: (0, 0, 0)),
        pl.BlockSpec((1, cout_p), lambda n: (0, 0)),
        pl.BlockSpec((3, 3 * cout_p, cout_p), lambda n: (0, 0, 0)),
        pl.BlockSpec((1, cout_p), lambda n: (0, 0)),
    ]
    if has_skip_conv:
        ws3, bs = _fold_bn_conv(params["ws"], None,
                                params["bns_gamma"], params["bns_beta"],
                                params["bns_mean"], params["bns_var"],
                                eps, cin_p, cout_p)
        args += [ws3[0], bs]                     # 1x1 conv -> (cin_p, cout_p)
        in_specs += [pl.BlockSpec((cin_p, cout_p), lambda n: (0, 0)),
                     pl.BlockSpec((1, cout_p), lambda n: (0, 0))]

    # Cost estimate + footprint-derived VMEM limit.
    flops = 2 * N * HWo * 9 * cout_p * (cin_p + cout_p)
    if has_skip_conv:
        flops += 2 * N * HWo * cin_p * cout_p
    bytes_accessed = (sum(int(a.size) * a.dtype.itemsize for a in args)
                      + N * HWo * cout_p * 2)
    per_step_blocks = R * Wq * cin_p * 2 + HWo * cout_p * 2     # x block + out block
    const_blocks = sum(int(a.size) * a.dtype.itemsize for a in args[1:])
    scratch_bytes = (Ho + 2) * (Wo + 2) * cout_p * 2
    vmem_limit = _vmem_limit(2 * (per_step_blocks + const_blocks) + scratch_bytes)

    kernel = _make_fused_kernel(Ho, Wo, Hq, cin_p, cout_p, s, has_skip_conv)
    out = pl.pallas_call(
        kernel,
        out_shape=jax.ShapeDtypeStruct((N, HWo, cout_p), jnp.bfloat16),
        grid=(N,),
        in_specs=in_specs,
        out_specs=pl.BlockSpec((None, HWo, cout_p), lambda n: (n, 0, 0)),
        scratch_shapes=[
            pltpu.VMEM((Ho + 2, Wo + 2, cout_p), jnp.bfloat16),   # padded y1
        ],
        compiler_params=pltpu.CompilerParams(
            dimension_semantics=("parallel",),
            vmem_limit_bytes=vmem_limit),
        cost_estimate=pl.CostEstimate(flops=flops, transcendentals=0,
                                      bytes_accessed=bytes_accessed),
    )(*args)

    out = out[:, :, :cout].astype(jnp.float32).reshape(N, Ho, Wo, cout)
    return jnp.transpose(out, (0, 3, 1, 2))                       # NCHW


# ----------------------- deterministic parameter init -----------------------

def init_params(key, cin, cout, stride=1):
    ks = jax.random.split(key, 20)
    p = {
        "w1": 0.1 * jax.random.normal(ks[0], (cout, cin, 3, 3), jnp.float32),
        "b1": 0.05 * jax.random.normal(ks[1], (cout,), jnp.float32),
        "bn1_gamma": 1.0 + 0.1 * jax.random.normal(ks[2], (cout,), jnp.float32),
        "bn1_beta": 0.05 * jax.random.normal(ks[3], (cout,), jnp.float32),
        "bn1_mean": 0.1 * jax.random.normal(ks[4], (cout,), jnp.float32),
        "bn1_var": 0.5 + jax.random.uniform(ks[5], (cout,), jnp.float32),
        "w2": 0.1 * jax.random.normal(ks[6], (cout, cout, 3, 3), jnp.float32),
        "b2": 0.05 * jax.random.normal(ks[7], (cout,), jnp.float32),
        "bn2_gamma": 1.0 + 0.1 * jax.random.normal(ks[8], (cout,), jnp.float32),
        "bn2_beta": 0.05 * jax.random.normal(ks[9], (cout,), jnp.float32),
        "bn2_mean": 0.1 * jax.random.normal(ks[10], (cout,), jnp.float32),
        "bn2_var": 0.5 + jax.random.uniform(ks[11], (cout,), jnp.float32),
    }
    if stride != 1 or cin != cout:
        p.update({
            "ws": 0.1 * jax.random.normal(ks[12], (cout, cin, 1, 1), jnp.float32),
            "bns_gamma": 1.0 + 0.1 * jax.random.normal(ks[13], (cout,), jnp.float32),
            "bns_beta": 0.05 * jax.random.normal(ks[14], (cout,), jnp.float32),
            "bns_mean": 0.1 * jax.random.normal(ks[15], (cout,), jnp.float32),
            "bns_var": 0.5 + jax.random.uniform(ks[16], (cout,), jnp.float32),
        })
    return p


# ------------------------- pure-JAX reference (check) -----------------------

def reference_forward(x, params, stride=1, eps=1e-5):
    def conv(a, w, b, s, pad):
        y = jax.lax.conv_general_dilated(
            a, w, window_strides=(s, s), padding=[(pad, pad), (pad, pad)],
            dimension_numbers=("NCHW", "OIHW", "NCHW"),
            precision=jax.lax.Precision.HIGHEST)
        if b is not None:
            y = y + b[None, :, None, None]
        return y

    def bn(y, g, b, m, v):
        s = (g / jnp.sqrt(v + eps))[None, :, None, None]
        return (y - m[None, :, None, None]) * s + b[None, :, None, None]

    out = jax.nn.relu(bn(conv(x, params["w1"], params["b1"], stride, 1),
                         params["bn1_gamma"], params["bn1_beta"],
                         params["bn1_mean"], params["bn1_var"]))
    out = bn(conv(out, params["w2"], params["b2"], 1, 1),
             params["bn2_gamma"], params["bn2_beta"],
             params["bn2_mean"], params["bn2_var"])
    if "ws" in params:
        res = bn(conv(x, params["ws"], None, stride, 0),
                 params["bns_gamma"], params["bns_beta"],
                 params["bns_mean"], params["bns_var"])
    else:
        res = x
    return jax.nn.relu(out + res)


def _check(out, ref, shape):
    assert out.shape == ref.shape == shape, (out.shape, ref.shape, shape)
    max_err = float(jnp.max(jnp.abs(out - ref)))
    # bf16 activations/weights/output with f32 accumulation vs f32 reference.
    tol = 2e-2 * (1.0 + float(jnp.max(jnp.abs(ref))))
    assert max_err < tol, f"max abs error {max_err} exceeds tol {tol}"


# --------------------------------- main --------------------------------------

if __name__ == "__main__":
    key = jax.random.PRNGKey(0)
    kx1, kp1, kx2, kp2, kx3, kp3 = jax.random.split(key, 6)

    # Case 1: projection skip (1x1 conv + BN), cin != cout, stride 1.
    N, Cin, Cout, H, W = 2, 4, 8, 16, 16
    x1 = jax.random.normal(kx1, (N, Cin, H, W), jnp.float32)     # NCHW
    p1 = init_params(kp1, Cin, Cout, 1)
    out1 = jax.block_until_ready(jax.jit(residual_block_forward)(x1, p1))
    _check(out1, reference_forward(x1, p1, 1), (N, Cout, H, W))

    # Case 2: identity skip (cin == cout, stride 1) - direct add.
    x2 = jax.random.normal(kx2, (N, Cout, H, W), jnp.float32)
    p2 = init_params(kp2, Cout, Cout, 1)
    out2 = jax.block_until_ready(jax.jit(residual_block_forward)(x2, p2))
    _check(out2, reference_forward(x2, p2, 1), (N, Cout, H, W))

    # Case 3: projection skip with stride 2 (phase-split path).
    x3 = jax.random.normal(kx3, (N, Cin, H, W), jnp.float32)
    p3 = init_params(kp3, Cin, Cout, 2)
    fwd2 = jax.jit(functools.partial(residual_block_forward, stride=2))
    out3 = jax.block_until_ready(fwd2(x3, p3))
    _check(out3, reference_forward(x3, p3, 2), (N, Cout, H // 2, W // 2))

    print("KERNEL_OK")
</pallas_src>

<mosaic_0001>
module attributes {stable_mosaic.version = 11 : i64} {
  func.func @kernel(%arg0: i32, %arg1: memref<1x18x18x128xbf16, #tpu.memory_space<vmem>>, %arg2: memref<3x384x128xbf16, #tpu.memory_space<vmem>>, %arg3: memref<1x128xf32, #tpu.memory_space<vmem>>, %arg4: memref<3x384x128xbf16, #tpu.memory_space<vmem>>, %arg5: memref<1x128xf32, #tpu.memory_space<vmem>>, %arg6: memref<128x128xbf16, #tpu.memory_space<vmem>>, %arg7: memref<1x128xf32, #tpu.memory_space<vmem>>, %arg8: memref<1x256x128xbf16, #tpu.memory_space<vmem>>, %arg9: memref<18x18x128xbf16, #tpu.memory_space<vmem>>) attributes {dimension_semantics = [#tpu.dimension_semantics<parallel>], iteration_bounds = array<i64: 2>, scalar_prefetch = 0 : i64, scratch_operands = 1 : i64, tpu.core_type = #tpu.core_type<tc>, window_params = [{transform_indices = @transform_0, window_bounds = array<i64: 1, 18, 18, 128>}, {pipeline_mode = #tpu.pipeline_mode<synchronous>, transform_indices = @transform_1, window_bounds = array<i64: 3, 384, 128>}, {pipeline_mode = #tpu.pipeline_mode<synchronous>, transform_indices = @transform_2, window_bounds = array<i64: 1, 128>}, {pipeline_mode = #tpu.pipeline_mode<synchronous>, transform_indices = @transform_3, window_bounds = array<i64: 3, 384, 128>}, {pipeline_mode = #tpu.pipeline_mode<synchronous>, transform_indices = @transform_4, window_bounds = array<i64: 1, 128>}, {pipeline_mode = #tpu.pipeline_mode<synchronous>, transform_indices = @transform_5, window_bounds = array<i64: 128, 128>}, {pipeline_mode = #tpu.pipeline_mode<synchronous>, transform_indices = @transform_6, window_bounds = array<i64: 1, 128>}, {transform_indices = @transform_7, window_bounds = array<i64: 1, 256, 128>}]} {
    %c0 = arith.constant 0 : index
    %c0_0 = arith.constant 0 : index
    %c0_1 = arith.constant 0 : index
    %c0_2 = arith.constant 0 : index
    %0 = vector.load %arg1[%c0, %c0_0, %c0_1, %c0_2] : memref<1x18x18x128xbf16, #tpu.memory_space<vmem>>, vector<1x16x16x128xbf16>
    %1 = vector.shape_cast %0 : vector<1x16x16x128xbf16> to vector<16x16x128xbf16>
    %2 = vector.shape_cast %1 : vector<16x16x128xbf16> to vector<256x128xbf16>
    %c0_3 = arith.constant 0 : index
    %c0_4 = arith.constant 0 : index
    %c1 = arith.constant 1 : index
    %c0_5 = arith.constant 0 : index
    %3 = vector.load %arg1[%c0_3, %c0_4, %c1, %c0_5] : memref<1x18x18x128xbf16, #tpu.memory_space<vmem>>, vector<1x16x16x128xbf16>
    %4 = vector.shape_cast %3 : vector<1x16x16x128xbf16> to vector<16x16x128xbf16>
    %5 = vector.shape_cast %4 : vector<16x16x128xbf16> to vector<256x128xbf16>
    %c0_6 = arith.constant 0 : index
    %c0_7 = arith.constant 0 : index
    %c2 = arith.constant 2 : index
    %c0_8 = arith.constant 0 : index
    %6 = vector.load %arg1[%c0_6, %c0_7, %c2, %c0_8] : memref<1x18x18x128xbf16, #tpu.memory_space<vmem>>, vector<1x16x16x128xbf16>
    %7 = vector.shape_cast %6 : vector<1x16x16x128xbf16> to vector<16x16x128xbf16>
    %8 = vector.shape_cast %7 : vector<16x16x128xbf16> to vector<256x128xbf16>
    %9 = tpu.concatenate %2, %5, %8 in 1 : vector<256x128xbf16>, vector<256x128xbf16>, vector<256x128xbf16> -> vector<256x384xbf16>
    %c0_9 = arith.constant 0 : index
    %c0_10 = arith.constant 0 : index
    %c0_11 = arith.constant 0 : index
    %10 = vector.load %arg2[%c0_9, %c0_10, %c0_11] : memref<3x384x128xbf16, #tpu.memory_space<vmem>>, vector<1x384x128xbf16>
    %11 = vector.shape_cast %10 : vector<1x384x128xbf16> to vector<384x128xbf16>
    %cst = arith.constant dense<0.000000e+00> : vector<256x128xf32>
    %12 = tpu.matmul %9, %11, %cst {dimension_numbers = #tpu.dot_dimension_numbers<[1], [0], [0], [1], [0, 0, 1, 1], [], []>} : vector<256x384xbf16>, vector<384x128xbf16>, vector<256x128xf32> -> vector<256x128xf32>
    %c0_12 = arith.constant 0 : index
    %c0_13 = arith.constant 0 : index
    %13 = vector.load %arg3[%c0_12, %c0_13] : memref<1x128xf32, #tpu.memory_space<vmem>>, vector<1x128xf32>
    %14 = vector.broadcast %13 : vector<1x128xf32> to vector<256x128xf32>
    %15 = arith.addf %12, %14 : vector<256x128xf32>
    %c0_14 = arith.constant 0 : index
    %c1_15 = arith.constant 1 : index
    %c0_16 = arith.constant 0 : index
    %c0_17 = arith.constant 0 : index
    %16 = vector.load %arg1[%c0_14, %c1_15, %c0_16, %c0_17] : memref<1x18x18x128xbf16, #tpu.memory_space<vmem>>, vector<1x16x16x128xbf16>
    %17 = vector.shape_cast %16 : vector<1x16x16x128xbf16> to vector<16x16x128xbf16>
    %18 = vector.shape_cast %17 : vector<16x16x128xbf16> to vector<256x128xbf16>
    %c0_18 = arith.constant 0 : index
    %c1_19 = arith.constant 1 : index
    %c1_20 = arith.constant 1 : index
    %c0_21 = arith.constant 0 : index
    %19 = vector.load %arg1[%c0_18, %c1_19, %c1_20, %c0_21] : memref<1x18x18x128xbf16, #tpu.memory_space<vmem>>, vector<1x16x16x128xbf16>
    %20 = vector.shape_cast %19 : vector<1x16x16x128xbf16> to vector<16x16x128xbf16>
    %21 = vector.shape_cast %20 : vector<16x16x128xbf16> to vector<256x128xbf16>
    %c0_22 = arith.constant 0 : index
    %c1_23 = arith.constant 1 : index
    %c2_24 = arith.constant 2 : index
    %c0_25 = arith.constant 0 : index
    %22 = vector.load %arg1[%c0_22, %c1_23, %c2_24, %c0_25] : memref<1x18x18x128xbf16, #tpu.memory_space<vmem>>, vector<1x16x16x128xbf16>
    %23 = vector.shape_cast %22 : vector<1x16x16x128xbf16> to vector<16x16x128xbf16>
    %24 = vector.shape_cast %23 : vector<16x16x128xbf16> to vector<256x128xbf16>
    %25 = tpu.concatenate %18, %21, %24 in 1 : vector<256x128xbf16>, vector<256x128xbf16>, vector<256x128xbf16> -> vector<256x384xbf16>
    %c1_26 = arith.constant 1 : index
    %c0_27 = arith.constant 0 : index
    %c0_28 = arith.constant 0 : index
    %26 = vector.load %arg2[%c1_26, %c0_27, %c0_28] : memref<3x384x128xbf16, #tpu.memory_space<vmem>>, vector<1x384x128xbf16>
    %27 = vector.shape_cast %26 : vector<1x384x128xbf16> to vector<384x128xbf16>
    %cst_29 = arith.constant dense<0.000000e+00> : vector<256x128xf32>
    %28 = tpu.matmul %25, %27, %cst_29 {dimension_numbers = #tpu.dot_dimension_numbers<[1], [0], [0], [1], [0, 0, 1, 1], [], []>} : vector<256x384xbf16>, vector<384x128xbf16>, vector<256x128xf32> -> vector<256x128xf32>
    %29 = arith.addf %15, %28 : vector<256x128xf32>
    %c0_30 = arith.constant 0 : index
    %c2_31 = arith.constant 2 : index
    %c0_32 = arith.constant 0 : index
    %c0_33 = arith.constant 0 : index
    %30 = vector.load %arg1[%c0_30, %c2_31, %c0_32, %c0_33] : memref<1x18x18x128xbf16, #tpu.memory_space<vmem>>, vector<1x16x16x128xbf16>
    %31 = vector.shape_cast %30 : vector<1x16x16x128xbf16> to vector<16x16x128xbf16>
    %32 = vector.shape_cast %31 : vector<16x16x128xbf16> to vector<256x128xbf16>
    %c0_34 = arith.constant 0 : index
    %c2_35 = arith.constant 2 : index
    %c1_36 = arith.constant 1 : index
    %c0_37 = arith.constant 0 : index
    %33 = vector.load %arg1[%c0_34, %c2_35, %c1_36, %c0_37] : memref<1x18x18x128xbf16, #tpu.memory_space<vmem>>, vector<1x16x16x128xbf16>
    %34 = vector.shape_cast %33 : vector<1x16x16x128xbf16> to vector<16x16x128xbf16>
    %35 = vector.shape_cast %34 : vector<16x16x128xbf16> to vector<256x128xbf16>
    %c0_38 = arith.constant 0 : index
    %c2_39 = arith.constant 2 : index
    %c2_40 = arith.constant 2 : index
    %c0_41 = arith.constant 0 : index
    %36 = vector.load %arg1[%c0_38, %c2_39, %c2_40, %c0_41] : memref<1x18x18x128xbf16, #tpu.memory_space<vmem>>, vector<1x16x16x128xbf16>
    %37 = vector.shape_cast %36 : vector<1x16x16x128xbf16> to vector<16x16x128xbf16>
    %38 = vector.shape_cast %37 : vector<16x16x128xbf16> to vector<256x128xbf16>
    %39 = tpu.concatenate %32, %35, %38 in 1 : vector<256x128xbf16>, vector<256x128xbf16>, vector<256x128xbf16> -> vector<256x384xbf16>
    %c2_42 = arith.constant 2 : index
    %c0_43 = arith.constant 0 : index
    %c0_44 = arith.constant 0 : index
    %40 = vector.load %arg2[%c2_42, %c0_43, %c0_44] : memref<3x384x128xbf16, #tpu.memory_space<vmem>>, vector<1x384x128xbf16>
    %41 = vector.shape_cast %40 : vector<1x384x128xbf16> to vector<384x128xbf16>
    %cst_45 = arith.constant dense<0.000000e+00> : vector<256x128xf32>
    %42 = tpu.matmul %39, %41, %cst_45 {dimension_numbers = #tpu.dot_dimension_numbers<[1], [0], [0], [1], [0, 0, 1, 1], [], []>} : vector<256x384xbf16>, vector<384x128xbf16>, vector<256x128xf32> -> vector<256x128xf32>
    %43 = arith.addf %29, %42 : vector<256x128xf32>
    %cst_46 = arith.constant 0.000000e+00 : f32
    %44 = vector.broadcast %cst_46 : f32 to vector<256x128xf32>
    %45 = arith.maximumf %43, %44 : vector<256x128xf32>
    %cst_47 = arith.constant 0.000000e+00 : bf16
    %46 = vector.broadcast %cst_47 : bf16 to vector<1x18x128xbf16>
    %cst_48 = arith.constant 0.000000e+00 : bf16
    %47 = vector.broadcast %cst_48 : bf16 to vector<16x1x128xbf16>
    %c0_49 = arith.constant 0 : index
    %c0_50 = arith.constant 0 : index
    %c0_51 = arith.constant 0 : index
    %48 = vector.load %arg9[%c0_49, %c0_50, %c0_51] : memref<18x18x128xbf16, #tpu.memory_space<vmem>>, vector<1x18x128xbf16>
    tpu.vector_store %arg9[%c0_49, %c0_50, %c0_51], %46 {strides = array<i32>} : memref<18x18x128xbf16, #tpu.memory_space<vmem>>, vector<1x18x128xbf16>,
    %c17 = arith.constant 17 : index
    %c0_52 = arith.constant 0 : index
    %c0_53 = arith.constant 0 : index
    %49 = vector.load %arg9[%c17, %c0_52, %c0_53] : memref<18x18x128xbf16, #tpu.memory_space<vmem>>, vector<1x18x128xbf16>
    tpu.vector_store %arg9[%c17, %c0_52, %c0_53], %46 {strides = array<i32>} : memref<18x18x128xbf16, #tpu.memory_space<vmem>>, vector<1x18x128xbf16>,
    %c1_54 = arith.constant 1 : index
    %c0_55 = arith.constant 0 : index
    %c0_56 = arith.constant 0 : index
    %50 = vector.load %arg9[%c1_54, %c0_55, %c0_56] : memref<18x18x128xbf16, #tpu.memory_space<vmem>>, vector<16x1x128xbf16>
    tpu.vector_store %arg9[%c1_54, %c0_55, %c0_56], %47 {strides = array<i32>} : memref<18x18x128xbf16, #tpu.memory_space<vmem>>, vector<16x1x128xbf16>,
    %c1_57 = arith.constant 1 : index
    %c17_58 = arith.constant 17 : index
    %c0_59 = arith.constant 0 : index
    %51 = vector.load %arg9[%c1_57, %c17_58, %c0_59] : memref<18x18x128xbf16, #tpu.memory_space<vmem>>, vector<16x1x128xbf16>
    tpu.vector_store %arg9[%c1_57, %c17_58, %c0_59], %47 {strides = array<i32>} : memref<18x18x128xbf16, #tpu.memory_space<vmem>>, vector<16x1x128xbf16>,
    %52 = vector.shape_cast %45 : vector<256x128xf32> to vector<16x16x128xf32>
    %53 = arith.truncf %52 : vector<16x16x128xf32> to vector<16x16x128xbf16>
    %c1_60 = arith.constant 1 : index
    %c1_61 = arith.constant 1 : index
    %c0_62 = arith.constant 0 : index
    %54 = vector.load %arg9[%c1_60, %c1_61, %c0_62] : memref<18x18x128xbf16, #tpu.memory_space<vmem>>, vector<16x16x128xbf16>
    tpu.vector_store %arg9[%c1_60, %c1_61, %c0_62], %53 {strides = array<i32>} : memref<18x18x128xbf16, #tpu.memory_space<vmem>>, vector<16x16x128xbf16>,
    %c0_63 = arith.constant 0 : index
    %c0_64 = arith.constant 0 : index
    %c0_65 = arith.constant 0 : index
    %55 = vector.load %arg9[%c0_63, %c0_64, %c0_65] : memref<18x18x128xbf16, #tpu.memory_space<vmem>>, vector<16x16x128xbf16>
    %56 = vector.shape_cast %55 : vector<16x16x128xbf16> to vector<256x128xbf16>
    %c0_66 = arith.constant 0 : index
    %c1_67 = arith.constant 1 : index
    %c0_68 = arith.constant 0 : index
    %57 = vector.load %arg9[%c0_66, %c1_67, %c0_68] : memref<18x18x128xbf16, #tpu.memory_space<vmem>>, vector<16x16x128xbf16>
    %58 = vector.shape_cast %57 : vector<16x16x128xbf16> to vector<256x128xbf16>
    %c0_69 = arith.constant 0 : index
    %c2_70 = arith.constant 2 : index
    %c0_71 = arith.constant 0 : index
    %59 = vector.load %arg9[%c0_69, %c2_70, %c0_71] : memref<18x18x128xbf16, #tpu.memory_space<vmem>>, vector<16x16x128xbf16>
    %60 = vector.shape_cast %59 : vector<16x16x128xbf16> to vector<256x128xbf16>
    %61 = tpu.concatenate %56, %58, %60 in 1 : vector<256x128xbf16>, vector<256x128xbf16>, vector<256x128xbf16> -> vector<256x384xbf16>
    %c0_72 = arith.constant 0 : index
    %c0_73 = arith.constant 0 : index
    %c0_74 = arith.constant 0 : index
    %62 = vector.load %arg4[%c0_72, %c0_73, %c0_74] : memref<3x384x128xbf16, #tpu.memory_space<vmem>>, vector<1x384x128xbf16>
    %63 = vector.shape_cast %62 : vector<1x384x128xbf16> to vector<384x128xbf16>
    %cst_75 = arith.constant dense<0.000000e+00> : vector<256x128xf32>
    %64 = tpu.matmul %61, %63, %cst_75 {dimension_numbers = #tpu.dot_dimension_numbers<[1], [0], [0], [1], [0, 0, 1, 1], [], []>} : vector<256x384xbf16>, vector<384x128xbf16>, vector<256x128xf32> -> vector<256x128xf32>
    %c0_76 = arith.constant 0 : index
    %c0_77 = arith.constant 0 : index
    %65 = vector.load %arg5[%c0_76, %c0_77] : memref<1x128xf32, #tpu.memory_space<vmem>>, vector<1x128xf32>
    %66 = vector.broadcast %65 : vector<1x128xf32> to vector<256x128xf32>
    %67 = arith.addf %64, %66 : vector<256x128xf32>
    %c1_78 = arith.constant 1 : index
    %c0_79 = arith.constant 0 : index
    %c0_80 = arith.constant 0 : index
    %68 = vector.load %arg9[%c1_78, %c0_79, %c0_80] : memref<18x18x128xbf16, #tpu.memory_space<vmem>>, vector<16x16x128xbf16>
    %69 = vector.shape_cast %68 : vector<16x16x128xbf16> to vector<256x128xbf16>
    %c1_81 = arith.constant 1 : index
    %c1_82 = arith.constant 1 : index
    %c0_83 = arith.constant 0 : index
    %70 = vector.load %arg9[%c1_81, %c1_82, %c0_83] : memref<18x18x128xbf16, #tpu.memory_space<vmem>>, vector<16x16x128xbf16>
    %71 = vector.shape_cast %70 : vector<16x16x128xbf16> to vector<256x128xbf16>
    %c1_84 = arith.constant 1 : index
    %c2_85 = arith.constant 2 : index
    %c0_86 = arith.constant 0 : index
    %72 = vector.load %arg9[%c1_84, %c2_85, %c0_86] : memref<18x18x128xbf16, #tpu.memory_space<vmem>>, vector<16x16x128xbf16>
    %73 = vector.shape_cast %72 : vector<16x16x128xbf16> to vector<256x128xbf16>
    %74 = tpu.concatenate %69, %71, %73 in 1 : vector<256x128xbf16>, vector<256x128xbf16>, vector<256x128xbf16> -> vector<256x384xbf16>
    %c1_87 = arith.constant 1 : index
    %c0_88 = arith.constant 0 : index
    %c0_89 = arith.constant 0 : index
    %75 = vector.load %arg4[%c1_87, %c0_88, %c0_89] : memref<3x384x128xbf16, #tpu.memory_space<vmem>>, vector<1x384x128xbf16>
    %76 = vector.shape_cast %75 : vector<1x384x128xbf16> to vector<384x128xbf16>
    %cst_90 = arith.constant dense<0.000000e+00> : vector<256x128xf32>
    %77 = tpu.matmul %74, %76, %cst_90 {dimension_numbers = #tpu.dot_dimension_numbers<[1], [0], [0], [1], [0, 0, 1, 1], [], []>} : vector<256x384xbf16>, vector<384x128xbf16>, vector<256x128xf32> -> vector<256x128xf32>
    %78 = arith.addf %67, %77 : vector<256x128xf32>
    %c2_91 = arith.constant 2 : index
    %c0_92 = arith.constant 0 : index
    %c0_93 = arith.constant 0 : index
    %79 = vector.load %arg9[%c2_91, %c0_92, %c0_93] : memref<18x18x128xbf16, #tpu.memory_space<vmem>>, vector<16x16x128xbf16>
    %80 = vector.shape_cast %79 : vector<16x16x128xbf16> to vector<256x128xbf16>
    %c2_94 = arith.constant 2 : index
    %c1_95 = arith.constant 1 : index
    %c0_96 = arith.constant 0 : index
    %81 = vector.load %arg9[%c2_94, %c1_95, %c0_96] : memref<18x18x128xbf16, #tpu.memory_space<vmem>>, vector<16x16x128xbf16>
    %82 = vector.shape_cast %81 : vector<16x16x128xbf16> to vector<256x128xbf16>
    %c2_97 = arith.constant 2 : index
    %c2_98 = arith.constant 2 : index
    %c0_99 = arith.constant 0 : index
    %83 = vector.load %arg9[%c2_97, %c2_98, %c0_99] : memref<18x18x128xbf16, #tpu.memory_space<vmem>>, vector<16x16x128xbf16>
    %84 = vector.shape_cast %83 : vector<16x16x128xbf16> to vector<256x128xbf16>
    %85 = tpu.concatenate %80, %82, %84 in 1 : vector<256x128xbf16>, vector<256x128xbf16>, vector<256x128xbf16> -> vector<256x384xbf16>
    %c2_100 = arith.constant 2 : index
    %c0_101 = arith.constant 0 : index
    %c0_102 = arith.constant 0 : index
    %86 = vector.load %arg4[%c2_100, %c0_101, %c0_102] : memref<3x384x128xbf16, #tpu.memory_space<vmem>>, vector<1x384x128xbf16>
    %87 = vector.shape_cast %86 : vector<1x384x128xbf16> to vector<384x128xbf16>
    %cst_103 = arith.constant dense<0.000000e+00> : vector<256x128xf32>
    %88 = tpu.matmul %85, %87, %cst_103 {dimension_numbers = #tpu.dot_dimension_numbers<[1], [0], [0], [1], [0, 0, 1, 1], [], []>} : vector<256x384xbf16>, vector<384x128xbf16>, vector<256x128xf32> -> vector<256x128xf32>
    %89 = arith.addf %78, %88 : vector<256x128xf32>
    %c0_104 = arith.constant 0 : index
    %c1_105 = arith.constant 1 : index
    %c1_106 = arith.constant 1 : index
    %c0_107 = arith.constant 0 : index
    %90 = vector.load %arg1[%c0_104, %c1_105, %c1_106, %c0_107] : memref<1x18x18x128xbf16, #tpu.memory_space<vmem>>, vector<1x16x16x128xbf16>
    %91 = vector.shape_cast %90 : vector<1x16x16x128xbf16> to vector<16x16x128xbf16>
    %92 = vector.shape_cast %91 : vector<16x16x128xbf16> to vector<256x128xbf16>
    %c0_108 = arith.constant 0 : index
    %c0_109 = arith.constant 0 : index
    %93 = vector.load %arg6[%c0_108, %c0_109] : memref<128x128xbf16, #tpu.memory_space<vmem>>, vector<128x128xbf16>
    %cst_110 = arith.constant dense<0.000000e+00> : vector<256x128xf32>
    %94 = tpu.matmul %92, %93, %cst_110 {dimension_numbers = #tpu.dot_dimension_numbers<[1], [0], [0], [1], [0, 0, 1, 1], [], []>} : vector<256x128xbf16>, vector<128x128xbf16>, vector<256x128xf32> -> vector<256x128xf32>
    %95 = arith.addf %89, %94 : vector<256x128xf32>
    %c0_111 = arith.constant 0 : index
    %c0_112 = arith.constant 0 : index
    %96 = vector.load %arg7[%c0_111, %c0_112] : memref<1x128xf32, #tpu.memory_space<vmem>>, vector<1x128xf32>
    %97 = vector.broadcast %96 : vector<1x128xf32> to vector<256x128xf32>
    %98 = arith.addf %95, %97 : vector<256x128xf32>
    %cst_113 = arith.constant 0.000000e+00 : f32
    %99 = vector.broadcast %cst_113 : f32 to vector<256x128xf32>
    %100 = arith.maximumf %98, %99 : vector<256x128xf32>
    %101 = arith.truncf %100 : vector<256x128xf32> to vector<256x128xbf16>
    %c0_114 = arith.constant 0 : index
    %c0_115 = arith.constant 0 : index
    %c0_116 = arith.constant 0 : index
    %102 = vector.load %arg8[%c0_114, %c0_115, %c0_116] : memref<1x256x128xbf16, #tpu.memory_space<vmem>>, vector<1x256x128xbf16>
    %103 = vector.shape_cast %102 : vector<1x256x128xbf16> to vector<256x128xbf16>
    %104 = vector.shape_cast %101 : vector<256x128xbf16> to vector<1x256x128xbf16>
    tpu.vector_store %arg8[%c0_114, %c0_115, %c0_116], %104 {strides = array<i32>} : memref<1x256x128xbf16, #tpu.memory_space<vmem>>, vector<1x256x128xbf16>,
    return
  }
  func.func @transform_0(%arg0: i32) -> (i32, i32, i32, i32) {
    %c0_i32 = arith.constant 0 : i32
    %c0_i32_0 = arith.constant 0 : i32
    %c0_i32_1 = arith.constant 0 : i32
    %c0_i32_2 = arith.constant 0 : i32
    return %arg0, %c0_i32, %c0_i32_0, %c0_i32_1 : i32, i32, i32, i32
  }
  func.func @transform_1(%arg0: i32) -> (i32, i32, i32) {
    %c0_i32 = arith.constant 0 : i32
    %c0_i32_0 = arith.constant 0 : i32
    %c0_i32_1 = arith.constant 0 : i32
    %c0_i32_2 = arith.constant 0 : i32
    return %c0_i32, %c0_i32_0, %c0_i32_1 : i32, i32, i32
  }
  func.func @transform_2(%arg0: i32) -> (i32, i32) {
    %c0_i32 = arith.constant 0 : i32
    %c0_i32_0 = arith.constant 0 : i32
    %c0_i32_1 = arith.constant 0 : i32
    return %c0_i32, %c0_i32_0 : i32, i32
  }
  func.func @transform_3(%arg0: i32) -> (i32, i32, i32) {
    %c0_i32 = arith.constant 0 : i32
    %c0_i32_0 = arith.constant 0 : i32
    %c0_i32_1 = arith.constant 0 : i32
    %c0_i32_2 = arith.constant 0 : i32
    return %c0_i32, %c0_i32_0, %c0_i32_1 : i32, i32, i32
  }
  func.func @transform_4(%arg0: i32) -> (i32, i32) {
    %c0_i32 = arith.constant 0 : i32
    %c0_i32_0 = arith.constant 0 : i32
    %c0_i32_1 = arith.constant 0 : i32
    return %c0_i32, %c0_i32_0 : i32, i32
  }
  func.func @transform_5(%arg0: i32) -> (i32, i32) {
    %c0_i32 = arith.constant 0 : i32
    %c0_i32_0 = arith.constant 0 : i32
    %c0_i32_1 = arith.constant 0 : i32
    return %c0_i32, %c0_i32_0 : i32, i32
  }
  func.func @transform_6(%arg0: i32) -> (i32, i32) {
    %c0_i32 = arith.constant 0 : i32
    %c0_i32_0 = arith.constant 0 : i32
    %c0_i32_1 = arith.constant 0 : i32
    return %c0_i32, %c0_i32_0 : i32, i32
  }
  func.func @transform_7(%arg0: i32) -> (i32, i32, i32) {
    %c0_i32 = arith.constant 0 : i32
    %c0_i32_0 = arith.constant 0 : i32
    %c0_i32_1 = arith.constant 0 : i32
    return %arg0, %c0_i32, %c0_i32_0 : i32, i32, i32
  }
}

</mosaic_0001>

<llo_original>
// kernel: residual_block_forward.1
$region0: #{residual_block_forward.1}
  #allocation0 [shape = 'u32[]', space=smem, size = 0x4, offset = 0x4, fixed_abs, tag = 'smem constant byte address 0x4 - core index']
  #allocation1 [shape = 'u32[144,128]{1,0:T(1,128)}', space=vmem, size = 0x12000, scoped, tag = 'internal scratch']
  #allocation2 [shape = 'bf16[18,18,128]{2,1,0:T(8,128)(2,1)}', space=vmem, size = 0x1b000, scoped, tag = 'scratch operand']
  %s0 = inlined_call_operand.vmem [shape: bf16[2,18,18,128], index: 0, kind: input, shape index: {}]
  %s1 = inlined_call_operand.vmem [shape: bf16[3,384,128], index: 1, kind: input, shape index: {}]
  %s2 = inlined_call_operand.vmem [shape: f32[1,128], index: 2, kind: input, shape index: {}]
  %s3 = inlined_call_operand.vmem [shape: bf16[3,384,128], index: 3, kind: input, shape index: {}]
  %s4 = inlined_call_operand.vmem [shape: f32[1,128], index: 4, kind: input, shape index: {}]
  %s5 = inlined_call_operand.vmem [shape: bf16[128,128], index: 5, kind: input, shape index: {}]
  %s6 = inlined_call_operand.vmem [shape: f32[1,128], index: 6, kind: input, shape index: {}]
  %s7 = inlined_call_operand.vmem [shape: bf16[2,256,128], index: 7, kind: output, shape index: {}]
  %s8 = sld [smem:[#allocation0]]
  $region61: #{residual_block_forward.1} parent=0
    _
  %s10 = ssub.s32 1, %s8
  %s11 = scalar_select 0, %s10, %s8
  loop: start=0, step=1, limit=4
  $region2: #{residual_block_forward.1} parent=0 // loop_pre_header
    _
  $region3: #{residual_block_forward.1} parent=0 // loop_header
    %s13 = sphi 0, %s17
    %p14 = scmp.ge.s32.totalorder %s13, 4
    %s23 = sphi 0, %s25
    %s26 = sphi 0, %s23
    %s27 = sphi 0, %s26
    %s43 = sphi 0, %s27
    %s47 = sphi 0, %s47
    %s49 = sphi 0, %s47
    %s50 = sphi 0, %s49
    %s64 = sphi 0, %s50
    %s68 = sphi 0, %s68
    %s70 = sphi 0, %s68
    %s71 = sphi 0, %s70
    %s85 = sphi 0, %s71
    %s89 = sphi 0, %s89
    %s91 = sphi 0, %s89
    %s92 = sphi 0, %s91
    %s106 = sphi 0, %s92
    %s110 = sphi 0, %s110
    %s112 = sphi 0, %s110
    %s113 = sphi 0, %s112
    %s127 = sphi 0, %s113
    %s131 = sphi 0, %s131
    %s133 = sphi 0, %s131
    %s134 = sphi 0, %s133
    %s148 = sphi 0, %s134
    %s152 = sphi 0, %s152
    %s154 = sphi 0, %s152
    %s155 = sphi 0, %s154
    %s169 = sphi 0, %s155
    %s175 = sphi 0, %s177
    %s178 = sphi 0, %s175
    %s179 = sphi 0, %s178
    %s195 = sphi 0, %s179
  $region4: #{residual_block_forward.1} parent=0 // loop_header_branch
    %16 = sbr.rel (%p14) target = $region8
  $region5: #{residual_block_forward.1} parent=0 // loop_body
    %s18 = ssub.s32 %s13, 1
    %s19 = ssub.s32 %s13, 2
    %s20 = sadd.s32 %s13, 1
    %s21 = ssub.s32 %s13, %s20
    %p22 = scmp.eq.s32.totalorder %s21, 0
    %s24 = sadd.s32 %s23, 1
    %s25 = scalar_select %p22, %s23, %s24
    %p28 = pneg %p22
    %p29 = scmp.eq.s32.totalorder %s13, 1
    %p30 = por %p28, %p29
    %p31 = scmp.ne.s32.totalorder %s23, %s26
    %p32 = scmp.eq.s32.totalorder %s13, 0
    %p33 = por %p31, %p32
    %p34 = scmp.ne.s32.totalorder %s23, %s26
    %p35 = scmp.eq.s32.totalorder %s18, 1
    %p36 = por %p34, %p35
    %p37 = scmp.ne.s32.totalorder %s26, %s27
    %p38 = scmp.eq.s32.totalorder %s18, 0
    %p39 = por %p37, %p38
    %p40 = scmp.ne.s32.totalorder %s26, %s27
    %p41 = scmp.eq.s32.totalorder %s19, 1
    %p42 = por %p40, %p41
    %p44 = scmp.ne.s32.totalorder %s27, %s43
    %p45 = scmp.eq.s32.totalorder %s19, 0
    %p46 = por %p44, %p45
    %s48 = sadd.s32 %s47, 1
    %p51 = scmp.eq.s32.totalorder %s13, 1
    %p52 = scmp.ne.s32.totalorder %s47, %s49
    %p53 = scmp.eq.s32.totalorder %s13, 0
    %p54 = por %p52, %p53
    %p55 = scmp.ne.s32.totalorder %s47, %s49
    %p56 = scmp.eq.s32.totalorder %s18, 1
    %p57 = por %p55, %p56
    %p58 = scmp.ne.s32.totalorder %s49, %s50
    %p59 = scmp.eq.s32.totalorder %s18, 0
    %p60 = por %p58, %p59
    %p61 = scmp.ne.s32.totalorder %s49, %s50
    %p62 = scmp.eq.s32.totalorder %s19, 1
    %p63 = por %p61, %p62
    %p65 = scmp.ne.s32.totalorder %s50, %s64
    %p66 = scmp.eq.s32.totalorder %s19, 0
    %p67 = por %p65, %p66
    %s69 = sadd.s32 %s68, 1
    %p72 = scmp.eq.s32.totalorder %s13, 1
    %p73 = scmp.ne.s32.totalorder %s68, %s70
    %p74 = scmp.eq.s32.totalorder %s13, 0
    %p75 = por %p73, %p74
    %p76 = scmp.ne.s32.totalorder %s68, %s70
    %p77 = scmp.eq.s32.totalorder %s18, 1
    %p78 = por %p76, %p77
    %p79 = scmp.ne.s32.totalorder %s70, %s71
    %p80 = scmp.eq.s32.totalorder %s18, 0
    %p81 = por %p79, %p80
    %p82 = scmp.ne.s32.totalorder %s70, %s71
    %p83 = scmp.eq.s32.totalorder %s19, 1
    %p84 = por %p82, %p83
    %p86 = scmp.ne.s32.totalorder %s71, %s85
    %p87 = scmp.eq.s32.totalorder %s19, 0
    %p88 = por %p86, %p87
    %s90 = sadd.s32 %s89, 1
    %p93 = scmp.eq.s32.totalorder %s13, 1
    %p94 = scmp.ne.s32.totalorder %s89, %s91
    %p95 = scmp.eq.s32.totalorder %s13, 0
    %p96 = por %p94, %p95
    %p97 = scmp.ne.s32.totalorder %s89, %s91
    %p98 = scmp.eq.s32.totalorder %s18, 1
    %p99 = por %p97, %p98
    %p100 = scmp.ne.s32.totalorder %s91, %s92
    %p101 = scmp.eq.s32.totalorder %s18, 0
    %p102 = por %p100, %p101
    %p103 = scmp.ne.s32.totalorder %s91, %s92
    %p104 = scmp.eq.s32.totalorder %s19, 1
    %p105 = por %p103, %p104
    %p107 = scmp.ne.s32.totalorder %s92, %s106
    %p108 = scmp.eq.s32.totalorder %s19, 0
    %p109 = por %p107, %p108
    %s111 = sadd.s32 %s110, 1
    %p114 = scmp.eq.s32.totalorder %s13, 1
    %p115 = scmp.ne.s32.totalorder %s110, %s112
    %p116 = scmp.eq.s32.totalorder %s13, 0
    %p117 = por %p115, %p116
    %p118 = scmp.ne.s32.totalorder %s110, %s112
    %p119 = scmp.eq.s32.totalorder %s18, 1
    %p120 = por %p118, %p119
    %p121 = scmp.ne.s32.totalorder %s112, %s113
    %p122 = scmp.eq.s32.totalorder %s18, 0
    %p123 = por %p121, %p122
    %p124 = scmp.ne.s32.totalorder %s112, %s113
    %p125 = scmp.eq.s32.totalorder %s19, 1
    %p126 = por %p124, %p125
    %p128 = scmp.ne.s32.totalorder %s113, %s127
    %p129 = scmp.eq.s32.totalorder %s19, 0
    %p130 = por %p128, %p129
    %s132 = sadd.s32 %s131, 1
    %p135 = scmp.eq.s32.totalorder %s13, 1
    %p136 = scmp.ne.s32.totalorder %s131, %s133
    %p137 = scmp.eq.s32.totalorder %s13, 0
    %p138 = por %p136, %p137
    %p139 = scmp.ne.s32.totalorder %s131, %s133
    %p140 = scmp.eq.s32.totalorder %s18, 1
    %p141 = por %p139, %p140
    %p142 = scmp.ne.s32.totalorder %s133, %s134
    %p143 = scmp.eq.s32.totalorder %s18, 0
    %p144 = por %p142, %p143
    %p145 = scmp.ne.s32.totalorder %s133, %s134
    %p146 = scmp.eq.s32.totalorder %s19, 1
    %p147 = por %p145, %p146
    %p149 = scmp.ne.s32.totalorder %s134, %s148
    %p150 = scmp.eq.s32.totalorder %s19, 0
    %p151 = por %p149, %p150
    %s153 = sadd.s32 %s152, 1
    %p156 = scmp.eq.s32.totalorder %s13, 1
    %p157 = scmp.ne.s32.totalorder %s152, %s154
    %p158 = scmp.eq.s32.totalorder %s13, 0
    %p159 = por %p157, %p158
    %p160 = scmp.ne.s32.totalorder %s152, %s154
    %p161 = scmp.eq.s32.totalorder %s18, 1
    %p162 = por %p160, %p161
    %p163 = scmp.ne.s32.totalorder %s154, %s155
    %p164 = scmp.eq.s32.totalorder %s18, 0
    %p165 = por %p163, %p164
    %p166 = scmp.ne.s32.totalorder %s154, %s155
    %p167 = scmp.eq.s32.totalorder %s19, 1
    %p168 = por %p166, %p167
    %p170 = scmp.ne.s32.totalorder %s155, %s169
    %p171 = scmp.eq.s32.totalorder %s19, 0
    %p172 = por %p170, %p171
    %s173 = ssub.s32 %s13, %s20
    %p174 = scmp.eq.s32.totalorder %s173, 0
    %s176 = sadd.s32 %s175, 1
    %s177 = scalar_select %p174, %s175, %s176
    %p180 = pneg %p174
    %p181 = scmp.eq.s32.totalorder %s13, 1
    %p182 = por %p180, %p181
    %p183 = scmp.ne.s32.totalorder %s175, %s178
    %p184 = scmp.eq.s32.totalorder %s13, 0
    %p185 = por %p183, %p184
    %p186 = scmp.ne.s32.totalorder %s175, %s178
    %p187 = scmp.eq.s32.totalorder %s18, 1
    %p188 = por %p186, %p187
    %p189 = scmp.ne.s32.totalorder %s178, %s179
    %p190 = scmp.eq.s32.totalorder %s18, 0
    %p191 = por %p189, %p190
    %p192 = scmp.ne.s32.totalorder %s178, %s179
    %p193 = scmp.eq.s32.totalorder %s19, 1
    %p194 = por %p192, %p193
    %p196 = scmp.ne.s32.totalorder %s179, %s195
    %p197 = scmp.eq.s32.totalorder %s19, 0
    %p198 = por %p196, %p197
    %p199 = scmp.le.s32.totalorder 1, %s13
    %p200 = scmp.lt.s32.totalorder %s13, 3
    %p201 = pnand %p199, %p200
    %p202 = pneg %p201
    // Predicated region
    $region9: #{residual_block_forward.1} parent=5 // pred_check
      _
    $region10: #{residual_block_forward.1} parent=5 // pred_check_branch
      %204 = sbr.rel (%p201) target = $region12
    $region11: #{residual_block_forward.1} parent=5 // pred_region
      %s205 = ssub.s32 %s13, 1
      // Predicated region
      $region13: #{residual_block_forward.1} parent=11 // pred_check
        %p206 = pneg %p60
      $region14: #{residual_block_forward.1} parent=11 // pred_check_branch
        %208 = sbr.rel (%p206) target = $region16
      $region15: #{residual_block_forward.1} parent=11 // pred_region
        _
      $region16: #{residual_block_forward.1} parent=11 // pred_fallthru
        _
      // Predicated region
      $region17: #{residual_block_forward.1} parent=11 // pred_check
        %p209 = pneg %p81
      $region18: #{residual_block_forward.1} parent=11 // pred_check_branch
        %211 = sbr.rel (%p209) target = $region20
      $region19: #{residual_block_forward.1} parent=11 // pred_region
        _
      $region20: #{residual_block_forward.1} parent=11 // pred_fallthru
        _
      // Predicated region
      $region21: #{residual_block_forward.1} parent=11 // pred_check
        %p212 = pneg %p102
      $region22: #{residual_block_forward.1} parent=11 // pred_check_branch
        %214 = sbr.rel (%p212) target = $region24
      $region23: #{residual_block_forward.1} parent=11 // pred_region
        _
      $region24: #{residual_block_forward.1} parent=11 // pred_fallthru
        _
      // Predicated region
      $region25: #{residual_block_forward.1} parent=11 // pred_check
        %p215 = pneg %p123
      $region26: #{residual_block_forward.1} parent=11 // pred_check_branch
        %217 = sbr.rel (%p215) target = $region28
      $region27: #{residual_block_forward.1} parent=11 // pred_region
        _
      $region28: #{residual_block_forward.1} parent=11 // pred_fallthru
        _
      // Predicated region
      $region29: #{residual_block_forward.1} parent=11 // pred_check
        %p218 = pneg %p144
      $region30: #{residual_block_forward.1} parent=11 // pred_check_branch
        %220 = sbr.rel (%p218) target = $region32
      $region31: #{residual_block_forward.1} parent=11 // pred_region
        _
      $region32: #{residual_block_forward.1} parent=11 // pred_fallthru
        _
      // Predicated region
      $region33: #{residual_block_forward.1} parent=11 // pred_check
        %p221 = pneg %p165
      $region34: #{residual_block_forward.1} parent=11 // pred_check_branch
        %223 = sbr.rel (%p221) target = $region36
      $region35: #{residual_block_forward.1} parent=11 // pred_region
        _
      $region36: #{residual_block_forward.1} parent=11 // pred_fallthru
        _
    $region12: #{residual_block_forward.1} parent=5 // pred_fallthru
      _
    %p224 = scmp.lt.s32.totalorder %s13, 2
    // Predicated region
    $region37: #{residual_block_forward.1} parent=5 // pred_check
      %p225 = pneg %p224
    $region38: #{residual_block_forward.1} parent=5 // pred_check_branch
      %227 = sbr.rel (%p225) target = $region40
    $region39: #{residual_block_forward.1} parent=5 // pred_region
      // Predicated region
      $region41: #{residual_block_forward.1} parent=39 // pred_check
        %p228 = pneg %p33
      $region42: #{residual_block_forward.1} parent=39 // pred_check_branch
        %230 = sbr.rel (%p228) target = $region44
      $region43: #{residual_block_forward.1} parent=39 // pred_region
        %p231 = scmp.lt.s32.totalorder %s13, 1
        %s232 = scalar_select %p231, %s13, 1
        %s233 = smul.addr %s232, 54
        %s234 = smul.addr %s233, 4
        %s235 = scalar_lea.vmem %s0, %s234
      $region44: #{residual_block_forward.1} parent=39 // pred_fallthru
        _
    $region40: #{residual_block_forward.1} parent=5 // pred_fallthru
      _
    %p236 = scmp.le.s32.totalorder 1, %s13
    %p237 = scmp.lt.s32.totalorder %s13, 3
    %p238 = pnand %p236, %p237
    %p239 = pneg %p238
    // Predicated region
    $region45: #{residual_block_forward.1} parent=5 // pred_check
      _
    $region46: #{residual_block_forward.1} parent=5 // pred_check_branch
      %241 = sbr.rel (%p238) target = $region48
    $region47: #{residual_block_forward.1} parent=5 // pred_region
      %s242 = ssub.s32 %s13, 1
      %p243 = scmp.lt.s32.totalorder %s18, 1
      %s244 = scalar_select %p243, %s18, 1
      %s245 = smul.addr %s244, 54
      %s246 = smul.addr %s245, 4
      %s247 = scalar_lea.vmem %s0, %s246
      %p248 = pneg %p39
      %p249 = pneg %p36
      %p250 = pneg %p60
      %p251 = pneg %p57
      %p252 = pneg %p81
      %p253 = pneg %p78
      %p254 = pneg %p102
      %p255 = pneg %p99
      %p256 = pneg %p123
      %p257 = pneg %p120
      %p258 = pneg %p144
      %p259 = pneg %p141
      %p260 = pneg %p165
      %p261 = pneg %p162
      %p262 = pneg %p191
      %p263 = pneg %p188
      %p264 = scmp.lt.s32.totalorder %s18, 1
      %s265 = scalar_select %p264, %s18, 1
      %s266 = smul.addr %s265, 32
      %s267 = smul.addr %s266, 4
      %s268 = scalar_lea.vmem %s7, %s267
      %p269 = scmp.lt.s32.totalorder %s18, 1
      %s270 = scalar_select %p269, %s18, 1
      %s271 = smul.addr %s270, 54
      %s272 = smul.addr %s271, 4
      %s273 = scalar_lea.vmem %s0, %s272
      %p274 = scmp.lt.s32.totalorder %s18, 1
      %s275 = scalar_select %p274, %s18, 1
      %s276 = smul.addr %s275, 32
      %s277 = smul.addr %s276, 4
      %s278 = scalar_lea.vmem %s7, %s277
      %v280 = vld [vmem:[%s273] sm:$0xf]
      %v281 = vld [vmem:[%s273 + $0x4] sm:$0xf]
      %v282 = vld [vmem:[%s273 + $0xc] sm:$0xf]
      %v283 = vld [vmem:[%s273 + $0x10] sm:$0xf]
      %v284 = vld [vmem:[%s273 + $0x18] sm:$0xf]
      %v285 = vld [vmem:[%s273 + $0x1c] sm:$0xf]
      %v286 = vld [vmem:[%s273 + $0x24] sm:$0xf]
      %v287 = vld [vmem:[%s273 + $0x28] sm:$0xf]
      %v288 = vld [vmem:[%s273 + $0x30] sm:$0xf]
      %v289 = vld [vmem:[%s273 + $0x34] sm:$0xf]
      %v290 = vld [vmem:[%s273 + $0x3c] sm:$0xf]
      %v291 = vld [vmem:[%s273 + $0x40] sm:$0xf]
      %v292 = vld [vmem:[%s273 + $0x48] sm:$0xf]
      %v293 = vld [vmem:[%s273 + $0x4c] sm:$0xf]
      %v294 = vld [vmem:[%s273 + $0x54] sm:$0xf]
      %v295 = vld [vmem:[%s273 + $0x58] sm:$0xf]
      %v296 = vld [vmem:[%s273 + $0x60] sm:$0xf]
      %v297 = vld [vmem:[%s273 + $0x64] sm:$0xf]
      %v298 = vld [vmem:[%s273 + $0x6c] sm:$0xf]
      %v299 = vld [vmem:[%s273 + $0x70] sm:$0xf]
      %v300 = vld [vmem:[%s273 + $0x78] sm:$0xf]
      %v301 = vld [vmem:[%s273 + $0x7c] sm:$0xf]
      %v302 = vld [vmem:[%s273 + $0x84] sm:$0xf]
      %v303 = vld [vmem:[%s273 + $0x88] sm:$0xf]
      %v304 = vld [vmem:[%s273 + $0x90] sm:$0xf]
      %v305 = vld [vmem:[%s273 + $0x94] sm:$0xf]
      %v306 = vld [vmem:[%s273 + $0x9c] sm:$0xf]
      %v307 = vld [vmem:[%s273 + $0xa0] sm:$0xf]
      %v308 = vld [vmem:[%s273 + $0xa8] sm:$0xf]
      %v309 = vld [vmem:[%s273 + $0xac] sm:$0xf]
      %v310 = vld [vmem:[%s273 + $0xb4] sm:$0xf]
      %v311 = vld [vmem:[%s273 + $0xb8] sm:$0xf]
      %v312 = vld [vmem:[%s273 + $0x8] sm:$0x1]
      %v313 = vld [vmem:[%s273 + $0x14] sm:$0x1]
      %v314 = vld [vmem:[%s273 + $0x20] sm:$0x1]
      %v315 = vld [vmem:[%s273 + $0x2c] sm:$0x1]
      %v316 = vld [vmem:[%s273 + $0x38] sm:$0x1]
      %v317 = vld [vmem:[%s273 + $0x44] sm:$0x1]
      %v318 = vld [vmem:[%s273 + $0x50] sm:$0x1]
      %v319 = vld [vmem:[%s273 + $0x5c] sm:$0x1]
      %v320 = vld [vmem:[%s273 + $0x68] sm:$0x1]
      %v321 = vld [vmem:[%s273 + $0x74] sm:$0x1]
      %v322 = vld [vmem:[%s273 + $0x80] sm:$0x1]
      %v323 = vld [vmem:[%s273 + $0x8c] sm:$0x1]
      %v324 = vld [vmem:[%s273 + $0x98] sm:$0x1]
      %v325 = vld [vmem:[%s273 + $0xa4] sm:$0x1]
      %v326 = vld [vmem:[%s273 + $0xb0] sm:$0x1]
      %v327 = vld [vmem:[%s273 + $0xbc] sm:$0x1]
      %vm328 = vsmask.f32 3328
      %vm329 = vsmask.f32 7440
      %vm330 = vmor %vm328, %vm329
      %v332 = vshrl.u32 %v280, 16
      %v334 = vrot.slane %v332, 4
      %v335 = vshll.u32 %v280, 16
      %v337 = vrot.slane %v335, 5
      %v338 = vor.u32 %v334, %v337
      %v339 = vrot.slane %v338, 4
      %v341 = vshll.u32 %v281, 16
      %v343 = vrot.slane %v341, 5
      %v344 = vsel %vm330, %v339, %v343
      %v345 = vshrl.u32 %v281, 16
      %v347 = vrot.slane %v345, 4
      %v348 = vor.u32 %v347, %v343
      %v349 = vrot.slane %v348, 4
      %v351 = vshll.u32 %v312, 16
      %v353 = vrot.slane %v351, 5
      %v354 = vsel %vm330, %v349, %v353
      %v356 = vshrl.u32 %v282, 16
      %v358 = vrot.slane %v356, 4
      %v359 = vshll.u32 %v282, 16
      %v361 = vrot.slane %v359, 5
      %v362 = vor.u32 %v358, %v361
      %v363 = vrot.slane %v362, 4
      %v365 = vshll.u32 %v283, 16
      %v367 = vrot.slane %v365, 5
      %v368 = vsel %vm330, %v363, %v367
      %v369 = vshrl.u32 %v283, 16
      %v371 = vrot.slane %v369, 4
      %v372 = vor.u32 %v371, %v367
      %v373 = vrot.slane %v372, 4
      %v375 = vshll.u32 %v313, 16
      %v377 = vrot.slane %v375, 5
      %v378 = vsel %vm330, %v373, %v377
      %v380 = vshrl.u32 %v284, 16
      %v382 = vrot.slane %v380, 4
      %v383 = vshll.u32 %v284, 16
      %v385 = vrot.slane %v383, 5
      %v386 = vor.u32 %v382, %v385
      %v387 = vrot.slane %v386, 4
      %v389 = vshll.u32 %v285, 16
      %v391 = vrot.slane %v389, 5
      %v392 = vsel %vm330, %v387, %v391
      %v393 = vshrl.u32 %v285, 16
      %v395 = vrot.slane %v393, 4
      %v396 = vor.u32 %v395, %v391
      %v397 = vrot.slane %v396, 4
      %v399 = vshll.u32 %v314, 16
      %v401 = vrot.slane %v399, 5
      %v402 = vsel %vm330, %v397, %v401
      %v404 = vshrl.u32 %v286, 16
      %v406 = vrot.slane %v404, 4
      %v407 = vshll.u32 %v286, 16
      %v409 = vrot.slane %v407, 5
      %v410 = vor.u32 %v406, %v409
      %v411 = vrot.slane %v410, 4
      %v413 = vshll.u32 %v287, 16
      %v415 = vrot.slane %v413, 5
      %v416 = vsel %vm330, %v411, %v415
      %v417 = vshrl.u32 %v287, 16
      %v419 = vrot.slane %v417, 4
      %v420 = vor.u32 %v419, %v415
      %v421 = vrot.slane %v420, 4
      %v423 = vshll.u32 %v315, 16
      %v425 = vrot.slane %v423, 5
      %v426 = vsel %vm330, %v421, %v425
      %v428 = vshrl.u32 %v288, 16
      %v430 = vrot.slane %v428, 4
      %v431 = vshll.u32 %v288, 16
      %v433 = vrot.slane %v431, 5
      %v434 = vor.u32 %v430, %v433
      %v435 = vrot.slane %v434, 4
      %v437 = vshll.u32 %v289, 16
      %v439 = vrot.slane %v437, 5
      %v440 = vsel %vm330, %v435, %v439
      %v441 = vshrl.u32 %v289, 16
      %v443 = vrot.slane %v441, 4
      %v444 = vor.u32 %v443, %v439
      %v445 = vrot.slane %v444, 4
      %v447 = vshll.u32 %v316, 16
      %v449 = vrot.slane %v447, 5
      %v450 = vsel %vm330, %v445, %v449
      %v452 = vshrl.u32 %v290, 16
      %v454 = vrot.slane %v452, 4
      %v455 = vshll.u32 %v290, 16
      %v457 = vrot.slane %v455, 5
      %v458 = vor.u32 %v454, %v457
      %v459 = vrot.slane %v458, 4
      %v461 = vshll.u32 %v291, 16
      %v463 = vrot.slane %v461, 5
      %v464 = vsel %vm330, %v459, %v463
      %v465 = vshrl.u32 %v291, 16
      %v467 = vrot.slane %v465, 4
      %v468 = vor.u32 %v467, %v463
      %v469 = vrot.slane %v468, 4
      %v471 = vshll.u32 %v317, 16
      %v473 = vrot.slane %v471, 5
      %v474 = vsel %vm330, %v469, %v473
      %v476 = vshrl.u32 %v292, 16
      %v478 = vrot.slane %v476, 4
      %v479 = vshll.u32 %v292, 16
      %v481 = vrot.slane %v479, 5
      %v482 = vor.u32 %v478, %v481
      %v483 = vrot.slane %v482, 4
      %v485 = vshll.u32 %v293, 16
      %v487 = vrot.slane %v485, 5
      %v488 = vsel %vm330, %v483, %v487
      %v489 = vshrl.u32 %v293, 16
      %v491 = vrot.slane %v489, 4
      %v492 = vor.u32 %v491, %v487
      %v493 = vrot.slane %v492, 4
      %v495 = vshll.u32 %v318, 16
      %v497 = vrot.slane %v495, 5
      %v498 = vsel %vm330, %v493, %v497
      %v500 = vshrl.u32 %v294, 16
      %v502 = vrot.slane %v500, 4
      %v503 = vshll.u32 %v294, 16
      %v505 = vrot.slane %v503, 5
      %v506 = vor.u32 %v502, %v505
      %v507 = vrot.slane %v506, 4
      %v509 = vshll.u32 %v295, 16
      %v511 = vrot.slane %v509, 5
      %v512 = vsel %vm330, %v507, %v511
      %v513 = vshrl.u32 %v295, 16
      %v515 = vrot.slane %v513, 4
      %v516 = vor.u32 %v515, %v511
      %v517 = vrot.slane %v516, 4
      %v519 = vshll.u32 %v319, 16
      %v521 = vrot.slane %v519, 5
      %v522 = vsel %vm330, %v517, %v521
      %v524 = vshrl.u32 %v296, 16
      %v526 = vrot.slane %v524, 4
      %v527 = vshll.u32 %v296, 16
      %v529 = vrot.slane %v527, 5
      %v530 = vor.u32 %v526, %v529
      %v531 = vrot.slane %v530, 4
      %v533 = vshll.u32 %v297, 16
      %v535 = vrot.slane %v533, 5
      %v536 = vsel %vm330, %v531, %v535
      %v537 = vshrl.u32 %v297, 16
      %v539 = vrot.slane %v537, 4
      %v540 = vor.u32 %v539, %v535
      %v541 = vrot.slane %v540, 4
      %v543 = vshll.u32 %v320, 16
      %v545 = vrot.slane %v543, 5
      %v546 = vsel %vm330, %v541, %v545
      %v548 = vshrl.u32 %v298, 16
      %v550 = vrot.slane %v548, 4
      %v551 = vshll.u32 %v298, 16
      %v553 = vrot.slane %v551, 5
      %v554 = vor.u32 %v550, %v553
      %v555 = vrot.slane %v554, 4
      %v557 = vshll.u32 %v299, 16
      %v559 = vrot.slane %v557, 5
      %v560 = vsel %vm330, %v555, %v559
      %v561 = vshrl.u32 %v299, 16
      %v563 = vrot.slane %v561, 4
      %v564 = vor.u32 %v563, %v559
      %v565 = vrot.slane %v564, 4
      %v567 = vshll.u32 %v321, 16
      %v569 = vrot.slane %v567, 5
      %v570 = vsel %vm330, %v565, %v569
      %v572 = vshrl.u32 %v300, 16
      %v574 = vrot.slane %v572, 4
      %v575 = vshll.u32 %v300, 16
      %v577 = vrot.slane %v575, 5
      %v578 = vor.u32 %v574, %v577
      %v579 = vrot.slane %v578, 4
      %v581 = vshll.u32 %v301, 16
      %v583 = vrot.slane %v581, 5
      %v584 = vsel %vm330, %v579, %v583
      %v585 = vshrl.u32 %v301, 16
      %v587 = vrot.slane %v585, 4
      %v588 = vor.u32 %v587, %v583
      %v589 = vrot.slane %v588, 4
      %v591 = vshll.u32 %v322, 16
      %v593 = vrot.slane %v591, 5
      %v594 = vsel %vm330, %v589, %v593
      %v596 = vshrl.u32 %v302, 16
      %v598 = vrot.slane %v596, 4
      %v599 = vshll.u32 %v302, 16
      %v601 = vrot.slane %v599, 5
      %v602 = vor.u32 %v598, %v601
      %v603 = vrot.slane %v602, 4
      %v605 = vshll.u32 %v303, 16
      %v607 = vrot.slane %v605, 5
      %v608 = vsel %vm330, %v603, %v607
      %v609 = vshrl.u32 %v303, 16
      %v611 = vrot.slane %v609, 4
      %v612 = vor.u32 %v611, %v607
      %v613 = vrot.slane %v612, 4
      %v615 = vshll.u32 %v323, 16
      %v617 = vrot.slane %v615, 5
      %v618 = vsel %vm330, %v613, %v617
      %v620 = vshrl.u32 %v304, 16
      %v622 = vrot.slane %v620, 4
      %v623 = vshll.u32 %v304, 16
      %v625 = vrot.slane %v623, 5
      %v626 = vor.u32 %v622, %v625
      %v627 = vrot.slane %v626, 4
      %v629 = vshll.u32 %v305, 16
      %v631 = vrot.slane %v629, 5
      %v632 = vsel %vm330, %v627, %v631
      %v633 = vshrl.u32 %v305, 16
      %v635 = vrot.slane %v633, 4
      %v636 = vor.u32 %v635, %v631
      %v637 = vrot.slane %v636, 4
      %v639 = vshll.u32 %v324, 16
      %v641 = vrot.slane %v639, 5
      %v642 = vsel %vm330, %v637, %v641
      %v644 = vshrl.u32 %v306, 16
      %v646 = vrot.slane %v644, 4
      %v647 = vshll.u32 %v306, 16
      %v649 = vrot.slane %v647, 5
      %v650 = vor.u32 %v646, %v649
      %v651 = vrot.slane %v650, 4
      %v653 = vshll.u32 %v307, 16
      %v655 = vrot.slane %v653, 5
      %v656 = vsel %vm330, %v651, %v655
      %v657 = vshrl.u32 %v307, 16
      %v659 = vrot.slane %v657, 4
      %v660 = vor.u32 %v659, %v655
      %v661 = vrot.slane %v660, 4
      %v663 = vshll.u32 %v325, 16
      %v665 = vrot.slane %v663, 5
      %v666 = vsel %vm330, %v661, %v665
      %v668 = vshrl.u32 %v308, 16
      %v670 = vrot.slane %v668, 4
      %v671 = vshll.u32 %v308, 16
      %v673 = vrot.slane %v671, 5
      %v674 = vor.u32 %v670, %v673
      %v675 = vrot.slane %v674, 4
      %v677 = vshll.u32 %v309, 16
      %v679 = vrot.slane %v677, 5
      %v680 = vsel %vm330, %v675, %v679
      %v681 = vshrl.u32 %v309, 16
      %v683 = vrot.slane %v681, 4
      %v684 = vor.u32 %v683, %v679
      %v685 = vrot.slane %v684, 4
      %v687 = vshll.u32 %v326, 16
      %v689 = vrot.slane %v687, 5
      %v690 = vsel %vm330, %v685, %v689
      %v692 = vshrl.u32 %v310, 16
      %v694 = vrot.slane %v692, 4
      %v695 = vshll.u32 %v310, 16
      %v697 = vrot.slane %v695, 5
      %v698 = vor.u32 %v694, %v697
      %v699 = vrot.slane %v698, 4
      %v701 = vshll.u32 %v311, 16
      %v703 = vrot.slane %v701, 5
      %v704 = vsel %vm330, %v699, %v703
      %v705 = vshrl.u32 %v311, 16
      %v707 = vrot.slane %v705, 4
      %v708 = vor.u32 %v707, %v703
      %v709 = vrot.slane %v708, 4
      %v711 = vshll.u32 %v327, 16
      %v713 = vrot.slane %v711, 5
      %v714 = vsel %vm330, %v709, %v713
      %v715 = vld [vmem:[%s273] sm:$0xe]
      %v716 = vld [vmem:[%s273 + $0xc] sm:$0xe]
      %v717 = vld [vmem:[%s273 + $0x18] sm:$0xe]
      %v718 = vld [vmem:[%s273 + $0x24] sm:$0xe]
      %v719 = vld [vmem:[%s273 + $0x30] sm:$0xe]
      %v720 = vld [vmem:[%s273 + $0x3c] sm:$0xe]
      %v721 = vld [vmem:[%s273 + $0x48] sm:$0xe]
      %v722 = vld [vmem:[%s273 + $0x54] sm:$0xe]
      %v723 = vld [vmem:[%s273 + $0x60] sm:$0xe]
      %v724 = vld [vmem:[%s273 + $0x6c] sm:$0xe]
      %v725 = vld [vmem:[%s273 + $0x78] sm:$0xe]
      %v726 = vld [vmem:[%s273 + $0x84] sm:$0xe]
      %v727 = vld [vmem:[%s273 + $0x90] sm:$0xe]
      %v728 = vld [vmem:[%s273 + $0x9c] sm:$0xe]
      %v729 = vld [vmem:[%s273 + $0xa8] sm:$0xe]
      %v730 = vld [vmem:[%s273 + $0xb4] sm:$0xe]
      %vm779 = vcmask 1042432
      %vm780 = vcmask 1046532
      %vm781 = vmor %vm779, %vm780
      %v782 = vrot.slane %v715, 5
      %v783 = vrot.slane %v782, 4
      %v784 = vrot.slane %v281, 5
      %v785 = vsel %vm781, %v783, %v784
      %v786 = vrot.slane %v784, 4
      %v787 = vrot.slane %v312, 5
      %v788 = vsel %vm781, %v786, %v787
      %v789 = vrot.slane %v716, 5
      %v790 = vrot.slane %v789, 4
      %v791 = vrot.slane %v283, 5
      %v792 = vsel %vm781, %v790, %v791
      %v793 = vrot.slane %v791, 4
      %v794 = vrot.slane %v313, 5
      %v795 = vsel %vm781, %v793, %v794
      %v796 = vrot.slane %v717, 5
      %v797 = vrot.slane %v796, 4
      %v798 = vrot.slane %v285, 5
      %v799 = vsel %vm781, %v797, %v798
      %v800 = vrot.slane %v798, 4
      %v801 = vrot.slane %v314, 5
      %v802 = vsel %vm781, %v800, %v801
      %v803 = vrot.slane %v718, 5
      %v804 = vrot.slane %v803, 4
      %v805 = vrot.slane %v287, 5
      %v806 = vsel %vm781, %v804, %v805
      %v807 = vrot.slane %v805, 4
      %v808 = vrot.slane %v315, 5
      %v809 = vsel %vm781, %v807, %v808
      %v810 = vrot.slane %v719, 5
      %v811 = vrot.slane %v810, 4
      %v812 = vrot.slane %v289, 5
      %v813 = vsel %vm781, %v811, %v812
      %v814 = vrot.slane %v812, 4
      %v815 = vrot.slane %v316, 5
      %v816 = vsel %vm781, %v814, %v815
      %v817 = vrot.slane %v720, 5
      %v818 = vrot.slane %v817, 4
      %v819 = vrot.slane %v291, 5
      %v820 = vsel %vm781, %v818, %v819
      %v821 = vrot.slane %v819, 4
      %v822 = vrot.slane %v317, 5
      %v823 = vsel %vm781, %v821, %v822
      %v824 = vrot.slane %v721, 5
      %v825 = vrot.slane %v824, 4
      %v826 = vrot.slane %v293, 5
      %v827 = vsel %vm781, %v825, %v826
      %v828 = vrot.slane %v826, 4
      %v829 = vrot.slane %v318, 5
      %v830 = vsel %vm781, %v828, %v829
      %v831 = vrot.slane %v722, 5
      %v832 = vrot.slane %v831, 4
      %v833 = vrot.slane %v295, 5
      %v834 = vsel %vm781, %v832, %v833
      %v835 = vrot.slane %v833, 4
      %v836 = vrot.slane %v319, 5
      %v837 = vsel %vm781, %v835, %v836
      %v838 = vrot.slane %v723, 5
      %v839 = vrot.slane %v838, 4
      %v840 = vrot.slane %v297, 5
      %v841 = vsel %vm781, %v839, %v840
      %v842 = vrot.slane %v840, 4
      %v843 = vrot.slane %v320, 5
      %v844 = vsel %vm781, %v842, %v843
      %v845 = vrot.slane %v724, 5
      %v846 = vrot.slane %v845, 4
      %v847 = vrot.slane %v299, 5
      %v848 = vsel %vm781, %v846, %v847
      %v849 = vrot.slane %v847, 4
      %v850 = vrot.slane %v321, 5
      %v851 = vsel %vm781, %v849, %v850
      %v852 = vrot.slane %v725, 5
      %v853 = vrot.slane %v852, 4
      %v854 = vrot.slane %v301, 5
      %v855 = vsel %vm781, %v853, %v854
      %v856 = vrot.slane %v854, 4
      %v857 = vrot.slane %v322, 5
      %v858 = vsel %vm781, %v856, %v857
      %v859 = vrot.slane %v726, 5
      %v860 = vrot.slane %v859, 4
      %v861 = vrot.slane %v303, 5
      %v862 = vsel %vm781, %v860, %v861
      %v863 = vrot.slane %v861, 4
      %v864 = vrot.slane %v323, 5
      %v865 = vsel %vm781, %v863, %v864
      %v866 = vrot.slane %v727, 5
      %v867 = vrot.slane %v866, 4
      %v868 = vrot.slane %v305, 5
      %v869 = vsel %vm781, %v867, %v868
      %v870 = vrot.slane %v868, 4
      %v871 = vrot.slane %v324, 5
      %v872 = vsel %vm781, %v870, %v871
      %v873 = vrot.slane %v728, 5
      %v874 = vrot.slane %v873, 4
      %v875 = vrot.slane %v307, 5
      %v876 = vsel %vm781, %v874, %v875
      %v877 = vrot.slane %v875, 4
      %v878 = vrot.slane %v325, 5
      %v879 = vsel %vm781, %v877, %v878
      %v880 = vrot.slane %v729, 5
      %v881 = vrot.slane %v880, 4
      %v882 = vrot.slane %v309, 5
      %v883 = vsel %vm781, %v881, %v882
      %v884 = vrot.slane %v882, 4
      %v885 = vrot.slane %v326, 5
      %v886 = vsel %vm781, %v884, %v885
      %v887 = vrot.slane %v730, 5
      %v888 = vrot.slane %v887, 4
      %v889 = vrot.slane %v311, 5
      %v890 = vsel %vm781, %v888, %v889
      %v891 = vrot.slane %v889, 4
      %v892 = vrot.slane %v327, 5
      %v893 = vsel %vm781, %v891, %v892
      %v910 = vunpack.c.l.b16 %v280
      %v911 = vunpack.c.l.b16 %v281
      %v912 = vunpack.c.l.b16 %v282
      %v913 = vunpack.c.l.b16 %v283
      %v914 = vunpack.c.l.b16 %v284
      %v915 = vunpack.c.l.b16 %v285
      %v916 = vunpack.c.l.b16 %v286
      %v917 = vunpack.c.l.b16 %v287
      %v918 = vunpack.c.l.b16 %v288
      %v919 = vunpack.c.l.b16 %v289
      %v920 = vunpack.c.l.b16 %v290
      %v921 = vunpack.c.l.b16 %v291
      %v922 = vunpack.c.l.b16 %v292
      %v923 = vunpack.c.l.b16 %v293
      %v924 = vunpack.c.l.b16 %v294
      %v925 = vunpack.c.l.b16 %v295
      %v926 = vunpack.c.l.b16 %v296
      %v927 = vunpack.c.l.b16 %v297
      %v928 = vunpack.c.l.b16 %v298
      %v929 = vunpack.c.l.b16 %v299
      %v930 = vunpack.c.l.b16 %v300
      %v931 = vunpack.c.l.b16 %v301
      %v932 = vunpack.c.l.b16 %v302
      %v933 = vunpack.c.l.b16 %v303
      %v934 = vunpack.c.l.b16 %v304
      %v935 = vunpack.c.l.b16 %v305
      %v936 = vunpack.c.l.b16 %v306
      %v937 = vunpack.c.l.b16 %v307
      %v938 = vunpack.c.l.b16 %v308
      %v939 = vunpack.c.l.b16 %v309
      %v940 = vunpack.c.l.b16 %v310
      %v941 = vunpack.c.l.b16 %v311
      %v942 = vpack.c.b16 %v911, %v910
      %v943 = vpack.c.b16 %v913, %v912
      %v944 = vpack.c.b16 %v915, %v914
      %v945 = vpack.c.b16 %v917, %v916
      %v946 = vpack.c.b16 %v919, %v918
      %v947 = vpack.c.b16 %v921, %v920
      %v948 = vpack.c.b16 %v923, %v922
      %v949 = vpack.c.b16 %v925, %v924
      %v950 = vpack.c.b16 %v927, %v926
      %v951 = vpack.c.b16 %v929, %v928
      %v952 = vpack.c.b16 %v931, %v930
      %v953 = vpack.c.b16 %v933, %v932
      %v954 = vpack.c.b16 %v935, %v934
      %v955 = vpack.c.b16 %v937, %v936
      %v956 = vpack.c.b16 %v939, %v938
      %v957 = vpack.c.b16 %v941, %v940
      %v974 = vunpack.c.l.b16 %v344
      %v975 = vunpack.c.l.b16 %v354
      %v976 = vunpack.c.l.b16 %v368
      %v977 = vunpack.c.l.b16 %v378
      %v978 = vunpack.c.l.b16 %v392
      %v979 = vunpack.c.l.b16 %v402
      %v980 = vunpack.c.l.b16 %v416
      %v981 = vunpack.c.l.b16 %v426
      %v982 = vunpack.c.l.b16 %v440
      %v983 = vunpack.c.l.b16 %v450
      %v984 = vunpack.c.l.b16 %v464
      %v985 = vunpack.c.l.b16 %v474
      %v986 = vunpack.c.l.b16 %v488
      %v987 = vunpack.c.l.b16 %v498
      %v988 = vunpack.c.l.b16 %v512
      %v989 = vunpack.c.l.b16 %v522
      %v990 = vunpack.c.l.b16 %v536
      %v991 = vunpack.c.l.b16 %v546
      %v992 = vunpack.c.l.b16 %v560
      %v993 = vunpack.c.l.b16 %v570
      %v994 = vunpack.c.l.b16 %v584
      %v995 = vunpack.c.l.b16 %v594
      %v996 = vunpack.c.l.b16 %v608
      %v997 = vunpack.c.l.b16 %v618
      %v998 = vunpack.c.l.b16 %v632
      %v999 = vunpack.c.l.b16 %v642
      %v1000 = vunpack.c.l.b16 %v656
      %v1001 = vunpack.c.l.b16 %v666
      %v1002 = vunpack.c.l.b16 %v680
      %v1003 = vunpack.c.l.b16 %v690
      %v1004 = vunpack.c.l.b16 %v704
      %v1005 = vunpack.c.l.b16 %v714
      %v1006 = vpack.c.b16 %v975, %v974
      %v1007 = vpack.c.b16 %v977, %v976
      %v1008 = vpack.c.b16 %v979, %v978
      %v1009 = vpack.c.b16 %v981, %v980
      %v1010 = vpack.c.b16 %v983, %v982
      %v1011 = vpack.c.b16 %v985, %v984
      %v1012 = vpack.c.b16 %v987, %v986
      %v1013 = vpack.c.b16 %v989, %v988
      %v1014 = vpack.c.b16 %v991, %v990
      %v1015 = vpack.c.b16 %v993, %v992
      %v1016 = vpack.c.b16 %v995, %v994
      %v1017 = vpack.c.b16 %v997, %v996
      %v1018 = vpack.c.b16 %v999, %v998
      %v1019 = vpack.c.b16 %v1001, %v1000
      %v1020 = vpack.c.b16 %v1003, %v1002
      %v1021 = vpack.c.b16 %v1005, %v1004
      %v1038 = vunpack.c.l.b16 %v785
      %v1039 = vunpack.c.l.b16 %v788
      %v1040 = vunpack.c.l.b16 %v792
      %v1041 = vunpack.c.l.b16 %v795
      %v1042 = vunpack.c.l.b16 %v799
      %v1043 = vunpack.c.l.b16 %v802
      %v1044 = vunpack.c.l.b16 %v806
      %v1045 = vunpack.c.l.b16 %v809
      %v1046 = vunpack.c.l.b16 %v813
      %v1047 = vunpack.c.l.b16 %v816
      %v1048 = vunpack.c.l.b16 %v820
      %v1049 = vunpack.c.l.b16 %v823
      %v1050 = vunpack.c.l.b16 %v827
      %v1051 = vunpack.c.l.b16 %v830
      %v1052 = vunpack.c.l.b16 %v834
      %v1053 = vunpack.c.l.b16 %v837
      %v1054 = vunpack.c.l.b16 %v841
      %v1055 = vunpack.c.l.b16 %v844
      %v1056 = vunpack.c.l.b16 %v848
      %v1057 = vunpack.c.l.b16 %v851
      %v1058 = vunpack.c.l.b16 %v855
      %v1059 = vunpack.c.l.b16 %v858
      %v1060 = vunpack.c.l.b16 %v862
      %v1061 = vunpack.c.l.b16 %v865
      %v1062 = vunpack.c.l.b16 %v869
      %v1063 = vunpack.c.l.b16 %v872
      %v1064 = vunpack.c.l.b16 %v876
      %v1065 = vunpack.c.l.b16 %v879
      %v1066 = vunpack.c.l.b16 %v883
      %v1067 = vunpack.c.l.b16 %v886
      %v1068 = vunpack.c.l.b16 %v890
      %v1069 = vunpack.c.l.b16 %v893
      %v1070 = vpack.c.b16 %v1039, %v1038
      %v1071 = vpack.c.b16 %v1041, %v1040
      %v1072 = vpack.c.b16 %v1043, %v1042
      %v1073 = vpack.c.b16 %v1045, %v1044
      %v1074 = vpack.c.b16 %v1047, %v1046
      %v1075 = vpack.c.b16 %v1049, %v1048
      %v1076 = vpack.c.b16 %v1051, %v1050
      %v1077 = vpack.c.b16 %v1053, %v1052
      %v1078 = vpack.c.b16 %v1055, %v1054
      %v1079 = vpack.c.b16 %v1057, %v1056
      %v1080 = vpack.c.b16 %v1059, %v1058
      %v1081 = vpack.c.b16 %v1061, %v1060
      %v1082 = vpack.c.b16 %v1063, %v1062
      %v1083 = vpack.c.b16 %v1065, %v1064
      %v1084 = vpack.c.b16 %v1067, %v1066
      %v1085 = vpack.c.b16 %v1069, %v1068
      %v1102 = vld [vmem:[%s1] sm:$0xf]
      %v1103 = vld [vmem:[%s1 + $0x4] sm:$0xf]
      %v1104 = vld [vmem:[%s1 + $0x8] sm:$0xf]
      %v1105 = vld [vmem:[%s1 + $0xc] sm:$0xf]
      %v1106 = vld [vmem:[%s1 + $0x10] sm:$0xf]
      %v1107 = vld [vmem:[%s1 + $0x14] sm:$0xf]
      %v1108 = vld [vmem:[%s1 + $0x18] sm:$0xf]
      %v1109 = vld [vmem:[%s1 + $0x1c] sm:$0xf]
      %v1110 = vld [vmem:[%s1 + $0x20] sm:$0xf]
      %v1111 = vld [vmem:[%s1 + $0x24] sm:$0xf]
      %v1112 = vld [vmem:[%s1 + $0x28] sm:$0xf]
      %v1113 = vld [vmem:[%s1 + $0x2c] sm:$0xf]
      %v1114 = vld [vmem:[%s1 + $0x30] sm:$0xf]
      %v1115 = vld [vmem:[%s1 + $0x34] sm:$0xf]
      %v1116 = vld [vmem:[%s1 + $0x38] sm:$0xf]
      %v1117 = vld [vmem:[%s1 + $0x3c] sm:$0xf]
      %v1118 = vld [vmem:[%s1 + $0x40] sm:$0xf]
      %v1119 = vld [vmem:[%s1 + $0x44] sm:$0xf]
      %v1120 = vld [vmem:[%s1 + $0x48] sm:$0xf]
      %v1121 = vld [vmem:[%s1 + $0x4c] sm:$0xf]
      %v1122 = vld [vmem:[%s1 + $0x50] sm:$0xf]
      %v1123 = vld [vmem:[%s1 + $0x54] sm:$0xf]
      %v1124 = vld [vmem:[%s1 + $0x58] sm:$0xf]
      %v1125 = vld [vmem:[%s1 + $0x5c] sm:$0xf]
      %v1126 = vld [vmem:[%s1 + $0x60] sm:$0xf]
      %v1127 = vld [vmem:[%s1 + $0x64] sm:$0xf]
      %v1128 = vld [vmem:[%s1 + $0x68] sm:$0xf]
      %v1129 = vld [vmem:[%s1 + $0x6c] sm:$0xf]
      %v1130 = vld [vmem:[%s1 + $0x70] sm:$0xf]
      %v1131 = vld [vmem:[%s1 + $0x74] sm:$0xf]
      %v1132 = vld [vmem:[%s1 + $0x78] sm:$0xf]
      %v1133 = vld [vmem:[%s1 + $0x7c] sm:$0xf]
      %v1134 = vld [vmem:[%s1 + $0x80] sm:$0xf]
      %v1135 = vld [vmem:[%s1 + $0x84] sm:$0xf]
      %v1136 = vld [vmem:[%s1 + $0x88] sm:$0xf]
      %v1137 = vld [vmem:[%s1 + $0x8c] sm:$0xf]
      %v1138 = vld [vmem:[%s1 + $0x90] sm:$0xf]
      %v1139 = vld [vmem:[%s1 + $0x94] sm:$0xf]
      %v1140 = vld [vmem:[%s1 + $0x98] sm:$0xf]
      %v1141 = vld [vmem:[%s1 + $0x9c] sm:$0xf]
      %v1142 = vld [vmem:[%s1 + $0xa0] sm:$0xf]
      %v1143 = vld [vmem:[%s1 + $0xa4] sm:$0xf]
      %v1144 = vld [vmem:[%s1 + $0xa8] sm:$0xf]
      %v1145 = vld [vmem:[%s1 + $0xac] sm:$0xf]
      %v1146 = vld [vmem:[%s1 + $0xb0] sm:$0xf]
      %v1147 = vld [vmem:[%s1 + $0xb4] sm:$0xf]
      %v1148 = vld [vmem:[%s1 + $0xb8] sm:$0xf]
      %v1149 = vld [vmem:[%s1 + $0xbc] sm:$0xf]
      %v1150 = vld [vmem:[%s2] sm:$0x1]
      %v1152 = vlaneseq
      %v1153 = vshrl.u32 %v1152, 7
      %v1154 = vsub.s32 0, %v1153
      %v1155 = vrot.slane %v1150, %v1154
      %v1205 = vunpack.c.l.b16 %v1102
      %v1206 = vunpack.c.l.b16 %v1103
      %v1207 = vunpack.c.l.b16 %v1104
      %v1208 = vunpack.c.l.b16 %v1105
      %v1209 = vunpack.c.l.b16 %v1106
      %v1210 = vunpack.c.l.b16 %v1107
      %v1211 = vunpack.c.l.b16 %v1108
      %v1212 = vunpack.c.l.b16 %v1109
      %v1213 = vunpack.c.l.b16 %v1110
      %v1214 = vunpack.c.l.b16 %v1111
      %v1215 = vunpack.c.l.b16 %v1112
      %v1216 = vunpack.c.l.b16 %v1113
      %v1217 = vunpack.c.l.b16 %v1114
      %v1218 = vunpack.c.l.b16 %v1115
      %v1219 = vunpack.c.l.b16 %v1116
      %v1220 = vunpack.c.l.b16 %v1117
      %v1221 = vunpack.c.l.b16 %v1118
      %v1222 = vunpack.c.l.b16 %v1119
      %v1223 = vunpack.c.l.b16 %v1120
      %v1224 = vunpack.c.l.b16 %v1121
      %v1225 = vunpack.c.l.b16 %v1122
      %v1226 = vunpack.c.l.b16 %v1123
      %v1227 = vunpack.c.l.b16 %v1124
      %v1228 = vunpack.c.l.b16 %v1125
      %v1229 = vunpack.c.l.b16 %v1126
      %v1230 = vunpack.c.l.b16 %v1127
      %v1231 = vunpack.c.l.b16 %v1128
      %v1232 = vunpack.c.l.b16 %v1129
      %v1233 = vunpack.c.l.b16 %v1130
      %v1234 = vunpack.c.l.b16 %v1131
      %v1235 = vunpack.c.l.b16 %v1132
      %v1236 = vunpack.c.l.b16 %v1133
      %v1237 = vunpack.c.l.b16 %v1134
      %v1238 = vunpack.c.l.b16 %v1135
      %v1239 = vunpack.c.l.b16 %v1136
      %v1240 = vunpack.c.l.b16 %v1137
      %v1241 = vunpack.c.l.b16 %v1138
      %v1242 = vunpack.c.l.b16 %v1139
      %v1243 = vunpack.c.l.b16 %v1140
      %v1244 = vunpack.c.l.b16 %v1141
      %v1245 = vunpack.c.l.b16 %v1142
      %v1246 = vunpack.c.l.b16 %v1143
      %v1247 = vunpack.c.l.b16 %v1144
      %v1248 = vunpack.c.l.b16 %v1145
      %v1249 = vunpack.c.l.b16 %v1146
      %v1250 = vunpack.c.l.b16 %v1147
      %v1251 = vunpack.c.l.b16 %v1148
      %v1252 = vunpack.c.l.b16 %v1149
      %v1253 = vpack.c.b16 %v1206, %v1205
      %v1254 = vpack.c.b16 %v1208, %v1207
      %v1255 = vpack.c.b16 %v1210, %v1209
      %v1256 = vpack.c.b16 %v1212, %v1211
      %v1257 = vpack.c.b16 %v1214, %v1213
      %v1258 = vpack.c.b16 %v1216, %v1215
      %v1259 = vpack.c.b16 %v1218, %v1217
      %v1260 = vpack.c.b16 %v1220, %v1219
      %v1261 = vpack.c.b16 %v1222, %v1221
      %v1262 = vpack.c.b16 %v1224, %v1223
      %v1263 = vpack.c.b16 %v1226, %v1225
      %v1264 = vpack.c.b16 %v1228, %v1227
      %v1265 = vpack.c.b16 %v1230, %v1229
      %v1266 = vpack.c.b16 %v1232, %v1231
      %v1267 = vpack.c.b16 %v1234, %v1233
      %v1268 = vpack.c.b16 %v1236, %v1235
      %v1269 = vpack.c.b16 %v1238, %v1237
      %v1270 = vpack.c.b16 %v1240, %v1239
      %v1271 = vpack.c.b16 %v1242, %v1241
      %v1272 = vpack.c.b16 %v1244, %v1243
      %v1273 = vpack.c.b16 %v1246, %v1245
      %v1274 = vpack.c.b16 %v1248, %v1247
      %v1275 = vpack.c.b16 %v1250, %v1249
      %v1276 = vpack.c.b16 %v1252, %v1251
      %1301 = vmatprep.subr.bf16.mxu0 0
      %1302 = vmatpush1.bf16.msra.mxu0 %v1260
      %1303 = vmatprep.subr.bf16.mxu0 0
      %1304 = vmatpush1.bf16.msra.mxu0 %v1259
      %1305 = vmatprep.subr.bf16.mxu0 0
      %1306 = vmatpush1.bf16.msra.mxu0 %v1258
      %1307 = vmatprep.subr.bf16.mxu0 0
      %1308 = vmatpush1.bf16.msra.mxu0 %v1257
      %1309 = vmatprep.subr.bf16.mxu0 0
      %1310 = vmatpush1.bf16.msra.mxu0 %v1256
      %1311 = vmatprep.subr.bf16.mxu0 0
      %1312 = vmatpush1.bf16.msra.mxu0 %v1255
      %1313 = vmatprep.subr.bf16.mxu0 0
      %1314 = vmatpush1.bf16.msra.mxu0 %v1254
      %1315 = vmatprep.subr.bf16.mxu0 0
      %1316 = vmatpush1.bf16.msra.mxu0 %v1253
      %1317 = vmatprep.subr.bf16.mxu0 0
      %1318 = vmatpush2.bf16.msra.mxu0 %v1268
      %1319 = vmatprep.subr.bf16.mxu0 0
      %1320 = vmatpush2.bf16.msra.mxu0 %v1267
      %1321 = vmatprep.subr.bf16.mxu0 0
      %1322 = vmatpush2.bf16.msra.mxu0 %v1266
      %1323 = vmatprep.subr.bf16.mxu0 0
      %1324 = vmatpush2.bf16.msra.mxu0 %v1265
      %1325 = vmatprep.subr.bf16.mxu0 0
      %1326 = vmatpush2.bf16.msra.mxu0 %v1264
      %1327 = vmatprep.subr.bf16.mxu0 0
      %1328 = vmatpush2.bf16.msra.mxu0 %v1263
      %1329 = vmatprep.subr.bf16.mxu0 0
      %1330 = vmatpush2.bf16.msra.mxu0 %v1262
      %1331 = vmatprep.subr.bf16.mxu0 0
      %1332 = vmatpush2.bf16.msra.mxu0 %v1261
      %1333 = vmatprep.mubr.bf16.mxu0 %v1006
      %1334 = vmatmul.mubr.bf16.gmra.mxu0 %v942
      %v1335 = vpop.f32.mrf.mxu0
      %v1336 = vadd.f32 %v1155, %v1335
      %v1337 = vpop.f32.mrf.mxu0
      %v1338 = vpop.f32.mrf.mxu0
      %v1339 = vadd.f32 %v1155, %v1338
      %v1340 = vpop.f32.mrf.mxu0
      %1341 = vmatprep.mubr.bf16.mxu0 %v1007
      %1342 = vmatmul.mubr.bf16.gmra.mxu0 %v943
      %v1343 = vpop.f32.mrf.mxu0
      %v1344 = vadd.f32 %v1155, %v1343
      %v1345 = vpop.f32.mrf.mxu0
      %v1346 = vpop.f32.mrf.mxu0
      %v1347 = vadd.f32 %v1155, %v1346
      %v1348 = vpop.f32.mrf.mxu0
      %1349 = vmatprep.mubr.bf16.mxu0 %v1008
      %1350 = vmatmul.mubr.bf16.gmra.mxu0 %v944
      %v1351 = vpop.f32.mrf.mxu0
      %v1352 = vadd.f32 %v1155, %v1351
      %v1353 = vpop.f32.mrf.mxu0
      %v1354 = vpop.f32.mrf.mxu0
      %v1355 = vadd.f32 %v1155, %v1354
      %v1356 = vpop.f32.mrf.mxu0
      %1357 = vmatprep.mubr.bf16.mxu0 %v1009
      %1358 = vmatmul.mubr.bf16.gmra.mxu0 %v945
      %v1359 = vpop.f32.mrf.mxu0
      %v1360 = vadd.f32 %v1155, %v1359
      %v1361 = vpop.f32.mrf.mxu0
      %v1362 = vpop.f32.mrf.mxu0
      %v1363 = vadd.f32 %v1155, %v1362
      %v1364 = vpop.f32.mrf.mxu0
      %1365 = vmatprep.mubr.bf16.mxu0 %v1010
      %1366 = vmatmul.mubr.bf16.gmra.mxu0 %v946
      %v1367 = vpop.f32.mrf.mxu0
      %v1368 = vadd.f32 %v1155, %v1367
      %v1369 = vpop.f32.mrf.mxu0
      %v1370 = vpop.f32.mrf.mxu0
      %v1371 = vadd.f32 %v1155, %v1370
      %v1372 = vpop.f32.mrf.mxu0
      %1373 = vmatprep.mubr.bf16.mxu0 %v1011
      %1374 = vmatmul.mubr.bf16.gmra.mxu0 %v947
      %v1375 = vpop.f32.mrf.mxu0
      %v1376 = vadd.f32 %v1155, %v1375
      %v1377 = vpop.f32.mrf.mxu0
      %v1378 = vpop.f32.mrf.mxu0
      %v1379 = vadd.f32 %v1155, %v1378
      %v1380 = vpop.f32.mrf.mxu0
      %1381 = vmatprep.mubr.bf16.mxu0 %v1012
      %1382 = vmatmul.mubr.bf16.gmra.mxu0 %v948
      %v1383 = vpop.f32.mrf.mxu0
      %v1384 = vadd.f32 %v1155, %v1383
      %v1385 = vpop.f32.mrf.mxu0
      %v1386 = vpop.f32.mrf.mxu0
      %v1387 = vadd.f32 %v1155, %v1386
      %v1388 = vpop.f32.mrf.mxu0
      %1389 = vmatprep.mubr.bf16.mxu0 %v1013
      %1390 = vmatmul.mubr.bf16.gmra.mxu0 %v949
      %v1391 = vpop.f32.mrf.mxu0
      %v1392 = vadd.f32 %v1155, %v1391
      %v1393 = vpop.f32.mrf.mxu0
      %v1394 = vpop.f32.mrf.mxu0
      %v1395 = vadd.f32 %v1155, %v1394
      %v1396 = vpop.f32.mrf.mxu0
      %1397 = vmatprep.mubr.bf16.mxu0 %v1014
      %1398 = vmatmul.mubr.bf16.gmra.mxu0 %v950
      %v1399 = vpop.f32.mrf.mxu0
      %v1400 = vadd.f32 %v1155, %v1399
      %v1401 = vpop.f32.mrf.mxu0
      %v1402 = vpop.f32.mrf.mxu0
      %v1403 = vadd.f32 %v1155, %v1402
      %v1404 = vpop.f32.mrf.mxu0
      %1405 = vmatprep.mubr.bf16.mxu0 %v1015
      %1406 = vmatmul.mubr.bf16.gmra.mxu0 %v951
      %v1407 = vpop.f32.mrf.mxu0
      %v1408 = vadd.f32 %v1155, %v1407
      %v1409 = vpop.f32.mrf.mxu0
      %v1410 = vpop.f32.mrf.mxu0
      %v1411 = vadd.f32 %v1155, %v1410
      %v1412 = vpop.f32.mrf.mxu0
      %1413 = vmatprep.mubr.bf16.mxu0 %v1016
      %1414 = vmatmul.mubr.bf16.gmra.mxu0 %v952
      %v1415 = vpop.f32.mrf.mxu0
      %v1416 = vadd.f32 %v1155, %v1415
      %v1417 = vpop.f32.mrf.mxu0
      %v1418 = vpop.f32.mrf.mxu0
      %v1419 = vadd.f32 %v1155, %v1418
      %v1420 = vpop.f32.mrf.mxu0
      %1421 = vmatprep.mubr.bf16.mxu0 %v1017
      %1422 = vmatmul.mubr.bf16.gmra.mxu0 %v953
      %v1423 = vpop.f32.mrf.mxu0
      %v1424 = vadd.f32 %v1155, %v1423
      %v1425 = vpop.f32.mrf.mxu0
      %v1426 = vpop.f32.mrf.mxu0
      %v1427 = vadd.f32 %v1155, %v1426
      %v1428 = vpop.f32.mrf.mxu0
      %1429 = vmatprep.mubr.bf16.mxu0 %v1018
      %1430 = vmatmul.mubr.bf16.gmra.mxu0 %v954
      %v1431 = vpop.f32.mrf.mxu0
      %v1432 = vadd.f32 %v1155, %v1431
      %v1433 = vpop.f32.mrf.mxu0
      %v1434 = vpop.f32.mrf.mxu0
      %v1435 = vadd.f32 %v1155, %v1434
      %v1436 = vpop.f32.mrf.mxu0
      %1437 = vmatprep.mubr.bf16.mxu0 %v1019
      %1438 = vmatmul.mubr.bf16.gmra.mxu0 %v955
      %v1439 = vpop.f32.mrf.mxu0
      %v1440 = vadd.f32 %v1155, %v1439
      %v1441 = vpop.f32.mrf.mxu0
      %v1442 = vpop.f32.mrf.mxu0
      %v1443 = vadd.f32 %v1155, %v1442
      %v1444 = vpop.f32.mrf.mxu0
      %1445 = vmatprep.mubr.bf16.mxu0 %v1020
      %1446 = vmatmul.mubr.bf16.gmra.mxu0 %v956
      %v1447 = vpop.f32.mrf.mxu0
      %v1448 = vadd.f32 %v1155, %v1447
      %v1449 = vpop.f32.mrf.mxu0
      %v1450 = vpop.f32.mrf.mxu0
      %v1451 = vadd.f32 %v1155, %v1450
      %v1452 = vpop.f32.mrf.mxu0
      %1453 = vmatprep.mubr.bf16.mxu0 %v1021
      %1454 = vmatmul.mubr.bf16.gmra.mxu0 %v957
      %v1455 = vpop.f32.mrf.mxu0
      %v1456 = vadd.f32 %v1155, %v1455
      %v1457 = vpop.f32.mrf.mxu0
      %v1458 = vpop.f32.mrf.mxu0
      %v1459 = vadd.f32 %v1155, %v1458
      %v1460 = vpop.f32.mrf.mxu0
      %1461 = vdwg.mxu0
      %1462 = vmatprep.subr.bf16.mxu0 0
      %1463 = vmatpush1.bf16.msra.mxu0 %v1276
      %1464 = vmatprep.subr.bf16.mxu0 0
      %1465 = vmatpush1.bf16.msra.mxu0 %v1275
      %1466 = vmatprep.subr.bf16.mxu0 0
      %1467 = vmatpush1.bf16.msra.mxu0 %v1274
      %1468 = vmatprep.subr.bf16.mxu0 0
      %1469 = vmatpush1.bf16.msra.mxu0 %v1273
      %1470 = vmatprep.subr.bf16.mxu0 0
      %1471 = vmatpush1.bf16.msra.mxu0 %v1272
      %1472 = vmatprep.subr.bf16.mxu0 0
      %1473 = vmatpush1.bf16.msra.mxu0 %v1271
      %1474 = vmatprep.subr.bf16.mxu0 0
      %1475 = vmatpush1.bf16.msra.mxu0 %v1270
      %1476 = vmatprep.subr.bf16.mxu0 0
      %1477 = vmatpush1.bf16.msra.mxu0 %v1269
      %1478 = vmatprep.subr.bf16.mxu0 0
      %1479 = vmatpush2.bf16.msra.mxu0 0
      %1480 = vmatprep.subr.bf16.mxu0 0
      %1481 = vmatpush2.bf16.msra.mxu0 0
      %1482 = vmatprep.subr.bf16.mxu0 0
      %1483 = vmatpush2.bf16.msra.mxu0 0
      %1484 = vmatprep.subr.bf16.mxu0 0
      %1485 = vmatpush2.bf16.msra.mxu0 0
      %1486 = vmatprep.subr.bf16.mxu0 0
      %1487 = vmatpush2.bf16.msra.mxu0 0
      %1488 = vmatprep.subr.bf16.mxu0 0
      %1489 = vmatpush2.bf16.msra.mxu0 0
      %1490 = vmatprep.subr.bf16.mxu0 0
      %1491 = vmatpush2.bf16.msra.mxu0 0
      %1492 = vmatprep.subr.bf16.mxu0 0
      %1493 = vmatpush2.bf16.msra.mxu0 0
      %1494 = vmatprep.mubr.bf16.mxu0 0
      %1495 = vmatmul.mubr.bf16.gmra.mxu0 %v1070
      %v1496 = vpop.f32.mrf.mxu0
      %v1497 = vadd.f32 %v1336, %v1496
      %v1498 = vpop.f32.mrf.mxu0
      %v1499 = vpop.f32.mrf.mxu0
      %v1500 = vadd.f32 %v1339, %v1499
      %v1501 = vpop.f32.mrf.mxu0
      %1502 = vmatprep.mubr.bf16.mxu0 0
      %1503 = vmatmul.mubr.bf16.gmra.mxu0 %v1071
      %v1504 = vpop.f32.mrf.mxu0
      %v1505 = vadd.f32 %v1344, %v1504
      %v1506 = vpop.f32.mrf.mxu0
      %v1507 = vpop.f32.mrf.mxu0
      %v1508 = vadd.f32 %v1347, %v1507
      %v1509 = vpop.f32.mrf.mxu0
      %1510 = vmatprep.mubr.bf16.mxu0 0
      %1511 = vmatmul.mubr.bf16.gmra.mxu0 %v1072
      %v1512 = vpop.f32.mrf.mxu0
      %v1513 = vadd.f32 %v1352, %v1512
      %v1514 = vpop.f32.mrf.mxu0
      %v1515 = vpop.f32.mrf.mxu0
      %v1516 = vadd.f32 %v1355, %v1515
      %v1517 = vpop.f32.mrf.mxu0
      %1518 = vmatprep.mubr.bf16.mxu0 0
      %1519 = vmatmul.mubr.bf16.gmra.mxu0 %v1073
      %v1520 = vpop.f32.mrf.mxu0
      %v1521 = vadd.f32 %v1360, %v1520
      %v1522 = vpop.f32.mrf.mxu0
      %v1523 = vpop.f32.mrf.mxu0
      %v1524 = vadd.f32 %v1363, %v1523
      %v1525 = vpop.f32.mrf.mxu0
      %1526 = vmatprep.mubr.bf16.mxu0 0
      %1527 = vmatmul.mubr.bf16.gmra.mxu0 %v1074
      %v1528 = vpop.f32.mrf.mxu0
      %v1529 = vadd.f32 %v1368, %v1528
      %v1530 = vpop.f32.mrf.mxu0
      %v1531 = vpop.f32.mrf.mxu0
      %v1532 = vadd.f32 %v1371, %v1531
      %v1533 = vpop.f32.mrf.mxu0
      %1534 = vmatprep.mubr.bf16.mxu0 0
      %1535 = vmatmul.mubr.bf16.gmra.mxu0 %v1075
      %v1536 = vpop.f32.mrf.mxu0
      %v1537 = vadd.f32 %v1376, %v1536
      %v1538 = vpop.f32.mrf.mxu0
      %v1539 = vpop.f32.mrf.mxu0
      %v1540 = vadd.f32 %v1379, %v1539
      %v1541 = vpop.f32.mrf.mxu0
      %1542 = vmatprep.mubr.bf16.mxu0 0
      %1543 = vmatmul.mubr.bf16.gmra.mxu0 %v1076
      %v1544 = vpop.f32.mrf.mxu0
      %v1545 = vadd.f32 %v1384, %v1544
      %v1546 = vpop.f32.mrf.mxu0
      %v1547 = vpop.f32.mrf.mxu0
      %v1548 = vadd.f32 %v1387, %v1547
      %v1549 = vpop.f32.mrf.mxu0
      %1550 = vmatprep.mubr.bf16.mxu0 0
      %1551 = vmatmul.mubr.bf16.gmra.mxu0 %v1077
      %v1552 = vpop.f32.mrf.mxu0
      %v1553 = vadd.f32 %v1392, %v1552
      %v1554 = vpop.f32.mrf.mxu0
      %v1555 = vpop.f32.mrf.mxu0
      %v1556 = vadd.f32 %v1395, %v1555
      %v1557 = vpop.f32.mrf.mxu0
      %1558 = vmatprep.mubr.bf16.mxu0 0
      %1559 = vmatmul.mubr.bf16.gmra.mxu0 %v1078
      %v1560 = vpop.f32.mrf.mxu0
      %v1561 = vadd.f32 %v1400, %v1560
      %v1562 = vpop.f32.mrf.mxu0
      %v1563 = vpop.f32.mrf.mxu0
      %v1564 = vadd.f32 %v1403, %v1563
      %v1565 = vpop.f32.mrf.mxu0
      %1566 = vmatprep.mubr.bf16.mxu0 0
      %1567 = vmatmul.mubr.bf16.gmra.mxu0 %v1079
      %v1568 = vpop.f32.mrf.mxu0
      %v1569 = vadd.f32 %v1408, %v1568
      %v1570 = vpop.f32.mrf.mxu0
      %v1571 = vpop.f32.mrf.mxu0
      %v1572 = vadd.f32 %v1411, %v1571
      %v1573 = vpop.f32.mrf.mxu0
      %1574 = vmatprep.mubr.bf16.mxu0 0
      %1575 = vmatmul.mubr.bf16.gmra.mxu0 %v1080
      %v1576 = vpop.f32.mrf.mxu0
      %v1577 = vadd.f32 %v1416, %v1576
      %v1578 = vpop.f32.mrf.mxu0
      %v1579 = vpop.f32.mrf.mxu0
      %v1580 = vadd.f32 %v1419, %v1579
      %v1581 = vpop.f32.mrf.mxu0
      %1582 = vmatprep.mubr.bf16.mxu0 0
      %1583 = vmatmul.mubr.bf16.gmra.mxu0 %v1081
      %v1584 = vpop.f32.mrf.mxu0
      %v1585 = vadd.f32 %v1424, %v1584
      %v1586 = vpop.f32.mrf.mxu0
      %v1587 = vpop.f32.mrf.mxu0
      %v1588 = vadd.f32 %v1427, %v1587
      %v1589 = vpop.f32.mrf.mxu0
      %1590 = vmatprep.mubr.bf16.mxu0 0
      %1591 = vmatmul.mubr.bf16.gmra.mxu0 %v1082
      %v1592 = vpop.f32.mrf.mxu0
      %v1593 = vadd.f32 %v1432, %v1592
      %v1594 = vpop.f32.mrf.mxu0
      %v1595 = vpop.f32.mrf.mxu0
      %v1596 = vadd.f32 %v1435, %v1595
      %v1597 = vpop.f32.mrf.mxu0
      %1598 = vmatprep.mubr.bf16.mxu0 0
      %1599 = vmatmul.mubr.bf16.gmra.mxu0 %v1083
      %v1600 = vpop.f32.mrf.mxu0
      %v1601 = vadd.f32 %v1440, %v1600
      %v1602 = vpop.f32.mrf.mxu0
      %v1603 = vpop.f32.mrf.mxu0
      %v1604 = vadd.f32 %v1443, %v1603
      %v1605 = vpop.f32.mrf.mxu0
      %1606 = vmatprep.mubr.bf16.mxu0 0
      %1607 = vmatmul.mubr.bf16.gmra.mxu0 %v1084
      %v1608 = vpop.f32.mrf.mxu0
      %v1609 = vadd.f32 %v1448, %v1608
      %v1610 = vpop.f32.mrf.mxu0
      %v1611 = vpop.f32.mrf.mxu0
      %v1612 = vadd.f32 %v1451, %v1611
      %v1613 = vpop.f32.mrf.mxu0
      %1614 = vmatprep.mubr.bf16.mxu0 0
      %1615 = vmatmul.mubr.bf16.gmra.mxu0 %v1085
      %v1616 = vpop.f32.mrf.mxu0
      %v1617 = vadd.f32 %v1456, %v1616
      %v1618 = vpop.f32.mrf.mxu0
      %v1619 = vpop.f32.mrf.mxu0
      %v1620 = vadd.f32 %v1459, %v1619
      %v1621 = vpop.f32.mrf.mxu0
      %1622 = vdwg.mxu0
      %s1623 = scalar_lea.vmem %s273, 12
      %v1624 = vld [vmem:[%s1623] sm:$0xf]
      %v1625 = vld [vmem:[%s1623 + $0x4] sm:$0xf]
      %v1626 = vld [vmem:[%s1623 + $0xc] sm:$0xf]
      %v1627 = vld [vmem:[%s1623 + $0x10] sm:$0xf]
      %v1628 = vld [vmem:[%s1623 + $0x18] sm:$0xf]
      %v1629 = vld [vmem:[%s1623 + $0x1c] sm:$0xf]
      %v1630 = vld [vmem:[%s1623 + $0x24] sm:$0xf]
      %v1631 = vld [vmem:[%s1623 + $0x28] sm:$0xf]
      %v1632 = vld [vmem:[%s1623 + $0x30] sm:$0xf]
      %v1633 = vld [vmem:[%s1623 + $0x34] sm:$0xf]
      %v1634 = vld [vmem:[%s1623 + $0x3c] sm:$0xf]
      %v1635 = vld [vmem:[%s1623 + $0x40] sm:$0xf]
      %v1636 = vld [vmem:[%s1623 + $0x48] sm:$0xf]
      %v1637 = vld [vmem:[%s1623 + $0x4c] sm:$0xf]
      %v1638 = vld [vmem:[%s1623 + $0x54] sm:$0xf]
      %v1639 = vld [vmem:[%s1623 + $0x58] sm:$0xf]
      %v1640 = vld [vmem:[%s1623 + $0x60] sm:$0xf]
      %v1641 = vld [vmem:[%s1623 + $0x64] sm:$0xf]
      %v1642 = vld [vmem:[%s1623 + $0x6c] sm:$0xf]
      %v1643 = vld [vmem:[%s1623 + $0x70] sm:$0xf]
      %v1644 = vld [vmem:[%s1623 + $0x78] sm:$0xf]
      %v1645 = vld [vmem:[%s1623 + $0x7c] sm:$0xf]
      %v1646 = vld [vmem:[%s1623 + $0x84] sm:$0xf]
      %v1647 = vld [vmem:[%s1623 + $0x88] sm:$0xf]
      %v1648 = vld [vmem:[%s1623 + $0x90] sm:$0xf]
      %v1649 = vld [vmem:[%s1623 + $0x94] sm:$0xf]
      %v1650 = vld [vmem:[%s1623 + $0x9c] sm:$0xf]
      %v1651 = vld [vmem:[%s1623 + $0xa0] sm:$0xf]
      %v1652 = vld [vmem:[%s1623 + $0xa8] sm:$0xf]
      %v1653 = vld [vmem:[%s1623 + $0xac] sm:$0xf]
      %v1654 = vld [vmem:[%s1623 + $0xb4] sm:$0xf]
      %v1655 = vld [vmem:[%s1623 + $0xb8] sm:$0xf]
      %v1656 = vld [vmem:[%s1623 + $0x8] sm:$0x1]
      %v1657 = vld [vmem:[%s1623 + $0x14] sm:$0x1]
      %v1658 = vld [vmem:[%s1623 + $0x20] sm:$0x1]
      %v1659 = vld [vmem:[%s1623 + $0x2c] sm:$0x1]
      %v1660 = vld [vmem:[%s1623 + $0x38] sm:$0x1]
      %v1661 = vld [vmem:[%s1623 + $0x44] sm:$0x1]
      %v1662 = vld [vmem:[%s1623 + $0x50] sm:$0x1]
      %v1663 = vld [vmem:[%s1623 + $0x5c] sm:$0x1]
      %v1664 = vld [vmem:[%s1623 + $0x68] sm:$0x1]
      %v1665 = vld [vmem:[%s1623 + $0x74] sm:$0x1]
      %v1666 = vld [vmem:[%s1623 + $0x80] sm:$0x1]
      %v1667 = vld [vmem:[%s1623 + $0x8c] sm:$0x1]
      %v1668 = vld [vmem:[%s1623 + $0x98] sm:$0x1]
      %v1669 = vld [vmem:[%s1623 + $0xa4] sm:$0x1]
      %v1670 = vld [vmem:[%s1623 + $0xb0] sm:$0x1]
      %v1671 = vld [vmem:[%s1623 + $0xbc] sm:$0x1]
      %v1673 = vshrl.u32 %v1624, 16
      %v1675 = vrot.slane %v1673, 4
      %v1676 = vshll.u32 %v1624, 16
      %v1678 = vrot.slane %v1676, 5
      %v1679 = vor.u32 %v1675, %v1678
      %v1680 = vrot.slane %v1679, 4
      %v1682 = vshll.u32 %v1625, 16
      %v1684 = vrot.slane %v1682, 5
      %v1685 = vsel %vm330, %v1680, %v1684
      %v1686 = vshrl.u32 %v1625, 16
      %v1688 = vrot.slane %v1686, 4
      %v1689 = vor.u32 %v1688, %v1684
      %v1690 = vrot.slane %v1689, 4
      %v1692 = vshll.u32 %v1656, 16
      %v1694 = vrot.slane %v1692, 5
      %v1695 = vsel %vm330, %v1690, %v1694
      %v1697 = vshrl.u32 %v1626, 16
      %v1699 = vrot.slane %v1697, 4
      %v1700 = vshll.u32 %v1626, 16
      %v1702 = vrot.slane %v1700, 5
      %v1703 = vor.u32 %v1699, %v1702
      %v1704 = vrot.slane %v1703, 4
      %v1706 = vshll.u32 %v1627, 16
      %v1708 = vrot.slane %v1706, 5
      %v1709 = vsel %vm330, %v1704, %v1708
      %v1710 = vshrl.u32 %v1627, 16
      %v1712 = vrot.slane %v1710, 4
      %v1713 = vor.u32 %v1712, %v1708
      %v1714 = vrot.slane %v1713, 4
      %v1716 = vshll.u32 %v1657, 16
      %v1718 = vrot.slane %v1716, 5
      %v1719 = vsel %vm330, %v1714, %v1718
      %v1721 = vshrl.u32 %v1628, 16
      %v1723 = vrot.slane %v1721, 4
      %v1724 = vshll.u32 %v1628, 16
      %v1726 = vrot.slane %v1724, 5
      %v1727 = vor.u32 %v1723, %v1726
      %v1728 = vrot.slane %v1727, 4
      %v1730 = vshll.u32 %v1629, 16
      %v1732 = vrot.slane %v1730, 5
      %v1733 = vsel %vm330, %v1728, %v1732
      %v1734 = vshrl.u32 %v1629, 16
      %v1736 = vrot.slane %v1734, 4
      %v1737 = vor.u32 %v1736, %v1732
      %v1738 = vrot.slane %v1737, 4
      %v1740 = vshll.u32 %v1658, 16
      %v1742 = vrot.slane %v1740, 5
      %v1743 = vsel %vm330, %v1738, %v1742
      %v1745 = vshrl.u32 %v1630, 16
      %v1747 = vrot.slane %v1745, 4
      %v1748 = vshll.u32 %v1630, 16
      %v1750 = vrot.slane %v1748, 5
      %v1751 = vor.u32 %v1747, %v1750
      %v1752 = vrot.slane %v1751, 4
      %v1754 = vshll.u32 %v1631, 16
      %v1756 = vrot.slane %v1754, 5
      %v1757 = vsel %vm330, %v1752, %v1756
      %v1758 = vshrl.u32 %v1631, 16
      %v1760 = vrot.slane %v1758, 4
      %v1761 = vor.u32 %v1760, %v1756
      %v1762 = vrot.slane %v1761, 4
      %v1764 = vshll.u32 %v1659, 16
      %v1766 = vrot.slane %v1764, 5
      %v1767 = vsel %vm330, %v1762, %v1766
      %v1769 = vshrl.u32 %v1632, 16
      %v1771 = vrot.slane %v1769, 4
      %v1772 = vshll.u32 %v1632, 16
      %v1774 = vrot.slane %v1772, 5
      %v1775 = vor.u32 %v1771, %v1774
      %v1776 = vrot.slane %v1775, 4
      %v1778 = vshll.u32 %v1633, 16
      %v1780 = vrot.slane %v1778, 5
      %v1781 = vsel %vm330, %v1776, %v1780
      %v1782 = vshrl.u32 %v1633, 16
      %v1784 = vrot.slane %v1782, 4
      %v1785 = vor.u32 %v1784, %v1780
      %v1786 = vrot.slane %v1785, 4
      %v1788 = vshll.u32 %v1660, 16
      %v1790 = vrot.slane %v1788, 5
      %v1791 = vsel %vm330, %v1786, %v1790
      %v1793 = vshrl.u32 %v1634, 16
      %v1795 = vrot.slane %v1793, 4
      %v1796 = vshll.u32 %v1634, 16
      %v1798 = vrot.slane %v1796, 5
      %v1799 = vor.u32 %v1795, %v1798
      %v1800 = vrot.slane %v1799, 4
      %v1802 = vshll.u32 %v1635, 16
      %v1804 = vrot.slane %v1802, 5
      %v1805 = vsel %vm330, %v1800, %v1804
      %v1806 = vshrl.u32 %v1635, 16
      %v1808 = vrot.slane %v1806, 4
      %v1809 = vor.u32 %v1808, %v1804
      %v1810 = vrot.slane %v1809, 4
      %v1812 = vshll.u32 %v1661, 16
      %v1814 = vrot.slane %v1812, 5
      %v1815 = vsel %vm330, %v1810, %v1814
      %v1817 = vshrl.u32 %v1636, 16
      %v1819 = vrot.slane %v1817, 4
      %v1820 = vshll.u32 %v1636, 16
      %v1822 = vrot.slane %v1820, 5
      %v1823 = vor.u32 %v1819, %v1822
      %v1824 = vrot.slane %v1823, 4
      %v1826 = vshll.u32 %v1637, 16
      %v1828 = vrot.slane %v1826, 5
      %v1829 = vsel %vm330, %v1824, %v1828
      %v1830 = vshrl.u32 %v1637, 16
      %v1832 = vrot.slane %v1830, 4
      %v1833 = vor.u32 %v1832, %v1828
      %v1834 = vrot.slane %v1833, 4
      %v1836 = vshll.u32 %v1662, 16
      %v1838 = vrot.slane %v1836, 5
      %v1839 = vsel %vm330, %v1834, %v1838
      %v1841 = vshrl.u32 %v1638, 16
      %v1843 = vrot.slane %v1841, 4
      %v1844 = vshll.u32 %v1638, 16
      %v1846 = vrot.slane %v1844, 5
      %v1847 = vor.u32 %v1843, %v1846
      %v1848 = vrot.slane %v1847, 4
      %v1850 = vshll.u32 %v1639, 16
      %v1852 = vrot.slane %v1850, 5
      %v1853 = vsel %vm330, %v1848, %v1852
      %v1854 = vshrl.u32 %v1639, 16
      %v1856 = vrot.slane %v1854, 4
      %v1857 = vor.u32 %v1856, %v1852
      %v1858 = vrot.slane %v1857, 4
      %v1860 = vshll.u32 %v1663, 16
      %v1862 = vrot.slane %v1860, 5
      %v1863 = vsel %vm330, %v1858, %v1862
      %v1865 = vshrl.u32 %v1640, 16
      %v1867 = vrot.slane %v1865, 4
      %v1868 = vshll.u32 %v1640, 16
      %v1870 = vrot.slane %v1868, 5
      %v1871 = vor.u32 %v1867, %v1870
      %v1872 = vrot.slane %v1871, 4
      %v1874 = vshll.u32 %v1641, 16
      %v1876 = vrot.slane %v1874, 5
      %v1877 = vsel %vm330, %v1872, %v1876
      %v1878 = vshrl.u32 %v1641, 16
      %v1880 = vrot.slane %v1878, 4
      %v1881 = vor.u32 %v1880, %v1876
      %v1882 = vrot.slane %v1881, 4
      %v1884 = vshll.u32 %v1664, 16
      %v1886 = vrot.slane %v1884, 5
      %v1887 = vsel %vm330, %v1882, %v1886
      %v1889 = vshrl.u32 %v1642, 16
      %v1891 = vrot.slane %v1889, 4
      %v1892 = vshll.u32 %v1642, 16
      %v1894 = vrot.slane %v1892, 5
      %v1895 = vor.u32 %v1891, %v1894
      %v1896 = vrot.slane %v1895, 4
      %v1898 = vshll.u32 %v1643, 16
      %v1900 = vrot.slane %v1898, 5
      %v1901 = vsel %vm330, %v1896, %v1900
      %v1902 = vshrl.u32 %v1643, 16
      %v1904 = vrot.slane %v1902, 4
      %v1905 = vor.u32 %v1904, %v1900
      %v1906 = vrot.slane %v1905, 4
      %v1908 = vshll.u32 %v1665, 16
      %v1910 = vrot.slane %v1908, 5
      %v1911 = vsel %vm330, %v1906, %v1910
      %v1913 = vshrl.u32 %v1644, 16
      %v1915 = vrot.slane %v1913, 4
      %v1916 = vshll.u32 %v1644, 16
      %v1918 = vrot.slane %v1916, 5
      %v1919 = vor.u32 %v1915, %v1918
      %v1920 = vrot.slane %v1919, 4
      %v1922 = vshll.u32 %v1645, 16
      %v1924 = vrot.slane %v1922, 5
      %v1925 = vsel %vm330, %v1920, %v1924
      %v1926 = vshrl.u32 %v1645, 16
      %v1928 = vrot.slane %v1926, 4
      %v1929 = vor.u32 %v1928, %v1924
      %v1930 = vrot.slane %v1929, 4
      %v1932 = vshll.u32 %v1666, 16
      %v1934 = vrot.slane %v1932, 5
      %v1935 = vsel %vm330, %v1930, %v1934
      %v1937 = vshrl.u32 %v1646, 16
      %v1939 = vrot.slane %v1937, 4
      %v1940 = vshll.u32 %v1646, 16
      %v1942 = vrot.slane %v1940, 5
      %v1943 = vor.u32 %v1939, %v1942
      %v1944 = vrot.slane %v1943, 4
      %v1946 = vshll.u32 %v1647, 16
      %v1948 = vrot.slane %v1946, 5
      %v1949 = vsel %vm330, %v1944, %v1948
      %v1950 = vshrl.u32 %v1647, 16
      %v1952 = vrot.slane %v1950, 4
      %v1953 = vor.u32 %v1952, %v1948
      %v1954 = vrot.slane %v1953, 4
      %v1956 = vshll.u32 %v1667, 16
      %v1958 = vrot.slane %v1956, 5
      %v1959 = vsel %vm330, %v1954, %v1958
      %v1961 = vshrl.u32 %v1648, 16
      %v1963 = vrot.slane %v1961, 4
      %v1964 = vshll.u32 %v1648, 16
      %v1966 = vrot.slane %v1964, 5
      %v1967 = vor.u32 %v1963, %v1966
      %v1968 = vrot.slane %v1967, 4
      %v1970 = vshll.u32 %v1649, 16
      %v1972 = vrot.slane %v1970, 5
      %v1973 = vsel %vm330, %v1968, %v1972
      %v1974 = vshrl.u32 %v1649, 16
      %v1976 = vrot.slane %v1974, 4
      %v1977 = vor.u32 %v1976, %v1972
      %v1978 = vrot.slane %v1977, 4
      %v1980 = vshll.u32 %v1668, 16
      %v1982 = vrot.slane %v1980, 5
      %v1983 = vsel %vm330, %v1978, %v1982
      %v1985 = vshrl.u32 %v1650, 16
      %v1987 = vrot.slane %v1985, 4
      %v1988 = vshll.u32 %v1650, 16
      %v1990 = vrot.slane %v1988, 5
      %v1991 = vor.u32 %v1987, %v1990
      %v1992 = vrot.slane %v1991, 4
      %v1994 = vshll.u32 %v1651, 16
      %v1996 = vrot.slane %v1994, 5
      %v1997 = vsel %vm330, %v1992, %v1996
      %v1998 = vshrl.u32 %v1651, 16
      %v2000 = vrot.slane %v1998, 4
      %v2001 = vor.u32 %v2000, %v1996
      %v2002 = vrot.slane %v2001, 4
      %v2004 = vshll.u32 %v1669, 16
      %v2006 = vrot.slane %v2004, 5
      %v2007 = vsel %vm330, %v2002, %v2006
      %v2009 = vshrl.u32 %v1652, 16
      %v2011 = vrot.slane %v2009, 4
      %v2012 = vshll.u32 %v1652, 16
      %v2014 = vrot.slane %v2012, 5
      %v2015 = vor.u32 %v2011, %v2014
      %v2016 = vrot.slane %v2015, 4
      %v2018 = vshll.u32 %v1653, 16
      %v2020 = vrot.slane %v2018, 5
      %v2021 = vsel %vm330, %v2016, %v2020
      %v2022 = vshrl.u32 %v1653, 16
      %v2024 = vrot.slane %v2022, 4
      %v2025 = vor.u32 %v2024, %v2020
      %v2026 = vrot.slane %v2025, 4
      %v2028 = vshll.u32 %v1670, 16
      %v2030 = vrot.slane %v2028, 5
      %v2031 = vsel %vm330, %v2026, %v2030
      %v2033 = vshrl.u32 %v1654, 16
      %v2035 = vrot.slane %v2033, 4
      %v2036 = vshll.u32 %v1654, 16
      %v2038 = vrot.slane %v2036, 5
      %v2039 = vor.u32 %v2035, %v2038
      %v2040 = vrot.slane %v2039, 4
      %v2042 = vshll.u32 %v1655, 16
      %v2044 = vrot.slane %v2042, 5
      %v2045 = vsel %vm330, %v2040, %v2044
      %v2046 = vshrl.u32 %v1655, 16
      %v2048 = vrot.slane %v2046, 4
      %v2049 = vor.u32 %v2048, %v2044
      %v2050 = vrot.slane %v2049, 4
      %v2052 = vshll.u32 %v1671, 16
      %v2054 = vrot.slane %v2052, 5
      %v2055 = vsel %vm330, %v2050, %v2054
      %v2056 = vld [vmem:[%s1623] sm:$0xe]
      %v2057 = vld [vmem:[%s1623 + $0xc] sm:$0xe]
      %v2058 = vld [vmem:[%s1623 + $0x18] sm:$0xe]
      %v2059 = vld [vmem:[%s1623 + $0x24] sm:$0xe]
      %v2060 = vld [vmem:[%s1623 + $0x30] sm:$0xe]
      %v2061 = vld [vmem:[%s1623 + $0x3c] sm:$0xe]
      %v2062 = vld [vmem:[%s1623 + $0x48] sm:$0xe]
      %v2063 = vld [vmem:[%s1623 + $0x54] sm:$0xe]
      %v2064 = vld [vmem:[%s1623 + $0x60] sm:$0xe]
      %v2065 = vld [vmem:[%s1623 + $0x6c] sm:$0xe]
      %v2066 = vld [vmem:[%s1623 + $0x78] sm:$0xe]
      %v2067 = vld [vmem:[%s1623 + $0x84] sm:$0xe]
      %v2068 = vld [vmem:[%s1623 + $0x90] sm:$0xe]
      %v2069 = vld [vmem:[%s1623 + $0x9c] sm:$0xe]
      %v2070 = vld [vmem:[%s1623 + $0xa8] sm:$0xe]
      %v2071 = vld [vmem:[%s1623 + $0xb4] sm:$0xe]
      %v2120 = vrot.slane %v2056, 5
      %v2121 = vrot.slane %v2120, 4
      %v2122 = vrot.slane %v1625, 5
      %v2123 = vsel %vm781, %v2121, %v2122
      %v2124 = vrot.slane %v2122, 4
      %v2125 = vrot.slane %v1656, 5
      %v2126 = vsel %vm781, %v2124, %v2125
      %v2127 = vrot.slane %v2057, 5
      %v2128 = vrot.slane %v2127, 4
      %v2129 = vrot.slane %v1627, 5
      %v2130 = vsel %vm781, %v2128, %v2129
      %v2131 = vrot.slane %v2129, 4
      %v2132 = vrot.slane %v1657, 5
      %v2133 = vsel %vm781, %v2131, %v2132
      %v2134 = vrot.slane %v2058, 5
      %v2135 = vrot.slane %v2134, 4
      %v2136 = vrot.slane %v1629, 5
      %v2137 = vsel %vm781, %v2135, %v2136
      %v2138 = vrot.slane %v2136, 4
      %v2139 = vrot.slane %v1658, 5
      %v2140 = vsel %vm781, %v2138, %v2139
      %v2141 = vrot.slane %v2059, 5
      %v2142 = vrot.slane %v2141, 4
      %v2143 = vrot.slane %v1631, 5
      %v2144 = vsel %vm781, %v2142, %v2143
      %v2145 = vrot.slane %v2143, 4
      %v2146 = vrot.slane %v1659, 5
      %v2147 = vsel %vm781, %v2145, %v2146
      %v2148 = vrot.slane %v2060, 5
      %v2149 = vrot.slane %v2148, 4
      %v2150 = vrot.slane %v1633, 5
      %v2151 = vsel %vm781, %v2149, %v2150
      %v2152 = vrot.slane %v2150, 4
      %v2153 = vrot.slane %v1660, 5
      %v2154 = vsel %vm781, %v2152, %v2153
      %v2155 = vrot.slane %v2061, 5
      %v2156 = vrot.slane %v2155, 4
      %v2157 = vrot.slane %v1635, 5
      %v2158 = vsel %vm781, %v2156, %v2157
      %v2159 = vrot.slane %v2157, 4
      %v2160 = vrot.slane %v1661, 5
      %v2161 = vsel %vm781, %v2159, %v2160
      %v2162 = vrot.slane %v2062, 5
      %v2163 = vrot.slane %v2162, 4
      %v2164 = vrot.slane %v1637, 5
      %v2165 = vsel %vm781, %v2163, %v2164
      %v2166 = vrot.slane %v2164, 4
      %v2167 = vrot.slane %v1662, 5
      %v2168 = vsel %vm781, %v2166, %v2167
      %v2169 = vrot.slane %v2063, 5
      %v2170 = vrot.slane %v2169, 4
      %v2171 = vrot.slane %v1639, 5
      %v2172 = vsel %vm781, %v2170, %v2171
      %v2173 = vrot.slane %v2171, 4
      %v2174 = vrot.slane %v1663, 5
      %v2175 = vsel %vm781, %v2173, %v2174
      %v2176 = vrot.slane %v2064, 5
      %v2177 = vrot.slane %v2176, 4
      %v2178 = vrot.slane %v1641, 5
      %v2179 = vsel %vm781, %v2177, %v2178
      %v2180 = vrot.slane %v2178, 4
      %v2181 = vrot.slane %v1664, 5
      %v2182 = vsel %vm781, %v2180, %v2181
      %v2183 = vrot.slane %v2065, 5
      %v2184 = vrot.slane %v2183, 4
      %v2185 = vrot.slane %v1643, 5
      %v2186 = vsel %vm781, %v2184, %v2185
      %v2187 = vrot.slane %v2185, 4
      %v2188 = vrot.slane %v1665, 5
      %v2189 = vsel %vm781, %v2187, %v2188
      %v2190 = vrot.slane %v2066, 5
      %v2191 = vrot.slane %v2190, 4
      %v2192 = vrot.slane %v1645, 5
      %v2193 = vsel %vm781, %v2191, %v2192
      %v2194 = vrot.slane %v2192, 4
      %v2195 = vrot.slane %v1666, 5
      %v2196 = vsel %vm781, %v2194, %v2195
      %v2197 = vrot.slane %v2067, 5
      %v2198 = vrot.slane %v2197, 4
      %v2199 = vrot.slane %v1647, 5
      %v2200 = vsel %vm781, %v2198, %v2199
      %v2201 = vrot.slane %v2199, 4
      %v2202 = vrot.slane %v1667, 5
      %v2203 = vsel %vm781, %v2201, %v2202
      %v2204 = vrot.slane %v2068, 5
      %v2205 = vrot.slane %v2204, 4
      %v2206 = vrot.slane %v1649, 5
      %v2207 = vsel %vm781, %v2205, %v2206
      %v2208 = vrot.slane %v2206, 4
      %v2209 = vrot.slane %v1668, 5
      %v2210 = vsel %vm781, %v2208, %v2209
      %v2211 = vrot.slane %v2069, 5
      %v2212 = vrot.slane %v2211, 4
      %v2213 = vrot.slane %v1651, 5
      %v2214 = vsel %vm781, %v2212, %v2213
      %v2215 = vrot.slane %v2213, 4
      %v2216 = vrot.slane %v1669, 5
      %v2217 = vsel %vm781, %v2215, %v2216
      %v2218 = vrot.slane %v2070, 5
      %v2219 = vrot.slane %v2218, 4
      %v2220 = vrot.slane %v1653, 5
      %v2221 = vsel %vm781, %v2219, %v2220
      %v2222 = vrot.slane %v2220, 4
      %v2223 = vrot.slane %v1670, 5
      %v2224 = vsel %vm781, %v2222, %v2223
      %v2225 = vrot.slane %v2071, 5
      %v2226 = vrot.slane %v2225, 4
      %v2227 = vrot.slane %v1655, 5
      %v2228 = vsel %vm781, %v2226, %v2227
      %v2229 = vrot.slane %v2227, 4
      %v2230 = vrot.slane %v1671, 5
      %v2231 = vsel %vm781, %v2229, %v2230
      %v2248 = vunpack.c.l.b16 %v1624
      %v2249 = vunpack.c.l.b16 %v1625
      %v2250 = vunpack.c.l.b16 %v1626
      %v2251 = vunpack.c.l.b16 %v1627
      %v2252 = vunpack.c.l.b16 %v1628
      %v2253 = vunpack.c.l.b16 %v1629
      %v2254 = vunpack.c.l.b16 %v1630
      %v2255 = vunpack.c.l.b16 %v1631
      %v2256 = vunpack.c.l.b16 %v1632
      %v2257 = vunpack.c.l.b16 %v1633
      %v2258 = vunpack.c.l.b16 %v1634
      %v2259 = vunpack.c.l.b16 %v1635
      %v2260 = vunpack.c.l.b16 %v1636
      %v2261 = vunpack.c.l.b16 %v1637
      %v2262 = vunpack.c.l.b16 %v1638
      %v2263 = vunpack.c.l.b16 %v1639
      %v2264 = vunpack.c.l.b16 %v1640
      %v2265 = vunpack.c.l.b16 %v1641
      %v2266 = vunpack.c.l.b16 %v1642
      %v2267 = vunpack.c.l.b16 %v1643
      %v2268 = vunpack.c.l.b16 %v1644
      %v2269 = vunpack.c.l.b16 %v1645
      %v2270 = vunpack.c.l.b16 %v1646
      %v2271 = vunpack.c.l.b16 %v1647
      %v2272 = vunpack.c.l.b16 %v1648
      %v2273 = vunpack.c.l.b16 %v1649
      %v2274 = vunpack.c.l.b16 %v1650
      %v2275 = vunpack.c.l.b16 %v1651
      %v2276 = vunpack.c.l.b16 %v1652
      %v2277 = vunpack.c.l.b16 %v1653
      %v2278 = vunpack.c.l.b16 %v1654
      %v2279 = vunpack.c.l.b16 %v1655
      %v2280 = vpack.c.b16 %v2249, %v2248
      %v2281 = vpack.c.b16 %v2251, %v2250
      %v2282 = vpack.c.b16 %v2253, %v2252
      %v2283 = vpack.c.b16 %v2255, %v2254
      %v2284 = vpack.c.b16 %v2257, %v2256
      %v2285 = vpack.c.b16 %v2259, %v2258
      %v2286 = vpack.c.b16 %v2261, %v2260
      %v2287 = vpack.c.b16 %v2263, %v2262
      %v2288 = vpack.c.b16 %v2265, %v2264
      %v2289 = vpack.c.b16 %v2267, %v2266
      %v2290 = vpack.c.b16 %v2269, %v2268
      %v2291 = vpack.c.b16 %v2271, %v2270
      %v2292 = vpack.c.b16 %v2273, %v2272
      %v2293 = vpack.c.b16 %v2275, %v2274
      %v2294 = vpack.c.b16 %v2277, %v2276
      %v2295 = vpack.c.b16 %v2279, %v2278
      %v2312 = vunpack.c.l.b16 %v1685
      %v2313 = vunpack.c.l.b16 %v1695
      %v2314 = vunpack.c.l.b16 %v1709
      %v2315 = vunpack.c.l.b16 %v1719
      %v2316 = vunpack.c.l.b16 %v1733
      %v2317 = vunpack.c.l.b16 %v1743
      %v2318 = vunpack.c.l.b16 %v1757
      %v2319 = vunpack.c.l.b16 %v1767
      %v2320 = vunpack.c.l.b16 %v1781
      %v2321 = vunpack.c.l.b16 %v1791
      %v2322 = vunpack.c.l.b16 %v1805
      %v2323 = vunpack.c.l.b16 %v1815
      %v2324 = vunpack.c.l.b16 %v1829
      %v2325 = vunpack.c.l.b16 %v1839
      %v2326 = vunpack.c.l.b16 %v1853
      %v2327 = vunpack.c.l.b16 %v1863
      %v2328 = vunpack.c.l.b16 %v1877
      %v2329 = vunpack.c.l.b16 %v1887
      %v2330 = vunpack.c.l.b16 %v1901
      %v2331 = vunpack.c.l.b16 %v1911
      %v2332 = vunpack.c.l.b16 %v1925
      %v2333 = vunpack.c.l.b16 %v1935
      %v2334 = vunpack.c.l.b16 %v1949
      %v2335 = vunpack.c.l.b16 %v1959
      %v2336 = vunpack.c.l.b16 %v1973
      %v2337 = vunpack.c.l.b16 %v1983
      %v2338 = vunpack.c.l.b16 %v1997
      %v2339 = vunpack.c.l.b16 %v2007
      %v2340 = vunpack.c.l.b16 %v2021
      %v2341 = vunpack.c.l.b16 %v2031
      %v2342 = vunpack.c.l.b16 %v2045
      %v2343 = vunpack.c.l.b16 %v2055
      %v2344 = vpack.c.b16 %v2313, %v2312
      %v2345 = vpack.c.b16 %v2315, %v2314
      %v2346 = vpack.c.b16 %v2317, %v2316
      %v2347 = vpack.c.b16 %v2319, %v2318
      %v2348 = vpack.c.b16 %v2321, %v2320
      %v2349 = vpack.c.b16 %v2323, %v2322
      %v2350 = vpack.c.b16 %v2325, %v2324
      %v2351 = vpack.c.b16 %v2327, %v2326
      %v2352 = vpack.c.b16 %v2329, %v2328
      %v2353 = vpack.c.b16 %v2331, %v2330
      %v2354 = vpack.c.b16 %v2333, %v2332
      %v2355 = vpack.c.b16 %v2335, %v2334
      %v2356 = vpack.c.b16 %v2337, %v2336
      %v2357 = vpack.c.b16 %v2339, %v2338
      %v2358 = vpack.c.b16 %v2341, %v2340
      %v2359 = vpack.c.b16 %v2343, %v2342
      %v2376 = vunpack.c.l.b16 %v2123
      %v2377 = vunpack.c.l.b16 %v2126
      %v2378 = vunpack.c.l.b16 %v2130
      %v2379 = vunpack.c.l.b16 %v2133
      %v2380 = vunpack.c.l.b16 %v2137
      %v2381 = vunpack.c.l.b16 %v2140
      %v2382 = vunpack.c.l.b16 %v2144
      %v2383 = vunpack.c.l.b16 %v2147
      %v2384 = vunpack.c.l.b16 %v2151
      %v2385 = vunpack.c.l.b16 %v2154
      %v2386 = vunpack.c.l.b16 %v2158
      %v2387 = vunpack.c.l.b16 %v2161
      %v2388 = vunpack.c.l.b16 %v2165
      %v2389 = vunpack.c.l.b16 %v2168
      %v2390 = vunpack.c.l.b16 %v2172
      %v2391 = vunpack.c.l.b16 %v2175
      %v2392 = vunpack.c.l.b16 %v2179
      %v2393 = vunpack.c.l.b16 %v2182
      %v2394 = vunpack.c.l.b16 %v2186
      %v2395 = vunpack.c.l.b16 %v2189
      %v2396 = vunpack.c.l.b16 %v2193
      %v2397 = vunpack.c.l.b16 %v2196
      %v2398 = vunpack.c.l.b16 %v2200
      %v2399 = vunpack.c.l.b16 %v2203
      %v2400 = vunpack.c.l.b16 %v2207
      %v2401 = vunpack.c.l.b16 %v2210
      %v2402 = vunpack.c.l.b16 %v2214
      %v2403 = vunpack.c.l.b16 %v2217
      %v2404 = vunpack.c.l.b16 %v2221
      %v2405 = vunpack.c.l.b16 %v2224
      %v2406 = vunpack.c.l.b16 %v2228
      %v2407 = vunpack.c.l.b16 %v2231
      %v2408 = vpack.c.b16 %v2377, %v2376
      %v2409 = vpack.c.b16 %v2379, %v2378
      %v2410 = vpack.c.b16 %v2381, %v2380
      %v2411 = vpack.c.b16 %v2383, %v2382
      %v2412 = vpack.c.b16 %v2385, %v2384
      %v2413 = vpack.c.b16 %v2387, %v2386
      %v2414 = vpack.c.b16 %v2389, %v2388
      %v2415 = vpack.c.b16 %v2391, %v2390
      %v2416 = vpack.c.b16 %v2393, %v2392
      %v2417 = vpack.c.b16 %v2395, %v2394
      %v2418 = vpack.c.b16 %v2397, %v2396
      %v2419 = vpack.c.b16 %v2399, %v2398
      %v2420 = vpack.c.b16 %v2401, %v2400
      %v2421 = vpack.c.b16 %v2403, %v2402
      %v2422 = vpack.c.b16 %v2405, %v2404
      %v2423 = vpack.c.b16 %v2407, %v2406
      %s2440 = scalar_lea.vmem %s1, 192
      %v2441 = vld [vmem:[%s2440] sm:$0xf]
      %v2442 = vld [vmem:[%s2440 + $0x4] sm:$0xf]
      %v2443 = vld [vmem:[%s2440 + $0x8] sm:$0xf]
      %v2444 = vld [vmem:[%s2440 + $0xc] sm:$0xf]
      %v2445 = vld [vmem:[%s2440 + $0x10] sm:$0xf]
      %v2446 = vld [vmem:[%s2440 + $0x14] sm:$0xf]
      %v2447 = vld [vmem:[%s2440 + $0x18] sm:$0xf]
      %v2448 = vld [vmem:[%s2440 + $0x1c] sm:$0xf]
      %v2449 = vld [vmem:[%s2440 + $0x20] sm:$0xf]
      %v2450 = vld [vmem:[%s2440 + $0x24] sm:$0xf]
      %v2451 = vld [vmem:[%s2440 + $0x28] sm:$0xf]
      %v2452 = vld [vmem:[%s2440 + $0x2c] sm:$0xf]
      %v2453 = vld [vmem:[%s2440 + $0x30] sm:$0xf]
      %v2454 = vld [vmem:[%s2440 + $0x34] sm:$0xf]
      %v2455 = vld [vmem:[%s2440 + $0x38] sm:$0xf]
      %v2456 = vld [vmem:[%s2440 + $0x3c] sm:$0xf]
      %v2457 = vld [vmem:[%s2440 + $0x40] sm:$0xf]
      %v2458 = vld [vmem:[%s2440 + $0x44] sm:$0xf]
      %v2459 = vld [vmem:[%s2440 + $0x48] sm:$0xf]
      %v2460 = vld [vmem:[%s2440 + $0x4c] sm:$0xf]
      %v2461 = vld [vmem:[%s2440 + $0x50] sm:$0xf]
      %v2462 = vld [vmem:[%s2440 + $0x54] sm:$0xf]
      %v2463 = vld [vmem:[%s2440 + $0x58] sm:$0xf]
      %v2464 = vld [vmem:[%s2440 + $0x5c] sm:$0xf]
      %v2465 = vld [vmem:[%s2440 + $0x60] sm:$0xf]
      %v2466 = vld [vmem:[%s2440 + $0x64] sm:$0xf]
      %v2467 = vld [vmem:[%s2440 + $0x68] sm:$0xf]
      %v2468 = vld [vmem:[%s2440 + $0x6c] sm:$0xf]
      %v2469 = vld [vmem:[%s2440 + $0x70] sm:$0xf]
      %v2470 = vld [vmem:[%s2440 + $0x74] sm:$0xf]
      %v2471 = vld [vmem:[%s2440 + $0x78] sm:$0xf]
      %v2472 = vld [vmem:[%s2440 + $0x7c] sm:$0xf]
      %v2473 = vld [vmem:[%s2440 + $0x80] sm:$0xf]
      %v2474 = vld [vmem:[%s2440 + $0x84] sm:$0xf]
      %v2475 = vld [vmem:[%s2440 + $0x88] sm:$0xf]
      %v2476 = vld [vmem:[%s2440 + $0x8c] sm:$0xf]
      %v2477 = vld [vmem:[%s2440 + $0x90] sm:$0xf]
      %v2478 = vld [vmem:[%s2440 + $0x94] sm:$0xf]
      %v2479 = vld [vmem:[%s2440 + $0x98] sm:$0xf]
      %v2480 = vld [vmem:[%s2440 + $0x9c] sm:$0xf]
      %v2481 = vld [vmem:[%s2440 + $0xa0] sm:$0xf]
      %v2482 = vld [vmem:[%s2440 + $0xa4] sm:$0xf]
      %v2483 = vld [vmem:[%s2440 + $0xa8] sm:$0xf]
      %v2484 = vld [vmem:[%s2440 + $0xac] sm:$0xf]
      %v2485 = vld [vmem:[%s2440 + $0xb0] sm:$0xf]
      %v2486 = vld [vmem:[%s2440 + $0xb4] sm:$0xf]
      %v2487 = vld [vmem:[%s2440 + $0xb8] sm:$0xf]
      %v2488 = vld [vmem:[%s2440 + $0xbc] sm:$0xf]
      %v2537 = vunpack.c.l.b16 %v2441
      %v2538 = vunpack.c.l.b16 %v2442
      %v2539 = vunpack.c.l.b16 %v2443
      %v2540 = vunpack.c.l.b16 %v2444
      %v2541 = vunpack.c.l.b16 %v2445
      %v2542 = vunpack.c.l.b16 %v2446
      %v2543 = vunpack.c.l.b16 %v2447
      %v2544 = vunpack.c.l.b16 %v2448
      %v2545 = vunpack.c.l.b16 %v2449
      %v2546 = vunpack.c.l.b16 %v2450
      %v2547 = vunpack.c.l.b16 %v2451
      %v2548 = vunpack.c.l.b16 %v2452
      %v2549 = vunpack.c.l.b16 %v2453
      %v2550 = vunpack.c.l.b16 %v2454
      %v2551 = vunpack.c.l.b16 %v2455
      %v2552 = vunpack.c.l.b16 %v2456
      %v2553 = vunpack.c.l.b16 %v2457
      %v2554 = vunpack.c.l.b16 %v2458
      %v2555 = vunpack.c.l.b16 %v2459
      %v2556 = vunpack.c.l.b16 %v2460
      %v2557 = vunpack.c.l.b16 %v2461
      %v2558 = vunpack.c.l.b16 %v2462
      %v2559 = vunpack.c.l.b16 %v2463
      %v2560 = vunpack.c.l.b16 %v2464
      %v2561 = vunpack.c.l.b16 %v2465
      %v2562 = vunpack.c.l.b16 %v2466
      %v2563 = vunpack.c.l.b16 %v2467
      %v2564 = vunpack.c.l.b16 %v2468
      %v2565 = vunpack.c.l.b16 %v2469
      %v2566 = vunpack.c.l.b16 %v2470
      %v2567 = vunpack.c.l.b16 %v2471
      %v2568 = vunpack.c.l.b16 %v2472
      %v2569 = vunpack.c.l.b16 %v2473
      %v2570 = vunpack.c.l.b16 %v2474
      %v2571 = vunpack.c.l.b16 %v2475
      %v2572 = vunpack.c.l.b16 %v2476
      %v2573 = vunpack.c.l.b16 %v2477
      %v2574 = vunpack.c.l.b16 %v2478
      %v2575 = vunpack.c.l.b16 %v2479
      %v2576 = vunpack.c.l.b16 %v2480
      %v2577 = vunpack.c.l.b16 %v2481
      %v2578 = vunpack.c.l.b16 %v2482
      %v2579 = vunpack.c.l.b16 %v2483
      %v2580 = vunpack.c.l.b16 %v2484
      %v2581 = vunpack.c.l.b16 %v2485
      %v2582 = vunpack.c.l.b16 %v2486
      %v2583 = vunpack.c.l.b16 %v2487
      %v2584 = vunpack.c.l.b16 %v2488
      %v2585 = vpack.c.b16 %v2538, %v2537
      %v2586 = vpack.c.b16 %v2540, %v2539
      %v2587 = vpack.c.b16 %v2542, %v2541
      %v2588 = vpack.c.b16 %v2544, %v2543
      %v2589 = vpack.c.b16 %v2546, %v2545
      %v2590 = vpack.c.b16 %v2548, %v2547
      %v2591 = vpack.c.b16 %v2550, %v2549
      %v2592 = vpack.c.b16 %v2552, %v2551
      %v2593 = vpack.c.b16 %v2554, %v2553
      %v2594 = vpack.c.b16 %v2556, %v2555
      %v2595 = vpack.c.b16 %v2558, %v2557
      %v2596 = vpack.c.b16 %v2560, %v2559
      %v2597 = vpack.c.b16 %v2562, %v2561
      %v2598 = vpack.c.b16 %v2564, %v2563
      %v2599 = vpack.c.b16 %v2566, %v2565
      %v2600 = vpack.c.b16 %v2568, %v2567
      %v2601 = vpack.c.b16 %v2570, %v2569
      %v2602 = vpack.c.b16 %v2572, %v2571
      %v2603 = vpack.c.b16 %v2574, %v2573
      %v2604 = vpack.c.b16 %v2576, %v2575
      %v2605 = vpack.c.b16 %v2578, %v2577
      %v2606 = vpack.c.b16 %v2580, %v2579
      %v2607 = vpack.c.b16 %v2582, %v2581
      %v2608 = vpack.c.b16 %v2584, %v2583
      %2633 = vmatprep.subr.bf16.mxu0 0
      %2634 = vmatpush1.bf16.msra.mxu0 %v2592
      %2635 = vmatprep.subr.bf16.mxu0 0
      %2636 = vmatpush1.bf16.msra.mxu0 %v2591
      %2637 = vmatprep.subr.bf16.mxu0 0
      %2638 = vmatpush1.bf16.msra.mxu0 %v2590
      %2639 = vmatprep.subr.bf16.mxu0 0
      %2640 = vmatpush1.bf16.msra.mxu0 %v2589
      %2641 = vmatprep.subr.bf16.mxu0 0
      %2642 = vmatpush1.bf16.msra.mxu0 %v2588
      %2643 = vmatprep.subr.bf16.mxu0 0
      %2644 = vmatpush1.bf16.msra.mxu0 %v2587
      %2645 = vmatprep.subr.bf16.mxu0 0
      %2646 = vmatpush1.bf16.msra.mxu0 %v2586
      %2647 = vmatprep.subr.bf16.mxu0 0
      %2648 = vmatpush1.bf16.msra.mxu0 %v2585
      %2649 = vmatprep.subr.bf16.mxu0 0
      %2650 = vmatpush2.bf16.msra.mxu0 %v2600
      %2651 = vmatprep.subr.bf16.mxu0 0
      %2652 = vmatpush2.bf16.msra.mxu0 %v2599
      %2653 = vmatprep.subr.bf16.mxu0 0
      %2654 = vmatpush2.bf16.msra.mxu0 %v2598
      %2655 = vmatprep.subr.bf16.mxu0 0
      %2656 = vmatpush2.bf16.msra.mxu0 %v2597
      %2657 = vmatprep.subr.bf16.mxu0 0
      %2658 = vmatpush2.bf16.msra.mxu0 %v2596
      %2659 = vmatprep.subr.bf16.mxu0 0
      %2660 = vmatpush2.bf16.msra.mxu0 %v2595
      %2661 = vmatprep.subr.bf16.mxu0 0
      %2662 = vmatpush2.bf16.msra.mxu0 %v2594
      %2663 = vmatprep.subr.bf16.mxu0 0
      %2664 = vmatpush2.bf16.msra.mxu0 %v2593
      %2665 = vmatprep.mubr.bf16.mxu0 %v2344
      %2666 = vmatmul.mubr.bf16.gmra.mxu0 %v2280
      %v2667 = vpop.f32.mrf.mxu0
      %v2668 = vadd.f32 0.0, %v2667
      %v2669 = vpop.f32.mrf.mxu0
      %v2670 = vpop.f32.mrf.mxu0
      %v2671 = vadd.f32 0.0, %v2670
      %v2672 = vpop.f32.mrf.mxu0
      %2673 = vmatprep.mubr.bf16.mxu0 %v2345
      %2674 = vmatmul.mubr.bf16.gmra.mxu0 %v2281
      %v2675 = vpop.f32.mrf.mxu0
      %v2676 = vadd.f32 0.0, %v2675
      %v2677 = vpop.f32.mrf.mxu0
      %v2678 = vpop.f32.mrf.mxu0
      %v2679 = vadd.f32 0.0, %v2678
      %v2680 = vpop.f32.mrf.mxu0
      %2681 = vmatprep.mubr.bf16.mxu0 %v2346
      %2682 = vmatmul.mubr.bf16.gmra.mxu0 %v2282
      %v2683 = vpop.f32.mrf.mxu0
      %v2684 = vadd.f32 0.0, %v2683
      %v2685 = vpop.f32.mrf.mxu0
      %v2686 = vpop.f32.mrf.mxu0
      %v2687 = vadd.f32 0.0, %v2686
      %v2688 = vpop.f32.mrf.mxu0
      %2689 = vmatprep.mubr.bf16.mxu0 %v2347
      %2690 = vmatmul.mubr.bf16.gmra.mxu0 %v2283
      %v2691 = vpop.f32.mrf.mxu0
      %v2692 = vadd.f32 0.0, %v2691
      %v2693 = vpop.f32.mrf.mxu0
      %v2694 = vpop.f32.mrf.mxu0
      %v2695 = vadd.f32 0.0, %v2694
      %v2696 = vpop.f32.mrf.mxu0
      %2697 = vmatprep.mubr.bf16.mxu0 %v2348
      %2698 = vmatmul.mubr.bf16.gmra.mxu0 %v2284
      %v2699 = vpop.f32.mrf.mxu0
      %v2700 = vadd.f32 0.0, %v2699
      %v2701 = vpop.f32.mrf.mxu0
      %v2702 = vpop.f32.mrf.mxu0
      %v2703 = vadd.f32 0.0, %v2702
      %v2704 = vpop.f32.mrf.mxu0
      %2705 = vmatprep.mubr.bf16.mxu0 %v2349
      %2706 = vmatmul.mubr.bf16.gmra.mxu0 %v2285
      %v2707 = vpop.f32.mrf.mxu0
      %v2708 = vadd.f32 0.0, %v2707
      %v2709 = vpop.f32.mrf.mxu0
      %v2710 = vpop.f32.mrf.mxu0
      %v2711 = vadd.f32 0.0, %v2710
      %v2712 = vpop.f32.mrf.mxu0
      %2713 = vmatprep.mubr.bf16.mxu0 %v2350
      %2714 = vmatmul.mubr.bf16.gmra.mxu0 %v2286
      %v2715 = vpop.f32.mrf.mxu0
      %v2716 = vadd.f32 0.0, %v2715
      %v2717 = vpop.f32.mrf.mxu0
      %v2718 = vpop.f32.mrf.mxu0
      %v2719 = vadd.f32 0.0, %v2718
      %v2720 = vpop.f32.mrf.mxu0
      %2721 = vmatprep.mubr.bf16.mxu0 %v2351
      %2722 = vmatmul.mubr.bf16.gmra.mxu0 %v2287
      %v2723 = vpop.f32.mrf.mxu0
      %v2724 = vadd.f32 0.0, %v2723
      %v2725 = vpop.f32.mrf.mxu0
      %v2726 = vpop.f32.mrf.mxu0
      %v2727 = vadd.f32 0.0, %v2726
      %v2728 = vpop.f32.mrf.mxu0
      %2729 = vmatprep.mubr.bf16.mxu0 %v2352
      %2730 = vmatmul.mubr.bf16.gmra.mxu0 %v2288
      %v2731 = vpop.f32.mrf.mxu0
      %v2732 = vadd.f32 0.0, %v2731
      %v2733 = vpop.f32.mrf.mxu0
      %v2734 = vpop.f32.mrf.mxu0
      %v2735 = vadd.f32 0.0, %v2734
      %v2736 = vpop.f32.mrf.mxu0
      %2737 = vmatprep.mubr.bf16.mxu0 %v2353
      %2738 = vmatmul.mubr.bf16.gmra.mxu0 %v2289
      %v2739 = vpop.f32.mrf.mxu0
      %v2740 = vadd.f32 0.0, %v2739
      %v2741 = vpop.f32.mrf.mxu0
      %v2742 = vpop.f32.mrf.mxu0
      %v2743 = vadd.f32 0.0, %v2742
      %v2744 = vpop.f32.mrf.mxu0
      %2745 = vmatprep.mubr.bf16.mxu0 %v2354
      %2746 = vmatmul.mubr.bf16.gmra.mxu0 %v2290
      %v2747 = vpop.f32.mrf.mxu0
      %v2748 = vadd.f32 0.0, %v2747
      %v2749 = vpop.f32.mrf.mxu0
      %v2750 = vpop.f32.mrf.mxu0
      %v2751 = vadd.f32 0.0, %v2750
      %v2752 = vpop.f32.mrf.mxu0
      %2753 = vmatprep.mubr.bf16.mxu0 %v2355
      %2754 = vmatmul.mubr.bf16.gmra.mxu0 %v2291
      %v2755 = vpop.f32.mrf.mxu0
      %v2756 = vadd.f32 0.0, %v2755
      %v2757 = vpop.f32.mrf.mxu0
      %v2758 = vpop.f32.mrf.mxu0
      %v2759 = vadd.f32 0.0, %v2758
      %v2760 = vpop.f32.mrf.mxu0
      %2761 = vmatprep.mubr.bf16.mxu0 %v2356
      %2762 = vmatmul.mubr.bf16.gmra.mxu0 %v2292
      %v2763 = vpop.f32.mrf.mxu0
      %v2764 = vadd.f32 0.0, %v2763
      %v2765 = vpop.f32.mrf.mxu0
      %v2766 = vpop.f32.mrf.mxu0
      %v2767 = vadd.f32 0.0, %v2766
      %v2768 = vpop.f32.mrf.mxu0
      %2769 = vmatprep.mubr.bf16.mxu0 %v2357
      %2770 = vmatmul.mubr.bf16.gmra.mxu0 %v2293
      %v2771 = vpop.f32.mrf.mxu0
      %v2772 = vadd.f32 0.0, %v2771
      %v2773 = vpop.f32.mrf.mxu0
      %v2774 = vpop.f32.mrf.mxu0
      %v2775 = vadd.f32 0.0, %v2774
      %v2776 = vpop.f32.mrf.mxu0
      %2777 = vmatprep.mubr.bf16.mxu0 %v2358
      %2778 = vmatmul.mubr.bf16.gmra.mxu0 %v2294
      %v2779 = vpop.f32.mrf.mxu0
      %v2780 = vadd.f32 0.0, %v2779
      %v2781 = vpop.f32.mrf.mxu0
      %v2782 = vpop.f32.mrf.mxu0
      %v2783 = vadd.f32 0.0, %v2782
      %v2784 = vpop.f32.mrf.mxu0
      %2785 = vmatprep.mubr.bf16.mxu0 %v2359
      %2786 = vmatmul.mubr.bf16.gmra.mxu0 %v2295
      %v2787 = vpop.f32.mrf.mxu0
      %v2788 = vadd.f32 0.0, %v2787
      %v2789 = vpop.f32.mrf.mxu0
      %v2790 = vpop.f32.mrf.mxu0
      %v2791 = vadd.f32 0.0, %v2790
      %v2792 = vpop.f32.mrf.mxu0
      %2793 = vdwg.mxu0
      %2794 = vmatprep.subr.bf16.mxu0 0
      %2795 = vmatpush1.bf16.msra.mxu0 %v2608
      %2796 = vmatprep.subr.bf16.mxu0 0
      %2797 = vmatpush1.bf16.msra.mxu0 %v2607
      %2798 = vmatprep.subr.bf16.mxu0 0
      %2799 = vmatpush1.bf16.msra.mxu0 %v2606
      %2800 = vmatprep.subr.bf16.mxu0 0
      %2801 = vmatpush1.bf16.msra.mxu0 %v2605
      %2802 = vmatprep.subr.bf16.mxu0 0
      %2803 = vmatpush1.bf16.msra.mxu0 %v2604
      %2804 = vmatprep.subr.bf16.mxu0 0
      %2805 = vmatpush1.bf16.msra.mxu0 %v2603
      %2806 = vmatprep.subr.bf16.mxu0 0
      %2807 = vmatpush1.bf16.msra.mxu0 %v2602
      %2808 = vmatprep.subr.bf16.mxu0 0
      %2809 = vmatpush1.bf16.msra.mxu0 %v2601
      %2810 = vmatprep.subr.bf16.mxu0 0
      %2811 = vmatpush2.bf16.msra.mxu0 0
      %2812 = vmatprep.subr.bf16.mxu0 0
      %2813 = vmatpush2.bf16.msra.mxu0 0
      %2814 = vmatprep.subr.bf16.mxu0 0
      %2815 = vmatpush2.bf16.msra.mxu0 0
      %2816 = vmatprep.subr.bf16.mxu0 0
      %2817 = vmatpush2.bf16.msra.mxu0 0
      %2818 = vmatprep.subr.bf16.mxu0 0
      %2819 = vmatpush2.bf16.msra.mxu0 0
      %2820 = vmatprep.subr.bf16.mxu0 0
      %2821 = vmatpush2.bf16.msra.mxu0 0
      %2822 = vmatprep.subr.bf16.mxu0 0
      %2823 = vmatpush2.bf16.msra.mxu0 0
      %2824 = vmatprep.subr.bf16.mxu0 0
      %2825 = vmatpush2.bf16.msra.mxu0 0
      %2826 = vmatprep.mubr.bf16.mxu0 0
      %2827 = vmatmul.mubr.bf16.gmra.mxu0 %v2408
      %v2828 = vpop.f32.mrf.mxu0
      %v2829 = vadd.f32 %v2668, %v2828
      %v2830 = vpop.f32.mrf.mxu0
      %v2831 = vpop.f32.mrf.mxu0
      %v2832 = vadd.f32 %v2671, %v2831
      %v2833 = vpop.f32.mrf.mxu0
      %2834 = vmatprep.mubr.bf16.mxu0 0
      %2835 = vmatmul.mubr.bf16.gmra.mxu0 %v2409
      %v2836 = vpop.f32.mrf.mxu0
      %v2837 = vadd.f32 %v2676, %v2836
      %v2838 = vpop.f32.mrf.mxu0
      %v2839 = vpop.f32.mrf.mxu0
      %v2840 = vadd.f32 %v2679, %v2839
      %v2841 = vpop.f32.mrf.mxu0
      %2842 = vmatprep.mubr.bf16.mxu0 0
      %2843 = vmatmul.mubr.bf16.gmra.mxu0 %v2410
      %v2844 = vpop.f32.mrf.mxu0
      %v2845 = vadd.f32 %v2684, %v2844
      %v2846 = vpop.f32.mrf.mxu0
      %v2847 = vpop.f32.mrf.mxu0
      %v2848 = vadd.f32 %v2687, %v2847
      %v2849 = vpop.f32.mrf.mxu0
      %2850 = vmatprep.mubr.bf16.mxu0 0
      %2851 = vmatmul.mubr.bf16.gmra.mxu0 %v2411
      %v2852 = vpop.f32.mrf.mxu0
      %v2853 = vadd.f32 %v2692, %v2852
      %v2854 = vpop.f32.mrf.mxu0
      %v2855 = vpop.f32.mrf.mxu0
      %v2856 = vadd.f32 %v2695, %v2855
      %v2857 = vpop.f32.mrf.mxu0
      %2858 = vmatprep.mubr.bf16.mxu0 0
      %2859 = vmatmul.mubr.bf16.gmra.mxu0 %v2412
      %v2860 = vpop.f32.mrf.mxu0
      %v2861 = vadd.f32 %v2700, %v2860
      %v2862 = vpop.f32.mrf.mxu0
      %v2863 = vpop.f32.mrf.mxu0
      %v2864 = vadd.f32 %v2703, %v2863
      %v2865 = vpop.f32.mrf.mxu0
      %2866 = vmatprep.mubr.bf16.mxu0 0
      %2867 = vmatmul.mubr.bf16.gmra.mxu0 %v2413
      %v2868 = vpop.f32.mrf.mxu0
      %v2869 = vadd.f32 %v2708, %v2868
      %v2870 = vpop.f32.mrf.mxu0
      %v2871 = vpop.f32.mrf.mxu0
      %v2872 = vadd.f32 %v2711, %v2871
      %v2873 = vpop.f32.mrf.mxu0
      %2874 = vmatprep.mubr.bf16.mxu0 0
      %2875 = vmatmul.mubr.bf16.gmra.mxu0 %v2414
      %v2876 = vpop.f32.mrf.mxu0
      %v2877 = vadd.f32 %v2716, %v2876
      %v2878 = vpop.f32.mrf.mxu0
      %v2879 = vpop.f32.mrf.mxu0
      %v2880 = vadd.f32 %v2719, %v2879
      %v2881 = vpop.f32.mrf.mxu0
      %2882 = vmatprep.mubr.bf16.mxu0 0
      %2883 = vmatmul.mubr.bf16.gmra.mxu0 %v2415
      %v2884 = vpop.f32.mrf.mxu0
      %v2885 = vadd.f32 %v2724, %v2884
      %v2886 = vpop.f32.mrf.mxu0
      %v2887 = vpop.f32.mrf.mxu0
      %v2888 = vadd.f32 %v2727, %v2887
      %v2889 = vpop.f32.mrf.mxu0
      %2890 = vmatprep.mubr.bf16.mxu0 0
      %2891 = vmatmul.mubr.bf16.gmra.mxu0 %v2416
      %v2892 = vpop.f32.mrf.mxu0
      %v2893 = vadd.f32 %v2732, %v2892
      %v2894 = vpop.f32.mrf.mxu0
      %v2895 = vpop.f32.mrf.mxu0
      %v2896 = vadd.f32 %v2735, %v2895
      %v2897 = vpop.f32.mrf.mxu0
      %2898 = vmatprep.mubr.bf16.mxu0 0
      %2899 = vmatmul.mubr.bf16.gmra.mxu0 %v2417
      %v2900 = vpop.f32.mrf.mxu0
      %v2901 = vadd.f32 %v2740, %v2900
      %v2902 = vpop.f32.mrf.mxu0
      %v2903 = vpop.f32.mrf.mxu0
      %v2904 = vadd.f32 %v2743, %v2903
      %v2905 = vpop.f32.mrf.mxu0
      %2906 = vmatprep.mubr.bf16.mxu0 0
      %2907 = vmatmul.mubr.bf16.gmra.mxu0 %v2418
      %v2908 = vpop.f32.mrf.mxu0
      %v2909 = vadd.f32 %v2748, %v2908
      %v2910 = vpop.f32.mrf.mxu0
      %v2911 = vpop.f32.mrf.mxu0
      %v2912 = vadd.f32 %v2751, %v2911
      %v2913 = vpop.f32.mrf.mxu0
      %2914 = vmatprep.mubr.bf16.mxu0 0
      %2915 = vmatmul.mubr.bf16.gmra.mxu0 %v2419
      %v2916 = vpop.f32.mrf.mxu0
      %v2917 = vadd.f32 %v2756, %v2916
      %v2918 = vpop.f32.mrf.mxu0
      %v2919 = vpop.f32.mrf.mxu0
      %v2920 = vadd.f32 %v2759, %v2919
      %v2921 = vpop.f32.mrf.mxu0
      %2922 = vmatprep.mubr.bf16.mxu0 0
      %2923 = vmatmul.mubr.bf16.gmra.mxu0 %v2420
      %v2924 = vpop.f32.mrf.mxu0
      %v2925 = vadd.f32 %v2764, %v2924
      %v2926 = vpop.f32.mrf.mxu0
      %v2927 = vpop.f32.mrf.mxu0
      %v2928 = vadd.f32 %v2767, %v2927
      %v2929 = vpop.f32.mrf.mxu0
      %2930 = vmatprep.mubr.bf16.mxu0 0
      %2931 = vmatmul.mubr.bf16.gmra.mxu0 %v2421
      %v2932 = vpop.f32.mrf.mxu0
      %v2933 = vadd.f32 %v2772, %v2932
      %v2934 = vpop.f32.mrf.mxu0
      %v2935 = vpop.f32.mrf.mxu0
      %v2936 = vadd.f32 %v2775, %v2935
      %v2937 = vpop.f32.mrf.mxu0
      %2938 = vmatprep.mubr.bf16.mxu0 0
      %2939 = vmatmul.mubr.bf16.gmra.mxu0 %v2422
      %v2940 = vpop.f32.mrf.mxu0
      %v2941 = vadd.f32 %v2780, %v2940
      %v2942 = vpop.f32.mrf.mxu0
      %v2943 = vpop.f32.mrf.mxu0
      %v2944 = vadd.f32 %v2783, %v2943
      %v2945 = vpop.f32.mrf.mxu0
      %2946 = vmatprep.mubr.bf16.mxu0 0
      %2947 = vmatmul.mubr.bf16.gmra.mxu0 %v2423
      %v2948 = vpop.f32.mrf.mxu0
      %v2949 = vadd.f32 %v2788, %v2948
      %v2950 = vpop.f32.mrf.mxu0
      %v2951 = vpop.f32.mrf.mxu0
      %v2952 = vadd.f32 %v2791, %v2951
      %v2953 = vpop.f32.mrf.mxu0
      %2954 = vdwg.mxu0
      %v2955 = vadd.f32 %v1497, %v2829
      %v2956 = vadd.f32 %v1500, %v2832
      %v2957 = vadd.f32 %v1505, %v2837
      %v2958 = vadd.f32 %v1508, %v2840
      %v2959 = vadd.f32 %v1513, %v2845
      %v2960 = vadd.f32 %v1516, %v2848
      %v2961 = vadd.f32 %v1521, %v2853
      %v2962 = vadd.f32 %v1524, %v2856
      %v2963 = vadd.f32 %v1529, %v2861
      %v2964 = vadd.f32 %v1532, %v2864
      %v2965 = vadd.f32 %v1537, %v2869
      %v2966 = vadd.f32 %v1540, %v2872
      %v2967 = vadd.f32 %v1545, %v2877
      %v2968 = vadd.f32 %v1548, %v2880
      %v2969 = vadd.f32 %v1553, %v2885
      %v2970 = vadd.f32 %v1556, %v2888
      %v2971 = vadd.f32 %v1561, %v2893
      %v2972 = vadd.f32 %v1564, %v2896
      %v2973 = vadd.f32 %v1569, %v2901
      %v2974 = vadd.f32 %v1572, %v2904
      %v2975 = vadd.f32 %v1577, %v2909
      %v2976 = vadd.f32 %v1580, %v2912
      %v2977 = vadd.f32 %v1585, %v2917
      %v2978 = vadd.f32 %v1588, %v2920
      %v2979 = vadd.f32 %v1593, %v2925
      %v2980 = vadd.f32 %v1596, %v2928
      %v2981 = vadd.f32 %v1601, %v2933
      %v2982 = vadd.f32 %v1604, %v2936
      %v2983 = vadd.f32 %v1609, %v2941
      %v2984 = vadd.f32 %v1612, %v2944
      %v2985 = vadd.f32 %v1617, %v2949
      %v2986 = vadd.f32 %v1620, %v2952
      %s2987 = scalar_lea.vmem %s273, 24
      %v2988 = vld [vmem:[%s2987] sm:$0xf]
      %v2989 = vld [vmem:[%s2987 + $0x4] sm:$0xf]
      %v2990 = vld [vmem:[%s2987 + $0xc] sm:$0xf]
      %v2991 = vld [vmem:[%s2987 + $0x10] sm:$0xf]
      %v2992 = vld [vmem:[%s2987 + $0x18] sm:$0xf]
      %v2993 = vld [vmem:[%s2987 + $0x1c] sm:$0xf]
      %v2994 = vld [vmem:[%s2987 + $0x24] sm:$0xf]
      %v2995 = vld [vmem:[%s2987 + $0x28] sm:$0xf]
      %v2996 = vld [vmem:[%s2987 + $0x30] sm:$0xf]
      %v2997 = vld [vmem:[%s2987 + $0x34] sm:$0xf]
      %v2998 = vld [vmem:[%s2987 + $0x3c] sm:$0xf]
      %v2999 = vld [vmem:[%s2987 + $0x40] sm:$0xf]
      %v3000 = vld [vmem:[%s2987 + $0x48] sm:$0xf]
      %v3001 = vld [vmem:[%s2987 + $0x4c] sm:$0xf]
      %v3002 = vld [vmem:[%s2987 + $0x54] sm:$0xf]
      %v3003 = vld [vmem:[%s2987 + $0x58] sm:$0xf]
      %v3004 = vld [vmem:[%s2987 + $0x60] sm:$0xf]
      %v3005 = vld [vmem:[%s2987 + $0x64] sm:$0xf]
      %v3006 = vld [vmem:[%s2987 + $0x6c] sm:$0xf]
      %v3007 = vld [vmem:[%s2987 + $0x70] sm:$0xf]
      %v3008 = vld [vmem:[%s2987 + $0x78] sm:$0xf]
      %v3009 = vld [vmem:[%s2987 + $0x7c] sm:$0xf]
      %v3010 = vld [vmem:[%s2987 + $0x84] sm:$0xf]
      %v3011 = vld [vmem:[%s2987 + $0x88] sm:$0xf]
      %v3012 = vld [vmem:[%s2987 + $0x90] sm:$0xf]
      %v3013 = vld [vmem:[%s2987 + $0x94] sm:$0xf]
      %v3014 = vld [vmem:[%s2987 + $0x9c] sm:$0xf]
      %v3015 = vld [vmem:[%s2987 + $0xa0] sm:$0xf]
      %v3016 = vld [vmem:[%s2987 + $0xa8] sm:$0xf]
      %v3017 = vld [vmem:[%s2987 + $0xac] sm:$0xf]
      %v3018 = vld [vmem:[%s2987 + $0xb4] sm:$0xf]
      %v3019 = vld [vmem:[%s2987 + $0xb8] sm:$0xf]
      %v3020 = vld [vmem:[%s2987 + $0x8] sm:$0x1]
      %v3021 = vld [vmem:[%s2987 + $0x14] sm:$0x1]
      %v3022 = vld [vmem:[%s2987 + $0x20] sm:$0x1]
      %v3023 = vld [vmem:[%s2987 + $0x2c] sm:$0x1]
      %v3024 = vld [vmem:[%s2987 + $0x38] sm:$0x1]
      %v3025 = vld [vmem:[%s2987 + $0x44] sm:$0x1]
      %v3026 = vld [vmem:[%s2987 + $0x50] sm:$0x1]
      %v3027 = vld [vmem:[%s2987 + $0x5c] sm:$0x1]
      %v3028 = vld [vmem:[%s2987 + $0x68] sm:$0x1]
      %v3029 = vld [vmem:[%s2987 + $0x74] sm:$0x1]
      %v3030 = vld [vmem:[%s2987 + $0x80] sm:$0x1]
      %v3031 = vld [vmem:[%s2987 + $0x8c] sm:$0x1]
      %v3032 = vld [vmem:[%s2987 + $0x98] sm:$0x1]
      %v3033 = vld [vmem:[%s2987 + $0xa4] sm:$0x1]
      %v3034 = vld [vmem:[%s2987 + $0xb0] sm:$0x1]
      %v3035 = vld [vmem:[%s2987 + $0xbc] sm:$0x1]
      %v3037 = vshrl.u32 %v2988, 16
      %v3039 = vrot.slane %v3037, 4
      %v3040 = vshll.u32 %v2988, 16
      %v3042 = vrot.slane %v3040, 5
      %v3043 = vor.u32 %v3039, %v3042
      %v3044 = vrot.slane %v3043, 4
      %v3046 = vshll.u32 %v2989, 16
      %v3048 = vrot.slane %v3046, 5
      %v3049 = vsel %vm330, %v3044, %v3048
      %v3050 = vshrl.u32 %v2989, 16
      %v3052 = vrot.slane %v3050, 4
      %v3053 = vor.u32 %v3052, %v3048
      %v3054 = vrot.slane %v3053, 4
      %v3056 = vshll.u32 %v3020, 16
      %v3058 = vrot.slane %v3056, 5
      %v3059 = vsel %vm330, %v3054, %v3058
      %v3061 = vshrl.u32 %v2990, 16
      %v3063 = vrot.slane %v3061, 4
      %v3064 = vshll.u32 %v2990, 16
      %v3066 = vrot.slane %v3064, 5
      %v3067 = vor.u32 %v3063, %v3066
      %v3068 = vrot.slane %v3067, 4
      %v3070 = vshll.u32 %v2991, 16
      %v3072 = vrot.slane %v3070, 5
      %v3073 = vsel %vm330, %v3068, %v3072
      %v3074 = vshrl.u32 %v2991, 16
      %v3076 = vrot.slane %v3074, 4
      %v3077 = vor.u32 %v3076, %v3072
      %v3078 = vrot.slane %v3077, 4
      %v3080 = vshll.u32 %v3021, 16
      %v3082 = vrot.slane %v3080, 5
      %v3083 = vsel %vm330, %v3078, %v3082
      %v3085 = vshrl.u32 %v2992, 16
      %v3087 = vrot.slane %v3085, 4
      %v3088 = vshll.u32 %v2992, 16
      %v3090 = vrot.slane %v3088, 5
      %v3091 = vor.u32 %v3087, %v3090
      %v3092 = vrot.slane %v3091, 4
      %v3094 = vshll.u32 %v2993, 16
      %v3096 = vrot.slane %v3094, 5
      %v3097 = vsel %vm330, %v3092, %v3096
      %v3098 = vshrl.u32 %v2993, 16
      %v3100 = vrot.slane %v3098, 4
      %v3101 = vor.u32 %v3100, %v3096
      %v3102 = vrot.slane %v3101, 4
      %v3104 = vshll.u32 %v3022, 16
      %v3106 = vrot.slane %v3104, 5
      %v3107 = vsel %vm330, %v3102, %v3106
      %v3109 = vshrl.u32 %v2994, 16
      %v3111 = vrot.slane %v3109, 4
      %v3112 = vshll.u32 %v2994, 16
      %v3114 = vrot.slane %v3112, 5
      %v3115 = vor.u32 %v3111, %v3114
      %v3116 = vrot.slane %v3115, 4
      %v3118 = vshll.u32 %v2995, 16
      %v3120 = vrot.slane %v3118, 5
      %v3121 = vsel %vm330, %v3116, %v3120
      %v3122 = vshrl.u32 %v2995, 16
      %v3124 = vrot.slane %v3122, 4
      %v3125 = vor.u32 %v3124, %v3120
      %v3126 = vrot.slane %v3125, 4
      %v3128 = vshll.u32 %v3023, 16
      %v3130 = vrot.slane %v3128, 5
      %v3131 = vsel %vm330, %v3126, %v3130
      %v3133 = vshrl.u32 %v2996, 16
      %v3135 = vrot.slane %v3133, 4
      %v3136 = vshll.u32 %v2996, 16
      %v3138 = vrot.slane %v3136, 5
      %v3139 = vor.u32 %v3135, %v3138
      %v3140 = vrot.slane %v3139, 4
      %v3142 = vshll.u32 %v2997, 16
      %v3144 = vrot.slane %v3142, 5
      %v3145 = vsel %vm330, %v3140, %v3144
      %v3146 = vshrl.u32 %v2997, 16
      %v3148 = vrot.slane %v3146, 4
      %v3149 = vor.u32 %v3148, %v3144
      %v3150 = vrot.slane %v3149, 4
      %v3152 = vshll.u32 %v3024, 16
      %v3154 = vrot.slane %v3152, 5
      %v3155 = vsel %vm330, %v3150, %v3154
      %v3157 = vshrl.u32 %v2998, 16
      %v3159 = vrot.slane %v3157, 4
      %v3160 = vshll.u32 %v2998, 16
      %v3162 = vrot.slane %v3160, 5
      %v3163 = vor.u32 %v3159, %v3162
      %v3164 = vrot.slane %v3163, 4
      %v3166 = vshll.u32 %v2999, 16
      %v3168 = vrot.slane %v3166, 5
      %v3169 = vsel %vm330, %v3164, %v3168
      %v3170 = vshrl.u32 %v2999, 16
      %v3172 = vrot.slane %v3170, 4
      %v3173 = vor.u32 %v3172, %v3168
      %v3174 = vrot.slane %v3173, 4
      %v3176 = vshll.u32 %v3025, 16
      %v3178 = vrot.slane %v3176, 5
      %v3179 = vsel %vm330, %v3174, %v3178
      %v3181 = vshrl.u32 %v3000, 16
      %v3183 = vrot.slane %v3181, 4
      %v3184 = vshll.u32 %v3000, 16
      %v3186 = vrot.slane %v3184, 5
      %v3187 = vor.u32 %v3183, %v3186
      %v3188 = vrot.slane %v3187, 4
      %v3190 = vshll.u32 %v3001, 16
      %v3192 = vrot.slane %v3190, 5
      %v3193 = vsel %vm330, %v3188, %v3192
      %v3194 = vshrl.u32 %v3001, 16
      %v3196 = vrot.slane %v3194, 4
      %v3197 = vor.u32 %v3196, %v3192
      %v3198 = vrot.slane %v3197, 4
      %v3200 = vshll.u32 %v3026, 16
      %v3202 = vrot.slane %v3200, 5
      %v3203 = vsel %vm330, %v3198, %v3202
      %v3205 = vshrl.u32 %v3002, 16
      %v3207 = vrot.slane %v3205, 4
      %v3208 = vshll.u32 %v3002, 16
      %v3210 = vrot.slane %v3208, 5
      %v3211 = vor.u32 %v3207, %v3210
      %v3212 = vrot.slane %v3211, 4
      %v3214 = vshll.u32 %v3003, 16
      %v3216 = vrot.slane %v3214, 5
      %v3217 = vsel %vm330, %v3212, %v3216
      %v3218 = vshrl.u32 %v3003, 16
      %v3220 = vrot.slane %v3218, 4
      %v3221 = vor.u32 %v3220, %v3216
      %v3222 = vrot.slane %v3221, 4
      %v3224 = vshll.u32 %v3027, 16
      %v3226 = vrot.slane %v3224, 5
      %v3227 = vsel %vm330, %v3222, %v3226
      %v3229 = vshrl.u32 %v3004, 16
      %v3231 = vrot.slane %v3229, 4
      %v3232 = vshll.u32 %v3004, 16
      %v3234 = vrot.slane %v3232, 5
      %v3235 = vor.u32 %v3231, %v3234
      %v3236 = vrot.slane %v3235, 4
      %v3238 = vshll.u32 %v3005, 16
      %v3240 = vrot.slane %v3238, 5
      %v3241 = vsel %vm330, %v3236, %v3240
      %v3242 = vshrl.u32 %v3005, 16
      %v3244 = vrot.slane %v3242, 4
      %v3245 = vor.u32 %v3244, %v3240
      %v3246 = vrot.slane %v3245, 4
      %v3248 = vshll.u32 %v3028, 16
      %v3250 = vrot.slane %v3248, 5
      %v3251 = vsel %vm330, %v3246, %v3250
      %v3253 = vshrl.u32 %v3006, 16
      %v3255 = vrot.slane %v3253, 4
      %v3256 = vshll.u32 %v3006, 16
      %v3258 = vrot.slane %v3256, 5
      %v3259 = vor.u32 %v3255, %v3258
      %v3260 = vrot.slane %v3259, 4
      %v3262 = vshll.u32 %v3007, 16
      %v3264 = vrot.slane %v3262, 5
      %v3265 = vsel %vm330, %v3260, %v3264
      %v3266 = vshrl.u32 %v3007, 16
      %v3268 = vrot.slane %v3266, 4
      %v3269 = vor.u32 %v3268, %v3264
      %v3270 = vrot.slane %v3269, 4
      %v3272 = vshll.u32 %v3029, 16
      %v3274 = vrot.slane %v3272, 5
      %v3275 = vsel %vm330, %v3270, %v3274
      %v3277 = vshrl.u32 %v3008, 16
      %v3279 = vrot.slane %v3277, 4
      %v3280 = vshll.u32 %v3008, 16
      %v3282 = vrot.slane %v3280, 5
      %v3283 = vor.u32 %v3279, %v3282
      %v3284 = vrot.slane %v3283, 4
      %v3286 = vshll.u32 %v3009, 16
      %v3288 = vrot.slane %v3286, 5
      %v3289 = vsel %vm330, %v3284, %v3288
      %v3290 = vshrl.u32 %v3009, 16
      %v3292 = vrot.slane %v3290, 4
      %v3293 = vor.u32 %v3292, %v3288
      %v3294 = vrot.slane %v3293, 4
      %v3296 = vshll.u32 %v3030, 16
      %v3298 = vrot.slane %v3296, 5
      %v3299 = vsel %vm330, %v3294, %v3298
      %v3301 = vshrl.u32 %v3010, 16
      %v3303 = vrot.slane %v3301, 4
      %v3304 = vshll.u32 %v3010, 16
      %v3306 = vrot.slane %v3304, 5
      %v3307 = vor.u32 %v3303, %v3306
      %v3308 = vrot.slane %v3307, 4
      %v3310 = vshll.u32 %v3011, 16
      %v3312 = vrot.slane %v3310, 5
      %v3313 = vsel %vm330, %v3308, %v3312
      %v3314 = vshrl.u32 %v3011, 16
      %v3316 = vrot.slane %v3314, 4
      %v3317 = vor.u32 %v3316, %v3312
      %v3318 = vrot.slane %v3317, 4
      %v3320 = vshll.u32 %v3031, 16
      %v3322 = vrot.slane %v3320, 5
      %v3323 = vsel %vm330, %v3318, %v3322
      %v3325 = vshrl.u32 %v3012, 16
      %v3327 = vrot.slane %v3325, 4
      %v3328 = vshll.u32 %v3012, 16
      %v3330 = vrot.slane %v3328, 5
      %v3331 = vor.u32 %v3327, %v3330
      %v3332 = vrot.slane %v3331, 4
      %v3334 = vshll.u32 %v3013, 16
      %v3336 = vrot.slane %v3334, 5
      %v3337 = vsel %vm330, %v3332, %v3336
      %v3338 = vshrl.u32 %v3013, 16
      %v3340 = vrot.slane %v3338, 4
      %v3341 = vor.u32 %v3340, %v3336
      %v3342 = vrot.slane %v3341, 4
      %v3344 = vshll.u32 %v3032, 16
      %v3346 = vrot.slane %v3344, 5
      %v3347 = vsel %vm330, %v3342, %v3346
      %v3349 = vshrl.u32 %v3014, 16
      %v3351 = vrot.slane %v3349, 4
      %v3352 = vshll.u32 %v3014, 16
      %v3354 = vrot.slane %v3352, 5
      %v3355 = vor.u32 %v3351, %v3354
      %v3356 = vrot.slane %v3355, 4
      %v3358 = vshll.u32 %v3015, 16
      %v3360 = vrot.slane %v3358, 5
      %v3361 = vsel %vm330, %v3356, %v3360
      %v3362 = vshrl.u32 %v3015, 16
      %v3364 = vrot.slane %v3362, 4
      %v3365 = vor.u32 %v3364, %v3360
      %v3366 = vrot.slane %v3365, 4
      %v3368 = vshll.u32 %v3033, 16
      %v3370 = vrot.slane %v3368, 5
      %v3371 = vsel %vm330, %v3366, %v3370
      %v3373 = vshrl.u32 %v3016, 16
      %v3375 = vrot.slane %v3373, 4
      %v3376 = vshll.u32 %v3016, 16
      %v3378 = vrot.slane %v3376, 5
      %v3379 = vor.u32 %v3375, %v3378
      %v3380 = vrot.slane %v3379, 4
      %v3382 = vshll.u32 %v3017, 16
      %v3384 = vrot.slane %v3382, 5
      %v3385 = vsel %vm330, %v3380, %v3384
      %v3386 = vshrl.u32 %v3017, 16
      %v3388 = vrot.slane %v3386, 4
      %v3389 = vor.u32 %v3388, %v3384
      %v3390 = vrot.slane %v3389, 4
      %v3392 = vshll.u32 %v3034, 16
      %v3394 = vrot.slane %v3392, 5
      %v3395 = vsel %vm330, %v3390, %v3394
      %v3397 = vshrl.u32 %v3018, 16
      %v3399 = vrot.slane %v3397, 4
      %v3400 = vshll.u32 %v3018, 16
      %v3402 = vrot.slane %v3400, 5
      %v3403 = vor.u32 %v3399, %v3402
      %v3404 = vrot.slane %v3403, 4
      %v3406 = vshll.u32 %v3019, 16
      %v3408 = vrot.slane %v3406, 5
      %v3409 = vsel %vm330, %v3404, %v3408
      %v3410 = vshrl.u32 %v3019, 16
      %v3412 = vrot.slane %v3410, 4
      %v3413 = vor.u32 %v3412, %v3408
      %v3414 = vrot.slane %v3413, 4
      %v3416 = vshll.u32 %v3035, 16
      %v3418 = vrot.slane %v3416, 5
      %v3419 = vsel %vm330, %v3414, %v3418
      %v3420 = vld [vmem:[%s2987] sm:$0xe]
      %v3421 = vld [vmem:[%s2987 + $0xc] sm:$0xe]
      %v3422 = vld [vmem:[%s2987 + $0x18] sm:$0xe]
      %v3423 = vld [vmem:[%s2987 + $0x24] sm:$0xe]
      %v3424 = vld [vmem:[%s2987 + $0x30] sm:$0xe]
      %v3425 = vld [vmem:[%s2987 + $0x3c] sm:$0xe]
      %v3426 = vld [vmem:[%s2987 + $0x48] sm:$0xe]
      %v3427 = vld [vmem:[%s2987 + $0x54] sm:$0xe]
      %v3428 = vld [vmem:[%s2987 + $0x60] sm:$0xe]
      %v3429 = vld [vmem:[%s2987 + $0x6c] sm:$0xe]
      %v3430 = vld [vmem:[%s2987 + $0x78] sm:$0xe]
      %v3431 = vld [vmem:[%s2987 + $0x84] sm:$0xe]
      %v3432 = vld [vmem:[%s2987 + $0x90] sm:$0xe]
      %v3433 = vld [vmem:[%s2987 + $0x9c] sm:$0xe]
      %v3434 = vld [vmem:[%s2987 + $0xa8] sm:$0xe]
      %v3435 = vld [vmem:[%s2987 + $0xb4] sm:$0xe]
      %v3484 = vrot.slane %v3420, 5
      %v3485 = vrot.slane %v3484, 4
      %v3486 = vrot.slane %v2989, 5
      %v3487 = vsel %vm781, %v3485, %v3486
      %v3488 = vrot.slane %v3486, 4
      %v3489 = vrot.slane %v3020, 5
      %v3490 = vsel %vm781, %v3488, %v3489
      %v3491 = vrot.slane %v3421, 5
      %v3492 = vrot.slane %v3491, 4
      %v3493 = vrot.slane %v2991, 5
      %v3494 = vsel %vm781, %v3492, %v3493
      %v3495 = vrot.slane %v3493, 4
      %v3496 = vrot.slane %v3021, 5
      %v3497 = vsel %vm781, %v3495, %v3496
      %v3498 = vrot.slane %v3422, 5
      %v3499 = vrot.slane %v3498, 4
      %v3500 = vrot.slane %v2993, 5
      %v3501 = vsel %vm781, %v3499, %v3500
      %v3502 = vrot.slane %v3500, 4
      %v3503 = vrot.slane %v3022, 5
      %v3504 = vsel %vm781, %v3502, %v3503
      %v3505 = vrot.slane %v3423, 5
      %v3506 = vrot.slane %v3505, 4
      %v3507 = vrot.slane %v2995, 5
      %v3508 = vsel %vm781, %v3506, %v3507
      %v3509 = vrot.slane %v3507, 4
      %v3510 = vrot.slane %v3023, 5
      %v3511 = vsel %vm781, %v3509, %v3510
      %v3512 = vrot.slane %v3424, 5
      %v3513 = vrot.slane %v3512, 4
      %v3514 = vrot.slane %v2997, 5
      %v3515 = vsel %vm781, %v3513, %v3514
      %v3516 = vrot.slane %v3514, 4
      %v3517 = vrot.slane %v3024, 5
      %v3518 = vsel %vm781, %v3516, %v3517
      %v3519 = vrot.slane %v3425, 5
      %v3520 = vrot.slane %v3519, 4
      %v3521 = vrot.slane %v2999, 5
      %v3522 = vsel %vm781, %v3520, %v3521
      %v3523 = vrot.slane %v3521, 4
      %v3524 = vrot.slane %v3025, 5
      %v3525 = vsel %vm781, %v3523, %v3524
      %v3526 = vrot.slane %v3426, 5
      %v3527 = vrot.slane %v3526, 4
      %v3528 = vrot.slane %v3001, 5
      %v3529 = vsel %vm781, %v3527, %v3528
      %v3530 = vrot.slane %v3528, 4
      %v3531 = vrot.slane %v3026, 5
      %v3532 = vsel %vm781, %v3530, %v3531
      %v3533 = vrot.slane %v3427, 5
      %v3534 = vrot.slane %v3533, 4
      %v3535 = vrot.slane %v3003, 5
      %v3536 = vsel %vm781, %v3534, %v3535
      %v3537 = vrot.slane %v3535, 4
      %v3538 = vrot.slane %v3027, 5
      %v3539 = vsel %vm781, %v3537, %v3538
      %v3540 = vrot.slane %v3428, 5
      %v3541 = vrot.slane %v3540, 4
      %v3542 = vrot.slane %v3005, 5
      %v3543 = vsel %vm781, %v3541, %v3542
      %v3544 = vrot.slane %v3542, 4
      %v3545 = vrot.slane %v3028, 5
      %v3546 = vsel %vm781, %v3544, %v3545
      %v3547 = vrot.slane %v3429, 5
      %v3548 = vrot.slane %v3547, 4
      %v3549 = vrot.slane %v3007, 5
      %v3550 = vsel %vm781, %v3548, %v3549
      %v3551 = vrot.slane %v3549, 4
      %v3552 = vrot.slane %v3029, 5
      %v3553 = vsel %vm781, %v3551, %v3552
      %v3554 = vrot.slane %v3430, 5
      %v3555 = vrot.slane %v3554, 4
      %v3556 = vrot.slane %v3009, 5
      %v3557 = vsel %vm781, %v3555, %v3556
      %v3558 = vrot.slane %v3556, 4
      %v3559 = vrot.slane %v3030, 5
      %v3560 = vsel %vm781, %v3558, %v3559
      %v3561 = vrot.slane %v3431, 5
      %v3562 = vrot.slane %v3561, 4
      %v3563 = vrot.slane %v3011, 5
      %v3564 = vsel %vm781, %v3562, %v3563
      %v3565 = vrot.slane %v3563, 4
      %v3566 = vrot.slane %v3031, 5
      %v3567 = vsel %vm781, %v3565, %v3566
      %v3568 = vrot.slane %v3432, 5
      %v3569 = vrot.slane %v3568, 4
      %v3570 = vrot.slane %v3013, 5
      %v3571 = vsel %vm781, %v3569, %v3570
      %v3572 = vrot.slane %v3570, 4
      %v3573 = vrot.slane %v3032, 5
      %v3574 = vsel %vm781, %v3572, %v3573
      %v3575 = vrot.slane %v3433, 5
      %v3576 = vrot.slane %v3575, 4
      %v3577 = vrot.slane %v3015, 5
      %v3578 = vsel %vm781, %v3576, %v3577
      %v3579 = vrot.slane %v3577, 4
      %v3580 = vrot.slane %v3033, 5
      %v3581 = vsel %vm781, %v3579, %v3580
      %v3582 = vrot.slane %v3434, 5
      %v3583 = vrot.slane %v3582, 4
      %v3584 = vrot.slane %v3017, 5
      %v3585 = vsel %vm781, %v3583, %v3584
      %v3586 = vrot.slane %v3584, 4
      %v3587 = vrot.slane %v3034, 5
      %v3588 = vsel %vm781, %v3586, %v3587
      %v3589 = vrot.slane %v3435, 5
      %v3590 = vrot.slane %v3589, 4
      %v3591 = vrot.slane %v3019, 5
      %v3592 = vsel %vm781, %v3590, %v3591
      %v3593 = vrot.slane %v3591, 4
      %v3594 = vrot.slane %v3035, 5
      %v3595 = vsel %vm781, %v3593, %v3594
      %v3612 = vunpack.c.l.b16 %v2988
      %v3613 = vunpack.c.l.b16 %v2989
      %v3614 = vunpack.c.l.b16 %v2990
      %v3615 = vunpack.c.l.b16 %v2991
      %v3616 = vunpack.c.l.b16 %v2992
      %v3617 = vunpack.c.l.b16 %v2993
      %v3618 = vunpack.c.l.b16 %v2994
      %v3619 = vunpack.c.l.b16 %v2995
      %v3620 = vunpack.c.l.b16 %v2996
      %v3621 = vunpack.c.l.b16 %v2997
      %v3622 = vunpack.c.l.b16 %v2998
      %v3623 = vunpack.c.l.b16 %v2999
      %v3624 = vunpack.c.l.b16 %v3000
      %v3625 = vunpack.c.l.b16 %v3001
      %v3626 = vunpack.c.l.b16 %v3002
      %v3627 = vunpack.c.l.b16 %v3003
      %v3628 = vunpack.c.l.b16 %v3004
      %v3629 = vunpack.c.l.b16 %v3005
      %v3630 = vunpack.c.l.b16 %v3006
      %v3631 = vunpack.c.l.b16 %v3007
      %v3632 = vunpack.c.l.b16 %v3008
      %v3633 = vunpack.c.l.b16 %v3009
      %v3634 = vunpack.c.l.b16 %v3010
      %v3635 = vunpack.c.l.b16 %v3011
      %v3636 = vunpack.c.l.b16 %v3012
      %v3637 = vunpack.c.l.b16 %v3013
      %v3638 = vunpack.c.l.b16 %v3014
      %v3639 = vunpack.c.l.b16 %v3015
      %v3640 = vunpack.c.l.b16 %v3016
      %v3641 = vunpack.c.l.b16 %v3017
      %v3642 = vunpack.c.l.b16 %v3018
      %v3643 = vunpack.c.l.b16 %v3019
      %v3644 = vpack.c.b16 %v3613, %v3612
      %v3645 = vpack.c.b16 %v3615, %v3614
      %v3646 = vpack.c.b16 %v3617, %v3616
      %v3647 = vpack.c.b16 %v3619, %v3618
      %v3648 = vpack.c.b16 %v3621, %v3620
      %v3649 = vpack.c.b16 %v3623, %v3622
      %v3650 = vpack.c.b16 %v3625, %v3624
      %v3651 = vpack.c.b16 %v3627, %v3626
      %v3652 = vpack.c.b16 %v3629, %v3628
      %v3653 = vpack.c.b16 %v3631, %v3630
      %v3654 = vpack.c.b16 %v3633, %v3632
      %v3655 = vpack.c.b16 %v3635, %v3634
      %v3656 = vpack.c.b16 %v3637, %v3636
      %v3657 = vpack.c.b16 %v3639, %v3638
      %v3658 = vpack.c.b16 %v3641, %v3640
      %v3659 = vpack.c.b16 %v3643, %v3642
      %v3676 = vunpack.c.l.b16 %v3049
      %v3677 = vunpack.c.l.b16 %v3059
      %v3678 = vunpack.c.l.b16 %v3073
      %v3679 = vunpack.c.l.b16 %v3083
      %v3680 = vunpack.c.l.b16 %v3097
      %v3681 = vunpack.c.l.b16 %v3107
      %v3682 = vunpack.c.l.b16 %v3121
      %v3683 = vunpack.c.l.b16 %v3131
      %v3684 = vunpack.c.l.b16 %v3145
      %v3685 = vunpack.c.l.b16 %v3155
      %v3686 = vunpack.c.l.b16 %v3169
      %v3687 = vunpack.c.l.b16 %v3179
      %v3688 = vunpack.c.l.b16 %v3193
      %v3689 = vunpack.c.l.b16 %v3203
      %v3690 = vunpack.c.l.b16 %v3217
      %v3691 = vunpack.c.l.b16 %v3227
      %v3692 = vunpack.c.l.b16 %v3241
      %v3693 = vunpack.c.l.b16 %v3251
      %v3694 = vunpack.c.l.b16 %v3265
      %v3695 = vunpack.c.l.b16 %v3275
      %v3696 = vunpack.c.l.b16 %v3289
      %v3697 = vunpack.c.l.b16 %v3299
      %v3698 = vunpack.c.l.b16 %v3313
      %v3699 = vunpack.c.l.b16 %v3323
      %v3700 = vunpack.c.l.b16 %v3337
      %v3701 = vunpack.c.l.b16 %v3347
      %v3702 = vunpack.c.l.b16 %v3361
      %v3703 = vunpack.c.l.b16 %v3371
      %v3704 = vunpack.c.l.b16 %v3385
      %v3705 = vunpack.c.l.b16 %v3395
      %v3706 = vunpack.c.l.b16 %v3409
      %v3707 = vunpack.c.l.b16 %v3419
      %v3708 = vpack.c.b16 %v3677, %v3676
      %v3709 = vpack.c.b16 %v3679, %v3678
      %v3710 = vpack.c.b16 %v3681, %v3680
      %v3711 = vpack.c.b16 %v3683, %v3682
      %v3712 = vpack.c.b16 %v3685, %v3684
      %v3713 = vpack.c.b16 %v3687, %v3686
      %v3714 = vpack.c.b16 %v3689, %v3688
      %v3715 = vpack.c.b16 %v3691, %v3690
      %v3716 = vpack.c.b16 %v3693, %v3692
      %v3717 = vpack.c.b16 %v3695, %v3694
      %v3718 = vpack.c.b16 %v3697, %v3696
      %v3719 = vpack.c.b16 %v3699, %v3698
      %v3720 = vpack.c.b16 %v3701, %v3700
      %v3721 = vpack.c.b16 %v3703, %v3702
      %v3722 = vpack.c.b16 %v3705, %v3704
      %v3723 = vpack.c.b16 %v3707, %v3706
      %v3740 = vunpack.c.l.b16 %v3487
      %v3741 = vunpack.c.l.b16 %v3490
      %v3742 = vunpack.c.l.b16 %v3494
      %v3743 = vunpack.c.l.b16 %v3497
      %v3744 = vunpack.c.l.b16 %v3501
      %v3745 = vunpack.c.l.b16 %v3504
      %v3746 = vunpack.c.l.b16 %v3508
      %v3747 = vunpack.c.l.b16 %v3511
      %v3748 = vunpack.c.l.b16 %v3515
      %v3749 = vunpack.c.l.b16 %v3518
      %v3750 = vunpack.c.l.b16 %v3522
      %v3751 = vunpack.c.l.b16 %v3525
      %v3752 = vunpack.c.l.b16 %v3529
      %v3753 = vunpack.c.l.b16 %v3532
      %v3754 = vunpack.c.l.b16 %v3536
      %v3755 = vunpack.c.l.b16 %v3539
      %v3756 = vunpack.c.l.b16 %v3543
      %v3757 = vunpack.c.l.b16 %v3546
      %v3758 = vunpack.c.l.b16 %v3550
      %v3759 = vunpack.c.l.b16 %v3553
      %v3760 = vunpack.c.l.b16 %v3557
      %v3761 = vunpack.c.l.b16 %v3560
      %v3762 = vunpack.c.l.b16 %v3564
      %v3763 = vunpack.c.l.b16 %v3567
      %v3764 = vunpack.c.l.b16 %v3571
      %v3765 = vunpack.c.l.b16 %v3574
      %v3766 = vunpack.c.l.b16 %v3578
      %v3767 = vunpack.c.l.b16 %v3581
      %v3768 = vunpack.c.l.b16 %v3585
      %v3769 = vunpack.c.l.b16 %v3588
      %v3770 = vunpack.c.l.b16 %v3592
      %v3771 = vunpack.c.l.b16 %v3595
      %v3772 = vpack.c.b16 %v3741, %v3740
      %v3773 = vpack.c.b16 %v3743, %v3742
      %v3774 = vpack.c.b16 %v3745, %v3744
      %v3775 = vpack.c.b16 %v3747, %v3746
      %v3776 = vpack.c.b16 %v3749, %v3748
      %v3777 = vpack.c.b16 %v3751, %v3750
      %v3778 = vpack.c.b16 %v3753, %v3752
      %v3779 = vpack.c.b16 %v3755, %v3754
      %v3780 = vpack.c.b16 %v3757, %v3756
      %v3781 = vpack.c.b16 %v3759, %v3758
      %v3782 = vpack.c.b16 %v3761, %v3760
      %v3783 = vpack.c.b16 %v3763, %v3762
      %v3784 = vpack.c.b16 %v3765, %v3764
      %v3785 = vpack.c.b16 %v3767, %v3766
      %v3786 = vpack.c.b16 %v3769, %v3768
      %v3787 = vpack.c.b16 %v3771, %v3770
      %s3804 = scalar_lea.vmem %s1, 384
      %v3805 = vld [vmem:[%s3804] sm:$0xf]
      %v3806 = vld [vmem:[%s3804 + $0x4] sm:$0xf]
      %v3807 = vld [vmem:[%s3804 + $0x8] sm:$0xf]
      %v3808 = vld [vmem:[%s3804 + $0xc] sm:$0xf]
      %v3809 = vld [vmem:[%s3804 + $0x10] sm:$0xf]
      %v3810 = vld [vmem:[%s3804 + $0x14] sm:$0xf]
      %v3811 = vld [vmem:[%s3804 + $0x18] sm:$0xf]
      %v3812 = vld [vmem:[%s3804 + $0x1c] sm:$0xf]
      %v3813 = vld [vmem:[%s3804 + $0x20] sm:$0xf]
      %v3814 = vld [vmem:[%s3804 + $0x24] sm:$0xf]
      %v3815 = vld [vmem:[%s3804 + $0x28] sm:$0xf]
      %v3816 = vld [vmem:[%s3804 + $0x2c] sm:$0xf]
      %v3817 = vld [vmem:[%s3804 + $0x30] sm:$0xf]
      %v3818 = vld [vmem:[%s3804 + $0x34] sm:$0xf]
      %v3819 = vld [vmem:[%s3804 + $0x38] sm:$0xf]
      %v3820 = vld [vmem:[%s3804 + $0x3c] sm:$0xf]
      %v3821 = vld [vmem:[%s3804 + $0x40] sm:$0xf]
      %v3822 = vld [vmem:[%s3804 + $0x44] sm:$0xf]
      %v3823 = vld [vmem:[%s3804 + $0x48] sm:$0xf]
      %v3824 = vld [vmem:[%s3804 + $0x4c] sm:$0xf]
      %v3825 = vld [vmem:[%s3804 + $0x50] sm:$0xf]
      %v3826 = vld [vmem:[%s3804 + $0x54] sm:$0xf]
      %v3827 = vld [vmem:[%s3804 + $0x58] sm:$0xf]
      %v3828 = vld [vmem:[%s3804 + $0x5c] sm:$0xf]
      %v3829 = vld [vmem:[%s3804 + $0x60] sm:$0xf]
      %v3830 = vld [vmem:[%s3804 + $0x64] sm:$0xf]
      %v3831 = vld [vmem:[%s3804 + $0x68] sm:$0xf]
      %v3832 = vld [vmem:[%s3804 + $0x6c] sm:$0xf]
      %v3833 = vld [vmem:[%s3804 + $0x70] sm:$0xf]
      %v3834 = vld [vmem:[%s3804 + $0x74] sm:$0xf]
      %v3835 = vld [vmem:[%s3804 + $0x78] sm:$0xf]
      %v3836 = vld [vmem:[%s3804 + $0x7c] sm:$0xf]
      %v3837 = vld [vmem:[%s3804 + $0x80] sm:$0xf]
      %v3838 = vld [vmem:[%s3804 + $0x84] sm:$0xf]
      %v3839 = vld [vmem:[%s3804 + $0x88] sm:$0xf]
      %v3840 = vld [vmem:[%s3804 + $0x8c] sm:$0xf]
      %v3841 = vld [vmem:[%s3804 + $0x90] sm:$0xf]
      %v3842 = vld [vmem:[%s3804 + $0x94] sm:$0xf]
      %v3843 = vld [vmem:[%s3804 + $0x98] sm:$0xf]
      %v3844 = vld [vmem:[%s3804 + $0x9c] sm:$0xf]
      %v3845 = vld [vmem:[%s3804 + $0xa0] sm:$0xf]
      %v3846 = vld [vmem:[%s3804 + $0xa4] sm:$0xf]
      %v3847 = vld [vmem:[%s3804 + $0xa8] sm:$0xf]
      %v3848 = vld [vmem:[%s3804 + $0xac] sm:$0xf]
      %v3849 = vld [vmem:[%s3804 + $0xb0] sm:$0xf]
      %v3850 = vld [vmem:[%s3804 + $0xb4] sm:$0xf]
      %v3851 = vld [vmem:[%s3804 + $0xb8] sm:$0xf]
      %v3852 = vld [vmem:[%s3804 + $0xbc] sm:$0xf]
      %v3901 = vunpack.c.l.b16 %v3805
      %v3902 = vunpack.c.l.b16 %v3806
      %v3903 = vunpack.c.l.b16 %v3807
      %v3904 = vunpack.c.l.b16 %v3808
      %v3905 = vunpack.c.l.b16 %v3809
      %v3906 = vunpack.c.l.b16 %v3810
      %v3907 = vunpack.c.l.b16 %v3811
      %v3908 = vunpack.c.l.b16 %v3812
      %v3909 = vunpack.c.l.b16 %v3813
      %v3910 = vunpack.c.l.b16 %v3814
      %v3911 = vunpack.c.l.b16 %v3815
      %v3912 = vunpack.c.l.b16 %v3816
      %v3913 = vunpack.c.l.b16 %v3817
      %v3914 = vunpack.c.l.b16 %v3818
      %v3915 = vunpack.c.l.b16 %v3819
      %v3916 = vunpack.c.l.b16 %v3820
      %v3917 = vunpack.c.l.b16 %v3821
      %v3918 = vunpack.c.l.b16 %v3822
      %v3919 = vunpack.c.l.b16 %v3823
      %v3920 = vunpack.c.l.b16 %v3824
      %v3921 = vunpack.c.l.b16 %v3825
      %v3922 = vunpack.c.l.b16 %v3826
      %v3923 = vunpack.c.l.b16 %v3827
      %v3924 = vunpack.c.l.b16 %v3828
      %v3925 = vunpack.c.l.b16 %v3829
      %v3926 = vunpack.c.l.b16 %v3830
      %v3927 = vunpack.c.l.b16 %v3831
      %v3928 = vunpack.c.l.b16 %v3832
      %v3929 = vunpack.c.l.b16 %v3833
      %v3930 = vunpack.c.l.b16 %v3834
      %v3931 = vunpack.c.l.b16 %v3835
      %v3932 = vunpack.c.l.b16 %v3836
      %v3933 = vunpack.c.l.b16 %v3837
      %v3934 = vunpack.c.l.b16 %v3838
      %v3935 = vunpack.c.l.b16 %v3839
      %v3936 = vunpack.c.l.b16 %v3840
      %v3937 = vunpack.c.l.b16 %v3841
      %v3938 = vunpack.c.l.b16 %v3842
      %v3939 = vunpack.c.l.b16 %v3843
      %v3940 = vunpack.c.l.b16 %v3844
      %v3941 = vunpack.c.l.b16 %v3845
      %v3942 = vunpack.c.l.b16 %v3846
      %v3943 = vunpack.c.l.b16 %v3847
      %v3944 = vunpack.c.l.b16 %v3848
      %v3945 = vunpack.c.l.b16 %v3849
      %v3946 = vunpack.c.l.b16 %v3850
      %v3947 = vunpack.c.l.b16 %v3851
      %v3948 = vunpack.c.l.b16 %v3852
      %v3949 = vpack.c.b16 %v3902, %v3901
      %v3950 = vpack.c.b16 %v3904, %v3903
      %v3951 = vpack.c.b16 %v3906, %v3905
      %v3952 = vpack.c.b16 %v3908, %v3907
      %v3953 = vpack.c.b16 %v3910, %v3909
      %v3954 = vpack.c.b16 %v3912, %v3911
      %v3955 = vpack.c.b16 %v3914, %v3913
      %v3956 = vpack.c.b16 %v3916, %v3915
      %v3957 = vpack.c.b16 %v3918, %v3917
      %v3958 = vpack.c.b16 %v3920, %v3919
      %v3959 = vpack.c.b16 %v3922, %v3921
      %v3960 = vpack.c.b16 %v3924, %v3923
      %v3961 = vpack.c.b16 %v3926, %v3925
      %v3962 = vpack.c.b16 %v3928, %v3927
      %v3963 = vpack.c.b16 %v3930, %v3929
      %v3964 = vpack.c.b16 %v3932, %v3931
      %v3965 = vpack.c.b16 %v3934, %v3933
      %v3966 = vpack.c.b16 %v3936, %v3935
      %v3967 = vpack.c.b16 %v3938, %v3937
      %v3968 = vpack.c.b16 %v3940, %v3939
      %v3969 = vpack.c.b16 %v3942, %v3941
      %v3970 = vpack.c.b16 %v3944, %v3943
      %v3971 = vpack.c.b16 %v3946, %v3945
      %v3972 = vpack.c.b16 %v3948, %v3947
      %3997 = vmatprep.subr.bf16.mxu0 0
      %3998 = vmatpush1.bf16.msra.mxu0 %v3956
      %3999 = vmatprep.subr.bf16.mxu0 0
      %4000 = vmatpush1.bf16.msra.mxu0 %v3955
      %4001 = vmatprep.subr.bf16.mxu0 0
      %4002 = vmatpush1.bf16.msra.mxu0 %v3954
      %4003 = vmatprep.subr.bf16.mxu0 0
      %4004 = vmatpush1.bf16.msra.mxu0 %v3953
      %4005 = vmatprep.subr.bf16.mxu0 0
      %4006 = vmatpush1.bf16.msra.mxu0 %v3952
      %4007 = vmatprep.subr.bf16.mxu0 0
      %4008 = vmatpush1.bf16.msra.mxu0 %v3951
      %4009 = vmatprep.subr.bf16.mxu0 0
      %4010 = vmatpush1.bf16.msra.mxu0 %v3950
      %4011 = vmatprep.subr.bf16.mxu0 0
      %4012 = vmatpush1.bf16.msra.mxu0 %v3949
      %4013 = vmatprep.subr.bf16.mxu0 0
      %4014 = vmatpush2.bf16.msra.mxu0 %v3964
      %4015 = vmatprep.subr.bf16.mxu0 0
      %4016 = vmatpush2.bf16.msra.mxu0 %v3963
      %4017 = vmatprep.subr.bf16.mxu0 0
      %4018 = vmatpush2.bf16.msra.mxu0 %v3962
      %4019 = vmatprep.subr.bf16.mxu0 0
      %4020 = vmatpush2.bf16.msra.mxu0 %v3961
      %4021 = vmatprep.subr.bf16.mxu0 0
      %4022 = vmatpush2.bf16.msra.mxu0 %v3960
      %4023 = vmatprep.subr.bf16.mxu0 0
      %4024 = vmatpush2.bf16.msra.mxu0 %v3959
      %4025 = vmatprep.subr.bf16.mxu0 0
      %4026 = vmatpush2.bf16.msra.mxu0 %v3958
      %4027 = vmatprep.subr.bf16.mxu0 0
      %4028 = vmatpush2.bf16.msra.mxu0 %v3957
      %4029 = vmatprep.mubr.bf16.mxu0 %v3708
      %4030 = vmatmul.mubr.bf16.gmra.mxu0 %v3644
      %v4031 = vpop.f32.mrf.mxu0
      %v4032 = vadd.f32 0.0, %v4031
      %v4033 = vpop.f32.mrf.mxu0
      %v4034 = vpop.f32.mrf.mxu0
      %v4035 = vadd.f32 0.0, %v4034
      %v4036 = vpop.f32.mrf.mxu0
      %4037 = vmatprep.mubr.bf16.mxu0 %v3709
      %4038 = vmatmul.mubr.bf16.gmra.mxu0 %v3645
      %v4039 = vpop.f32.mrf.mxu0
      %v4040 = vadd.f32 0.0, %v4039
      %v4041 = vpop.f32.mrf.mxu0
      %v4042 = vpop.f32.mrf.mxu0
      %v4043 = vadd.f32 0.0, %v4042
      %v4044 = vpop.f32.mrf.mxu0
      %4045 = vmatprep.mubr.bf16.mxu0 %v3710
      %4046 = vmatmul.mubr.bf16.gmra.mxu0 %v3646
      %v4047 = vpop.f32.mrf.mxu0
      %v4048 = vadd.f32 0.0, %v4047
      %v4049 = vpop.f32.mrf.mxu0
      %v4050 = vpop.f32.mrf.mxu0
      %v4051 = vadd.f32 0.0, %v4050
      %v4052 = vpop.f32.mrf.mxu0
      %4053 = vmatprep.mubr.bf16.mxu0 %v3711
      %4054 = vmatmul.mubr.bf16.gmra.mxu0 %v3647
      %v4055 = vpop.f32.mrf.mxu0
      %v4056 = vadd.f32 0.0, %v4055
      %v4057 = vpop.f32.mrf.mxu0
      %v4058 = vpop.f32.mrf.mxu0
      %v4059 = vadd.f32 0.0, %v4058
      %v4060 = vpop.f32.mrf.mxu0
      %4061 = vmatprep.mubr.bf16.mxu0 %v3712
      %4062 = vmatmul.mubr.bf16.gmra.mxu0 %v3648
      %v4063 = vpop.f32.mrf.mxu0
      %v4064 = vadd.f32 0.0, %v4063
      %v4065 = vpop.f32.mrf.mxu0
      %v4066 = vpop.f32.mrf.mxu0
      %v4067 = vadd.f32 0.0, %v4066
      %v4068 = vpop.f32.mrf.mxu0
      %4069 = vmatprep.mubr.bf16.mxu0 %v3713
      %4070 = vmatmul.mubr.bf16.gmra.mxu0 %v3649
      %v4071 = vpop.f32.mrf.mxu0
      %v4072 = vadd.f32 0.0, %v4071
      %v4073 = vpop.f32.mrf.mxu0
      %v4074 = vpop.f32.mrf.mxu0
      %v4075 = vadd.f32 0.0, %v4074
      %v4076 = vpop.f32.mrf.mxu0
      %4077 = vmatprep.mubr.bf16.mxu0 %v3714
      %4078 = vmatmul.mubr.bf16.gmra.mxu0 %v3650
      %v4079 = vpop.f32.mrf.mxu0
      %v4080 = vadd.f32 0.0, %v4079
      %v4081 = vpop.f32.mrf.mxu0
      %v4082 = vpop.f32.mrf.mxu0
      %v4083 = vadd.f32 0.0, %v4082
      %v4084 = vpop.f32.mrf.mxu0
      %4085 = vmatprep.mubr.bf16.mxu0 %v3715
      %4086 = vmatmul.mubr.bf16.gmra.mxu0 %v3651
      %v4087 = vpop.f32.mrf.mxu0
      %v4088 = vadd.f32 0.0, %v4087
      %v4089 = vpop.f32.mrf.mxu0
      %v4090 = vpop.f32.mrf.mxu0
      %v4091 = vadd.f32 0.0, %v4090
      %v4092 = vpop.f32.mrf.mxu0
      %4093 = vmatprep.mubr.bf16.mxu0 %v3716
      %4094 = vmatmul.mubr.bf16.gmra.mxu0 %v3652
      %v4095 = vpop.f32.mrf.mxu0
      %v4096 = vadd.f32 0.0, %v4095
      %v4097 = vpop.f32.mrf.mxu0
      %v4098 = vpop.f32.mrf.mxu0
      %v4099 = vadd.f32 0.0, %v4098
      %v4100 = vpop.f32.mrf.mxu0
      %4101 = vmatprep.mubr.bf16.mxu0 %v3717
      %4102 = vmatmul.mubr.bf16.gmra.mxu0 %v3653
      %v4103 = vpop.f32.mrf.mxu0
      %v4104 = vadd.f32 0.0, %v4103
      %v4105 = vpop.f32.mrf.mxu0
      %v4106 = vpop.f32.mrf.mxu0
      %v4107 = vadd.f32 0.0, %v4106
      %v4108 = vpop.f32.mrf.mxu0
      %4109 = vmatprep.mubr.bf16.mxu0 %v3718
      %4110 = vmatmul.mubr.bf16.gmra.mxu0 %v3654
      %v4111 = vpop.f32.mrf.mxu0
      %v4112 = vadd.f32 0.0, %v4111
      %v4113 = vpop.f32.mrf.mxu0
      %v4114 = vpop.f32.mrf.mxu0
      %v4115 = vadd.f32 0.0, %v4114
      %v4116 = vpop.f32.mrf.mxu0
      %4117 = vmatprep.mubr.bf16.mxu0 %v3719
      %4118 = vmatmul.mubr.bf16.gmra.mxu0 %v3655
      %v4119 = vpop.f32.mrf.mxu0
      %v4120 = vadd.f32 0.0, %v4119
      %v4121 = vpop.f32.mrf.mxu0
      %v4122 = vpop.f32.mrf.mxu0
      %v4123 = vadd.f32 0.0, %v4122
      %v4124 = vpop.f32.mrf.mxu0
      %4125 = vmatprep.mubr.bf16.mxu0 %v3720
      %4126 = vmatmul.mubr.bf16.gmra.mxu0 %v3656
      %v4127 = vpop.f32.mrf.mxu0
      %v4128 = vadd.f32 0.0, %v4127
      %v4129 = vpop.f32.mrf.mxu0
      %v4130 = vpop.f32.mrf.mxu0
      %v4131 = vadd.f32 0.0, %v4130
      %v4132 = vpop.f32.mrf.mxu0
      %4133 = vmatprep.mubr.bf16.mxu0 %v3721
      %4134 = vmatmul.mubr.bf16.gmra.mxu0 %v3657
      %v4135 = vpop.f32.mrf.mxu0
      %v4136 = vadd.f32 0.0, %v4135
      %v4137 = vpop.f32.mrf.mxu0
      %v4138 = vpop.f32.mrf.mxu0
      %v4139 = vadd.f32 0.0, %v4138
      %v4140 = vpop.f32.mrf.mxu0
      %4141 = vmatprep.mubr.bf16.mxu0 %v3722
      %4142 = vmatmul.mubr.bf16.gmra.mxu0 %v3658
      %v4143 = vpop.f32.mrf.mxu0
      %v4144 = vadd.f32 0.0, %v4143
      %v4145 = vpop.f32.mrf.mxu0
      %v4146 = vpop.f32.mrf.mxu0
      %v4147 = vadd.f32 0.0, %v4146
      %v4148 = vpop.f32.mrf.mxu0
      %4149 = vmatprep.mubr.bf16.mxu0 %v3723
      %4150 = vmatmul.mubr.bf16.gmra.mxu0 %v3659
      %v4151 = vpop.f32.mrf.mxu0
      %v4152 = vadd.f32 0.0, %v4151
      %v4153 = vpop.f32.mrf.mxu0
      %v4154 = vpop.f32.mrf.mxu0
      %v4155 = vadd.f32 0.0, %v4154
      %v4156 = vpop.f32.mrf.mxu0
      %4157 = vdwg.mxu0
      %4158 = vmatprep.subr.bf16.mxu0 0
      %4159 = vmatpush1.bf16.msra.mxu0 %v3972
      %4160 = vmatprep.subr.bf16.mxu0 0
      %4161 = vmatpush1.bf16.msra.mxu0 %v3971
      %4162 = vmatprep.subr.bf16.mxu0 0
      %4163 = vmatpush1.bf16.msra.mxu0 %v3970
      %4164 = vmatprep.subr.bf16.mxu0 0
      %4165 = vmatpush1.bf16.msra.mxu0 %v3969
      %4166 = vmatprep.subr.bf16.mxu0 0
      %4167 = vmatpush1.bf16.msra.mxu0 %v3968
      %4168 = vmatprep.subr.bf16.mxu0 0
      %4169 = vmatpush1.bf16.msra.mxu0 %v3967
      %4170 = vmatprep.subr.bf16.mxu0 0
      %4171 = vmatpush1.bf16.msra.mxu0 %v3966
      %4172 = vmatprep.subr.bf16.mxu0 0
      %4173 = vmatpush1.bf16.msra.mxu0 %v3965
      %4174 = vmatprep.subr.bf16.mxu0 0
      %4175 = vmatpush2.bf16.msra.mxu0 0
      %4176 = vmatprep.subr.bf16.mxu0 0
      %4177 = vmatpush2.bf16.msra.mxu0 0
      %4178 = vmatprep.subr.bf16.mxu0 0
      %4179 = vmatpush2.bf16.msra.mxu0 0
      %4180 = vmatprep.subr.bf16.mxu0 0
      %4181 = vmatpush2.bf16.msra.mxu0 0
      %4182 = vmatprep.subr.bf16.mxu0 0
      %4183 = vmatpush2.bf16.msra.mxu0 0
      %4184 = vmatprep.subr.bf16.mxu0 0
      %4185 = vmatpush2.bf16.msra.mxu0 0
      %4186 = vmatprep.subr.bf16.mxu0 0
      %4187 = vmatpush2.bf16.msra.mxu0 0
      %4188 = vmatprep.subr.bf16.mxu0 0
      %4189 = vmatpush2.bf16.msra.mxu0 0
      %4190 = vmatprep.mubr.bf16.mxu0 0
      %4191 = vmatmul.mubr.bf16.gmra.mxu0 %v3772
      %v4192 = vpop.f32.mrf.mxu0
      %v4193 = vadd.f32 %v4032, %v4192
      %v4194 = vpop.f32.mrf.mxu0
      %v4195 = vpop.f32.mrf.mxu0
      %v4196 = vadd.f32 %v4035, %v4195
      %v4197 = vpop.f32.mrf.mxu0
      %4198 = vmatprep.mubr.bf16.mxu0 0
      %4199 = vmatmul.mubr.bf16.gmra.mxu0 %v3773
      %v4200 = vpop.f32.mrf.mxu0
      %v4201 = vadd.f32 %v4040, %v4200
      %v4202 = vpop.f32.mrf.mxu0
      %v4203 = vpop.f32.mrf.mxu0
      %v4204 = vadd.f32 %v4043, %v4203
      %v4205 = vpop.f32.mrf.mxu0
      %4206 = vmatprep.mubr.bf16.mxu0 0
      %4207 = vmatmul.mubr.bf16.gmra.mxu0 %v3774
      %v4208 = vpop.f32.mrf.mxu0
      %v4209 = vadd.f32 %v4048, %v4208
      %v4210 = vpop.f32.mrf.mxu0
      %v4211 = vpop.f32.mrf.mxu0
      %v4212 = vadd.f32 %v4051, %v4211
      %v4213 = vpop.f32.mrf.mxu0
      %4214 = vmatprep.mubr.bf16.mxu0 0
      %4215 = vmatmul.mubr.bf16.gmra.mxu0 %v3775
      %v4216 = vpop.f32.mrf.mxu0
      %v4217 = vadd.f32 %v4056, %v4216
      %v4218 = vpop.f32.mrf.mxu0
      %v4219 = vpop.f32.mrf.mxu0
      %v4220 = vadd.f32 %v4059, %v4219
      %v4221 = vpop.f32.mrf.mxu0
      %4222 = vmatprep.mubr.bf16.mxu0 0
      %4223 = vmatmul.mubr.bf16.gmra.mxu0 %v3776
      %v4224 = vpop.f32.mrf.mxu0
      %v4225 = vadd.f32 %v4064, %v4224
      %v4226 = vpop.f32.mrf.mxu0
      %v4227 = vpop.f32.mrf.mxu0
      %v4228 = vadd.f32 %v4067, %v4227
      %v4229 = vpop.f32.mrf.mxu0
      %4230 = vmatprep.mubr.bf16.mxu0 0
      %4231 = vmatmul.mubr.bf16.gmra.mxu0 %v3777
      %v4232 = vpop.f32.mrf.mxu0
      %v4233 = vadd.f32 %v4072, %v4232
      %v4234 = vpop.f32.mrf.mxu0
      %v4235 = vpop.f32.mrf.mxu0
      %v4236 = vadd.f32 %v4075, %v4235
      %v4237 = vpop.f32.mrf.mxu0
      %4238 = vmatprep.mubr.bf16.mxu0 0
      %4239 = vmatmul.mubr.bf16.gmra.mxu0 %v3778
      %v4240 = vpop.f32.mrf.mxu0
      %v4241 = vadd.f32 %v4080, %v4240
      %v4242 = vpop.f32.mrf.mxu0
      %v4243 = vpop.f32.mrf.mxu0
      %v4244 = vadd.f32 %v4083, %v4243
      %v4245 = vpop.f32.mrf.mxu0
      %4246 = vmatprep.mubr.bf16.mxu0 0
      %4247 = vmatmul.mubr.bf16.gmra.mxu0 %v3779
      %v4248 = vpop.f32.mrf.mxu0
      %v4249 = vadd.f32 %v4088, %v4248
      %v4250 = vpop.f32.mrf.mxu0
      %v4251 = vpop.f32.mrf.mxu0
      %v4252 = vadd.f32 %v4091, %v4251
      %v4253 = vpop.f32.mrf.mxu0
      %4254 = vmatprep.mubr.bf16.mxu0 0
      %4255 = vmatmul.mubr.bf16.gmra.mxu0 %v3780
      %v4256 = vpop.f32.mrf.mxu0
      %v4257 = vadd.f32 %v4096, %v4256
      %v4258 = vpop.f32.mrf.mxu0
      %v4259 = vpop.f32.mrf.mxu0
      %v4260 = vadd.f32 %v4099, %v4259
      %v4261 = vpop.f32.mrf.mxu0
      %4262 = vmatprep.mubr.bf16.mxu0 0
      %4263 = vmatmul.mubr.bf16.gmra.mxu0 %v3781
      %v4264 = vpop.f32.mrf.mxu0
      %v4265 = vadd.f32 %v4104, %v4264
      %v4266 = vpop.f32.mrf.mxu0
      %v4267 = vpop.f32.mrf.mxu0
      %v4268 = vadd.f32 %v4107, %v4267
      %v4269 = vpop.f32.mrf.mxu0
      %4270 = vmatprep.mubr.bf16.mxu0 0
      %4271 = vmatmul.mubr.bf16.gmra.mxu0 %v3782
      %v4272 = vpop.f32.mrf.mxu0
      %v4273 = vadd.f32 %v4112, %v4272
      %v4274 = vpop.f32.mrf.mxu0
      %v4275 = vpop.f32.mrf.mxu0
      %v4276 = vadd.f32 %v4115, %v4275
      %v4277 = vpop.f32.mrf.mxu0
      %4278 = vmatprep.mubr.bf16.mxu0 0
      %4279 = vmatmul.mubr.bf16.gmra.mxu0 %v3783
      %v4280 = vpop.f32.mrf.mxu0
      %v4281 = vadd.f32 %v4120, %v4280
      %v4282 = vpop.f32.mrf.mxu0
      %v4283 = vpop.f32.mrf.mxu0
      %v4284 = vadd.f32 %v4123, %v4283
      %v4285 = vpop.f32.mrf.mxu0
      %4286 = vmatprep.mubr.bf16.mxu0 0
      %4287 = vmatmul.mubr.bf16.gmra.mxu0 %v3784
      %v4288 = vpop.f32.mrf.mxu0
      %v4289 = vadd.f32 %v4128, %v4288
      %v4290 = vpop.f32.mrf.mxu0
      %v4291 = vpop.f32.mrf.mxu0
      %v4292 = vadd.f32 %v4131, %v4291
      %v4293 = vpop.f32.mrf.mxu0
      %4294 = vmatprep.mubr.bf16.mxu0 0
      %4295 = vmatmul.mubr.bf16.gmra.mxu0 %v3785
      %v4296 = vpop.f32.mrf.mxu0
      %v4297 = vadd.f32 %v4136, %v4296
      %v4298 = vpop.f32.mrf.mxu0
      %v4299 = vpop.f32.mrf.mxu0
      %v4300 = vadd.f32 %v4139, %v4299
      %v4301 = vpop.f32.mrf.mxu0
      %4302 = vmatprep.mubr.bf16.mxu0 0
      %4303 = vmatmul.mubr.bf16.gmra.mxu0 %v3786
      %v4304 = vpop.f32.mrf.mxu0
      %v4305 = vadd.f32 %v4144, %v4304
      %v4306 = vpop.f32.mrf.mxu0
      %v4307 = vpop.f32.mrf.mxu0
      %v4308 = vadd.f32 %v4147, %v4307
      %v4309 = vpop.f32.mrf.mxu0
      %4310 = vmatprep.mubr.bf16.mxu0 0
      %4311 = vmatmul.mubr.bf16.gmra.mxu0 %v3787
      %v4312 = vpop.f32.mrf.mxu0
      %v4313 = vadd.f32 %v4152, %v4312
      %v4314 = vpop.f32.mrf.mxu0
      %v4315 = vpop.f32.mrf.mxu0
      %v4316 = vadd.f32 %v4155, %v4315
      %v4317 = vpop.f32.mrf.mxu0
      %4318 = vdwg.mxu0
      %v4319 = vadd.f32 %v2955, %v4193
      %v4320 = vadd.f32 %v2956, %v4196
      %v4321 = vadd.f32 %v2957, %v4201
      %v4322 = vadd.f32 %v2958, %v4204
      %v4323 = vadd.f32 %v2959, %v4209
      %v4324 = vadd.f32 %v2960, %v4212
      %v4325 = vadd.f32 %v2961, %v4217
      %v4326 = vadd.f32 %v2962, %v4220
      %v4327 = vadd.f32 %v2963, %v4225
      %v4328 = vadd.f32 %v2964, %v4228
      %v4329 = vadd.f32 %v2965, %v4233
      %v4330 = vadd.f32 %v2966, %v4236
      %v4331 = vadd.f32 %v2967, %v4241
      %v4332 = vadd.f32 %v2968, %v4244
      %v4333 = vadd.f32 %v2969, %v4249
      %v4334 = vadd.f32 %v2970, %v4252
      %v4335 = vadd.f32 %v2971, %v4257
      %v4336 = vadd.f32 %v2972, %v4260
      %v4337 = vadd.f32 %v2973, %v4265
      %v4338 = vadd.f32 %v2974, %v4268
      %v4339 = vadd.f32 %v2975, %v4273
      %v4340 = vadd.f32 %v2976, %v4276
      %v4341 = vadd.f32 %v2977, %v4281
      %v4342 = vadd.f32 %v2978, %v4284
      %v4343 = vadd.f32 %v2979, %v4289
      %v4344 = vadd.f32 %v2980, %v4292
      %v4345 = vadd.f32 %v2981, %v4297
      %v4346 = vadd.f32 %v2982, %v4300
      %v4347 = vadd.f32 %v2983, %v4305
      %v4348 = vadd.f32 %v2984, %v4308
      %v4349 = vadd.f32 %v2985, %v4313
      %v4350 = vadd.f32 %v2986, %v4316
      %v4351 = vmax.f32 %v4319, 0.0
      %v4352 = vmax.f32 %v4320, 0.0
      %v4353 = vmax.f32 %v4321, 0.0
      %v4354 = vmax.f32 %v4322, 0.0
      %v4355 = vmax.f32 %v4323, 0.0
      %v4356 = vmax.f32 %v4324, 0.0
      %v4357 = vmax.f32 %v4325, 0.0
      %v4358 = vmax.f32 %v4326, 0.0
      %v4359 = vmax.f32 %v4327, 0.0
      %v4360 = vmax.f32 %v4328, 0.0
      %v4361 = vmax.f32 %v4329, 0.0
      %v4362 = vmax.f32 %v4330, 0.0
      %v4363 = vmax.f32 %v4331, 0.0
      %v4364 = vmax.f32 %v4332, 0.0
      %v4365 = vmax.f32 %v4333, 0.0
      %v4366 = vmax.f32 %v4334, 0.0
      %v4367 = vmax.f32 %v4335, 0.0
      %v4368 = vmax.f32 %v4336, 0.0
      %v4369 = vmax.f32 %v4337, 0.0
      %v4370 = vmax.f32 %v4338, 0.0
      %v4371 = vmax.f32 %v4339, 0.0
      %v4372 = vmax.f32 %v4340, 0.0
      %v4373 = vmax.f32 %v4341, 0.0
      %v4374 = vmax.f32 %v4342, 0.0
      %v4375 = vmax.f32 %v4343, 0.0
      %v4376 = vmax.f32 %v4344, 0.0
      %v4377 = vmax.f32 %v4345, 0.0
      %v4378 = vmax.f32 %v4346, 0.0
      %v4379 = vmax.f32 %v4347, 0.0
      %v4380 = vmax.f32 %v4348, 0.0
      %v4381 = vmax.f32 %v4349, 0.0
      %v4382 = vmax.f32 %v4350, 0.0
      %4383 = vst [vmem:[#allocation2] sm:$0xf] 0
      %4384 = vst [vmem:[#allocation2 + $0x4] sm:$0xf] 0
      %4385 = vst [vmem:[#allocation2 + $0x8] sm:$0x1] 0
      %s4386 = scalar_lea.vmem [#allocation2], 204
      %4387 = vst [vmem:[%s4386] sm:$0xf] 0
      %4388 = vst [vmem:[%s4386 + $0x4] sm:$0xf] 0
      %4389 = vst [vmem:[%s4386 + $0x8] sm:$0x1] 0
      %s4390 = scalar_lea.vmem [#allocation2], 12
      %vm4391 = vcmask 1040384
      %vm4392 = vsmask.f32 256
      %vm4393 = vmand %vm4391, %vm4392
      %v4394 = vld [vmem:[%s4390] sm:$0x1]
      %v4395 = vsel %vm4393, 0, %v4394
      %4396 = vst [vmem:[%s4390] sm:$0x1] %v4395
      %v4397 = vld [vmem:[%s4390 + $0xc] sm:$0x1]
      %v4398 = vsel %vm4393, 0, %v4397
      %4399 = vst [vmem:[%s4390 + $0xc] sm:$0x1] %v4398
      %v4400 = vld [vmem:[%s4390 + $0x18] sm:$0x1]
      %v4401 = vsel %vm4393, 0, %v4400
      %4402 = vst [vmem:[%s4390 + $0x18] sm:$0x1] %v4401
      %v4403 = vld [vmem:[%s4390 + $0x24] sm:$0x1]
      %v4404 = vsel %vm4393, 0, %v4403
      %4405 = vst [vmem:[%s4390 + $0x24] sm:$0x1] %v4404
      %v4406 = vld [vmem:[%s4390 + $0x30] sm:$0x1]
      %v4407 = vsel %vm4393, 0, %v4406
      %4408 = vst [vmem:[%s4390 + $0x30] sm:$0x1] %v4407
      %v4409 = vld [vmem:[%s4390 + $0x3c] sm:$0x1]
      %v4410 = vsel %vm4393, 0, %v4409
      %4411 = vst [vmem:[%s4390 + $0x3c] sm:$0x1] %v4410
      %v4412 = vld [vmem:[%s4390 + $0x48] sm:$0x1]
      %v4413 = vsel %vm4393, 0, %v4412
      %4414 = vst [vmem:[%s4390 + $0x48] sm:$0x1] %v4413
      %v4415 = vld [vmem:[%s4390 + $0x54] sm:$0x1]
      %v4416 = vsel %vm4393, 0, %v4415
      %4417 = vst [vmem:[%s4390 + $0x54] sm:$0x1] %v4416
      %v4418 = vld [vmem:[%s4390 + $0x60] sm:$0x1]
      %v4419 = vsel %vm4393, 0, %v4418
      %4420 = vst [vmem:[%s4390 + $0x60] sm:$0x1] %v4419
      %v4421 = vld [vmem:[%s4390 + $0x6c] sm:$0x1]
      %v4422 = vsel %vm4393, 0, %v4421
      %4423 = vst [vmem:[%s4390 + $0x6c] sm:$0x1] %v4422
      %v4424 = vld [vmem:[%s4390 + $0x78] sm:$0x1]
      %v4425 = vsel %vm4393, 0, %v4424
      %4426 = vst [vmem:[%s4390 + $0x78] sm:$0x1] %v4425
      %v4427 = vld [vmem:[%s4390 + $0x84] sm:$0x1]
      %v4428 = vsel %vm4393, 0, %v4427
      %4429 = vst [vmem:[%s4390 + $0x84] sm:$0x1] %v4428
      %v4430 = vld [vmem:[%s4390 + $0x90] sm:$0x1]
      %v4431 = vsel %vm4393, 0, %v4430
      %4432 = vst [vmem:[%s4390 + $0x90] sm:$0x1] %v4431
      %v4433 = vld [vmem:[%s4390 + $0x9c] sm:$0x1]
      %v4434 = vsel %vm4393, 0, %v4433
      %4435 = vst [vmem:[%s4390 + $0x9c] sm:$0x1] %v4434
      %v4436 = vld [vmem:[%s4390 + $0xa8] sm:$0x1]
      %v4437 = vsel %vm4393, 0, %v4436
      %4438 = vst [vmem:[%s4390 + $0xa8] sm:$0x1] %v4437
      %v4439 = vld [vmem:[%s4390 + $0xb4] sm:$0x1]
      %v4440 = vsel %vm4393, 0, %v4439
      %4441 = vst [vmem:[%s4390 + $0xb4] sm:$0x1] %v4440
      %vm4442 = vsmask.f32 7938
      %vm4443 = vmand %vm4391, %vm4442
      %v4444 = vld [vmem:[%s4390 + $0x8] sm:$0x1]
      %v4445 = vsel %vm4443, 0, %v4444
      %4446 = vst [vmem:[%s4390 + $0x8] sm:$0x1] %v4445
      %v4447 = vld [vmem:[%s4390 + $0x14] sm:$0x1]
      %v4448 = vsel %vm4443, 0, %v4447
      %4449 = vst [vmem:[%s4390 + $0x14] sm:$0x1] %v4448
      %v4450 = vld [vmem:[%s4390 + $0x20] sm:$0x1]
      %v4451 = vsel %vm4443, 0, %v4450
      %4452 = vst [vmem:[%s4390 + $0x20] sm:$0x1] %v4451
      %v4453 = vld [vmem:[%s4390 + $0x2c] sm:$0x1]
      %v4454 = vsel %vm4443, 0, %v4453
      %4455 = vst [vmem:[%s4390 + $0x2c] sm:$0x1] %v4454
      %v4456 = vld [vmem:[%s4390 + $0x38] sm:$0x1]
      %v4457 = vsel %vm4443, 0, %v4456
      %4458 = vst [vmem:[%s4390 + $0x38] sm:$0x1] %v4457
      %v4459 = vld [vmem:[%s4390 + $0x44] sm:$0x1]
      %v4460 = vsel %vm4443, 0, %v4459
      %4461 = vst [vmem:[%s4390 + $0x44] sm:$0x1] %v4460
      %v4462 = vld [vmem:[%s4390 + $0x50] sm:$0x1]
      %v4463 = vsel %vm4443, 0, %v4462
      %4464 = vst [vmem:[%s4390 + $0x50] sm:$0x1] %v4463
      %v4465 = vld [vmem:[%s4390 + $0x5c] sm:$0x1]
      %v4466 = vsel %vm4443, 0, %v4465
      %4467 = vst [vmem:[%s4390 + $0x5c] sm:$0x1] %v4466
      %v4468 = vld [vmem:[%s4390 + $0x68] sm:$0x1]
      %v4469 = vsel %vm4443, 0, %v4468
      %4470 = vst [vmem:[%s4390 + $0x68] sm:$0x1] %v4469
      %v4471 = vld [vmem:[%s4390 + $0x74] sm:$0x1]
      %v4472 = vsel %vm4443, 0, %v4471
      %4473 = vst [vmem:[%s4390 + $0x74] sm:$0x1] %v4472
      %v4474 = vld [vmem:[%s4390 + $0x80] sm:$0x1]
      %v4475 = vsel %vm4443, 0, %v4474
      %4476 = vst [vmem:[%s4390 + $0x80] sm:$0x1] %v4475
      %v4477 = vld [vmem:[%s4390 + $0x8c] sm:$0x1]
      %v4478 = vsel %vm4443, 0, %v4477
      %4479 = vst [vmem:[%s4390 + $0x8c] sm:$0x1] %v4478
      %v4480 = vld [vmem:[%s4390 + $0x98] sm:$0x1]
      %v4481 = vsel %vm4443, 0, %v4480
      %4482 = vst [vmem:[%s4390 + $0x98] sm:$0x1] %v4481
      %v4483 = vld [vmem:[%s4390 + $0xa4] sm:$0x1]
      %v4484 = vsel %vm4443, 0, %v4483
      %4485 = vst [vmem:[%s4390 + $0xa4] sm:$0x1] %v4484
      %v4486 = vld [vmem:[%s4390 + $0xb0] sm:$0x1]
      %v4487 = vsel %vm4443, 0, %v4486
      %4488 = vst [vmem:[%s4390 + $0xb0] sm:$0x1] %v4487
      %v4489 = vld [vmem:[%s4390 + $0xbc] sm:$0x1]
      %v4490 = vsel %vm4443, 0, %v4489
      %4491 = vst [vmem:[%s4390 + $0xbc] sm:$0x1] %v4490
      %v4492 = vpack.c.bf16 %v4352, %v4351
      %v4493 = vpack.c.bf16 %v4354, %v4353
      %v4494 = vpack.c.bf16 %v4356, %v4355
      %v4495 = vpack.c.bf16 %v4358, %v4357
      %v4496 = vpack.c.bf16 %v4360, %v4359
      %v4497 = vpack.c.bf16 %v4362, %v4361
      %v4498 = vpack.c.bf16 %v4364, %v4363
      %v4499 = vpack.c.bf16 %v4366, %v4365
      %v4500 = vpack.c.bf16 %v4368, %v4367
      %v4501 = vpack.c.bf16 %v4370, %v4369
      %v4502 = vpack.c.bf16 %v4372, %v4371
      %v4503 = vpack.c.bf16 %v4374, %v4373
      %v4504 = vpack.c.bf16 %v4376, %v4375
      %v4505 = vpack.c.bf16 %v4378, %v4377
      %v4506 = vpack.c.bf16 %v4380, %v4379
      %v4507 = vpack.c.bf16 %v4382, %v4381
      %v4524 = vunpack.c.l.b16 %v4492
      %v4525 = vunpack.c.h.b16 %v4492
      %v4526 = vunpack.c.l.b16 %v4493
      %v4527 = vunpack.c.h.b16 %v4493
      %v4528 = vunpack.c.l.b16 %v4494
      %v4529 = vunpack.c.h.b16 %v4494
      %v4530 = vunpack.c.l.b16 %v4495
      %v4531 = vunpack.c.h.b16 %v4495
      %v4532 = vunpack.c.l.b16 %v4496
      %v4533 = vunpack.c.h.b16 %v4496
      %v4534 = vunpack.c.l.b16 %v4497
      %v4535 = vunpack.c.h.b16 %v4497
      %v4536 = vunpack.c.l.b16 %v4498
      %v4537 = vunpack.c.h.b16 %v4498
      %v4538 = vunpack.c.l.b16 %v4499
      %v4539 = vunpack.c.h.b16 %v4499
      %v4540 = vunpack.c.l.b16 %v4500
      %v4541 = vunpack.c.h.b16 %v4500
      %v4542 = vunpack.c.l.b16 %v4501
      %v4543 = vunpack.c.h.b16 %v4501
      %v4544 = vunpack.c.l.b16 %v4502
      %v4545 = vunpack.c.h.b16 %v4502
      %v4546 = vunpack.c.l.b16 %v4503
      %v4547 = vunpack.c.h.b16 %v4503
      %v4548 = vunpack.c.l.b16 %v4504
      %v4549 = vunpack.c.h.b16 %v4504
      %v4550 = vunpack.c.l.b16 %v4505
      %v4551 = vunpack.c.h.b16 %v4505
      %v4552 = vunpack.c.l.b16 %v4506
      %v4553 = vunpack.c.h.b16 %v4506
      %v4554 = vunpack.c.l.b16 %v4507
      %v4555 = vunpack.c.h.b16 %v4507
      %v4556 = vpack.c.b16 %v4524, %v4524
      %v4557 = vpack.c.b16 %v4525, %v4525
      %v4558 = vpack.c.b16 %v4526, %v4526
      %v4559 = vpack.c.b16 %v4527, %v4527
      %v4560 = vpack.c.b16 %v4528, %v4528
      %v4561 = vpack.c.b16 %v4529, %v4529
      %v4562 = vpack.c.b16 %v4530, %v4530
      %v4563 = vpack.c.b16 %v4531, %v4531
      %v4564 = vpack.c.b16 %v4532, %v4532
      %v4565 = vpack.c.b16 %v4533, %v4533
      %v4566 = vpack.c.b16 %v4534, %v4534
      %v4567 = vpack.c.b16 %v4535, %v4535
      %v4568 = vpack.c.b16 %v4536, %v4536
      %v4569 = vpack.c.b16 %v4537, %v4537
      %v4570 = vpack.c.b16 %v4538, %v4538
      %v4571 = vpack.c.b16 %v4539, %v4539
      %v4572 = vpack.c.b16 %v4540, %v4540
      %v4573 = vpack.c.b16 %v4541, %v4541
      %v4574 = vpack.c.b16 %v4542, %v4542
      %v4575 = vpack.c.b16 %v4543, %v4543
      %v4576 = vpack.c.b16 %v4544, %v4544
      %v4577 = vpack.c.b16 %v4545, %v4545
      %v4578 = vpack.c.b16 %v4546, %v4546
      %v4579 = vpack.c.b16 %v4547, %v4547
      %v4580 = vpack.c.b16 %v4548, %v4548
      %v4581 = vpack.c.b16 %v4549, %v4549
      %v4582 = vpack.c.b16 %v4550, %v4550
      %v4583 = vpack.c.b16 %v4551, %v4551
      %v4584 = vpack.c.b16 %v4552, %v4552
      %v4585 = vpack.c.b16 %v4553, %v4553
      %v4586 = vpack.c.b16 %v4554, %v4554
      %v4587 = vpack.c.b16 %v4555, %v4555
      %vm4588 = vsmask.f32 4368
      %vm4589 = vmor %vm4392, %vm4588
      %v4591 = vshrl.u32 %v4556, 16
      %v4593 = vrot.slane %v4591, 7
      %v4594 = vshll.u32 %v4556, 16
      %v4596 = vor.u32 %v4593, %v4594
      %v4597 = vrot.slane %v4593, 4
      %v4599 = vshrl.u32 %v4557, 16
      %v4601 = vrot.slane %v4599, 7
      %v4602 = vshll.u32 %v4557, 16
      %v4604 = vor.u32 %v4601, %v4602
      %v4605 = vsel %vm4589, %v4597, %v4604
      %v4606 = vrot.slane %v4601, 4
      %v4608 = vshrl.u32 %v4558, 16
      %v4610 = vrot.slane %v4608, 7
      %v4611 = vshll.u32 %v4558, 16
      %v4613 = vor.u32 %v4610, %v4611
      %v4614 = vrot.slane %v4610, 4
      %v4616 = vshrl.u32 %v4559, 16
      %v4618 = vrot.slane %v4616, 7
      %v4619 = vshll.u32 %v4559, 16
      %v4621 = vor.u32 %v4618, %v4619
      %v4622 = vsel %vm4589, %v4614, %v4621
      %v4623 = vrot.slane %v4618, 4
      %v4625 = vshrl.u32 %v4560, 16
      %v4627 = vrot.slane %v4625, 7
      %v4628 = vshll.u32 %v4560, 16
      %v4630 = vor.u32 %v4627, %v4628
      %v4631 = vrot.slane %v4627, 4
      %v4633 = vshrl.u32 %v4561, 16
      %v4635 = vrot.slane %v4633, 7
      %v4636 = vshll.u32 %v4561, 16
      %v4638 = vor.u32 %v4635, %v4636
      %v4639 = vsel %vm4589, %v4631, %v4638
      %v4640 = vrot.slane %v4635, 4
      %v4642 = vshrl.u32 %v4562, 16
      %v4644 = vrot.slane %v4642, 7
      %v4645 = vshll.u32 %v4562, 16
      %v4647 = vor.u32 %v4644, %v4645
      %v4648 = vrot.slane %v4644, 4
      %v4650 = vshrl.u32 %v4563, 16
      %v4652 = vrot.slane %v4650, 7
      %v4653 = vshll.u32 %v4563, 16
      %v4655 = vor.u32 %v4652, %v4653
      %v4656 = vsel %vm4589, %v4648, %v4655
      %v4657 = vrot.slane %v4652, 4
      %v4659 = vshrl.u32 %v4564, 16
      %v4661 = vrot.slane %v4659, 7
      %v4662 = vshll.u32 %v4564, 16
      %v4664 = vor.u32 %v4661, %v4662
      %v4665 = vrot.slane %v4661, 4
      %v4667 = vshrl.u32 %v4565, 16
      %v4669 = vrot.slane %v4667, 7
      %v4670 = vshll.u32 %v4565, 16
      %v4672 = vor.u32 %v4669, %v4670
      %v4673 = vsel %vm4589, %v4665, %v4672
      %v4674 = vrot.slane %v4669, 4
      %v4676 = vshrl.u32 %v4566, 16
      %v4678 = vrot.slane %v4676, 7
      %v4679 = vshll.u32 %v4566, 16
      %v4681 = vor.u32 %v4678, %v4679
      %v4682 = vrot.slane %v4678, 4
      %v4684 = vshrl.u32 %v4567, 16
      %v4686 = vrot.slane %v4684, 7
      %v4687 = vshll.u32 %v4567, 16
      %v4689 = vor.u32 %v4686, %v4687
      %v4690 = vsel %vm4589, %v4682, %v4689
      %v4691 = vrot.slane %v4686, 4
      %v4693 = vshrl.u32 %v4568, 16
      %v4695 = vrot.slane %v4693, 7
      %v4696 = vshll.u32 %v4568, 16
      %v4698 = vor.u32 %v4695, %v4696
      %v4699 = vrot.slane %v4695, 4
      %v4701 = vshrl.u32 %v4569, 16
      %v4703 = vrot.slane %v4701, 7
      %v4704 = vshll.u32 %v4569, 16
      %v4706 = vor.u32 %v4703, %v4704
      %v4707 = vsel %vm4589, %v4699, %v4706
      %v4708 = vrot.slane %v4703, 4
      %v4710 = vshrl.u32 %v4570, 16
      %v4712 = vrot.slane %v4710, 7
      %v4713 = vshll.u32 %v4570, 16
      %v4715 = vor.u32 %v4712, %v4713
      %v4716 = vrot.slane %v4712, 4
      %v4718 = vshrl.u32 %v4571, 16
      %v4720 = vrot.slane %v4718, 7
      %v4721 = vshll.u32 %v4571, 16
      %v4723 = vor.u32 %v4720, %v4721
      %v4724 = vsel %vm4589, %v4716, %v4723
      %v4725 = vrot.slane %v4720, 4
      %v4727 = vshrl.u32 %v4572, 16
      %v4729 = vrot.slane %v4727, 7
      %v4730 = vshll.u32 %v4572, 16
      %v4732 = vor.u32 %v4729, %v4730
      %v4733 = vrot.slane %v4729, 4
      %v4735 = vshrl.u32 %v4573, 16
      %v4737 = vrot.slane %v4735, 7
      %v4738 = vshll.u32 %v4573, 16
      %v4740 = vor.u32 %v4737, %v4738
      %v4741 = vsel %vm4589, %v4733, %v4740
      %v4742 = vrot.slane %v4737, 4
      %v4744 = vshrl.u32 %v4574, 16
      %v4746 = vrot.slane %v4744, 7
      %v4747 = vshll.u32 %v4574, 16
      %v4749 = vor.u32 %v4746, %v4747
      %v4750 = vrot.slane %v4746, 4
      %v4752 = vshrl.u32 %v4575, 16
      %v4754 = vrot.slane %v4752, 7
      %v4755 = vshll.u32 %v4575, 16
      %v4757 = vor.u32 %v4754, %v4755
      %v4758 = vsel %vm4589, %v4750, %v4757
      %v4759 = vrot.slane %v4754, 4
      %v4761 = vshrl.u32 %v4576, 16
      %v4763 = vrot.slane %v4761, 7
      %v4764 = vshll.u32 %v4576, 16
      %v4766 = vor.u32 %v4763, %v4764
      %v4767 = vrot.slane %v4763, 4
      %v4769 = vshrl.u32 %v4577, 16
      %v4771 = vrot.slane %v4769, 7
      %v4772 = vshll.u32 %v4577, 16
      %v4774 = vor.u32 %v4771, %v4772
      %v4775 = vsel %vm4589, %v4767, %v4774
      %v4776 = vrot.slane %v4771, 4
      %v4778 = vshrl.u32 %v4578, 16
      %v4780 = vrot.slane %v4778, 7
      %v4781 = vshll.u32 %v4578, 16
      %v4783 = vor.u32 %v4780, %v4781
      %v4784 = vrot.slane %v4780, 4
      %v4786 = vshrl.u32 %v4579, 16
      %v4788 = vrot.slane %v4786, 7
      %v4789 = vshll.u32 %v4579, 16
      %v4791 = vor.u32 %v4788, %v4789
      %v4792 = vsel %vm4589, %v4784, %v4791
      %v4793 = vrot.slane %v4788, 4
      %v4795 = vshrl.u32 %v4580, 16
      %v4797 = vrot.slane %v4795, 7
      %v4798 = vshll.u32 %v4580, 16
      %v4800 = vor.u32 %v4797, %v4798
      %v4801 = vrot.slane %v4797, 4
      %v4803 = vshrl.u32 %v4581, 16
      %v4805 = vrot.slane %v4803, 7
      %v4806 = vshll.u32 %v4581, 16
      %v4808 = vor.u32 %v4805, %v4806
      %v4809 = vsel %vm4589, %v4801, %v4808
      %v4810 = vrot.slane %v4805, 4
      %v4812 = vshrl.u32 %v4582, 16
      %v4814 = vrot.slane %v4812, 7
      %v4815 = vshll.u32 %v4582, 16
      %v4817 = vor.u32 %v4814, %v4815
      %v4818 = vrot.slane %v4814, 4
      %v4820 = vshrl.u32 %v4583, 16
      %v4822 = vrot.slane %v4820, 7
      %v4823 = vshll.u32 %v4583, 16
      %v4825 = vor.u32 %v4822, %v4823
      %v4826 = vsel %vm4589, %v4818, %v4825
      %v4827 = vrot.slane %v4822, 4
      %v4829 = vshrl.u32 %v4584, 16
      %v4831 = vrot.slane %v4829, 7
      %v4832 = vshll.u32 %v4584, 16
      %v4834 = vor.u32 %v4831, %v4832
      %v4835 = vrot.slane %v4831, 4
      %v4837 = vshrl.u32 %v4585, 16
      %v4839 = vrot.slane %v4837, 7
      %v4840 = vshll.u32 %v4585, 16
      %v4842 = vor.u32 %v4839, %v4840
      %v4843 = vsel %vm4589, %v4835, %v4842
      %v4844 = vrot.slane %v4839, 4
      %v4846 = vshrl.u32 %v4586, 16
      %v4848 = vrot.slane %v4846, 7
      %v4849 = vshll.u32 %v4586, 16
      %v4851 = vor.u32 %v4848, %v4849
      %v4852 = vrot.slane %v4848, 4
      %v4854 = vshrl.u32 %v4587, 16
      %v4856 = vrot.slane %v4854, 7
      %v4857 = vshll.u32 %v4587, 16
      %v4859 = vor.u32 %v4856, %v4857
      %v4860 = vsel %vm4589, %v4852, %v4859
      %v4861 = vrot.slane %v4856, 4
      %vm4910 = vcmask 1043456
      %vm4911 = vmand %vm4910, %vm4442
      %v4912 = vld [vmem:[%s4390] sm:$0xf]
      %v4913 = vsel %vm4911, %v4596, %v4912
      %4914 = vst [vmem:[%s4390] sm:$0xf] %v4913
      %4915 = vst [vmem:[%s4390 + $0x4] sm:$0xf] %v4605
      %v4916 = vld [vmem:[%s4390 + $0x8] sm:$0x1]
      %v4917 = vsel %vm4393, %v4606, %v4916
      %4918 = vst [vmem:[%s4390 + $0x8] sm:$0x1] %v4917
      %v4919 = vld [vmem:[%s4390 + $0xc] sm:$0xf]
      %v4920 = vsel %vm4911, %v4613, %v4919
      %4921 = vst [vmem:[%s4390 + $0xc] sm:$0xf] %v4920
      %4922 = vst [vmem:[%s4390 + $0x10] sm:$0xf] %v4622
      %v4923 = vld [vmem:[%s4390 + $0x14] sm:$0x1]
      %v4924 = vsel %vm4393, %v4623, %v4923
      %4925 = vst [vmem:[%s4390 + $0x14] sm:$0x1] %v4924
      %v4926 = vld [vmem:[%s4390 + $0x18] sm:$0xf]
      %v4927 = vsel %vm4911, %v4630, %v4926
      %4928 = vst [vmem:[%s4390 + $0x18] sm:$0xf] %v4927
      %4929 = vst [vmem:[%s4390 + $0x1c] sm:$0xf] %v4639
      %v4930 = vld [vmem:[%s4390 + $0x20] sm:$0x1]
      %v4931 = vsel %vm4393, %v4640, %v4930
      %4932 = vst [vmem:[%s4390 + $0x20] sm:$0x1] %v4931
      %v4933 = vld [vmem:[%s4390 + $0x24] sm:$0xf]
      %v4934 = vsel %vm4911, %v4647, %v4933
      %4935 = vst [vmem:[%s4390 + $0x24] sm:$0xf] %v4934
      %4936 = vst [vmem:[%s4390 + $0x28] sm:$0xf] %v4656
      %v4937 = vld [vmem:[%s4390 + $0x2c] sm:$0x1]
      %v4938 = vsel %vm4393, %v4657, %v4937
      %4939 = vst [vmem:[%s4390 + $0x2c] sm:$0x1] %v4938
      %v4940 = vld [vmem:[%s4390 + $0x30] sm:$0xf]
      %v4941 = vsel %vm4911, %v4664, %v4940
      %4942 = vst [vmem:[%s4390 + $0x30] sm:$0xf] %v4941
      %4943 = vst [vmem:[%s4390 + $0x34] sm:$0xf] %v4673
      %v4944 = vld [vmem:[%s4390 + $0x38] sm:$0x1]
      %v4945 = vsel %vm4393, %v4674, %v4944
      %4946 = vst [vmem:[%s4390 + $0x38] sm:$0x1] %v4945
      %v4947 = vld [vmem:[%s4390 + $0x3c] sm:$0xf]
      %v4948 = vsel %vm4911, %v4681, %v4947
      %4949 = vst [vmem:[%s4390 + $0x3c] sm:$0xf] %v4948
      %4950 = vst [vmem:[%s4390 + $0x40] sm:$0xf] %v4690
      %v4951 = vld [vmem:[%s4390 + $0x44] sm:$0x1]
      %v4952 = vsel %vm4393, %v4691, %v4951
      %4953 = vst [vmem:[%s4390 + $0x44] sm:$0x1] %v4952
      %v4954 = vld [vmem:[%s4390 + $0x48] sm:$0xf]
      %v4955 = vsel %vm4911, %v4698, %v4954
      %4956 = vst [vmem:[%s4390 + $0x48] sm:$0xf] %v4955
      %4957 = vst [vmem:[%s4390 + $0x4c] sm:$0xf] %v4707
      %v4958 = vld [vmem:[%s4390 + $0x50] sm:$0x1]
      %v4959 = vsel %vm4393, %v4708, %v4958
      %4960 = vst [vmem:[%s4390 + $0x50] sm:$0x1] %v4959
      %v4961 = vld [vmem:[%s4390 + $0x54] sm:$0xf]
      %v4962 = vsel %vm4911, %v4715, %v4961
      %4963 = vst [vmem:[%s4390 + $0x54] sm:$0xf] %v4962
      %4964 = vst [vmem:[%s4390 + $0x58] sm:$0xf] %v4724
      %v4965 = vld [vmem:[%s4390 + $0x5c] sm:$0x1]
      %v4966 = vsel %vm4393, %v4725, %v4965
      %4967 = vst [vmem:[%s4390 + $0x5c] sm:$0x1] %v4966
      %v4968 = vld [vmem:[%s4390 + $0x60] sm:$0xf]
      %v4969 = vsel %vm4911, %v4732, %v4968
      %4970 = vst [vmem:[%s4390 + $0x60] sm:$0xf] %v4969
      %4971 = vst [vmem:[%s4390 + $0x64] sm:$0xf] %v4741
      %v4972 = vld [vmem:[%s4390 + $0x68] sm:$0x1]
      %v4973 = vsel %vm4393, %v4742, %v4972
      %4974 = vst [vmem:[%s4390 + $0x68] sm:$0x1] %v4973
      %v4975 = vld [vmem:[%s4390 + $0x6c] sm:$0xf]
      %v4976 = vsel %vm4911, %v4749, %v4975
      %4977 = vst [vmem:[%s4390 + $0x6c] sm:$0xf] %v4976
      %4978 = vst [vmem:[%s4390 + $0x70] sm:$0xf] %v4758
      %v4979 = vld [vmem:[%s4390 + $0x74] sm:$0x1]
      %v4980 = vsel %vm4393, %v4759, %v4979
      %4981 = vst [vmem:[%s4390 + $0x74] sm:$0x1] %v4980
      %v4982 = vld [vmem:[%s4390 + $0x78] sm:$0xf]
      %v4983 = vsel %vm4911, %v4766, %v4982
      %4984 = vst [vmem:[%s4390 + $0x78] sm:$0xf] %v4983
      %4985 = vst [vmem:[%s4390 + $0x7c] sm:$0xf] %v4775
      %v4986 = vld [vmem:[%s4390 + $0x80] sm:$0x1]
      %v4987 = vsel %vm4393, %v4776, %v4986
      %4988 = vst [vmem:[%s4390 + $0x80] sm:$0x1] %v4987
      %v4989 = vld [vmem:[%s4390 + $0x84] sm:$0xf]
      %v4990 = vsel %vm4911, %v4783, %v4989
      %4991 = vst [vmem:[%s4390 + $0x84] sm:$0xf] %v4990
      %4992 = vst [vmem:[%s4390 + $0x88] sm:$0xf] %v4792
      %v4993 = vld [vmem:[%s4390 + $0x8c] sm:$0x1]
      %v4994 = vsel %vm4393, %v4793, %v4993
      %4995 = vst [vmem:[%s4390 + $0x8c] sm:$0x1] %v4994
      %v4996 = vld [vmem:[%s4390 + $0x90] sm:$0xf]
      %v4997 = vsel %vm4911, %v4800, %v4996
      %4998 = vst [vmem:[%s4390 + $0x90] sm:$0xf] %v4997
      %4999 = vst [vmem:[%s4390 + $0x94] sm:$0xf] %v4809
      %v5000 = vld [vmem:[%s4390 + $0x98] sm:$0x1]
      %v5001 = vsel %vm4393, %v4810, %v5000
      %5002 = vst [vmem:[%s4390 + $0x98] sm:$0x1] %v5001
      %v5003 = vld [vmem:[%s4390 + $0x9c] sm:$0xf]
      %v5004 = vsel %vm4911, %v4817, %v5003
      %5005 = vst [vmem:[%s4390 + $0x9c] sm:$0xf] %v5004
      %5006 = vst [vmem:[%s4390 + $0xa0] sm:$0xf] %v4826
      %v5007 = vld [vmem:[%s4390 + $0xa4] sm:$0x1]
      %v5008 = vsel %vm4393, %v4827, %v5007
      %5009 = vst [vmem:[%s4390 + $0xa4] sm:$0x1] %v5008
      %v5010 = vld [vmem:[%s4390 + $0xa8] sm:$0xf]
      %v5011 = vsel %vm4911, %v4834, %v5010
      %5012 = vst [vmem:[%s4390 + $0xa8] sm:$0xf] %v5011
      %5013 = vst [vmem:[%s4390 + $0xac] sm:$0xf] %v4843
      %v5014 = vld [vmem:[%s4390 + $0xb0] sm:$0x1]
      %v5015 = vsel %vm4393, %v4844, %v5014
      %5016 = vst [vmem:[%s4390 + $0xb0] sm:$0x1] %v5015
      %v5017 = vld [vmem:[%s4390 + $0xb4] sm:$0xf]
      %v5018 = vsel %vm4911, %v4851, %v5017
      %5019 = vst [vmem:[%s4390 + $0xb4] sm:$0xf] %v5018
      %5020 = vst [vmem:[%s4390 + $0xb8] sm:$0xf] %v4860
      %v5021 = vld [vmem:[%s4390 + $0xbc] sm:$0x1]
      %v5022 = vsel %vm4393, %v4861, %v5021
      %5023 = vst [vmem:[%s4390 + $0xbc] sm:$0x1] %v5022
      %v5024 = vld [vmem:[#allocation2] sm:$0xf]
      %v5025 = vld [vmem:[#allocation2 + $0x4] sm:$0xf]
      %v5026 = vld [vmem:[#allocation2 + $0xc] sm:$0xf]
      %v5027 = vld [vmem:[#allocation2 + $0x10] sm:$0xf]
      %v5028 = vld [vmem:[#allocation2 + $0x18] sm:$0xf]
      %v5029 = vld [vmem:[#allocation2 + $0x1c] sm:$0xf]
      %v5030 = vld [vmem:[#allocation2 + $0x24] sm:$0xf]
      %v5031 = vld [vmem:[#allocation2 + $0x28] sm:$0xf]
      %v5032 = vld [vmem:[#allocation2 + $0x30] sm:$0xf]
      %v5033 = vld [vmem:[#allocation2 + $0x34] sm:$0xf]
      %v5034 = vld [vmem:[#allocation2 + $0x3c] sm:$0xf]
      %v5035 = vld [vmem:[#allocation2 + $0x40] sm:$0xf]
      %v5036 = vld [vmem:[#allocation2 + $0x48] sm:$0xf]
      %v5037 = vld [vmem:[#allocation2 + $0x4c] sm:$0xf]
      %v5038 = vld [vmem:[#allocation2 + $0x54] sm:$0xf]
      %v5039 = vld [vmem:[#allocation2 + $0x58] sm:$0xf]
      %v5040 = vld [vmem:[#allocation2 + $0x60] sm:$0xf]
      %v5041 = vld [vmem:[#allocation2 + $0x64] sm:$0xf]
      %v5042 = vld [vmem:[#allocation2 + $0x6c] sm:$0xf]
      %v5043 = vld [vmem:[#allocation2 + $0x70] sm:$0xf]
      %v5044 = vld [vmem:[#allocation2 + $0x78] sm:$0xf]
      %v5045 = vld [vmem:[#allocation2 + $0x7c] sm:$0xf]
      %v5046 = vld [vmem:[#allocation2 + $0x84] sm:$0xf]
      %v5047 = vld [vmem:[#allocation2 + $0x88] sm:$0xf]
      %v5048 = vld [vmem:[#allocation2 + $0x90] sm:$0xf]
      %v5049 = vld [vmem:[#allocation2 + $0x94] sm:$0xf]
      %v5050 = vld [vmem:[#allocation2 + $0x9c] sm:$0xf]
      %v5051 = vld [vmem:[#allocation2 + $0xa0] sm:$0xf]
      %v5052 = vld [vmem:[#allocation2 + $0xa8] sm:$0xf]
      %v5053 = vld [vmem:[#allocation2 + $0xac] sm:$0xf]
      %v5054 = vld [vmem:[#allocation2 + $0xb4] sm:$0xf]
      %v5055 = vld [vmem:[#allocation2 + $0xb8] sm:$0xf]
      %v5056 = vld [vmem:[#allocation2 + $0x8] sm:$0x1]
      %v5057 = vld [vmem:[#allocation2 + $0x14] sm:$0x1]
      %v5058 = vld [vmem:[#allocation2 + $0x20] sm:$0x1]
      %v5059 = vld [vmem:[#allocation2 + $0x2c] sm:$0x1]
      %v5060 = vld [vmem:[#allocation2 + $0x38] sm:$0x1]
      %v5061 = vld [vmem:[#allocation2 + $0x44] sm:$0x1]
      %v5062 = vld [vmem:[#allocation2 + $0x50] sm:$0x1]
      %v5063 = vld [vmem:[#allocation2 + $0x5c] sm:$0x1]
      %v5064 = vld [vmem:[#allocation2 + $0x68] sm:$0x1]
      %v5065 = vld [vmem:[#allocation2 + $0x74] sm:$0x1]
      %v5066 = vld [vmem:[#allocation2 + $0x80] sm:$0x1]
      %v5067 = vld [vmem:[#allocation2 + $0x8c] sm:$0x1]
      %v5068 = vld [vmem:[#allocation2 + $0x98] sm:$0x1]
      %v5069 = vld [vmem:[#allocation2 + $0xa4] sm:$0x1]
      %v5070 = vld [vmem:[#allocation2 + $0xb0] sm:$0x1]
      %v5071 = vld [vmem:[#allocation2 + $0xbc] sm:$0x1]
      %v5073 = vshrl.u32 %v5024, 16
      %v5075 = vrot.slane %v5073, 4
      %v5076 = vshll.u32 %v5024, 16
      %v5078 = vrot.slane %v5076, 5
      %v5079 = vor.u32 %v5075, %v5078
      %v5080 = vrot.slane %v5079, 4
      %v5082 = vshll.u32 %v5025, 16
      %v5084 = vrot.slane %v5082, 5
      %v5085 = vsel %vm330, %v5080, %v5084
      %v5086 = vshrl.u32 %v5025, 16
      %v5088 = vrot.slane %v5086, 4
      %v5089 = vor.u32 %v5088, %v5084
      %v5090 = vrot.slane %v5089, 4
      %v5092 = vshll.u32 %v5056, 16
      %v5094 = vrot.slane %v5092, 5
      %v5095 = vsel %vm330, %v5090, %v5094
      %v5097 = vshrl.u32 %v5026, 16
      %v5099 = vrot.slane %v5097, 4
      %v5100 = vshll.u32 %v5026, 16
      %v5102 = vrot.slane %v5100, 5
      %v5103 = vor.u32 %v5099, %v5102
      %v5104 = vrot.slane %v5103, 4
      %v5106 = vshll.u32 %v5027, 16
      %v5108 = vrot.slane %v5106, 5
      %v5109 = vsel %vm330, %v5104, %v5108
      %v5110 = vshrl.u32 %v5027, 16
      %v5112 = vrot.slane %v5110, 4
      %v5113 = vor.u32 %v5112, %v5108
      %v5114 = vrot.slane %v5113, 4
      %v5116 = vshll.u32 %v5057, 16
      %v5118 = vrot.slane %v5116, 5
      %v5119 = vsel %vm330, %v5114, %v5118
      %v5121 = vshrl.u32 %v5028, 16
      %v5123 = vrot.slane %v5121, 4
      %v5124 = vshll.u32 %v5028, 16
      %v5126 = vrot.slane %v5124, 5
      %v5127 = vor.u32 %v5123, %v5126
      %v5128 = vrot.slane %v5127, 4
      %v5130 = vshll.u32 %v5029, 16
      %v5132 = vrot.slane %v5130, 5
      %v5133 = vsel %vm330, %v5128, %v5132
      %v5134 = vshrl.u32 %v5029, 16
      %v5136 = vrot.slane %v5134, 4
      %v5137 = vor.u32 %v5136, %v5132
      %v5138 = vrot.slane %v5137, 4
      %v5140 = vshll.u32 %v5058, 16
      %v5142 = vrot.slane %v5140, 5
      %v5143 = vsel %vm330, %v5138, %v5142
      %v5145 = vshrl.u32 %v5030, 16
      %v5147 = vrot.slane %v5145, 4
      %v5148 = vshll.u32 %v5030, 16
      %v5150 = vrot.slane %v5148, 5
      %v5151 = vor.u32 %v5147, %v5150
      %v5152 = vrot.slane %v5151, 4
      %v5154 = vshll.u32 %v5031, 16
      %v5156 = vrot.slane %v5154, 5
      %v5157 = vsel %vm330, %v5152, %v5156
      %v5158 = vshrl.u32 %v5031, 16
      %v5160 = vrot.slane %v5158, 4
      %v5161 = vor.u32 %v5160, %v5156
      %v5162 = vrot.slane %v5161, 4
      %v5164 = vshll.u32 %v5059, 16
      %v5166 = vrot.slane %v5164, 5
      %v5167 = vsel %vm330, %v5162, %v5166
      %v5169 = vshrl.u32 %v5032, 16
      %v5171 = vrot.slane %v5169, 4
      %v5172 = vshll.u32 %v5032, 16
      %v5174 = vrot.slane %v5172, 5
      %v5175 = vor.u32 %v5171, %v5174
      %v5176 = vrot.slane %v5175, 4
      %v5178 = vshll.u32 %v5033, 16
      %v5180 = vrot.slane %v5178, 5
      %v5181 = vsel %vm330, %v5176, %v5180
      %v5182 = vshrl.u32 %v5033, 16
      %v5184 = vrot.slane %v5182, 4
      %v5185 = vor.u32 %v5184, %v5180
      %v5186 = vrot.slane %v5185, 4
      %v5188 = vshll.u32 %v5060, 16
      %v5190 = vrot.slane %v5188, 5
      %v5191 = vsel %vm330, %v5186, %v5190
      %v5193 = vshrl.u32 %v5034, 16
      %v5195 = vrot.slane %v5193, 4
      %v5196 = vshll.u32 %v5034, 16
      %v5198 = vrot.slane %v5196, 5
      %v5199 = vor.u32 %v5195, %v5198
      %v5200 = vrot.slane %v5199, 4
      %v5202 = vshll.u32 %v5035, 16
      %v5204 = vrot.slane %v5202, 5
      %v5205 = vsel %vm330, %v5200, %v5204
      %v5206 = vshrl.u32 %v5035, 16
      %v5208 = vrot.slane %v5206, 4
      %v5209 = vor.u32 %v5208, %v5204
      %v5210 = vrot.slane %v5209, 4
      %v5212 = vshll.u32 %v5061, 16
      %v5214 = vrot.slane %v5212, 5
      %v5215 = vsel %vm330, %v5210, %v5214
      %v5217 = vshrl.u32 %v5036, 16
      %v5219 = vrot.slane %v5217, 4
      %v5220 = vshll.u32 %v5036, 16
      %v5222 = vrot.slane %v5220, 5
      %v5223 = vor.u32 %v5219, %v5222
      %v5224 = vrot.slane %v5223, 4
      %v5226 = vshll.u32 %v5037, 16
      %v5228 = vrot.slane %v5226, 5
      %v5229 = vsel %vm330, %v5224, %v5228
      %v5230 = vshrl.u32 %v5037, 16
      %v5232 = vrot.slane %v5230, 4
      %v5233 = vor.u32 %v5232, %v5228
      %v5234 = vrot.slane %v5233, 4
      %v5236 = vshll.u32 %v5062, 16
      %v5238 = vrot.slane %v5236, 5
      %v5239 = vsel %vm330, %v5234, %v5238
      %v5241 = vshrl.u32 %v5038, 16
      %v5243 = vrot.slane %v5241, 4
      %v5244 = vshll.u32 %v5038, 16
      %v5246 = vrot.slane %v5244, 5
      %v5247 = vor.u32 %v5243, %v5246
      %v5248 = vrot.slane %v5247, 4
      %v5250 = vshll.u32 %v5039, 16
      %v5252 = vrot.slane %v5250, 5
      %v5253 = vsel %vm330, %v5248, %v5252
      %v5254 = vshrl.u32 %v5039, 16
      %v5256 = vrot.slane %v5254, 4
      %v5257 = vor.u32 %v5256, %v5252
      %v5258 = vrot.slane %v5257, 4
      %v5260 = vshll.u32 %v5063, 16
      %v5262 = vrot.slane %v5260, 5
      %v5263 = vsel %vm330, %v5258, %v5262
      %v5265 = vshrl.u32 %v5040, 16
      %v5267 = vrot.slane %v5265, 4
      %v5268 = vshll.u32 %v5040, 16
      %v5270 = vrot.slane %v5268, 5
      %v5271 = vor.u32 %v5267, %v5270
      %v5272 = vrot.slane %v5271, 4
      %v5274 = vshll.u32 %v5041, 16
      %v5276 = vrot.slane %v5274, 5
      %v5277 = vsel %vm330, %v5272, %v5276
      %v5278 = vshrl.u32 %v5041, 16
      %v5280 = vrot.slane %v5278, 4
      %v5281 = vor.u32 %v5280, %v5276
      %v5282 = vrot.slane %v5281, 4
      %v5284 = vshll.u32 %v5064, 16
      %v5286 = vrot.slane %v5284, 5
      %v5287 = vsel %vm330, %v5282, %v5286
      %v5289 = vshrl.u32 %v5042, 16
      %v5291 = vrot.slane %v5289, 4
      %v5292 = vshll.u32 %v5042, 16
      %v5294 = vrot.slane %v5292, 5
      %v5295 = vor.u32 %v5291, %v5294
      %v5296 = vrot.slane %v5295, 4
      %v5298 = vshll.u32 %v5043, 16
      %v5300 = vrot.slane %v5298, 5
      %v5301 = vsel %vm330, %v5296, %v5300
      %v5302 = vshrl.u32 %v5043, 16
      %v5304 = vrot.slane %v5302, 4
      %v5305 = vor.u32 %v5304, %v5300
      %v5306 = vrot.slane %v5305, 4
      %v5308 = vshll.u32 %v5065, 16
      %v5310 = vrot.slane %v5308, 5
      %v5311 = vsel %vm330, %v5306, %v5310
      %v5313 = vshrl.u32 %v5044, 16
      %v5315 = vrot.slane %v5313, 4
      %v5316 = vshll.u32 %v5044, 16
      %v5318 = vrot.slane %v5316, 5
      %v5319 = vor.u32 %v5315, %v5318
      %v5320 = vrot.slane %v5319, 4
      %v5322 = vshll.u32 %v5045, 16
      %v5324 = vrot.slane %v5322, 5
      %v5325 = vsel %vm330, %v5320, %v5324
      %v5326 = vshrl.u32 %v5045, 16
      %v5328 = vrot.slane %v5326, 4
      %v5329 = vor.u32 %v5328, %v5324
      %v5330 = vrot.slane %v5329, 4
      %v5332 = vshll.u32 %v5066, 16
      %v5334 = vrot.slane %v5332, 5
      %v5335 = vsel %vm330, %v5330, %v5334
      %v5337 = vshrl.u32 %v5046, 16
      %v5339 = vrot.slane %v5337, 4
      %v5340 = vshll.u32 %v5046, 16
      %v5342 = vrot.slane %v5340, 5
      %v5343 = vor.u32 %v5339, %v5342
      %v5344 = vrot.slane %v5343, 4
      %v5346 = vshll.u32 %v5047, 16
      %v5348 = vrot.slane %v5346, 5
      %v5349 = vsel %vm330, %v5344, %v5348
      %v5350 = vshrl.u32 %v5047, 16
      %v5352 = vrot.slane %v5350, 4
      %v5353 = vor.u32 %v5352, %v5348
      %v5354 = vrot.slane %v5353, 4
      %v5356 = vshll.u32 %v5067, 16
      %v5358 = vrot.slane %v5356, 5
      %v5359 = vsel %vm330, %v5354, %v5358
      %v5361 = vshrl.u32 %v5048, 16
      %v5363 = vrot.slane %v5361, 4
      %v5364 = vshll.u32 %v5048, 16
      %v5366 = vrot.slane %v5364, 5
      %v5367 = vor.u32 %v5363, %v5366
      %v5368 = vrot.slane %v5367, 4
      %v5370 = vshll.u32 %v5049, 16
      %v5372 = vrot.slane %v5370, 5
      %v5373 = vsel %vm330, %v5368, %v5372
      %v5374 = vshrl.u32 %v5049, 16
      %v5376 = vrot.slane %v5374, 4
      %v5377 = vor.u32 %v5376, %v5372
      %v5378 = vrot.slane %v5377, 4
      %v5380 = vshll.u32 %v5068, 16
      %v5382 = vrot.slane %v5380, 5
      %v5383 = vsel %vm330, %v5378, %v5382
      %v5385 = vshrl.u32 %v5050, 16
      %v5387 = vrot.slane %v5385, 4
      %v5388 = vshll.u32 %v5050, 16
      %v5390 = vrot.slane %v5388, 5
      %v5391 = vor.u32 %v5387, %v5390
      %v5392 = vrot.slane %v5391, 4
      %v5394 = vshll.u32 %v5051, 16
      %v5396 = vrot.slane %v5394, 5
      %v5397 = vsel %vm330, %v5392, %v5396
      %v5398 = vshrl.u32 %v5051, 16
      %v5400 = vrot.slane %v5398, 4
      %v5401 = vor.u32 %v5400, %v5396
      %v5402 = vrot.slane %v5401, 4
      %v5404 = vshll.u32 %v5069, 16
      %v5406 = vrot.slane %v5404, 5
      %v5407 = vsel %vm330, %v5402, %v5406
      %v5409 = vshrl.u32 %v5052, 16
      %v5411 = vrot.slane %v5409, 4
      %v5412 = vshll.u32 %v5052, 16
      %v5414 = vrot.slane %v5412, 5
      %v5415 = vor.u32 %v5411, %v5414
      %v5416 = vrot.slane %v5415, 4
      %v5418 = vshll.u32 %v5053, 16
      %v5420 = vrot.slane %v5418, 5
      %v5421 = vsel %vm330, %v5416, %v5420
      %v5422 = vshrl.u32 %v5053, 16
      %v5424 = vrot.slane %v5422, 4
      %v5425 = vor.u32 %v5424, %v5420
      %v5426 = vrot.slane %v5425, 4
      %v5428 = vshll.u32 %v5070, 16
      %v5430 = vrot.slane %v5428, 5
      %v5431 = vsel %vm330, %v5426, %v5430
      %v5433 = vshrl.u32 %v5054, 16
      %v5435 = vrot.slane %v5433, 4
      %v5436 = vshll.u32 %v5054, 16
      %v5438 = vrot.slane %v5436, 5
      %v5439 = vor.u32 %v5435, %v5438
      %v5440 = vrot.slane %v5439, 4
      %v5442 = vshll.u32 %v5055, 16
      %v5444 = vrot.slane %v5442, 5
      %v5445 = vsel %vm330, %v5440, %v5444
      %v5446 = vshrl.u32 %v5055, 16
      %v5448 = vrot.slane %v5446, 4
      %v5449 = vor.u32 %v5448, %v5444
      %v5450 = vrot.slane %v5449, 4
      %v5452 = vshll.u32 %v5071, 16
      %v5454 = vrot.slane %v5452, 5
      %v5455 = vsel %vm330, %v5450, %v5454
      %v5456 = vld [vmem:[#allocation2] sm:$0xe]
      %v5457 = vld [vmem:[#allocation2 + $0xc] sm:$0xe]
      %v5458 = vld [vmem:[#allocation2 + $0x18] sm:$0xe]
      %v5459 = vld [vmem:[#allocation2 + $0x24] sm:$0xe]
      %v5460 = vld [vmem:[#allocation2 + $0x30] sm:$0xe]
      %v5461 = vld [vmem:[#allocation2 + $0x3c] sm:$0xe]
      %v5462 = vld [vmem:[#allocation2 + $0x48] sm:$0xe]
      %v5463 = vld [vmem:[#allocation2 + $0x54] sm:$0xe]
      %v5464 = vld [vmem:[#allocation2 + $0x60] sm:$0xe]
      %v5465 = vld [vmem:[#allocation2 + $0x6c] sm:$0xe]
      %v5466 = vld [vmem:[#allocation2 + $0x78] sm:$0xe]
      %v5467 = vld [vmem:[#allocation2 + $0x84] sm:$0xe]
      %v5468 = vld [vmem:[#allocation2 + $0x90] sm:$0xe]
      %v5469 = vld [vmem:[#allocation2 + $0x9c] sm:$0xe]
      %v5470 = vld [vmem:[#allocation2 + $0xa8] sm:$0xe]
      %v5471 = vld [vmem:[#allocation2 + $0xb4] sm:$0xe]
      %v5520 = vrot.slane %v5456, 5
      %v5521 = vrot.slane %v5520, 4
      %v5522 = vrot.slane %v5025, 5
      %v5523 = vsel %vm781, %v5521, %v5522
      %v5524 = vrot.slane %v5522, 4
      %v5525 = vrot.slane %v5056, 5
      %v5526 = vsel %vm781, %v5524, %v5525
      %v5527 = vrot.slane %v5457, 5
      %v5528 = vrot.slane %v5527, 4
      %v5529 = vrot.slane %v5027, 5
      %v5530 = vsel %vm781, %v5528, %v5529
      %v5531 = vrot.slane %v5529, 4
      %v5532 = vrot.slane %v5057, 5
      %v5533 = vsel %vm781, %v5531, %v5532
      %v5534 = vrot.slane %v5458, 5
      %v5535 = vrot.slane %v5534, 4
      %v5536 = vrot.slane %v5029, 5
      %v5537 = vsel %vm781, %v5535, %v5536
      %v5538 = vrot.slane %v5536, 4
      %v5539 = vrot.slane %v5058, 5
      %v5540 = vsel %vm781, %v5538, %v5539
      %v5541 = vrot.slane %v5459, 5
      %v5542 = vrot.slane %v5541, 4
      %v5543 = vrot.slane %v5031, 5
      %v5544 = vsel %vm781, %v5542, %v5543
      %v5545 = vrot.slane %v5543, 4
      %v5546 = vrot.slane %v5059, 5
      %v5547 = vsel %vm781, %v5545, %v5546
      %v5548 = vrot.slane %v5460, 5
      %v5549 = vrot.slane %v5548, 4
      %v5550 = vrot.slane %v5033, 5
      %v5551 = vsel %vm781, %v5549, %v5550
      %v5552 = vrot.slane %v5550, 4
      %v5553 = vrot.slane %v5060, 5
      %v5554 = vsel %vm781, %v5552, %v5553
      %v5555 = vrot.slane %v5461, 5
      %v5556 = vrot.slane %v5555, 4
      %v5557 = vrot.slane %v5035, 5
      %v5558 = vsel %vm781, %v5556, %v5557
      %v5559 = vrot.slane %v5557, 4
      %v5560 = vrot.slane %v5061, 5
      %v5561 = vsel %vm781, %v5559, %v5560
      %v5562 = vrot.slane %v5462, 5
      %v5563 = vrot.slane %v5562, 4
      %v5564 = vrot.slane %v5037, 5
      %v5565 = vsel %vm781, %v5563, %v5564
      %v5566 = vrot.slane %v5564, 4
      %v5567 = vrot.slane %v5062, 5
      %v5568 = vsel %vm781, %v5566, %v5567
      %v5569 = vrot.slane %v5463, 5
      %v5570 = vrot.slane %v5569, 4
      %v5571 = vrot.slane %v5039, 5
      %v5572 = vsel %vm781, %v5570, %v5571
      %v5573 = vrot.slane %v5571, 4
      %v5574 = vrot.slane %v5063, 5
      %v5575 = vsel %vm781, %v5573, %v5574
      %v5576 = vrot.slane %v5464, 5
      %v5577 = vrot.slane %v5576, 4
      %v5578 = vrot.slane %v5041, 5
      %v5579 = vsel %vm781, %v5577, %v5578
      %v5580 = vrot.slane %v5578, 4
      %v5581 = vrot.slane %v5064, 5
      %v5582 = vsel %vm781, %v5580, %v5581
      %v5583 = vrot.slane %v5465, 5
      %v5584 = vrot.slane %v5583, 4
      %v5585 = vrot.slane %v5043, 5
      %v5586 = vsel %vm781, %v5584, %v5585
      %v5587 = vrot.slane %v5585, 4
      %v5588 = vrot.slane %v5065, 5
      %v5589 = vsel %vm781, %v5587, %v5588
      %v5590 = vrot.slane %v5466, 5
      %v5591 = vrot.slane %v5590, 4
      %v5592 = vrot.slane %v5045, 5
      %v5593 = vsel %vm781, %v5591, %v5592
      %v5594 = vrot.slane %v5592, 4
      %v5595 = vrot.slane %v5066, 5
      %v5596 = vsel %vm781, %v5594, %v5595
      %v5597 = vrot.slane %v5467, 5
      %v5598 = vrot.slane %v5597, 4
      %v5599 = vrot.slane %v5047, 5
      %v5600 = vsel %vm781, %v5598, %v5599
      %v5601 = vrot.slane %v5599, 4
      %v5602 = vrot.slane %v5067, 5
      %v5603 = vsel %vm781, %v5601, %v5602
      %v5604 = vrot.slane %v5468, 5
      %v5605 = vrot.slane %v5604, 4
      %v5606 = vrot.slane %v5049, 5
      %v5607 = vsel %vm781, %v5605, %v5606
      %v5608 = vrot.slane %v5606, 4
      %v5609 = vrot.slane %v5068, 5
      %v5610 = vsel %vm781, %v5608, %v5609
      %v5611 = vrot.slane %v5469, 5
      %v5612 = vrot.slane %v5611, 4
      %v5613 = vrot.slane %v5051, 5
      %v5614 = vsel %vm781, %v5612, %v5613
      %v5615 = vrot.slane %v5613, 4
      %v5616 = vrot.slane %v5069, 5
      %v5617 = vsel %vm781, %v5615, %v5616
      %v5618 = vrot.slane %v5470, 5
      %v5619 = vrot.slane %v5618, 4
      %v5620 = vrot.slane %v5053, 5
      %v5621 = vsel %vm781, %v5619, %v5620
      %v5622 = vrot.slane %v5620, 4
      %v5623 = vrot.slane %v5070, 5
      %v5624 = vsel %vm781, %v5622, %v5623
      %v5625 = vrot.slane %v5471, 5
      %v5626 = vrot.slane %v5625, 4
      %v5627 = vrot.slane %v5055, 5
      %v5628 = vsel %vm781, %v5626, %v5627
      %v5629 = vrot.slane %v5627, 4
      %v5630 = vrot.slane %v5071, 5
      %v5631 = vsel %vm781, %v5629, %v5630
      %v5648 = vunpack.c.l.b16 %v5024
      %v5649 = vunpack.c.l.b16 %v5025
      %v5650 = vunpack.c.l.b16 %v5026
      %v5651 = vunpack.c.l.b16 %v5027
      %v5652 = vunpack.c.l.b16 %v5028
      %v5653 = vunpack.c.l.b16 %v5029
      %v5654 = vunpack.c.l.b16 %v5030
      %v5655 = vunpack.c.l.b16 %v5031
      %v5656 = vunpack.c.l.b16 %v5032
      %v5657 = vunpack.c.l.b16 %v5033
      %v5658 = vunpack.c.l.b16 %v5034
      %v5659 = vunpack.c.l.b16 %v5035
      %v5660 = vunpack.c.l.b16 %v5036
      %v5661 = vunpack.c.l.b16 %v5037
      %v5662 = vunpack.c.l.b16 %v5038
      %v5663 = vunpack.c.l.b16 %v5039
      %v5664 = vunpack.c.l.b16 %v5040
      %v5665 = vunpack.c.l.b16 %v5041
      %v5666 = vunpack.c.l.b16 %v5042
      %v5667 = vunpack.c.l.b16 %v5043
      %v5668 = vunpack.c.l.b16 %v5044
      %v5669 = vunpack.c.l.b16 %v5045
      %v5670 = vunpack.c.l.b16 %v5046
      %v5671 = vunpack.c.l.b16 %v5047
      %v5672 = vunpack.c.l.b16 %v5048
      %v5673 = vunpack.c.l.b16 %v5049
      %v5674 = vunpack.c.l.b16 %v5050
      %v5675 = vunpack.c.l.b16 %v5051
      %v5676 = vunpack.c.l.b16 %v5052
      %v5677 = vunpack.c.l.b16 %v5053
      %v5678 = vunpack.c.l.b16 %v5054
      %v5679 = vunpack.c.l.b16 %v5055
      %v5680 = vpack.c.b16 %v5649, %v5648
      %v5681 = vpack.c.b16 %v5651, %v5650
      %v5682 = vpack.c.b16 %v5653, %v5652
      %v5683 = vpack.c.b16 %v5655, %v5654
      %v5684 = vpack.c.b16 %v5657, %v5656
      %v5685 = vpack.c.b16 %v5659, %v5658
      %v5686 = vpack.c.b16 %v5661, %v5660
      %v5687 = vpack.c.b16 %v5663, %v5662
      %v5688 = vpack.c.b16 %v5665, %v5664
      %v5689 = vpack.c.b16 %v5667, %v5666
      %v5690 = vpack.c.b16 %v5669, %v5668
      %v5691 = vpack.c.b16 %v5671, %v5670
      %v5692 = vpack.c.b16 %v5673, %v5672
      %v5693 = vpack.c.b16 %v5675, %v5674
      %v5694 = vpack.c.b16 %v5677, %v5676
      %v5695 = vpack.c.b16 %v5679, %v5678
      %v5712 = vunpack.c.l.b16 %v5085
      %v5713 = vunpack.c.l.b16 %v5095
      %v5714 = vunpack.c.l.b16 %v5109
      %v5715 = vunpack.c.l.b16 %v5119
      %v5716 = vunpack.c.l.b16 %v5133
      %v5717 = vunpack.c.l.b16 %v5143
      %v5718 = vunpack.c.l.b16 %v5157
      %v5719 = vunpack.c.l.b16 %v5167
      %v5720 = vunpack.c.l.b16 %v5181
      %v5721 = vunpack.c.l.b16 %v5191
      %v5722 = vunpack.c.l.b16 %v5205
      %v5723 = vunpack.c.l.b16 %v5215
      %v5724 = vunpack.c.l.b16 %v5229
      %v5725 = vunpack.c.l.b16 %v5239
      %v5726 = vunpack.c.l.b16 %v5253
      %v5727 = vunpack.c.l.b16 %v5263
      %v5728 = vunpack.c.l.b16 %v5277
      %v5729 = vunpack.c.l.b16 %v5287
      %v5730 = vunpack.c.l.b16 %v5301
      %v5731 = vunpack.c.l.b16 %v5311
      %v5732 = vunpack.c.l.b16 %v5325
      %v5733 = vunpack.c.l.b16 %v5335
      %v5734 = vunpack.c.l.b16 %v5349
      %v5735 = vunpack.c.l.b16 %v5359
      %v5736 = vunpack.c.l.b16 %v5373
      %v5737 = vunpack.c.l.b16 %v5383
      %v5738 = vunpack.c.l.b16 %v5397
      %v5739 = vunpack.c.l.b16 %v5407
      %v5740 = vunpack.c.l.b16 %v5421
      %v5741 = vunpack.c.l.b16 %v5431
      %v5742 = vunpack.c.l.b16 %v5445
      %v5743 = vunpack.c.l.b16 %v5455
      %v5744 = vpack.c.b16 %v5713, %v5712
      %v5745 = vpack.c.b16 %v5715, %v5714
      %v5746 = vpack.c.b16 %v5717, %v5716
      %v5747 = vpack.c.b16 %v5719, %v5718
      %v5748 = vpack.c.b16 %v5721, %v5720
      %v5749 = vpack.c.b16 %v5723, %v5722
      %v5750 = vpack.c.b16 %v5725, %v5724
      %v5751 = vpack.c.b16 %v5727, %v5726
      %v5752 = vpack.c.b16 %v5729, %v5728
      %v5753 = vpack.c.b16 %v5731, %v5730
      %v5754 = vpack.c.b16 %v5733, %v5732
      %v5755 = vpack.c.b16 %v5735, %v5734
      %v5756 = vpack.c.b16 %v5737, %v5736
      %v5757 = vpack.c.b16 %v5739, %v5738
      %v5758 = vpack.c.b16 %v5741, %v5740
      %v5759 = vpack.c.b16 %v5743, %v5742
      %v5776 = vunpack.c.l.b16 %v5523
      %v5777 = vunpack.c.l.b16 %v5526
      %v5778 = vunpack.c.l.b16 %v5530
      %v5779 = vunpack.c.l.b16 %v5533
      %v5780 = vunpack.c.l.b16 %v5537
      %v5781 = vunpack.c.l.b16 %v5540
      %v5782 = vunpack.c.l.b16 %v5544
      %v5783 = vunpack.c.l.b16 %v5547
      %v5784 = vunpack.c.l.b16 %v5551
      %v5785 = vunpack.c.l.b16 %v5554
      %v5786 = vunpack.c.l.b16 %v5558
      %v5787 = vunpack.c.l.b16 %v5561
      %v5788 = vunpack.c.l.b16 %v5565
      %v5789 = vunpack.c.l.b16 %v5568
      %v5790 = vunpack.c.l.b16 %v5572
      %v5791 = vunpack.c.l.b16 %v5575
      %v5792 = vunpack.c.l.b16 %v5579
      %v5793 = vunpack.c.l.b16 %v5582
      %v5794 = vunpack.c.l.b16 %v5586
      %v5795 = vunpack.c.l.b16 %v5589
      %v5796 = vunpack.c.l.b16 %v5593
      %v5797 = vunpack.c.l.b16 %v5596
      %v5798 = vunpack.c.l.b16 %v5600
      %v5799 = vunpack.c.l.b16 %v5603
      %v5800 = vunpack.c.l.b16 %v5607
      %v5801 = vunpack.c.l.b16 %v5610
      %v5802 = vunpack.c.l.b16 %v5614
      %v5803 = vunpack.c.l.b16 %v5617
      %v5804 = vunpack.c.l.b16 %v5621
      %v5805 = vunpack.c.l.b16 %v5624
      %v5806 = vunpack.c.l.b16 %v5628
      %v5807 = vunpack.c.l.b16 %v5631
      %v5808 = vpack.c.b16 %v5777, %v5776
      %v5809 = vpack.c.b16 %v5779, %v5778
      %v5810 = vpack.c.b16 %v5781, %v5780
      %v5811 = vpack.c.b16 %v5783, %v5782
      %v5812 = vpack.c.b16 %v5785, %v5784
      %v5813 = vpack.c.b16 %v5787, %v5786
      %v5814 = vpack.c.b16 %v5789, %v5788
      %v5815 = vpack.c.b16 %v5791, %v5790
      %v5816 = vpack.c.b16 %v5793, %v5792
      %v5817 = vpack.c.b16 %v5795, %v5794
      %v5818 = vpack.c.b16 %v5797, %v5796
      %v5819 = vpack.c.b16 %v5799, %v5798
      %v5820 = vpack.c.b16 %v5801, %v5800
      %v5821 = vpack.c.b16 %v5803, %v5802
      %v5822 = vpack.c.b16 %v5805, %v5804
      %v5823 = vpack.c.b16 %v5807, %v5806
      %v5840 = vld [vmem:[%s3] sm:$0xf]
      %v5841 = vld [vmem:[%s3 + $0x4] sm:$0xf]
      %v5842 = vld [vmem:[%s3 + $0x8] sm:$0xf]
      %v5843 = vld [vmem:[%s3 + $0xc] sm:$0xf]
      %v5844 = vld [vmem:[%s3 + $0x10] sm:$0xf]
      %v5845 = vld [vmem:[%s3 + $0x14] sm:$0xf]
      %v5846 = vld [vmem:[%s3 + $0x18] sm:$0xf]
      %v5847 = vld [vmem:[%s3 + $0x1c] sm:$0xf]
      %v5848 = vld [vmem:[%s3 + $0x20] sm:$0xf]
      %v5849 = vld [vmem:[%s3 + $0x24] sm:$0xf]
      %v5850 = vld [vmem:[%s3 + $0x28] sm:$0xf]
      %v5851 = vld [vmem:[%s3 + $0x2c] sm:$0xf]
      %v5852 = vld [vmem:[%s3 + $0x30] sm:$0xf]
      %v5853 = vld [vmem:[%s3 + $0x34] sm:$0xf]
      %v5854 = vld [vmem:[%s3 + $0x38] sm:$0xf]
      %v5855 = vld [vmem:[%s3 + $0x3c] sm:$0xf]
      %v5856 = vld [vmem:[%s3 + $0x40] sm:$0xf]
      %v5857 = vld [vmem:[%s3 + $0x44] sm:$0xf]
      %v5858 = vld [vmem:[%s3 + $0x48] sm:$0xf]
      %v5859 = vld [vmem:[%s3 + $0x4c] sm:$0xf]
      %v5860 = vld [vmem:[%s3 + $0x50] sm:$0xf]
      %v5861 = vld [vmem:[%s3 + $0x54] sm:$0xf]
      %v5862 = vld [vmem:[%s3 + $0x58] sm:$0xf]
      %v5863 = vld [vmem:[%s3 + $0x5c] sm:$0xf]
      %v5864 = vld [vmem:[%s3 + $0x60] sm:$0xf]
      %v5865 = vld [vmem:[%s3 + $0x64] sm:$0xf]
      %v5866 = vld [vmem:[%s3 + $0x68] sm:$0xf]
      %v5867 = vld [vmem:[%s3 + $0x6c] sm:$0xf]
      %v5868 = vld [vmem:[%s3 + $0x70] sm:$0xf]
      %v5869 = vld [vmem:[%s3 + $0x74] sm:$0xf]
      %v5870 = vld [vmem:[%s3 + $0x78] sm:$0xf]
      %v5871 = vld [vmem:[%s3 + $0x7c] sm:$0xf]
      %v5872 = vld [vmem:[%s3 + $0x80] sm:$0xf]
      %v5873 = vld [vmem:[%s3 + $0x84] sm:$0xf]
      %v5874 = vld [vmem:[%s3 + $0x88] sm:$0xf]
      %v5875 = vld [vmem:[%s3 + $0x8c] sm:$0xf]
      %v5876 = vld [vmem:[%s3 + $0x90] sm:$0xf]
      %v5877 = vld [vmem:[%s3 + $0x94] sm:$0xf]
      %v5878 = vld [vmem:[%s3 + $0x98] sm:$0xf]
      %v5879 = vld [vmem:[%s3 + $0x9c] sm:$0xf]
      %v5880 = vld [vmem:[%s3 + $0xa0] sm:$0xf]
      %v5881 = vld [vmem:[%s3 + $0xa4] sm:$0xf]
      %v5882 = vld [vmem:[%s3 + $0xa8] sm:$0xf]
      %v5883 = vld [vmem:[%s3 + $0xac] sm:$0xf]
      %v5884 = vld [vmem:[%s3 + $0xb0] sm:$0xf]
      %v5885 = vld [vmem:[%s3 + $0xb4] sm:$0xf]
      %v5886 = vld [vmem:[%s3 + $0xb8] sm:$0xf]
      %v5887 = vld [vmem:[%s3 + $0xbc] sm:$0xf]
      %v5888 = vld [vmem:[%s4] sm:$0x1]
      %v5890 = vlaneseq
      %v5891 = vshrl.u32 %v5890, 7
      %v5892 = vsub.s32 0, %v5891
      %v5893 = vrot.slane %v5888, %v5892
      %v5943 = vunpack.c.l.b16 %v5840
      %v5944 = vunpack.c.l.b16 %v5841
      %v5945 = vunpack.c.l.b16 %v5842
      %v5946 = vunpack.c.l.b16 %v5843
      %v5947 = vunpack.c.l.b16 %v5844
      %v5948 = vunpack.c.l.b16 %v5845
      %v5949 = vunpack.c.l.b16 %v5846
      %v5950 = vunpack.c.l.b16 %v5847
      %v5951 = vunpack.c.l.b16 %v5848
      %v5952 = vunpack.c.l.b16 %v5849
      %v5953 = vunpack.c.l.b16 %v5850
      %v5954 = vunpack.c.l.b16 %v5851
      %v5955 = vunpack.c.l.b16 %v5852
      %v5956 = vunpack.c.l.b16 %v5853
      %v5957 = vunpack.c.l.b16 %v5854
      %v5958 = vunpack.c.l.b16 %v5855
      %v5959 = vunpack.c.l.b16 %v5856
      %v5960 = vunpack.c.l.b16 %v5857
      %v5961 = vunpack.c.l.b16 %v5858
      %v5962 = vunpack.c.l.b16 %v5859
      %v5963 = vunpack.c.l.b16 %v5860
      %v5964 = vunpack.c.l.b16 %v5861
      %v5965 = vunpack.c.l.b16 %v5862
      %v5966 = vunpack.c.l.b16 %v5863
      %v5967 = vunpack.c.l.b16 %v5864
      %v5968 = vunpack.c.l.b16 %v5865
      %v5969 = vunpack.c.l.b16 %v5866
      %v5970 = vunpack.c.l.b16 %v5867
      %v5971 = vunpack.c.l.b16 %v5868
      %v5972 = vunpack.c.l.b16 %v5869
      %v5973 = vunpack.c.l.b16 %v5870
      %v5974 = vunpack.c.l.b16 %v5871
      %v5975 = vunpack.c.l.b16 %v5872
      %v5976 = vunpack.c.l.b16 %v5873
      %v5977 = vunpack.c.l.b16 %v5874
      %v5978 = vunpack.c.l.b16 %v5875
      %v5979 = vunpack.c.l.b16 %v5876
      %v5980 = vunpack.c.l.b16 %v5877
      %v5981 = vunpack.c.l.b16 %v5878
      %v5982 = vunpack.c.l.b16 %v5879
      %v5983 = vunpack.c.l.b16 %v5880
      %v5984 = vunpack.c.l.b16 %v5881
      %v5985 = vunpack.c.l.b16 %v5882
      %v5986 = vunpack.c.l.b16 %v5883
      %v5987 = vunpack.c.l.b16 %v5884
      %v5988 = vunpack.c.l.b16 %v5885
      %v5989 = vunpack.c.l.b16 %v5886
      %v5990 = vunpack.c.l.b16 %v5887
      %v5991 = vpack.c.b16 %v5944, %v5943
      %v5992 = vpack.c.b16 %v5946, %v5945
      %v5993 = vpack.c.b16 %v5948, %v5947
      %v5994 = vpack.c.b16 %v5950, %v5949
      %v5995 = vpack.c.b16 %v5952, %v5951
      %v5996 = vpack.c.b16 %v5954, %v5953
      %v5997 = vpack.c.b16 %v5956, %v5955
      %v5998 = vpack.c.b16 %v5958, %v5957
      %v5999 = vpack.c.b16 %v5960, %v5959
      %v6000 = vpack.c.b16 %v5962, %v5961
      %v6001 = vpack.c.b16 %v5964, %v5963
      %v6002 = vpack.c.b16 %v5966, %v5965
      %v6003 = vpack.c.b16 %v5968, %v5967
      %v6004 = vpack.c.b16 %v5970, %v5969
      %v6005 = vpack.c.b16 %v5972, %v5971
      %v6006 = vpack.c.b16 %v5974, %v5973
      %v6007 = vpack.c.b16 %v5976, %v5975
      %v6008 = vpack.c.b16 %v5978, %v5977
      %v6009 = vpack.c.b16 %v5980, %v5979
      %v6010 = vpack.c.b16 %v5982, %v5981
      %v6011 = vpack.c.b16 %v5984, %v5983
      %v6012 = vpack.c.b16 %v5986, %v5985
      %v6013 = vpack.c.b16 %v5988, %v5987
      %v6014 = vpack.c.b16 %v5990, %v5989
      %6039 = vmatprep.subr.bf16.mxu0 0
      %6040 = vmatpush1.bf16.msra.mxu0 %v5998
      %6041 = vmatprep.subr.bf16.mxu0 0
      %6042 = vmatpush1.bf16.msra.mxu0 %v5997
      %6043 = vmatprep.subr.bf16.mxu0 0
      %6044 = vmatpush1.bf16.msra.mxu0 %v5996
      %6045 = vmatprep.subr.bf16.mxu0 0
      %6046 = vmatpush1.bf16.msra.mxu0 %v5995
      %6047 = vmatprep.subr.bf16.mxu0 0
      %6048 = vmatpush1.bf16.msra.mxu0 %v5994
      %6049 = vmatprep.subr.bf16.mxu0 0
      %6050 = vmatpush1.bf16.msra.mxu0 %v5993
      %6051 = vmatprep.subr.bf16.mxu0 0
      %6052 = vmatpush1.bf16.msra.mxu0 %v5992
      %6053 = vmatprep.subr.bf16.mxu0 0
      %6054 = vmatpush1.bf16.msra.mxu0 %v5991
      %6055 = vmatprep.subr.bf16.mxu0 0
      %6056 = vmatpush2.bf16.msra.mxu0 %v6006
      %6057 = vmatprep.subr.bf16.mxu0 0
      %6058 = vmatpush2.bf16.msra.mxu0 %v6005
      %6059 = vmatprep.subr.bf16.mxu0 0
      %6060 = vmatpush2.bf16.msra.mxu0 %v6004
      %6061 = vmatprep.subr.bf16.mxu0 0
      %6062 = vmatpush2.bf16.msra.mxu0 %v6003
      %6063 = vmatprep.subr.bf16.mxu0 0
      %6064 = vmatpush2.bf16.msra.mxu0 %v6002
      %6065 = vmatprep.subr.bf16.mxu0 0
      %6066 = vmatpush2.bf16.msra.mxu0 %v6001
      %6067 = vmatprep.subr.bf16.mxu0 0
      %6068 = vmatpush2.bf16.msra.mxu0 %v6000
      %6069 = vmatprep.subr.bf16.mxu0 0
      %6070 = vmatpush2.bf16.msra.mxu0 %v5999
      %6071 = vmatprep.mubr.bf16.mxu0 %v5744
      %6072 = vmatmul.mubr.bf16.gmra.mxu0 %v5680
      %v6073 = vpop.f32.mrf.mxu0
      %v6074 = vadd.f32 %v5893, %v6073
      %v6075 = vpop.f32.mrf.mxu0
      %v6076 = vpop.f32.mrf.mxu0
      %v6077 = vadd.f32 %v5893, %v6076
      %v6078 = vpop.f32.mrf.mxu0
      %6079 = vmatprep.mubr.bf16.mxu0 %v5745
      %6080 = vmatmul.mubr.bf16.gmra.mxu0 %v5681
      %v6081 = vpop.f32.mrf.mxu0
      %v6082 = vadd.f32 %v5893, %v6081
      %v6083 = vpop.f32.mrf.mxu0
      %v6084 = vpop.f32.mrf.mxu0
      %v6085 = vadd.f32 %v5893, %v6084
      %v6086 = vpop.f32.mrf.mxu0
      %6087 = vmatprep.mubr.bf16.mxu0 %v5746
      %6088 = vmatmul.mubr.bf16.gmra.mxu0 %v5682
      %v6089 = vpop.f32.mrf.mxu0
      %v6090 = vadd.f32 %v5893, %v6089
      %v6091 = vpop.f32.mrf.mxu0
      %v6092 = vpop.f32.mrf.mxu0
      %v6093 = vadd.f32 %v5893, %v6092
      %v6094 = vpop.f32.mrf.mxu0
      %6095 = vmatprep.mubr.bf16.mxu0 %v5747
      %6096 = vmatmul.mubr.bf16.gmra.mxu0 %v5683
      %v6097 = vpop.f32.mrf.mxu0
      %v6098 = vadd.f32 %v5893, %v6097
      %v6099 = vpop.f32.mrf.mxu0
      %v6100 = vpop.f32.mrf.mxu0
      %v6101 = vadd.f32 %v5893, %v6100
      %v6102 = vpop.f32.mrf.mxu0
      %6103 = vmatprep.mubr.bf16.mxu0 %v5748
      %6104 = vmatmul.mubr.bf16.gmra.mxu0 %v5684
      %v6105 = vpop.f32.mrf.mxu0
      %v6106 = vadd.f32 %v5893, %v6105
      %v6107 = vpop.f32.mrf.mxu0
      %v6108 = vpop.f32.mrf.mxu0
      %v6109 = vadd.f32 %v5893, %v6108
      %v6110 = vpop.f32.mrf.mxu0
      %6111 = vmatprep.mubr.bf16.mxu0 %v5749
      %6112 = vmatmul.mubr.bf16.gmra.mxu0 %v5685
      %v6113 = vpop.f32.mrf.mxu0
      %v6114 = vadd.f32 %v5893, %v6113
      %v6115 = vpop.f32.mrf.mxu0
      %v6116 = vpop.f32.mrf.mxu0
      %v6117 = vadd.f32 %v5893, %v6116
      %v6118 = vpop.f32.mrf.mxu0
      %6119 = vmatprep.mubr.bf16.mxu0 %v5750
      %6120 = vmatmul.mubr.bf16.gmra.mxu0 %v5686
      %v6121 = vpop.f32.mrf.mxu0
      %v6122 = vadd.f32 %v5893, %v6121
      %v6123 = vpop.f32.mrf.mxu0
      %v6124 = vpop.f32.mrf.mxu0
      %v6125 = vadd.f32 %v5893, %v6124
      %v6126 = vpop.f32.mrf.mxu0
      %6127 = vmatprep.mubr.bf16.mxu0 %v5751
      %6128 = vmatmul.mubr.bf16.gmra.mxu0 %v5687
      %v6129 = vpop.f32.mrf.mxu0
      %v6130 = vadd.f32 %v5893, %v6129
      %v6131 = vpop.f32.mrf.mxu0
      %v6132 = vpop.f32.mrf.mxu0
      %v6133 = vadd.f32 %v5893, %v6132
      %v6134 = vpop.f32.mrf.mxu0
      %6135 = vmatprep.mubr.bf16.mxu0 %v5752
      %6136 = vmatmul.mubr.bf16.gmra.mxu0 %v5688
      %v6137 = vpop.f32.mrf.mxu0
      %v6138 = vadd.f32 %v5893, %v6137
      %v6139 = vpop.f32.mrf.mxu0
      %v6140 = vpop.f32.mrf.mxu0
      %v6141 = vadd.f32 %v5893, %v6140
      %v6142 = vpop.f32.mrf.mxu0
      %6143 = vmatprep.mubr.bf16.mxu0 %v5753
      %6144 = vmatmul.mubr.bf16.gmra.mxu0 %v5689
      %v6145 = vpop.f32.mrf.mxu0
      %v6146 = vadd.f32 %v5893, %v6145
      %v6147 = vpop.f32.mrf.mxu0
      %v6148 = vpop.f32.mrf.mxu0
      %v6149 = vadd.f32 %v5893, %v6148
      %v6150 = vpop.f32.mrf.mxu0
      %6151 = vmatprep.mubr.bf16.mxu0 %v5754
      %6152 = vmatmul.mubr.bf16.gmra.mxu0 %v5690
      %v6153 = vpop.f32.mrf.mxu0
      %v6154 = vadd.f32 %v5893, %v6153
      %v6155 = vpop.f32.mrf.mxu0
      %v6156 = vpop.f32.mrf.mxu0
      %v6157 = vadd.f32 %v5893, %v6156
      %v6158 = vpop.f32.mrf.mxu0
      %6159 = vmatprep.mubr.bf16.mxu0 %v5755
      %6160 = vmatmul.mubr.bf16.gmra.mxu0 %v5691
      %v6161 = vpop.f32.mrf.mxu0
      %v6162 = vadd.f32 %v5893, %v6161
      %v6163 = vpop.f32.mrf.mxu0
      %v6164 = vpop.f32.mrf.mxu0
      %v6165 = vadd.f32 %v5893, %v6164
      %v6166 = vpop.f32.mrf.mxu0
      %6167 = vmatprep.mubr.bf16.mxu0 %v5756
      %6168 = vmatmul.mubr.bf16.gmra.mxu0 %v5692
      %v6169 = vpop.f32.mrf.mxu0
      %v6170 = vadd.f32 %v5893, %v6169
      %v6171 = vpop.f32.mrf.mxu0
      %v6172 = vpop.f32.mrf.mxu0
      %v6173 = vadd.f32 %v5893, %v6172
      %v6174 = vpop.f32.mrf.mxu0
      %6175 = vmatprep.mubr.bf16.mxu0 %v5757
      %6176 = vmatmul.mubr.bf16.gmra.mxu0 %v5693
      %v6177 = vpop.f32.mrf.mxu0
      %v6178 = vadd.f32 %v5893, %v6177
      %v6179 = vpop.f32.mrf.mxu0
      %v6180 = vpop.f32.mrf.mxu0
      %v6181 = vadd.f32 %v5893, %v6180
      %v6182 = vpop.f32.mrf.mxu0
      %6183 = vmatprep.mubr.bf16.mxu0 %v5758
      %6184 = vmatmul.mubr.bf16.gmra.mxu0 %v5694
      %v6185 = vpop.f32.mrf.mxu0
      %v6186 = vadd.f32 %v5893, %v6185
      %v6187 = vpop.f32.mrf.mxu0
      %v6188 = vpop.f32.mrf.mxu0
      %v6189 = vadd.f32 %v5893, %v6188
      %v6190 = vpop.f32.mrf.mxu0
      %6191 = vmatprep.mubr.bf16.mxu0 %v5759
      %6192 = vmatmul.mubr.bf16.gmra.mxu0 %v5695
      %v6193 = vpop.f32.mrf.mxu0
      %v6194 = vadd.f32 %v5893, %v6193
      %v6195 = vpop.f32.mrf.mxu0
      %v6196 = vpop.f32.mrf.mxu0
      %v6197 = vadd.f32 %v5893, %v6196
      %v6198 = vpop.f32.mrf.mxu0
      %6199 = vdwg.mxu0
      %6200 = vmatprep.subr.bf16.mxu0 0
      %6201 = vmatpush1.bf16.msra.mxu0 %v6014
      %6202 = vmatprep.subr.bf16.mxu0 0
      %6203 = vmatpush1.bf16.msra.mxu0 %v6013
      %6204 = vmatprep.subr.bf16.mxu0 0
      %6205 = vmatpush1.bf16.msra.mxu0 %v6012
      %6206 = vmatprep.subr.bf16.mxu0 0
      %6207 = vmatpush1.bf16.msra.mxu0 %v6011
      %6208 = vmatprep.subr.bf16.mxu0 0
      %6209 = vmatpush1.bf16.msra.mxu0 %v6010
      %6210 = vmatprep.subr.bf16.mxu0 0
      %6211 = vmatpush1.bf16.msra.mxu0 %v6009
      %6212 = vmatprep.subr.bf16.mxu0 0
      %6213 = vmatpush1.bf16.msra.mxu0 %v6008
      %6214 = vmatprep.subr.bf16.mxu0 0
      %6215 = vmatpush1.bf16.msra.mxu0 %v6007
      %6216 = vmatprep.subr.bf16.mxu0 0
      %6217 = vmatpush2.bf16.msra.mxu0 0
      %6218 = vmatprep.subr.bf16.mxu0 0
      %6219 = vmatpush2.bf16.msra.mxu0 0
      %6220 = vmatprep.subr.bf16.mxu0 0
      %6221 = vmatpush2.bf16.msra.mxu0 0
      %6222 = vmatprep.subr.bf16.mxu0 0
      %6223 = vmatpush2.bf16.msra.mxu0 0
      %6224 = vmatprep.subr.bf16.mxu0 0
      %6225 = vmatpush2.bf16.msra.mxu0 0
      %6226 = vmatprep.subr.bf16.mxu0 0
      %6227 = vmatpush2.bf16.msra.mxu0 0
      %6228 = vmatprep.subr.bf16.mxu0 0
      %6229 = vmatpush2.bf16.msra.mxu0 0
      %6230 = vmatprep.subr.bf16.mxu0 0
      %6231 = vmatpush2.bf16.msra.mxu0 0
      %6232 = vmatprep.mubr.bf16.mxu0 0
      %6233 = vmatmul.mubr.bf16.gmra.mxu0 %v5808
      %v6234 = vpop.f32.mrf.mxu0
      %v6235 = vadd.f32 %v6074, %v6234
      %v6236 = vpop.f32.mrf.mxu0
      %v6237 = vpop.f32.mrf.mxu0
      %v6238 = vadd.f32 %v6077, %v6237
      %v6239 = vpop.f32.mrf.mxu0
      %6240 = vmatprep.mubr.bf16.mxu0 0
      %6241 = vmatmul.mubr.bf16.gmra.mxu0 %v5809
      %v6242 = vpop.f32.mrf.mxu0
      %v6243 = vadd.f32 %v6082, %v6242
      %v6244 = vpop.f32.mrf.mxu0
      %v6245 = vpop.f32.mrf.mxu0
      %v6246 = vadd.f32 %v6085, %v6245
      %v6247 = vpop.f32.mrf.mxu0
      %6248 = vmatprep.mubr.bf16.mxu0 0
      %6249 = vmatmul.mubr.bf16.gmra.mxu0 %v5810
      %v6250 = vpop.f32.mrf.mxu0
      %v6251 = vadd.f32 %v6090, %v6250
      %v6252 = vpop.f32.mrf.mxu0
      %v6253 = vpop.f32.mrf.mxu0
      %v6254 = vadd.f32 %v6093, %v6253
      %v6255 = vpop.f32.mrf.mxu0
      %6256 = vmatprep.mubr.bf16.mxu0 0
      %6257 = vmatmul.mubr.bf16.gmra.mxu0 %v5811
      %v6258 = vpop.f32.mrf.mxu0
      %v6259 = vadd.f32 %v6098, %v6258
      %v6260 = vpop.f32.mrf.mxu0
      %v6261 = vpop.f32.mrf.mxu0
      %v6262 = vadd.f32 %v6101, %v6261
      %v6263 = vpop.f32.mrf.mxu0
      %6264 = vmatprep.mubr.bf16.mxu0 0
      %6265 = vmatmul.mubr.bf16.gmra.mxu0 %v5812
      %v6266 = vpop.f32.mrf.mxu0
      %v6267 = vadd.f32 %v6106, %v6266
      %v6268 = vpop.f32.mrf.mxu0
      %v6269 = vpop.f32.mrf.mxu0
      %v6270 = vadd.f32 %v6109, %v6269
      %v6271 = vpop.f32.mrf.mxu0
      %6272 = vmatprep.mubr.bf16.mxu0 0
      %6273 = vmatmul.mubr.bf16.gmra.mxu0 %v5813
      %v6274 = vpop.f32.mrf.mxu0
      %v6275 = vadd.f32 %v6114, %v6274
      %v6276 = vpop.f32.mrf.mxu0
      %v6277 = vpop.f32.mrf.mxu0
      %v6278 = vadd.f32 %v6117, %v6277
      %v6279 = vpop.f32.mrf.mxu0
      %6280 = vmatprep.mubr.bf16.mxu0 0
      %6281 = vmatmul.mubr.bf16.gmra.mxu0 %v5814
      %v6282 = vpop.f32.mrf.mxu0
      %v6283 = vadd.f32 %v6122, %v6282
      %v6284 = vpop.f32.mrf.mxu0
      %v6285 = vpop.f32.mrf.mxu0
      %v6286 = vadd.f32 %v6125, %v6285
      %v6287 = vpop.f32.mrf.mxu0
      %6288 = vmatprep.mubr.bf16.mxu0 0
      %6289 = vmatmul.mubr.bf16.gmra.mxu0 %v5815
      %v6290 = vpop.f32.mrf.mxu0
      %v6291 = vadd.f32 %v6130, %v6290
      %v6292 = vpop.f32.mrf.mxu0
      %v6293 = vpop.f32.mrf.mxu0
      %v6294 = vadd.f32 %v6133, %v6293
      %v6295 = vpop.f32.mrf.mxu0
      %6296 = vmatprep.mubr.bf16.mxu0 0
      %6297 = vmatmul.mubr.bf16.gmra.mxu0 %v5816
      %v6298 = vpop.f32.mrf.mxu0
      %v6299 = vadd.f32 %v6138, %v6298
      %v6300 = vpop.f32.mrf.mxu0
      %v6301 = vpop.f32.mrf.mxu0
      %v6302 = vadd.f32 %v6141, %v6301
      %v6303 = vpop.f32.mrf.mxu0
      %6304 = vmatprep.mubr.bf16.mxu0 0
      %6305 = vmatmul.mubr.bf16.gmra.mxu0 %v5817
      %v6306 = vpop.f32.mrf.mxu0
      %v6307 = vadd.f32 %v6146, %v6306
      %v6308 = vpop.f32.mrf.mxu0
      %v6309 = vpop.f32.mrf.mxu0
      %v6310 = vadd.f32 %v6149, %v6309
      %v6311 = vpop.f32.mrf.mxu0
      %6312 = vmatprep.mubr.bf16.mxu0 0
      %6313 = vmatmul.mubr.bf16.gmra.mxu0 %v5818
      %v6314 = vpop.f32.mrf.mxu0
      %v6315 = vadd.f32 %v6154, %v6314
      %v6316 = vpop.f32.mrf.mxu0
      %v6317 = vpop.f32.mrf.mxu0
      %v6318 = vadd.f32 %v6157, %v6317
      %v6319 = vpop.f32.mrf.mxu0
      %6320 = vmatprep.mubr.bf16.mxu0 0
      %6321 = vmatmul.mubr.bf16.gmra.mxu0 %v5819
      %v6322 = vpop.f32.mrf.mxu0
      %v6323 = vadd.f32 %v6162, %v6322
      %v6324 = vpop.f32.mrf.mxu0
      %v6325 = vpop.f32.mrf.mxu0
      %v6326 = vadd.f32 %v6165, %v6325
      %v6327 = vpop.f32.mrf.mxu0
      %6328 = vmatprep.mubr.bf16.mxu0 0
      %6329 = vmatmul.mubr.bf16.gmra.mxu0 %v5820
      %v6330 = vpop.f32.mrf.mxu0
      %v6331 = vadd.f32 %v6170, %v6330
      %v6332 = vpop.f32.mrf.mxu0
      %v6333 = vpop.f32.mrf.mxu0
      %v6334 = vadd.f32 %v6173, %v6333
      %v6335 = vpop.f32.mrf.mxu0
      %6336 = vmatprep.mubr.bf16.mxu0 0
      %6337 = vmatmul.mubr.bf16.gmra.mxu0 %v5821
      %v6338 = vpop.f32.mrf.mxu0
      %v6339 = vadd.f32 %v6178, %v6338
      %v6340 = vpop.f32.mrf.mxu0
      %v6341 = vpop.f32.mrf.mxu0
      %v6342 = vadd.f32 %v6181, %v6341
      %v6343 = vpop.f32.mrf.mxu0
      %6344 = vmatprep.mubr.bf16.mxu0 0
      %6345 = vmatmul.mubr.bf16.gmra.mxu0 %v5822
      %v6346 = vpop.f32.mrf.mxu0
      %v6347 = vadd.f32 %v6186, %v6346
      %v6348 = vpop.f32.mrf.mxu0
      %v6349 = vpop.f32.mrf.mxu0
      %v6350 = vadd.f32 %v6189, %v6349
      %v6351 = vpop.f32.mrf.mxu0
      %6352 = vmatprep.mubr.bf16.mxu0 0
      %6353 = vmatmul.mubr.bf16.gmra.mxu0 %v5823
      %v6354 = vpop.f32.mrf.mxu0
      %v6355 = vadd.f32 %v6194, %v6354
      %v6356 = vpop.f32.mrf.mxu0
      %v6357 = vpop.f32.mrf.mxu0
      %v6358 = vadd.f32 %v6197, %v6357
      %v6359 = vpop.f32.mrf.mxu0
      %6360 = vdwg.mxu0
      %v6361 = vld [vmem:[%s4390] sm:$0xf]
      %v6362 = vld [vmem:[%s4390 + $0x4] sm:$0xf]
      %v6363 = vld [vmem:[%s4390 + $0xc] sm:$0xf]
      %v6364 = vld [vmem:[%s4390 + $0x10] sm:$0xf]
      %v6365 = vld [vmem:[%s4390 + $0x18] sm:$0xf]
      %v6366 = vld [vmem:[%s4390 + $0x1c] sm:$0xf]
      %v6367 = vld [vmem:[%s4390 + $0x24] sm:$0xf]
      %v6368 = vld [vmem:[%s4390 + $0x28] sm:$0xf]
      %v6369 = vld [vmem:[%s4390 + $0x30] sm:$0xf]
      %v6370 = vld [vmem:[%s4390 + $0x34] sm:$0xf]
      %v6371 = vld [vmem:[%s4390 + $0x3c] sm:$0xf]
      %v6372 = vld [vmem:[%s4390 + $0x40] sm:$0xf]
      %v6373 = vld [vmem:[%s4390 + $0x48] sm:$0xf]
      %v6374 = vld [vmem:[%s4390 + $0x4c] sm:$0xf]
      %v6375 = vld [vmem:[%s4390 + $0x54] sm:$0xf]
      %v6376 = vld [vmem:[%s4390 + $0x58] sm:$0xf]
      %v6377 = vld [vmem:[%s4390 + $0x60] sm:$0xf]
      %v6378 = vld [vmem:[%s4390 + $0x64] sm:$0xf]
      %v6379 = vld [vmem:[%s4390 + $0x6c] sm:$0xf]
      %v6380 = vld [vmem:[%s4390 + $0x70] sm:$0xf]
      %v6381 = vld [vmem:[%s4390 + $0x78] sm:$0xf]
      %v6382 = vld [vmem:[%s4390 + $0x7c] sm:$0xf]
      %v6383 = vld [vmem:[%s4390 + $0x84] sm:$0xf]
      %v6384 = vld [vmem:[%s4390 + $0x88] sm:$0xf]
      %v6385 = vld [vmem:[%s4390 + $0x90] sm:$0xf]
      %v6386 = vld [vmem:[%s4390 + $0x94] sm:$0xf]
      %v6387 = vld [vmem:[%s4390 + $0x9c] sm:$0xf]
      %v6388 = vld [vmem:[%s4390 + $0xa0] sm:$0xf]
      %v6389 = vld [vmem:[%s4390 + $0xa8] sm:$0xf]
      %v6390 = vld [vmem:[%s4390 + $0xac] sm:$0xf]
      %v6391 = vld [vmem:[%s4390 + $0xb4] sm:$0xf]
      %v6392 = vld [vmem:[%s4390 + $0xb8] sm:$0xf]
      %v6393 = vld [vmem:[%s4390 + $0x8] sm:$0x1]
      %v6394 = vld [vmem:[%s4390 + $0x14] sm:$0x1]
      %v6395 = vld [vmem:[%s4390 + $0x20] sm:$0x1]
      %v6396 = vld [vmem:[%s4390 + $0x2c] sm:$0x1]
      %v6397 = vld [vmem:[%s4390 + $0x38] sm:$0x1]
      %v6398 = vld [vmem:[%s4390 + $0x44] sm:$0x1]
      %v6399 = vld [vmem:[%s4390 + $0x50] sm:$0x1]
      %v6400 = vld [vmem:[%s4390 + $0x5c] sm:$0x1]
      %v6401 = vld [vmem:[%s4390 + $0x68] sm:$0x1]
      %v6402 = vld [vmem:[%s4390 + $0x74] sm:$0x1]
      %v6403 = vld [vmem:[%s4390 + $0x80] sm:$0x1]
      %v6404 = vld [vmem:[%s4390 + $0x8c] sm:$0x1]
      %v6405 = vld [vmem:[%s4390 + $0x98] sm:$0x1]
      %v6406 = vld [vmem:[%s4390 + $0xa4] sm:$0x1]
      %v6407 = vld [vmem:[%s4390 + $0xb0] sm:$0x1]
      %v6408 = vld [vmem:[%s4390 + $0xbc] sm:$0x1]
      %v6410 = vshrl.u32 %v6361, 16
      %v6412 = vrot.slane %v6410, 4
      %v6413 = vshll.u32 %v6361, 16
      %v6415 = vrot.slane %v6413, 5
      %v6416 = vor.u32 %v6412, %v6415
      %v6417 = vrot.slane %v6416, 4
      %v6419 = vshll.u32 %v6362, 16
      %v6421 = vrot.slane %v6419, 5
      %v6422 = vsel %vm330, %v6417, %v6421
      %v6423 = vshrl.u32 %v6362, 16
      %v6425 = vrot.slane %v6423, 4
      %v6426 = vor.u32 %v6425, %v6421
      %v6427 = vrot.slane %v6426, 4
      %v6429 = vshll.u32 %v6393, 16
      %v6431 = vrot.slane %v6429, 5
      %v6432 = vsel %vm330, %v6427, %v6431
      %v6434 = vshrl.u32 %v6363, 16
      %v6436 = vrot.slane %v6434, 4
      %v6437 = vshll.u32 %v6363, 16
      %v6439 = vrot.slane %v6437, 5
      %v6440 = vor.u32 %v6436, %v6439
      %v6441 = vrot.slane %v6440, 4
      %v6443 = vshll.u32 %v6364, 16
      %v6445 = vrot.slane %v6443, 5
      %v6446 = vsel %vm330, %v6441, %v6445
      %v6447 = vshrl.u32 %v6364, 16
      %v6449 = vrot.slane %v6447, 4
      %v6450 = vor.u32 %v6449, %v6445
      %v6451 = vrot.slane %v6450, 4
      %v6453 = vshll.u32 %v6394, 16
      %v6455 = vrot.slane %v6453, 5
      %v6456 = vsel %vm330, %v6451, %v6455
      %v6458 = vshrl.u32 %v6365, 16
      %v6460 = vrot.slane %v6458, 4
      %v6461 = vshll.u32 %v6365, 16
      %v6463 = vrot.slane %v6461, 5
      %v6464 = vor.u32 %v6460, %v6463
      %v6465 = vrot.slane %v6464, 4
      %v6467 = vshll.u32 %v6366, 16
      %v6469 = vrot.slane %v6467, 5
      %v6470 = vsel %vm330, %v6465, %v6469
      %v6471 = vshrl.u32 %v6366, 16
      %v6473 = vrot.slane %v6471, 4
      %v6474 = vor.u32 %v6473, %v6469
      %v6475 = vrot.slane %v6474, 4
      %v6477 = vshll.u32 %v6395, 16
      %v6479 = vrot.slane %v6477, 5
      %v6480 = vsel %vm330, %v6475, %v6479
      %v6482 = vshrl.u32 %v6367, 16
      %v6484 = vrot.slane %v6482, 4
      %v6485 = vshll.u32 %v6367, 16
      %v6487 = vrot.slane %v6485, 5
      %v6488 = vor.u32 %v6484, %v6487
      %v6489 = vrot.slane %v6488, 4
      %v6491 = vshll.u32 %v6368, 16
      %v6493 = vrot.slane %v6491, 5
      %v6494 = vsel %vm330, %v6489, %v6493
      %v6495 = vshrl.u32 %v6368, 16
      %v6497 = vrot.slane %v6495, 4
      %v6498 = vor.u32 %v6497, %v6493
      %v6499 = vrot.slane %v6498, 4
      %v6501 = vshll.u32 %v6396, 16
      %v6503 = vrot.slane %v6501, 5
      %v6504 = vsel %vm330, %v6499, %v6503
      %v6506 = vshrl.u32 %v6369, 16
      %v6508 = vrot.slane %v6506, 4
      %v6509 = vshll.u32 %v6369, 16
      %v6511 = vrot.slane %v6509, 5
      %v6512 = vor.u32 %v6508, %v6511
      %v6513 = vrot.slane %v6512, 4
      %v6515 = vshll.u32 %v6370, 16
      %v6517 = vrot.slane %v6515, 5
      %v6518 = vsel %vm330, %v6513, %v6517
      %v6519 = vshrl.u32 %v6370, 16
      %v6521 = vrot.slane %v6519, 4
      %v6522 = vor.u32 %v6521, %v6517
      %v6523 = vrot.slane %v6522, 4
      %v6525 = vshll.u32 %v6397, 16
      %v6527 = vrot.slane %v6525, 5
      %v6528 = vsel %vm330, %v6523, %v6527
      %v6530 = vshrl.u32 %v6371, 16
      %v6532 = vrot.slane %v6530, 4
      %v6533 = vshll.u32 %v6371, 16
      %v6535 = vrot.slane %v6533, 5
      %v6536 = vor.u32 %v6532, %v6535
      %v6537 = vrot.slane %v6536, 4
      %v6539 = vshll.u32 %v6372, 16
      %v6541 = vrot.slane %v6539, 5
      %v6542 = vsel %vm330, %v6537, %v6541
      %v6543 = vshrl.u32 %v6372, 16
      %v6545 = vrot.slane %v6543, 4
      %v6546 = vor.u32 %v6545, %v6541
      %v6547 = vrot.slane %v6546, 4
      %v6549 = vshll.u32 %v6398, 16
      %v6551 = vrot.slane %v6549, 5
      %v6552 = vsel %vm330, %v6547, %v6551
      %v6554 = vshrl.u32 %v6373, 16
      %v6556 = vrot.slane %v6554, 4
      %v6557 = vshll.u32 %v6373, 16
      %v6559 = vrot.slane %v6557, 5
      %v6560 = vor.u32 %v6556, %v6559
      %v6561 = vrot.slane %v6560, 4
      %v6563 = vshll.u32 %v6374, 16
      %v6565 = vrot.slane %v6563, 5
      %v6566 = vsel %vm330, %v6561, %v6565
      %v6567 = vshrl.u32 %v6374, 16
      %v6569 = vrot.slane %v6567, 4
      %v6570 = vor.u32 %v6569, %v6565
      %v6571 = vrot.slane %v6570, 4
      %v6573 = vshll.u32 %v6399, 16
      %v6575 = vrot.slane %v6573, 5
      %v6576 = vsel %vm330, %v6571, %v6575
      %v6578 = vshrl.u32 %v6375, 16
      %v6580 = vrot.slane %v6578, 4
      %v6581 = vshll.u32 %v6375, 16
      %v6583 = vrot.slane %v6581, 5
      %v6584 = vor.u32 %v6580, %v6583
      %v6585 = vrot.slane %v6584, 4
      %v6587 = vshll.u32 %v6376, 16
      %v6589 = vrot.slane %v6587, 5
      %v6590 = vsel %vm330, %v6585, %v6589
      %v6591 = vshrl.u32 %v6376, 16
      %v6593 = vrot.slane %v6591, 4
      %v6594 = vor.u32 %v6593, %v6589
      %v6595 = vrot.slane %v6594, 4
      %v6597 = vshll.u32 %v6400, 16
      %v6599 = vrot.slane %v6597, 5
      %v6600 = vsel %vm330, %v6595, %v6599
      %v6602 = vshrl.u32 %v6377, 16
      %v6604 = vrot.slane %v6602, 4
      %v6605 = vshll.u32 %v6377, 16
      %v6607 = vrot.slane %v6605, 5
      %v6608 = vor.u32 %v6604, %v6607
      %v6609 = vrot.slane %v6608, 4
      %v6611 = vshll.u32 %v6378, 16
      %v6613 = vrot.slane %v6611, 5
      %v6614 = vsel %vm330, %v6609, %v6613
      %v6615 = vshrl.u32 %v6378, 16
      %v6617 = vrot.slane %v6615, 4
      %v6618 = vor.u32 %v6617, %v6613
      %v6619 = vrot.slane %v6618, 4
      %v6621 = vshll.u32 %v6401, 16
      %v6623 = vrot.slane %v6621, 5
      %v6624 = vsel %vm330, %v6619, %v6623
      %v6626 = vshrl.u32 %v6379, 16
      %v6628 = vrot.slane %v6626, 4
      %v6629 = vshll.u32 %v6379, 16
      %v6631 = vrot.slane %v6629, 5
      %v6632 = vor.u32 %v6628, %v6631
      %v6633 = vrot.slane %v6632, 4
      %v6635 = vshll.u32 %v6380, 16
      %v6637 = vrot.slane %v6635, 5
      %v6638 = vsel %vm330, %v6633, %v6637
      %v6639 = vshrl.u32 %v6380, 16
      %v6641 = vrot.slane %v6639, 4
      %v6642 = vor.u32 %v6641, %v6637
      %v6643 = vrot.slane %v6642, 4
      %v6645 = vshll.u32 %v6402, 16
      %v6647 = vrot.slane %v6645, 5
      %v6648 = vsel %vm330, %v6643, %v6647
      %v6650 = vshrl.u32 %v6381, 16
      %v6652 = vrot.slane %v6650, 4
      %v6653 = vshll.u32 %v6381, 16
      %v6655 = vrot.slane %v6653, 5
      %v6656 = vor.u32 %v6652, %v6655
      %v6657 = vrot.slane %v6656, 4
      %v6659 = vshll.u32 %v6382, 16
      %v6661 = vrot.slane %v6659, 5
      %v6662 = vsel %vm330, %v6657, %v6661
      %v6663 = vshrl.u32 %v6382, 16
      %v6665 = vrot.slane %v6663, 4
      %v6666 = vor.u32 %v6665, %v6661
      %v6667 = vrot.slane %v6666, 4
      %v6669 = vshll.u32 %v6403, 16
      %v6671 = vrot.slane %v6669, 5
      %v6672 = vsel %vm330, %v6667, %v6671
      %v6674 = vshrl.u32 %v6383, 16
      %v6676 = vrot.slane %v6674, 4
      %v6677 = vshll.u32 %v6383, 16
      %v6679 = vrot.slane %v6677, 5
      %v6680 = vor.u32 %v6676, %v6679
      %v6681 = vrot.slane %v6680, 4
      %v6683 = vshll.u32 %v6384, 16
      %v6685 = vrot.slane %v6683, 5
      %v6686 = vsel %vm330, %v6681, %v6685
      %v6687 = vshrl.u32 %v6384, 16
      %v6689 = vrot.slane %v6687, 4
      %v6690 = vor.u32 %v6689, %v6685
      %v6691 = vrot.slane %v6690, 4
      %v6693 = vshll.u32 %v6404, 16
      %v6695 = vrot.slane %v6693, 5
      %v6696 = vsel %vm330, %v6691, %v6695
      %v6698 = vshrl.u32 %v6385, 16
      %v6700 = vrot.slane %v6698, 4
      %v6701 = vshll.u32 %v6385, 16
      %v6703 = vrot.slane %v6701, 5
      %v6704 = vor.u32 %v6700, %v6703
      %v6705 = vrot.slane %v6704, 4
      %v6707 = vshll.u32 %v6386, 16
      %v6709 = vrot.slane %v6707, 5
      %v6710 = vsel %vm330, %v6705, %v6709
      %v6711 = vshrl.u32 %v6386, 16
      %v6713 = vrot.slane %v6711, 4
      %v6714 = vor.u32 %v6713, %v6709
      %v6715 = vrot.slane %v6714, 4
      %v6717 = vshll.u32 %v6405, 16
      %v6719 = vrot.slane %v6717, 5
      %v6720 = vsel %vm330, %v6715, %v6719
      %v6722 = vshrl.u32 %v6387, 16
      %v6724 = vrot.slane %v6722, 4
      %v6725 = vshll.u32 %v6387, 16
      %v6727 = vrot.slane %v6725, 5
      %v6728 = vor.u32 %v6724, %v6727
      %v6729 = vrot.slane %v6728, 4
      %v6731 = vshll.u32 %v6388, 16
      %v6733 = vrot.slane %v6731, 5
      %v6734 = vsel %vm330, %v6729, %v6733
      %v6735 = vshrl.u32 %v6388, 16
      %v6737 = vrot.slane %v6735, 4
      %v6738 = vor.u32 %v6737, %v6733
      %v6739 = vrot.slane %v6738, 4
      %v6741 = vshll.u32 %v6406, 16
      %v6743 = vrot.slane %v6741, 5
      %v6744 = vsel %vm330, %v6739, %v6743
      %v6746 = vshrl.u32 %v6389, 16
      %v6748 = vrot.slane %v6746, 4
      %v6749 = vshll.u32 %v6389, 16
      %v6751 = vrot.slane %v6749, 5
      %v6752 = vor.u32 %v6748, %v6751
      %v6753 = vrot.slane %v6752, 4
      %v6755 = vshll.u32 %v6390, 16
      %v6757 = vrot.slane %v6755, 5
      %v6758 = vsel %vm330, %v6753, %v6757
      %v6759 = vshrl.u32 %v6390, 16
      %v6761 = vrot.slane %v6759, 4
      %v6762 = vor.u32 %v6761, %v6757
      %v6763 = vrot.slane %v6762, 4
      %v6765 = vshll.u32 %v6407, 16
      %v6767 = vrot.slane %v6765, 5
      %v6768 = vsel %vm330, %v6763, %v6767
      %v6770 = vshrl.u32 %v6391, 16
      %v6772 = vrot.slane %v6770, 4
      %v6773 = vshll.u32 %v6391, 16
      %v6775 = vrot.slane %v6773, 5
      %v6776 = vor.u32 %v6772, %v6775
      %v6777 = vrot.slane %v6776, 4
      %v6779 = vshll.u32 %v6392, 16
      %v6781 = vrot.slane %v6779, 5
      %v6782 = vsel %vm330, %v6777, %v6781
      %v6783 = vshrl.u32 %v6392, 16
      %v6785 = vrot.slane %v6783, 4
      %v6786 = vor.u32 %v6785, %v6781
      %v6787 = vrot.slane %v6786, 4
      %v6789 = vshll.u32 %v6408, 16
      %v6791 = vrot.slane %v6789, 5
      %v6792 = vsel %vm330, %v6787, %v6791
      %v6793 = vld [vmem:[%s4390] sm:$0xe]
      %v6794 = vld [vmem:[%s4390 + $0xc] sm:$0xe]
      %v6795 = vld [vmem:[%s4390 + $0x18] sm:$0xe]
      %v6796 = vld [vmem:[%s4390 + $0x24] sm:$0xe]
      %v6797 = vld [vmem:[%s4390 + $0x30] sm:$0xe]
      %v6798 = vld [vmem:[%s4390 + $0x3c] sm:$0xe]
      %v6799 = vld [vmem:[%s4390 + $0x48] sm:$0xe]
      %v6800 = vld [vmem:[%s4390 + $0x54] sm:$0xe]
      %v6801 = vld [vmem:[%s4390 + $0x60] sm:$0xe]
      %v6802 = vld [vmem:[%s4390 + $0x6c] sm:$0xe]
      %v6803 = vld [vmem:[%s4390 + $0x78] sm:$0xe]
      %v6804 = vld [vmem:[%s4390 + $0x84] sm:$0xe]
      %v6805 = vld [vmem:[%s4390 + $0x90] sm:$0xe]
      %v6806 = vld [vmem:[%s4390 + $0x9c] sm:$0xe]
      %v6807 = vld [vmem:[%s4390 + $0xa8] sm:$0xe]
      %v6808 = vld [vmem:[%s4390 + $0xb4] sm:$0xe]
      %v6857 = vrot.slane %v6793, 5
      %v6858 = vrot.slane %v6857, 4
      %v6859 = vrot.slane %v6362, 5
      %v6860 = vsel %vm781, %v6858, %v6859
      %v6861 = vrot.slane %v6859, 4
      %v6862 = vrot.slane %v6393, 5
      %v6863 = vsel %vm781, %v6861, %v6862
      %v6864 = vrot.slane %v6794, 5
      %v6865 = vrot.slane %v6864, 4
      %v6866 = vrot.slane %v6364, 5
      %v6867 = vsel %vm781, %v6865, %v6866
      %v6868 = vrot.slane %v6866, 4
      %v6869 = vrot.slane %v6394, 5
      %v6870 = vsel %vm781, %v6868, %v6869
      %v6871 = vrot.slane %v6795, 5
      %v6872 = vrot.slane %v6871, 4
      %v6873 = vrot.slane %v6366, 5
      %v6874 = vsel %vm781, %v6872, %v6873
      %v6875 = vrot.slane %v6873, 4
      %v6876 = vrot.slane %v6395, 5
      %v6877 = vsel %vm781, %v6875, %v6876
      %v6878 = vrot.slane %v6796, 5
      %v6879 = vrot.slane %v6878, 4
      %v6880 = vrot.slane %v6368, 5
      %v6881 = vsel %vm781, %v6879, %v6880
      %v6882 = vrot.slane %v6880, 4
      %v6883 = vrot.slane %v6396, 5
      %v6884 = vsel %vm781, %v6882, %v6883
      %v6885 = vrot.slane %v6797, 5
      %v6886 = vrot.slane %v6885, 4
      %v6887 = vrot.slane %v6370, 5
      %v6888 = vsel %vm781, %v6886, %v6887
      %v6889 = vrot.slane %v6887, 4
      %v6890 = vrot.slane %v6397, 5
      %v6891 = vsel %vm781, %v6889, %v6890
      %v6892 = vrot.slane %v6798, 5
      %v6893 = vrot.slane %v6892, 4
      %v6894 = vrot.slane %v6372, 5
      %v6895 = vsel %vm781, %v6893, %v6894
      %v6896 = vrot.slane %v6894, 4
      %v6897 = vrot.slane %v6398, 5
      %v6898 = vsel %vm781, %v6896, %v6897
      %v6899 = vrot.slane %v6799, 5
      %v6900 = vrot.slane %v6899, 4
      %v6901 = vrot.slane %v6374, 5
      %v6902 = vsel %vm781, %v6900, %v6901
      %v6903 = vrot.slane %v6901, 4
      %v6904 = vrot.slane %v6399, 5
      %v6905 = vsel %vm781, %v6903, %v6904
      %v6906 = vrot.slane %v6800, 5
      %v6907 = vrot.slane %v6906, 4
      %v6908 = vrot.slane %v6376, 5
      %v6909 = vsel %vm781, %v6907, %v6908
      %v6910 = vrot.slane %v6908, 4
      %v6911 = vrot.slane %v6400, 5
      %v6912 = vsel %vm781, %v6910, %v6911
      %v6913 = vrot.slane %v6801, 5
      %v6914 = vrot.slane %v6913, 4
      %v6915 = vrot.slane %v6378, 5
      %v6916 = vsel %vm781, %v6914, %v6915
      %v6917 = vrot.slane %v6915, 4
      %v6918 = vrot.slane %v6401, 5
      %v6919 = vsel %vm781, %v6917, %v6918
      %v6920 = vrot.slane %v6802, 5
      %v6921 = vrot.slane %v6920, 4
      %v6922 = vrot.slane %v6380, 5
      %v6923 = vsel %vm781, %v6921, %v6922
      %v6924 = vrot.slane %v6922, 4
      %v6925 = vrot.slane %v6402, 5
      %v6926 = vsel %vm781, %v6924, %v6925
      %v6927 = vrot.slane %v6803, 5
      %v6928 = vrot.slane %v6927, 4
      %v6929 = vrot.slane %v6382, 5
      %v6930 = vsel %vm781, %v6928, %v6929
      %v6931 = vrot.slane %v6929, 4
      %v6932 = vrot.slane %v6403, 5
      %v6933 = vsel %vm781, %v6931, %v6932
      %v6934 = vrot.slane %v6804, 5
      %v6935 = vrot.slane %v6934, 4
      %v6936 = vrot.slane %v6384, 5
      %v6937 = vsel %vm781, %v6935, %v6936
      %v6938 = vrot.slane %v6936, 4
      %v6939 = vrot.slane %v6404, 5
      %v6940 = vsel %vm781, %v6938, %v6939
      %v6941 = vrot.slane %v6805, 5
      %v6942 = vrot.slane %v6941, 4
      %v6943 = vrot.slane %v6386, 5
      %v6944 = vsel %vm781, %v6942, %v6943
      %v6945 = vrot.slane %v6943, 4
      %v6946 = vrot.slane %v6405, 5
      %v6947 = vsel %vm781, %v6945, %v6946
      %v6948 = vrot.slane %v6806, 5
      %v6949 = vrot.slane %v6948, 4
      %v6950 = vrot.slane %v6388, 5
      %v6951 = vsel %vm781, %v6949, %v6950
      %v6952 = vrot.slane %v6950, 4
      %v6953 = vrot.slane %v6406, 5
      %v6954 = vsel %vm781, %v6952, %v6953
      %v6955 = vrot.slane %v6807, 5
      %v6956 = vrot.slane %v6955, 4
      %v6957 = vrot.slane %v6390, 5
      %v6958 = vsel %vm781, %v6956, %v6957
      %v6959 = vrot.slane %v6957, 4
      %v6960 = vrot.slane %v6407, 5
      %v6961 = vsel %vm781, %v6959, %v6960
      %v6962 = vrot.slane %v6808, 5
      %v6963 = vrot.slane %v6962, 4
      %v6964 = vrot.slane %v6392, 5
      %v6965 = vsel %vm781, %v6963, %v6964
      %v6966 = vrot.slane %v6964, 4
      %v6967 = vrot.slane %v6408, 5
      %v6968 = vsel %vm781, %v6966, %v6967
      %v6985 = vunpack.c.l.b16 %v6361
      %v6986 = vunpack.c.l.b16 %v6362
      %v6987 = vunpack.c.l.b16 %v6363
      %v6988 = vunpack.c.l.b16 %v6364
      %v6989 = vunpack.c.l.b16 %v6365
      %v6990 = vunpack.c.l.b16 %v6366
      %v6991 = vunpack.c.l.b16 %v6367
      %v6992 = vunpack.c.l.b16 %v6368
      %v6993 = vunpack.c.l.b16 %v6369
      %v6994 = vunpack.c.l.b16 %v6370
      %v6995 = vunpack.c.l.b16 %v6371
      %v6996 = vunpack.c.l.b16 %v6372
      %v6997 = vunpack.c.l.b16 %v6373
      %v6998 = vunpack.c.l.b16 %v6374
      %v6999 = vunpack.c.l.b16 %v6375
      %v7000 = vunpack.c.l.b16 %v6376
      %v7001 = vunpack.c.l.b16 %v6377
      %v7002 = vunpack.c.l.b16 %v6378
      %v7003 = vunpack.c.l.b16 %v6379
      %v7004 = vunpack.c.l.b16 %v6380
      %v7005 = vunpack.c.l.b16 %v6381
      %v7006 = vunpack.c.l.b16 %v6382
      %v7007 = vunpack.c.l.b16 %v6383
      %v7008 = vunpack.c.l.b16 %v6384
      %v7009 = vunpack.c.l.b16 %v6385
      %v7010 = vunpack.c.l.b16 %v6386
      %v7011 = vunpack.c.l.b16 %v6387
      %v7012 = vunpack.c.l.b16 %v6388
      %v7013 = vunpack.c.l.b16 %v6389
      %v7014 = vunpack.c.l.b16 %v6390
      %v7015 = vunpack.c.l.b16 %v6391
      %v7016 = vunpack.c.l.b16 %v6392
      %v7017 = vpack.c.b16 %v6986, %v6985
      %v7018 = vpack.c.b16 %v6988, %v6987
      %v7019 = vpack.c.b16 %v6990, %v6989
      %v7020 = vpack.c.b16 %v6992, %v6991
      %v7021 = vpack.c.b16 %v6994, %v6993
      %v7022 = vpack.c.b16 %v6996, %v6995
      %v7023 = vpack.c.b16 %v6998, %v6997
      %v7024 = vpack.c.b16 %v7000, %v6999
      %v7025 = vpack.c.b16 %v7002, %v7001
      %v7026 = vpack.c.b16 %v7004, %v7003
      %v7027 = vpack.c.b16 %v7006, %v7005
      %v7028 = vpack.c.b16 %v7008, %v7007
      %v7029 = vpack.c.b16 %v7010, %v7009
      %v7030 = vpack.c.b16 %v7012, %v7011
      %v7031 = vpack.c.b16 %v7014, %v7013
      %v7032 = vpack.c.b16 %v7016, %v7015
      %v7049 = vunpack.c.l.b16 %v6422
      %v7050 = vunpack.c.l.b16 %v6432
      %v7051 = vunpack.c.l.b16 %v6446
      %v7052 = vunpack.c.l.b16 %v6456
      %v7053 = vunpack.c.l.b16 %v6470
      %v7054 = vunpack.c.l.b16 %v6480
      %v7055 = vunpack.c.l.b16 %v6494
      %v7056 = vunpack.c.l.b16 %v6504
      %v7057 = vunpack.c.l.b16 %v6518
      %v7058 = vunpack.c.l.b16 %v6528
      %v7059 = vunpack.c.l.b16 %v6542
      %v7060 = vunpack.c.l.b16 %v6552
      %v7061 = vunpack.c.l.b16 %v6566
      %v7062 = vunpack.c.l.b16 %v6576
      %v7063 = vunpack.c.l.b16 %v6590
      %v7064 = vunpack.c.l.b16 %v6600
      %v7065 = vunpack.c.l.b16 %v6614
      %v7066 = vunpack.c.l.b16 %v6624
      %v7067 = vunpack.c.l.b16 %v6638
      %v7068 = vunpack.c.l.b16 %v6648
      %v7069 = vunpack.c.l.b16 %v6662
      %v7070 = vunpack.c.l.b16 %v6672
      %v7071 = vunpack.c.l.b16 %v6686
      %v7072 = vunpack.c.l.b16 %v6696
      %v7073 = vunpack.c.l.b16 %v6710
      %v7074 = vunpack.c.l.b16 %v6720
      %v7075 = vunpack.c.l.b16 %v6734
      %v7076 = vunpack.c.l.b16 %v6744
      %v7077 = vunpack.c.l.b16 %v6758
      %v7078 = vunpack.c.l.b16 %v6768
      %v7079 = vunpack.c.l.b16 %v6782
      %v7080 = vunpack.c.l.b16 %v6792
      %v7081 = vpack.c.b16 %v7050, %v7049
      %v7082 = vpack.c.b16 %v7052, %v7051
      %v7083 = vpack.c.b16 %v7054, %v7053
      %v7084 = vpack.c.b16 %v7056, %v7055
      %v7085 = vpack.c.b16 %v7058, %v7057
      %v7086 = vpack.c.b16 %v7060, %v7059
      %v7087 = vpack.c.b16 %v7062, %v7061
      %v7088 = vpack.c.b16 %v7064, %v7063
      %v7089 = vpack.c.b16 %v7066, %v7065
      %v7090 = vpack.c.b16 %v7068, %v7067
      %v7091 = vpack.c.b16 %v7070, %v7069
      %v7092 = vpack.c.b16 %v7072, %v7071
      %v7093 = vpack.c.b16 %v7074, %v7073
      %v7094 = vpack.c.b16 %v7076, %v7075
      %v7095 = vpack.c.b16 %v7078, %v7077
      %v7096 = vpack.c.b16 %v7080, %v7079
      %v7113 = vunpack.c.l.b16 %v6860
      %v7114 = vunpack.c.l.b16 %v6863
      %v7115 = vunpack.c.l.b16 %v6867
      %v7116 = vunpack.c.l.b16 %v6870
      %v7117 = vunpack.c.l.b16 %v6874
      %v7118 = vunpack.c.l.b16 %v6877
      %v7119 = vunpack.c.l.b16 %v6881
      %v7120 = vunpack.c.l.b16 %v6884
      %v7121 = vunpack.c.l.b16 %v6888
      %v7122 = vunpack.c.l.b16 %v6891
      %v7123 = vunpack.c.l.b16 %v6895
      %v7124 = vunpack.c.l.b16 %v6898
      %v7125 = vunpack.c.l.b16 %v6902
      %v7126 = vunpack.c.l.b16 %v6905
      %v7127 = vunpack.c.l.b16 %v6909
      %v7128 = vunpack.c.l.b16 %v6912
      %v7129 = vunpack.c.l.b16 %v6916
      %v7130 = vunpack.c.l.b16 %v6919
      %v7131 = vunpack.c.l.b16 %v6923
      %v7132 = vunpack.c.l.b16 %v6926
      %v7133 = vunpack.c.l.b16 %v6930
      %v7134 = vunpack.c.l.b16 %v6933
      %v7135 = vunpack.c.l.b16 %v6937
      %v7136 = vunpack.c.l.b16 %v6940
      %v7137 = vunpack.c.l.b16 %v6944
      %v7138 = vunpack.c.l.b16 %v6947
      %v7139 = vunpack.c.l.b16 %v6951
      %v7140 = vunpack.c.l.b16 %v6954
      %v7141 = vunpack.c.l.b16 %v6958
      %v7142 = vunpack.c.l.b16 %v6961
      %v7143 = vunpack.c.l.b16 %v6965
      %v7144 = vunpack.c.l.b16 %v6968
      %v7145 = vpack.c.b16 %v7114, %v7113
      %v7146 = vpack.c.b16 %v7116, %v7115
      %v7147 = vpack.c.b16 %v7118, %v7117
      %v7148 = vpack.c.b16 %v7120, %v7119
      %v7149 = vpack.c.b16 %v7122, %v7121
      %v7150 = vpack.c.b16 %v7124, %v7123
      %v7151 = vpack.c.b16 %v7126, %v7125
      %v7152 = vpack.c.b16 %v7128, %v7127
      %v7153 = vpack.c.b16 %v7130, %v7129
      %v7154 = vpack.c.b16 %v7132, %v7131
      %v7155 = vpack.c.b16 %v7134, %v7133
      %v7156 = vpack.c.b16 %v7136, %v7135
      %v7157 = vpack.c.b16 %v7138, %v7137
      %v7158 = vpack.c.b16 %v7140, %v7139
      %v7159 = vpack.c.b16 %v7142, %v7141
      %v7160 = vpack.c.b16 %v7144, %v7143
      %s7177 = scalar_lea.vmem %s3, 192
      %v7178 = vld [vmem:[%s7177] sm:$0xf]
      %v7179 = vld [vmem:[%s7177 + $0x4] sm:$0xf]
      %v7180 = vld [vmem:[%s7177 + $0x8] sm:$0xf]
      %v7181 = vld [vmem:[%s7177 + $0xc] sm:$0xf]
      %v7182 = vld [vmem:[%s7177 + $0x10] sm:$0xf]
      %v7183 = vld [vmem:[%s7177 + $0x14] sm:$0xf]
      %v7184 = vld [vmem:[%s7177 + $0x18] sm:$0xf]
      %v7185 = vld [vmem:[%s7177 + $0x1c] sm:$0xf]
      %v7186 = vld [vmem:[%s7177 + $0x20] sm:$0xf]
      %v7187 = vld [vmem:[%s7177 + $0x24] sm:$0xf]
      %v7188 = vld [vmem:[%s7177 + $0x28] sm:$0xf]
      %v7189 = vld [vmem:[%s7177 + $0x2c] sm:$0xf]
      %v7190 = vld [vmem:[%s7177 + $0x30] sm:$0xf]
      %v7191 = vld [vmem:[%s7177 + $0x34] sm:$0xf]
      %v7192 = vld [vmem:[%s7177 + $0x38] sm:$0xf]
      %v7193 = vld [vmem:[%s7177 + $0x3c] sm:$0xf]
      %v7194 = vld [vmem:[%s7177 + $0x40] sm:$0xf]
      %v7195 = vld [vmem:[%s7177 + $0x44] sm:$0xf]
      %v7196 = vld [vmem:[%s7177 + $0x48] sm:$0xf]
      %v7197 = vld [vmem:[%s7177 + $0x4c] sm:$0xf]
      %v7198 = vld [vmem:[%s7177 + $0x50] sm:$0xf]
      %v7199 = vld [vmem:[%s7177 + $0x54] sm:$0xf]
      %v7200 = vld [vmem:[%s7177 + $0x58] sm:$0xf]
      %v7201 = vld [vmem:[%s7177 + $0x5c] sm:$0xf]
      %v7202 = vld [vmem:[%s7177 + $0x60] sm:$0xf]
      %v7203 = vld [vmem:[%s7177 + $0x64] sm:$0xf]
      %v7204 = vld [vmem:[%s7177 + $0x68] sm:$0xf]
      %v7205 = vld [vmem:[%s7177 + $0x6c] sm:$0xf]
      %v7206 = vld [vmem:[%s7177 + $0x70] sm:$0xf]
      %v7207 = vld [vmem:[%s7177 + $0x74] sm:$0xf]
      %v7208 = vld [vmem:[%s7177 + $0x78] sm:$0xf]
      %v7209 = vld [vmem:[%s7177 + $0x7c] sm:$0xf]
      %v7210 = vld [vmem:[%s7177 + $0x80] sm:$0xf]
      %v7211 = vld [vmem:[%s7177 + $0x84] sm:$0xf]
      %v7212 = vld [vmem:[%s7177 + $0x88] sm:$0xf]
      %v7213 = vld [vmem:[%s7177 + $0x8c] sm:$0xf]
      %v7214 = vld [vmem:[%s7177 + $0x90] sm:$0xf]
      %v7215 = vld [vmem:[%s7177 + $0x94] sm:$0xf]
      %v7216 = vld [vmem:[%s7177 + $0x98] sm:$0xf]
      %v7217 = vld [vmem:[%s7177 + $0x9c] sm:$0xf]
      %v7218 = vld [vmem:[%s7177 + $0xa0] sm:$0xf]
      %v7219 = vld [vmem:[%s7177 + $0xa4] sm:$0xf]
      %v7220 = vld [vmem:[%s7177 + $0xa8] sm:$0xf]
      %v7221 = vld [vmem:[%s7177 + $0xac] sm:$0xf]
      %v7222 = vld [vmem:[%s7177 + $0xb0] sm:$0xf]
      %v7223 = vld [vmem:[%s7177 + $0xb4] sm:$0xf]
      %v7224 = vld [vmem:[%s7177 + $0xb8] sm:$0xf]
      %v7225 = vld [vmem:[%s7177 + $0xbc] sm:$0xf]
      %v7274 = vunpack.c.l.b16 %v7178
      %v7275 = vunpack.c.l.b16 %v7179
      %v7276 = vunpack.c.l.b16 %v7180
      %v7277 = vunpack.c.l.b16 %v7181
      %v7278 = vunpack.c.l.b16 %v7182
      %v7279 = vunpack.c.l.b16 %v7183
      %v7280 = vunpack.c.l.b16 %v7184
      %v7281 = vunpack.c.l.b16 %v7185
      %v7282 = vunpack.c.l.b16 %v7186
      %v7283 = vunpack.c.l.b16 %v7187
      %v7284 = vunpack.c.l.b16 %v7188
      %v7285 = vunpack.c.l.b16 %v7189
      %v7286 = vunpack.c.l.b16 %v7190
      %v7287 = vunpack.c.l.b16 %v7191
      %v7288 = vunpack.c.l.b16 %v7192
      %v7289 = vunpack.c.l.b16 %v7193
      %v7290 = vunpack.c.l.b16 %v7194
      %v7291 = vunpack.c.l.b16 %v7195
      %v7292 = vunpack.c.l.b16 %v7196
      %v7293 = vunpack.c.l.b16 %v7197
      %v7294 = vunpack.c.l.b16 %v7198
      %v7295 = vunpack.c.l.b16 %v7199
      %v7296 = vunpack.c.l.b16 %v7200
      %v7297 = vunpack.c.l.b16 %v7201
      %v7298 = vunpack.c.l.b16 %v7202
      %v7299 = vunpack.c.l.b16 %v7203
      %v7300 = vunpack.c.l.b16 %v7204
      %v7301 = vunpack.c.l.b16 %v7205
      %v7302 = vunpack.c.l.b16 %v7206
      %v7303 = vunpack.c.l.b16 %v7207
      %v7304 = vunpack.c.l.b16 %v7208
      %v7305 = vunpack.c.l.b16 %v7209
      %v7306 = vunpack.c.l.b16 %v7210
      %v7307 = vunpack.c.l.b16 %v7211
      %v7308 = vunpack.c.l.b16 %v7212
      %v7309 = vunpack.c.l.b16 %v7213
      %v7310 = vunpack.c.l.b16 %v7214
      %v7311 = vunpack.c.l.b16 %v7215
      %v7312 = vunpack.c.l.b16 %v7216
      %v7313 = vunpack.c.l.b16 %v7217
      %v7314 = vunpack.c.l.b16 %v7218
      %v7315 = vunpack.c.l.b16 %v7219
      %v7316 = vunpack.c.l.b16 %v7220
      %v7317 = vunpack.c.l.b16 %v7221
      %v7318 = vunpack.c.l.b16 %v7222
      %v7319 = vunpack.c.l.b16 %v7223
      %v7320 = vunpack.c.l.b16 %v7224
      %v7321 = vunpack.c.l.b16 %v7225
      %v7322 = vpack.c.b16 %v7275, %v7274
      %v7323 = vpack.c.b16 %v7277, %v7276
      %v7324 = vpack.c.b16 %v7279, %v7278
      %v7325 = vpack.c.b16 %v7281, %v7280
      %v7326 = vpack.c.b16 %v7283, %v7282
      %v7327 = vpack.c.b16 %v7285, %v7284
      %v7328 = vpack.c.b16 %v7287, %v7286
      %v7329 = vpack.c.b16 %v7289, %v7288
      %v7330 = vpack.c.b16 %v7291, %v7290
      %v7331 = vpack.c.b16 %v7293, %v7292
      %v7332 = vpack.c.b16 %v7295, %v7294
      %v7333 = vpack.c.b16 %v7297, %v7296
      %v7334 = vpack.c.b16 %v7299, %v7298
      %v7335 = vpack.c.b16 %v7301, %v7300
      %v7336 = vpack.c.b16 %v7303, %v7302
      %v7337 = vpack.c.b16 %v7305, %v7304
      %v7338 = vpack.c.b16 %v7307, %v7306
      %v7339 = vpack.c.b16 %v7309, %v7308
      %v7340 = vpack.c.b16 %v7311, %v7310
      %v7341 = vpack.c.b16 %v7313, %v7312
      %v7342 = vpack.c.b16 %v7315, %v7314
      %v7343 = vpack.c.b16 %v7317, %v7316
      %v7344 = vpack.c.b16 %v7319, %v7318
      %v7345 = vpack.c.b16 %v7321, %v7320
      %7370 = vmatprep.subr.bf16.mxu0 0
      %7371 = vmatpush1.bf16.msra.mxu0 %v7329
      %7372 = vmatprep.subr.bf16.mxu0 0
      %7373 = vmatpush1.bf16.msra.mxu0 %v7328
      %7374 = vmatprep.subr.bf16.mxu0 0
      %7375 = vmatpush1.bf16.msra.mxu0 %v7327
      %7376 = vmatprep.subr.bf16.mxu0 0
      %7377 = vmatpush1.bf16.msra.mxu0 %v7326
      %7378 = vmatprep.subr.bf16.mxu0 0
      %7379 = vmatpush1.bf16.msra.mxu0 %v7325
      %7380 = vmatprep.subr.bf16.mxu0 0
      %7381 = vmatpush1.bf16.msra.mxu0 %v7324
      %7382 = vmatprep.subr.bf16.mxu0 0
      %7383 = vmatpush1.bf16.msra.mxu0 %v7323
      %7384 = vmatprep.subr.bf16.mxu0 0
      %7385 = vmatpush1.bf16.msra.mxu0 %v7322
      %7386 = vmatprep.subr.bf16.mxu0 0
      %7387 = vmatpush2.bf16.msra.mxu0 %v7337
      %7388 = vmatprep.subr.bf16.mxu0 0
      %7389 = vmatpush2.bf16.msra.mxu0 %v7336
      %7390 = vmatprep.subr.bf16.mxu0 0
      %7391 = vmatpush2.bf16.msra.mxu0 %v7335
      %7392 = vmatprep.subr.bf16.mxu0 0
      %7393 = vmatpush2.bf16.msra.mxu0 %v7334
      %7394 = vmatprep.subr.bf16.mxu0 0
      %7395 = vmatpush2.bf16.msra.mxu0 %v7333
      %7396 = vmatprep.subr.bf16.mxu0 0
      %7397 = vmatpush2.bf16.msra.mxu0 %v7332
      %7398 = vmatprep.subr.bf16.mxu0 0
      %7399 = vmatpush2.bf16.msra.mxu0 %v7331
      %7400 = vmatprep.subr.bf16.mxu0 0
      %7401 = vmatpush2.bf16.msra.mxu0 %v7330
      %7402 = vmatprep.mubr.bf16.mxu0 %v7081
      %7403 = vmatmul.mubr.bf16.gmra.mxu0 %v7017
      %v7404 = vpop.f32.mrf.mxu0
      %v7405 = vadd.f32 0.0, %v7404
      %v7406 = vpop.f32.mrf.mxu0
      %v7407 = vpop.f32.mrf.mxu0
      %v7408 = vadd.f32 0.0, %v7407
      %v7409 = vpop.f32.mrf.mxu0
      %7410 = vmatprep.mubr.bf16.mxu0 %v7082
      %7411 = vmatmul.mubr.bf16.gmra.mxu0 %v7018
      %v7412 = vpop.f32.mrf.mxu0
      %v7413 = vadd.f32 0.0, %v7412
      %v7414 = vpop.f32.mrf.mxu0
      %v7415 = vpop.f32.mrf.mxu0
      %v7416 = vadd.f32 0.0, %v7415
      %v7417 = vpop.f32.mrf.mxu0
      %7418 = vmatprep.mubr.bf16.mxu0 %v7083
      %7419 = vmatmul.mubr.bf16.gmra.mxu0 %v7019
      %v7420 = vpop.f32.mrf.mxu0
      %v7421 = vadd.f32 0.0, %v7420
      %v7422 = vpop.f32.mrf.mxu0
      %v7423 = vpop.f32.mrf.mxu0
      %v7424 = vadd.f32 0.0, %v7423
      %v7425 = vpop.f32.mrf.mxu0
      %7426 = vmatprep.mubr.bf16.mxu0 %v7084
      %7427 = vmatmul.mubr.bf16.gmra.mxu0 %v7020
      %v7428 = vpop.f32.mrf.mxu0
      %v7429 = vadd.f32 0.0, %v7428
      %v7430 = vpop.f32.mrf.mxu0
      %v7431 = vpop.f32.mrf.mxu0
      %v7432 = vadd.f32 0.0, %v7431
      %v7433 = vpop.f32.mrf.mxu0
      %7434 = vmatprep.mubr.bf16.mxu0 %v7085
      %7435 = vmatmul.mubr.bf16.gmra.mxu0 %v7021
      %v7436 = vpop.f32.mrf.mxu0
      %v7437 = vadd.f32 0.0, %v7436
      %v7438 = vpop.f32.mrf.mxu0
      %v7439 = vpop.f32.mrf.mxu0
      %v7440 = vadd.f32 0.0, %v7439
      %v7441 = vpop.f32.mrf.mxu0
      %7442 = vmatprep.mubr.bf16.mxu0 %v7086
      %7443 = vmatmul.mubr.bf16.gmra.mxu0 %v7022
      %v7444 = vpop.f32.mrf.mxu0
      %v7445 = vadd.f32 0.0, %v7444
      %v7446 = vpop.f32.mrf.mxu0
      %v7447 = vpop.f32.mrf.mxu0
      %v7448 = vadd.f32 0.0, %v7447
      %v7449 = vpop.f32.mrf.mxu0
      %7450 = vmatprep.mubr.bf16.mxu0 %v7087
      %7451 = vmatmul.mubr.bf16.gmra.mxu0 %v7023
      %v7452 = vpop.f32.mrf.mxu0
      %v7453 = vadd.f32 0.0, %v7452
      %v7454 = vpop.f32.mrf.mxu0
      %v7455 = vpop.f32.mrf.mxu0
      %v7456 = vadd.f32 0.0, %v7455
      %v7457 = vpop.f32.mrf.mxu0
      %7458 = vmatprep.mubr.bf16.mxu0 %v7088
      %7459 = vmatmul.mubr.bf16.gmra.mxu0 %v7024
      %v7460 = vpop.f32.mrf.mxu0
      %v7461 = vadd.f32 0.0, %v7460
      %v7462 = vpop.f32.mrf.mxu0
      %v7463 = vpop.f32.mrf.mxu0
      %v7464 = vadd.f32 0.0, %v7463
      %v7465 = vpop.f32.mrf.mxu0
      %7466 = vmatprep.mubr.bf16.mxu0 %v7089
      %7467 = vmatmul.mubr.bf16.gmra.mxu0 %v7025
      %v7468 = vpop.f32.mrf.mxu0
      %v7469 = vadd.f32 0.0, %v7468
      %v7470 = vpop.f32.mrf.mxu0
      %v7471 = vpop.f32.mrf.mxu0
      %v7472 = vadd.f32 0.0, %v7471
      %v7473 = vpop.f32.mrf.mxu0
      %7474 = vmatprep.mubr.bf16.mxu0 %v7090
      %7475 = vmatmul.mubr.bf16.gmra.mxu0 %v7026
      %v7476 = vpop.f32.mrf.mxu0
      %v7477 = vadd.f32 0.0, %v7476
      %v7478 = vpop.f32.mrf.mxu0
      %v7479 = vpop.f32.mrf.mxu0
      %v7480 = vadd.f32 0.0, %v7479
      %v7481 = vpop.f32.mrf.mxu0
      %7482 = vmatprep.mubr.bf16.mxu0 %v7091
      %7483 = vmatmul.mubr.bf16.gmra.mxu0 %v7027
      %v7484 = vpop.f32.mrf.mxu0
      %v7485 = vadd.f32 0.0, %v7484
      %v7486 = vpop.f32.mrf.mxu0
      %v7487 = vpop.f32.mrf.mxu0
      %v7488 = vadd.f32 0.0, %v7487
      %v7489 = vpop.f32.mrf.mxu0
      %7490 = vmatprep.mubr.bf16.mxu0 %v7092
      %7491 = vmatmul.mubr.bf16.gmra.mxu0 %v7028
      %v7492 = vpop.f32.mrf.mxu0
      %v7493 = vadd.f32 0.0, %v7492
      %v7494 = vpop.f32.mrf.mxu0
      %v7495 = vpop.f32.mrf.mxu0
      %v7496 = vadd.f32 0.0, %v7495
      %v7497 = vpop.f32.mrf.mxu0
      %7498 = vmatprep.mubr.bf16.mxu0 %v7093
      %7499 = vmatmul.mubr.bf16.gmra.mxu0 %v7029
      %v7500 = vpop.f32.mrf.mxu0
      %v7501 = vadd.f32 0.0, %v7500
      %v7502 = vpop.f32.mrf.mxu0
      %v7503 = vpop.f32.mrf.mxu0
      %v7504 = vadd.f32 0.0, %v7503
      %v7505 = vpop.f32.mrf.mxu0
      %7506 = vmatprep.mubr.bf16.mxu0 %v7094
      %7507 = vmatmul.mubr.bf16.gmra.mxu0 %v7030
      %v7508 = vpop.f32.mrf.mxu0
      %v7509 = vadd.f32 0.0, %v7508
      %v7510 = vpop.f32.mrf.mxu0
      %v7511 = vpop.f32.mrf.mxu0
      %v7512 = vadd.f32 0.0, %v7511
      %v7513 = vpop.f32.mrf.mxu0
      %7514 = vmatprep.mubr.bf16.mxu0 %v7095
      %7515 = vmatmul.mubr.bf16.gmra.mxu0 %v7031
      %v7516 = vpop.f32.mrf.mxu0
      %v7517 = vadd.f32 0.0, %v7516
      %v7518 = vpop.f32.mrf.mxu0
      %v7519 = vpop.f32.mrf.mxu0
      %v7520 = vadd.f32 0.0, %v7519
      %v7521 = vpop.f32.mrf.mxu0
      %7522 = vmatprep.mubr.bf16.mxu0 %v7096
      %7523 = vmatmul.mubr.bf16.gmra.mxu0 %v7032
      %v7524 = vpop.f32.mrf.mxu0
      %v7525 = vadd.f32 0.0, %v7524
      %v7526 = vpop.f32.mrf.mxu0
      %v7527 = vpop.f32.mrf.mxu0
      %v7528 = vadd.f32 0.0, %v7527
      %v7529 = vpop.f32.mrf.mxu0
      %7530 = vdwg.mxu0
      %7531 = vmatprep.subr.bf16.mxu0 0
      %7532 = vmatpush1.bf16.msra.mxu0 %v7345
      %7533 = vmatprep.subr.bf16.mxu0 0
      %7534 = vmatpush1.bf16.msra.mxu0 %v7344
      %7535 = vmatprep.subr.bf16.mxu0 0
      %7536 = vmatpush1.bf16.msra.mxu0 %v7343
      %7537 = vmatprep.subr.bf16.mxu0 0
      %7538 = vmatpush1.bf16.msra.mxu0 %v7342
      %7539 = vmatprep.subr.bf16.mxu0 0
      %7540 = vmatpush1.bf16.msra.mxu0 %v7341
      %7541 = vmatprep.subr.bf16.mxu0 0
      %7542 = vmatpush1.bf16.msra.mxu0 %v7340
      %7543 = vmatprep.subr.bf16.mxu0 0
      %7544 = vmatpush1.bf16.msra.mxu0 %v7339
      %7545 = vmatprep.subr.bf16.mxu0 0
      %7546 = vmatpush1.bf16.msra.mxu0 %v7338
      %7547 = vmatprep.subr.bf16.mxu0 0
      %7548 = vmatpush2.bf16.msra.mxu0 0
      %7549 = vmatprep.subr.bf16.mxu0 0
      %7550 = vmatpush2.bf16.msra.mxu0 0
      %7551 = vmatprep.subr.bf16.mxu0 0
      %7552 = vmatpush2.bf16.msra.mxu0 0
      %7553 = vmatprep.subr.bf16.mxu0 0
      %7554 = vmatpush2.bf16.msra.mxu0 0
      %7555 = vmatprep.subr.bf16.mxu0 0
      %7556 = vmatpush2.bf16.msra.mxu0 0
      %7557 = vmatprep.subr.bf16.mxu0 0
      %7558 = vmatpush2.bf16.msra.mxu0 0
      %7559 = vmatprep.subr.bf16.mxu0 0
      %7560 = vmatpush2.bf16.msra.mxu0 0
      %7561 = vmatprep.subr.bf16.mxu0 0
      %7562 = vmatpush2.bf16.msra.mxu0 0
      %7563 = vmatprep.mubr.bf16.mxu0 0
      %7564 = vmatmul.mubr.bf16.gmra.mxu0 %v7145
      %v7565 = vpop.f32.mrf.mxu0
      %v7566 = vadd.f32 %v7405, %v7565
      %v7567 = vpop.f32.mrf.mxu0
      %v7568 = vpop.f32.mrf.mxu0
      %v7569 = vadd.f32 %v7408, %v7568
      %v7570 = vpop.f32.mrf.mxu0
      %7571 = vmatprep.mubr.bf16.mxu0 0
      %7572 = vmatmul.mubr.bf16.gmra.mxu0 %v7146
      %v7573 = vpop.f32.mrf.mxu0
      %v7574 = vadd.f32 %v7413, %v7573
      %v7575 = vpop.f32.mrf.mxu0
      %v7576 = vpop.f32.mrf.mxu0
      %v7577 = vadd.f32 %v7416, %v7576
      %v7578 = vpop.f32.mrf.mxu0
      %7579 = vmatprep.mubr.bf16.mxu0 0
      %7580 = vmatmul.mubr.bf16.gmra.mxu0 %v7147
      %v7581 = vpop.f32.mrf.mxu0
      %v7582 = vadd.f32 %v7421, %v7581
      %v7583 = vpop.f32.mrf.mxu0
      %v7584 = vpop.f32.mrf.mxu0
      %v7585 = vadd.f32 %v7424, %v7584
      %v7586 = vpop.f32.mrf.mxu0
      %7587 = vmatprep.mubr.bf16.mxu0 0
      %7588 = vmatmul.mubr.bf16.gmra.mxu0 %v7148
      %v7589 = vpop.f32.mrf.mxu0
      %v7590 = vadd.f32 %v7429, %v7589
      %v7591 = vpop.f32.mrf.mxu0
      %v7592 = vpop.f32.mrf.mxu0
      %v7593 = vadd.f32 %v7432, %v7592
      %v7594 = vpop.f32.mrf.mxu0
      %7595 = vmatprep.mubr.bf16.mxu0 0
      %7596 = vmatmul.mubr.bf16.gmra.mxu0 %v7149
      %v7597 = vpop.f32.mrf.mxu0
      %v7598 = vadd.f32 %v7437, %v7597
      %v7599 = vpop.f32.mrf.mxu0
      %v7600 = vpop.f32.mrf.mxu0
      %v7601 = vadd.f32 %v7440, %v7600
      %v7602 = vpop.f32.mrf.mxu0
      %7603 = vmatprep.mubr.bf16.mxu0 0
      %7604 = vmatmul.mubr.bf16.gmra.mxu0 %v7150
      %v7605 = vpop.f32.mrf.mxu0
      %v7606 = vadd.f32 %v7445, %v7605
      %v7607 = vpop.f32.mrf.mxu0
      %v7608 = vpop.f32.mrf.mxu0
      %v7609 = vadd.f32 %v7448, %v7608
      %v7610 = vpop.f32.mrf.mxu0
      %7611 = vmatprep.mubr.bf16.mxu0 0
      %7612 = vmatmul.mubr.bf16.gmra.mxu0 %v7151
      %v7613 = vpop.f32.mrf.mxu0
      %v7614 = vadd.f32 %v7453, %v7613
      %v7615 = vpop.f32.mrf.mxu0
      %v7616 = vpop.f32.mrf.mxu0
      %v7617 = vadd.f32 %v7456, %v7616
      %v7618 = vpop.f32.mrf.mxu0
      %7619 = vmatprep.mubr.bf16.mxu0 0
      %7620 = vmatmul.mubr.bf16.gmra.mxu0 %v7152
      %v7621 = vpop.f32.mrf.mxu0
      %v7622 = vadd.f32 %v7461, %v7621
      %v7623 = vpop.f32.mrf.mxu0
      %v7624 = vpop.f32.mrf.mxu0
      %v7625 = vadd.f32 %v7464, %v7624
      %v7626 = vpop.f32.mrf.mxu0
      %7627 = vmatprep.mubr.bf16.mxu0 0
      %7628 = vmatmul.mubr.bf16.gmra.mxu0 %v7153
      %v7629 = vpop.f32.mrf.mxu0
      %v7630 = vadd.f32 %v7469, %v7629
      %v7631 = vpop.f32.mrf.mxu0
      %v7632 = vpop.f32.mrf.mxu0
      %v7633 = vadd.f32 %v7472, %v7632
      %v7634 = vpop.f32.mrf.mxu0
      %7635 = vmatprep.mubr.bf16.mxu0 0
      %7636 = vmatmul.mubr.bf16.gmra.mxu0 %v7154
      %v7637 = vpop.f32.mrf.mxu0
      %v7638 = vadd.f32 %v7477, %v7637
      %v7639 = vpop.f32.mrf.mxu0
      %v7640 = vpop.f32.mrf.mxu0
      %v7641 = vadd.f32 %v7480, %v7640
      %v7642 = vpop.f32.mrf.mxu0
      %7643 = vmatprep.mubr.bf16.mxu0 0
      %7644 = vmatmul.mubr.bf16.gmra.mxu0 %v7155
      %v7645 = vpop.f32.mrf.mxu0
      %v7646 = vadd.f32 %v7485, %v7645
      %v7647 = vpop.f32.mrf.mxu0
      %v7648 = vpop.f32.mrf.mxu0
      %v7649 = vadd.f32 %v7488, %v7648
      %v7650 = vpop.f32.mrf.mxu0
      %7651 = vmatprep.mubr.bf16.mxu0 0
      %7652 = vmatmul.mubr.bf16.gmra.mxu0 %v7156
      %v7653 = vpop.f32.mrf.mxu0
      %v7654 = vadd.f32 %v7493, %v7653
      %v7655 = vpop.f32.mrf.mxu0
      %v7656 = vpop.f32.mrf.mxu0
      %v7657 = vadd.f32 %v7496, %v7656
      %v7658 = vpop.f32.mrf.mxu0
      %7659 = vmatprep.mubr.bf16.mxu0 0
      %7660 = vmatmul.mubr.bf16.gmra.mxu0 %v7157
      %v7661 = vpop.f32.mrf.mxu0
      %v7662 = vadd.f32 %v7501, %v7661
      %v7663 = vpop.f32.mrf.mxu0
      %v7664 = vpop.f32.mrf.mxu0
      %v7665 = vadd.f32 %v7504, %v7664
      %v7666 = vpop.f32.mrf.mxu0
      %7667 = vmatprep.mubr.bf16.mxu0 0
      %7668 = vmatmul.mubr.bf16.gmra.mxu0 %v7158
      %v7669 = vpop.f32.mrf.mxu0
      %v7670 = vadd.f32 %v7509, %v7669
      %v7671 = vpop.f32.mrf.mxu0
      %v7672 = vpop.f32.mrf.mxu0
      %v7673 = vadd.f32 %v7512, %v7672
      %v7674 = vpop.f32.mrf.mxu0
      %7675 = vmatprep.mubr.bf16.mxu0 0
      %7676 = vmatmul.mubr.bf16.gmra.mxu0 %v7159
      %v7677 = vpop.f32.mrf.mxu0
      %v7678 = vadd.f32 %v7517, %v7677
      %v7679 = vpop.f32.mrf.mxu0
      %v7680 = vpop.f32.mrf.mxu0
      %v7681 = vadd.f32 %v7520, %v7680
      %v7682 = vpop.f32.mrf.mxu0
      %7683 = vmatprep.mubr.bf16.mxu0 0
      %7684 = vmatmul.mubr.bf16.gmra.mxu0 %v7160
      %v7685 = vpop.f32.mrf.mxu0
      %v7686 = vadd.f32 %v7525, %v7685
      %v7687 = vpop.f32.mrf.mxu0
      %v7688 = vpop.f32.mrf.mxu0
      %v7689 = vadd.f32 %v7528, %v7688
      %v7690 = vpop.f32.mrf.mxu0
      %7691 = vdwg.mxu0
      %v7692 = vadd.f32 %v6235, %v7566
      %v7693 = vadd.f32 %v6238, %v7569
      %v7694 = vadd.f32 %v6243, %v7574
      %v7695 = vadd.f32 %v6246, %v7577
      %v7696 = vadd.f32 %v6251, %v7582
      %v7697 = vadd.f32 %v6254, %v7585
      %v7698 = vadd.f32 %v6259, %v7590
      %v7699 = vadd.f32 %v6262, %v7593
      %v7700 = vadd.f32 %v6267, %v7598
      %v7701 = vadd.f32 %v6270, %v7601
      %v7702 = vadd.f32 %v6275, %v7606
      %v7703 = vadd.f32 %v6278, %v7609
      %v7704 = vadd.f32 %v6283, %v7614
      %v7705 = vadd.f32 %v6286, %v7617
      %v7706 = vadd.f32 %v6291, %v7622
      %v7707 = vadd.f32 %v6294, %v7625
      %v7708 = vadd.f32 %v6299, %v7630
      %v7709 = vadd.f32 %v6302, %v7633
      %v7710 = vadd.f32 %v6307, %v7638
      %v7711 = vadd.f32 %v6310, %v7641
      %v7712 = vadd.f32 %v6315, %v7646
      %v7713 = vadd.f32 %v6318, %v7649
      %v7714 = vadd.f32 %v6323, %v7654
      %v7715 = vadd.f32 %v6326, %v7657
      %v7716 = vadd.f32 %v6331, %v7662
      %v7717 = vadd.f32 %v6334, %v7665
      %v7718 = vadd.f32 %v6339, %v7670
      %v7719 = vadd.f32 %v6342, %v7673
      %v7720 = vadd.f32 %v6347, %v7678
      %v7721 = vadd.f32 %v6350, %v7681
      %v7722 = vadd.f32 %v6355, %v7686
      %v7723 = vadd.f32 %v6358, %v7689
      %s7724 = scalar_lea.vmem [#allocation2], 24
      %v7725 = vld [vmem:[%s7724] sm:$0xf]
      %v7726 = vld [vmem:[%s7724 + $0x4] sm:$0xf]
      %v7727 = vld [vmem:[%s7724 + $0xc] sm:$0xf]
      %v7728 = vld [vmem:[%s7724 + $0x10] sm:$0xf]
      %v7729 = vld [vmem:[%s7724 + $0x18] sm:$0xf]
      %v7730 = vld [vmem:[%s7724 + $0x1c] sm:$0xf]
      %v7731 = vld [vmem:[%s7724 + $0x24] sm:$0xf]
      %v7732 = vld [vmem:[%s7724 + $0x28] sm:$0xf]
      %v7733 = vld [vmem:[%s7724 + $0x30] sm:$0xf]
      %v7734 = vld [vmem:[%s7724 + $0x34] sm:$0xf]
      %v7735 = vld [vmem:[%s7724 + $0x3c] sm:$0xf]
      %v7736 = vld [vmem:[%s7724 + $0x40] sm:$0xf]
      %v7737 = vld [vmem:[%s7724 + $0x48] sm:$0xf]
      %v7738 = vld [vmem:[%s7724 + $0x4c] sm:$0xf]
      %v7739 = vld [vmem:[%s7724 + $0x54] sm:$0xf]
      %v7740 = vld [vmem:[%s7724 + $0x58] sm:$0xf]
      %v7741 = vld [vmem:[%s7724 + $0x60] sm:$0xf]
      %v7742 = vld [vmem:[%s7724 + $0x64] sm:$0xf]
      %v7743 = vld [vmem:[%s7724 + $0x6c] sm:$0xf]
      %v7744 = vld [vmem:[%s7724 + $0x70] sm:$0xf]
      %v7745 = vld [vmem:[%s7724 + $0x78] sm:$0xf]
      %v7746 = vld [vmem:[%s7724 + $0x7c] sm:$0xf]
      %v7747 = vld [vmem:[%s7724 + $0x84] sm:$0xf]
      %v7748 = vld [vmem:[%s7724 + $0x88] sm:$0xf]
      %v7749 = vld [vmem:[%s7724 + $0x90] sm:$0xf]
      %v7750 = vld [vmem:[%s7724 + $0x94] sm:$0xf]
      %v7751 = vld [vmem:[%s7724 + $0x9c] sm:$0xf]
      %v7752 = vld [vmem:[%s7724 + $0xa0] sm:$0xf]
      %v7753 = vld [vmem:[%s7724 + $0xa8] sm:$0xf]
      %v7754 = vld [vmem:[%s7724 + $0xac] sm:$0xf]
      %v7755 = vld [vmem:[%s7724 + $0xb4] sm:$0xf]
      %v7756 = vld [vmem:[%s7724 + $0xb8] sm:$0xf]
      %v7757 = vld [vmem:[%s7724 + $0x8] sm:$0x1]
      %v7758 = vld [vmem:[%s7724 + $0x14] sm:$0x1]
      %v7759 = vld [vmem:[%s7724 + $0x20] sm:$0x1]
      %v7760 = vld [vmem:[%s7724 + $0x2c] sm:$0x1]
      %v7761 = vld [vmem:[%s7724 + $0x38] sm:$0x1]
      %v7762 = vld [vmem:[%s7724 + $0x44] sm:$0x1]
      %v7763 = vld [vmem:[%s7724 + $0x50] sm:$0x1]
      %v7764 = vld [vmem:[%s7724 + $0x5c] sm:$0x1]
      %v7765 = vld [vmem:[%s7724 + $0x68] sm:$0x1]
      %v7766 = vld [vmem:[%s7724 + $0x74] sm:$0x1]
      %v7767 = vld [vmem:[%s7724 + $0x80] sm:$0x1]
      %v7768 = vld [vmem:[%s7724 + $0x8c] sm:$0x1]
      %v7769 = vld [vmem:[%s7724 + $0x98] sm:$0x1]
      %v7770 = vld [vmem:[%s7724 + $0xa4] sm:$0x1]
      %v7771 = vld [vmem:[%s7724 + $0xb0] sm:$0x1]
      %v7772 = vld [vmem:[%s7724 + $0xbc] sm:$0x1]
      %v7774 = vshrl.u32 %v7725, 16
      %v7776 = vrot.slane %v7774, 4
      %v7777 = vshll.u32 %v7725, 16
      %v7779 = vrot.slane %v7777, 5
      %v7780 = vor.u32 %v7776, %v7779
      %v7781 = vrot.slane %v7780, 4
      %v7783 = vshll.u32 %v7726, 16
      %v7785 = vrot.slane %v7783, 5
      %v7786 = vsel %vm330, %v7781, %v7785
      %v7787 = vshrl.u32 %v7726, 16
      %v7789 = vrot.slane %v7787, 4
      %v7790 = vor.u32 %v7789, %v7785
      %v7791 = vrot.slane %v7790, 4
      %v7793 = vshll.u32 %v7757, 16
      %v7795 = vrot.slane %v7793, 5
      %v7796 = vsel %vm330, %v7791, %v7795
      %v7798 = vshrl.u32 %v7727, 16
      %v7800 = vrot.slane %v7798, 4
      %v7801 = vshll.u32 %v7727, 16
      %v7803 = vrot.slane %v7801, 5
      %v7804 = vor.u32 %v7800, %v7803
      %v7805 = vrot.slane %v7804, 4
      %v7807 = vshll.u32 %v7728, 16
      %v7809 = vrot.slane %v7807, 5
      %v7810 = vsel %vm330, %v7805, %v7809
      %v7811 = vshrl.u32 %v7728, 16
      %v7813 = vrot.slane %v7811, 4
      %v7814 = vor.u32 %v7813, %v7809
      %v7815 = vrot.slane %v7814, 4
      %v7817 = vshll.u32 %v7758, 16
      %v7819 = vrot.slane %v7817, 5
      %v7820 = vsel %vm330, %v7815, %v7819
      %v7822 = vshrl.u32 %v7729, 16
      %v7824 = vrot.slane %v7822, 4
      %v7825 = vshll.u32 %v7729, 16
      %v7827 = vrot.slane %v7825, 5
      %v7828 = vor.u32 %v7824, %v7827
      %v7829 = vrot.slane %v7828, 4
      %v7831 = vshll.u32 %v7730, 16
      %v7833 = vrot.slane %v7831, 5
      %v7834 = vsel %vm330, %v7829, %v7833
      %v7835 = vshrl.u32 %v7730, 16
      %v7837 = vrot.slane %v7835, 4
      %v7838 = vor.u32 %v7837, %v7833
      %v7839 = vrot.slane %v7838, 4
      %v7841 = vshll.u32 %v7759, 16
      %v7843 = vrot.slane %v7841, 5
      %v7844 = vsel %vm330, %v7839, %v7843
      %v7846 = vshrl.u32 %v7731, 16
      %v7848 = vrot.slane %v7846, 4
      %v7849 = vshll.u32 %v7731, 16
      %v7851 = vrot.slane %v7849, 5
      %v7852 = vor.u32 %v7848, %v7851
      %v7853 = vrot.slane %v7852, 4
      %v7855 = vshll.u32 %v7732, 16
      %v7857 = vrot.slane %v7855, 5
      %v7858 = vsel %vm330, %v7853, %v7857
      %v7859 = vshrl.u32 %v7732, 16
      %v7861 = vrot.slane %v7859, 4
      %v7862 = vor.u32 %v7861, %v7857
      %v7863 = vrot.slane %v7862, 4
      %v7865 = vshll.u32 %v7760, 16
      %v7867 = vrot.slane %v7865, 5
      %v7868 = vsel %vm330, %v7863, %v7867
      %v7870 = vshrl.u32 %v7733, 16
      %v7872 = vrot.slane %v7870, 4
      %v7873 = vshll.u32 %v7733, 16
      %v7875 = vrot.slane %v7873, 5
      %v7876 = vor.u32 %v7872, %v7875
      %v7877 = vrot.slane %v7876, 4
      %v7879 = vshll.u32 %v7734, 16
      %v7881 = vrot.slane %v7879, 5
      %v7882 = vsel %vm330, %v7877, %v7881
      %v7883 = vshrl.u32 %v7734, 16
      %v7885 = vrot.slane %v7883, 4
      %v7886 = vor.u32 %v7885, %v7881
      %v7887 = vrot.slane %v7886, 4
      %v7889 = vshll.u32 %v7761, 16
      %v7891 = vrot.slane %v7889, 5
      %v7892 = vsel %vm330, %v7887, %v7891
      %v7894 = vshrl.u32 %v7735, 16
      %v7896 = vrot.slane %v7894, 4
      %v7897 = vshll.u32 %v7735, 16
      %v7899 = vrot.slane %v7897, 5
      %v7900 = vor.u32 %v7896, %v7899
      %v7901 = vrot.slane %v7900, 4
      %v7903 = vshll.u32 %v7736, 16
      %v7905 = vrot.slane %v7903, 5
      %v7906 = vsel %vm330, %v7901, %v7905
      %v7907 = vshrl.u32 %v7736, 16
      %v7909 = vrot.slane %v7907, 4
      %v7910 = vor.u32 %v7909, %v7905
      %v7911 = vrot.slane %v7910, 4
      %v7913 = vshll.u32 %v7762, 16
      %v7915 = vrot.slane %v7913, 5
      %v7916 = vsel %vm330, %v7911, %v7915
      %v7918 = vshrl.u32 %v7737, 16
      %v7920 = vrot.slane %v7918, 4
      %v7921 = vshll.u32 %v7737, 16
      %v7923 = vrot.slane %v7921, 5
      %v7924 = vor.u32 %v7920, %v7923
      %v7925 = vrot.slane %v7924, 4
      %v7927 = vshll.u32 %v7738, 16
      %v7929 = vrot.slane %v7927, 5
      %v7930 = vsel %vm330, %v7925, %v7929
      %v7931 = vshrl.u32 %v7738, 16
      %v7933 = vrot.slane %v7931, 4
      %v7934 = vor.u32 %v7933, %v7929
      %v7935 = vrot.slane %v7934, 4
      %v7937 = vshll.u32 %v7763, 16
      %v7939 = vrot.slane %v7937, 5
      %v7940 = vsel %vm330, %v7935, %v7939
      %v7942 = vshrl.u32 %v7739, 16
      %v7944 = vrot.slane %v7942, 4
      %v7945 = vshll.u32 %v7739, 16
      %v7947 = vrot.slane %v7945, 5
      %v7948 = vor.u32 %v7944, %v7947
      %v7949 = vrot.slane %v7948, 4
      %v7951 = vshll.u32 %v7740, 16
      %v7953 = vrot.slane %v7951, 5
      %v7954 = vsel %vm330, %v7949, %v7953
      %v7955 = vshrl.u32 %v7740, 16
      %v7957 = vrot.slane %v7955, 4
      %v7958 = vor.u32 %v7957, %v7953
      %v7959 = vrot.slane %v7958, 4
      %v7961 = vshll.u32 %v7764, 16
      %v7963 = vrot.slane %v7961, 5
      %v7964 = vsel %vm330, %v7959, %v7963
      %v7966 = vshrl.u32 %v7741, 16
      %v7968 = vrot.slane %v7966, 4
      %v7969 = vshll.u32 %v7741, 16
      %v7971 = vrot.slane %v7969, 5
      %v7972 = vor.u32 %v7968, %v7971
      %v7973 = vrot.slane %v7972, 4
      %v7975 = vshll.u32 %v7742, 16
      %v7977 = vrot.slane %v7975, 5
      %v7978 = vsel %vm330, %v7973, %v7977
      %v7979 = vshrl.u32 %v7742, 16
      %v7981 = vrot.slane %v7979, 4
      %v7982 = vor.u32 %v7981, %v7977
      %v7983 = vrot.slane %v7982, 4
      %v7985 = vshll.u32 %v7765, 16
      %v7987 = vrot.slane %v7985, 5
      %v7988 = vsel %vm330, %v7983, %v7987
      %v7990 = vshrl.u32 %v7743, 16
      %v7992 = vrot.slane %v7990, 4
      %v7993 = vshll.u32 %v7743, 16
      %v7995 = vrot.slane %v7993, 5
      %v7996 = vor.u32 %v7992, %v7995
      %v7997 = vrot.slane %v7996, 4
      %v7999 = vshll.u32 %v7744, 16
      %v8001 = vrot.slane %v7999, 5
      %v8002 = vsel %vm330, %v7997, %v8001
      %v8003 = vshrl.u32 %v7744, 16
      %v8005 = vrot.slane %v8003, 4
      %v8006 = vor.u32 %v8005, %v8001
      %v8007 = vrot.slane %v8006, 4
      %v8009 = vshll.u32 %v7766, 16
      %v8011 = vrot.slane %v8009, 5
      %v8012 = vsel %vm330, %v8007, %v8011
      %v8014 = vshrl.u32 %v7745, 16
      %v8016 = vrot.slane %v8014, 4
      %v8017 = vshll.u32 %v7745, 16
      %v8019 = vrot.slane %v8017, 5
      %v8020 = vor.u32 %v8016, %v8019
      %v8021 = vrot.slane %v8020, 4
      %v8023 = vshll.u32 %v7746, 16
      %v8025 = vrot.slane %v8023, 5
      %v8026 = vsel %vm330, %v8021, %v8025
      %v8027 = vshrl.u32 %v7746, 16
      %v8029 = vrot.slane %v8027, 4
      %v8030 = vor.u32 %v8029, %v8025
      %v8031 = vrot.slane %v8030, 4
      %v8033 = vshll.u32 %v7767, 16
      %v8035 = vrot.slane %v8033, 5
      %v8036 = vsel %vm330, %v8031, %v8035
      %v8038 = vshrl.u32 %v7747, 16
      %v8040 = vrot.slane %v8038, 4
      %v8041 = vshll.u32 %v7747, 16
      %v8043 = vrot.slane %v8041, 5
      %v8044 = vor.u32 %v8040, %v8043
      %v8045 = vrot.slane %v8044, 4
      %v8047 = vshll.u32 %v7748, 16
      %v8049 = vrot.slane %v8047, 5
      %v8050 = vsel %vm330, %v8045, %v8049
      %v8051 = vshrl.u32 %v7748, 16
      %v8053 = vrot.slane %v8051, 4
      %v8054 = vor.u32 %v8053, %v8049
      %v8055 = vrot.slane %v8054, 4
      %v8057 = vshll.u32 %v7768, 16
      %v8059 = vrot.slane %v8057, 5
      %v8060 = vsel %vm330, %v8055, %v8059
      %v8062 = vshrl.u32 %v7749, 16
      %v8064 = vrot.slane %v8062, 4
      %v8065 = vshll.u32 %v7749, 16
      %v8067 = vrot.slane %v8065, 5
      %v8068 = vor.u32 %v8064, %v8067
      %v8069 = vrot.slane %v8068, 4
      %v8071 = vshll.u32 %v7750, 16
      %v8073 = vrot.slane %v8071, 5
      %v8074 = vsel %vm330, %v8069, %v8073
      %v8075 = vshrl.u32 %v7750, 16
      %v8077 = vrot.slane %v8075, 4
      %v8078 = vor.u32 %v8077, %v8073
      %v8079 = vrot.slane %v8078, 4
      %v8081 = vshll.u32 %v7769, 16
      %v8083 = vrot.slane %v8081, 5
      %v8084 = vsel %vm330, %v8079, %v8083
      %v8086 = vshrl.u32 %v7751, 16
      %v8088 = vrot.slane %v8086, 4
      %v8089 = vshll.u32 %v7751, 16
      %v8091 = vrot.slane %v8089, 5
      %v8092 = vor.u32 %v8088, %v8091
      %v8093 = vrot.slane %v8092, 4
      %v8095 = vshll.u32 %v7752, 16
      %v8097 = vrot.slane %v8095, 5
      %v8098 = vsel %vm330, %v8093, %v8097
      %v8099 = vshrl.u32 %v7752, 16
      %v8101 = vrot.slane %v8099, 4
      %v8102 = vor.u32 %v8101, %v8097
      %v8103 = vrot.slane %v8102, 4
      %v8105 = vshll.u32 %v7770, 16
      %v8107 = vrot.slane %v8105, 5
      %v8108 = vsel %vm330, %v8103, %v8107
      %v8110 = vshrl.u32 %v7753, 16
      %v8112 = vrot.slane %v8110, 4
      %v8113 = vshll.u32 %v7753, 16
      %v8115 = vrot.slane %v8113, 5
      %v8116 = vor.u32 %v8112, %v8115
      %v8117 = vrot.slane %v8116, 4
      %v8119 = vshll.u32 %v7754, 16
      %v8121 = vrot.slane %v8119, 5
      %v8122 = vsel %vm330, %v8117, %v8121
      %v8123 = vshrl.u32 %v7754, 16
      %v8125 = vrot.slane %v8123, 4
      %v8126 = vor.u32 %v8125, %v8121
      %v8127 = vrot.slane %v8126, 4
      %v8129 = vshll.u32 %v7771, 16
      %v8131 = vrot.slane %v8129, 5
      %v8132 = vsel %vm330, %v8127, %v8131
      %v8134 = vshrl.u32 %v7755, 16
      %v8136 = vrot.slane %v8134, 4
      %v8137 = vshll.u32 %v7755, 16
      %v8139 = vrot.slane %v8137, 5
      %v8140 = vor.u32 %v8136, %v8139
      %v8141 = vrot.slane %v8140, 4
      %v8143 = vshll.u32 %v7756, 16
      %v8145 = vrot.slane %v8143, 5
      %v8146 = vsel %vm330, %v8141, %v8145
      %v8147 = vshrl.u32 %v7756, 16
      %v8149 = vrot.slane %v8147, 4
      %v8150 = vor.u32 %v8149, %v8145
      %v8151 = vrot.slane %v8150, 4
      %v8153 = vshll.u32 %v7772, 16
      %v8155 = vrot.slane %v8153, 5
      %v8156 = vsel %vm330, %v8151, %v8155
      %v8157 = vld [vmem:[%s7724] sm:$0xe]
      %v8158 = vld [vmem:[%s7724 + $0xc] sm:$0xe]
      %v8159 = vld [vmem:[%s7724 + $0x18] sm:$0xe]
      %v8160 = vld [vmem:[%s7724 + $0x24] sm:$0xe]
      %v8161 = vld [vmem:[%s7724 + $0x30] sm:$0xe]
      %v8162 = vld [vmem:[%s7724 + $0x3c] sm:$0xe]
      %v8163 = vld [vmem:[%s7724 + $0x48] sm:$0xe]
      %v8164 = vld [vmem:[%s7724 + $0x54] sm:$0xe]
      %v8165 = vld [vmem:[%s7724 + $0x60] sm:$0xe]
      %v8166 = vld [vmem:[%s7724 + $0x6c] sm:$0xe]
      %v8167 = vld [vmem:[%s7724 + $0x78] sm:$0xe]
      %v8168 = vld [vmem:[%s7724 + $0x84] sm:$0xe]
      %v8169 = vld [vmem:[%s7724 + $0x90] sm:$0xe]
      %v8170 = vld [vmem:[%s7724 + $0x9c] sm:$0xe]
      %v8171 = vld [vmem:[%s7724 + $0xa8] sm:$0xe]
      %v8172 = vld [vmem:[%s7724 + $0xb4] sm:$0xe]
      %v8221 = vrot.slane %v8157, 5
      %v8222 = vrot.slane %v8221, 4
      %v8223 = vrot.slane %v7726, 5
      %v8224 = vsel %vm781, %v8222, %v8223
      %v8225 = vrot.slane %v8223, 4
      %v8226 = vrot.slane %v7757, 5
      %v8227 = vsel %vm781, %v8225, %v8226
      %v8228 = vrot.slane %v8158, 5
      %v8229 = vrot.slane %v8228, 4
      %v8230 = vrot.slane %v7728, 5
      %v8231 = vsel %vm781, %v8229, %v8230
      %v8232 = vrot.slane %v8230, 4
      %v8233 = vrot.slane %v7758, 5
      %v8234 = vsel %vm781, %v8232, %v8233
      %v8235 = vrot.slane %v8159, 5
      %v8236 = vrot.slane %v8235, 4
      %v8237 = vrot.slane %v7730, 5
      %v8238 = vsel %vm781, %v8236, %v8237
      %v8239 = vrot.slane %v8237, 4
      %v8240 = vrot.slane %v7759, 5
      %v8241 = vsel %vm781, %v8239, %v8240
      %v8242 = vrot.slane %v8160, 5
      %v8243 = vrot.slane %v8242, 4
      %v8244 = vrot.slane %v7732, 5
      %v8245 = vsel %vm781, %v8243, %v8244
      %v8246 = vrot.slane %v8244, 4
      %v8247 = vrot.slane %v7760, 5
      %v8248 = vsel %vm781, %v8246, %v8247
      %v8249 = vrot.slane %v8161, 5
      %v8250 = vrot.slane %v8249, 4
      %v8251 = vrot.slane %v7734, 5
      %v8252 = vsel %vm781, %v8250, %v8251
      %v8253 = vrot.slane %v8251, 4
      %v8254 = vrot.slane %v7761, 5
      %v8255 = vsel %vm781, %v8253, %v8254
      %v8256 = vrot.slane %v8162, 5
      %v8257 = vrot.slane %v8256, 4
      %v8258 = vrot.slane %v7736, 5
      %v8259 = vsel %vm781, %v8257, %v8258
      %v8260 = vrot.slane %v8258, 4
      %v8261 = vrot.slane %v7762, 5
      %v8262 = vsel %vm781, %v8260, %v8261
      %v8263 = vrot.slane %v8163, 5
      %v8264 = vrot.slane %v8263, 4
      %v8265 = vrot.slane %v7738, 5
      %v8266 = vsel %vm781, %v8264, %v8265
      %v8267 = vrot.slane %v8265, 4
      %v8268 = vrot.slane %v7763, 5
      %v8269 = vsel %vm781, %v8267, %v8268
      %v8270 = vrot.slane %v8164, 5
      %v8271 = vrot.slane %v8270, 4
      %v8272 = vrot.slane %v7740, 5
      %v8273 = vsel %vm781, %v8271, %v8272
      %v8274 = vrot.slane %v8272, 4
      %v8275 = vrot.slane %v7764, 5
      %v8276 = vsel %vm781, %v8274, %v8275
      %v8277 = vrot.slane %v8165, 5
      %v8278 = vrot.slane %v8277, 4
      %v8279 = vrot.slane %v7742, 5
      %v8280 = vsel %vm781, %v8278, %v8279
      %v8281 = vrot.slane %v8279, 4
      %v8282 = vrot.slane %v7765, 5
      %v8283 = vsel %vm781, %v8281, %v8282
      %v8284 = vrot.slane %v8166, 5
      %v8285 = vrot.slane %v8284, 4
      %v8286 = vrot.slane %v7744, 5
      %v8287 = vsel %vm781, %v8285, %v8286
      %v8288 = vrot.slane %v8286, 4
      %v8289 = vrot.slane %v7766, 5
      %v8290 = vsel %vm781, %v8288, %v8289
      %v8291 = vrot.slane %v8167, 5
      %v8292 = vrot.slane %v8291, 4
      %v8293 = vrot.slane %v7746, 5
      %v8294 = vsel %vm781, %v8292, %v8293
      %v8295 = vrot.slane %v8293, 4
      %v8296 = vrot.slane %v7767, 5
      %v8297 = vsel %vm781, %v8295, %v8296
      %v8298 = vrot.slane %v8168, 5
      %v8299 = vrot.slane %v8298, 4
      %v8300 = vrot.slane %v7748, 5
      %v8301 = vsel %vm781, %v8299, %v8300
      %v8302 = vrot.slane %v8300, 4
      %v8303 = vrot.slane %v7768, 5
      %v8304 = vsel %vm781, %v8302, %v8303
      %v8305 = vrot.slane %v8169, 5
      %v8306 = vrot.slane %v8305, 4
      %v8307 = vrot.slane %v7750, 5
      %v8308 = vsel %vm781, %v8306, %v8307
      %v8309 = vrot.slane %v8307, 4
      %v8310 = vrot.slane %v7769, 5
      %v8311 = vsel %vm781, %v8309, %v8310
      %v8312 = vrot.slane %v8170, 5
      %v8313 = vrot.slane %v8312, 4
      %v8314 = vrot.slane %v7752, 5
      %v8315 = vsel %vm781, %v8313, %v8314
      %v8316 = vrot.slane %v8314, 4
      %v8317 = vrot.slane %v7770, 5
      %v8318 = vsel %vm781, %v8316, %v8317
      %v8319 = vrot.slane %v8171, 5
      %v8320 = vrot.slane %v8319, 4
      %v8321 = vrot.slane %v7754, 5
      %v8322 = vsel %vm781, %v8320, %v8321
      %v8323 = vrot.slane %v8321, 4
      %v8324 = vrot.slane %v7771, 5
      %v8325 = vsel %vm781, %v8323, %v8324
      %v8326 = vrot.slane %v8172, 5
      %v8327 = vrot.slane %v8326, 4
      %v8328 = vrot.slane %v7756, 5
      %v8329 = vsel %vm781, %v8327, %v8328
      %v8330 = vrot.slane %v8328, 4
      %v8331 = vrot.slane %v7772, 5
      %v8332 = vsel %vm781, %v8330, %v8331
      %v8349 = vunpack.c.l.b16 %v7725
      %v8350 = vunpack.c.l.b16 %v7726
      %v8351 = vunpack.c.l.b16 %v7727
      %v8352 = vunpack.c.l.b16 %v7728
      %v8353 = vunpack.c.l.b16 %v7729
      %v8354 = vunpack.c.l.b16 %v7730
      %v8355 = vunpack.c.l.b16 %v7731
      %v8356 = vunpack.c.l.b16 %v7732
      %v8357 = vunpack.c.l.b16 %v7733
      %v8358 = vunpack.c.l.b16 %v7734
      %v8359 = vunpack.c.l.b16 %v7735
      %v8360 = vunpack.c.l.b16 %v7736
      %v8361 = vunpack.c.l.b16 %v7737
      %v8362 = vunpack.c.l.b16 %v7738
      %v8363 = vunpack.c.l.b16 %v7739
      %v8364 = vunpack.c.l.b16 %v7740
      %v8365 = vunpack.c.l.b16 %v7741
      %v8366 = vunpack.c.l.b16 %v7742
      %v8367 = vunpack.c.l.b16 %v7743
      %v8368 = vunpack.c.l.b16 %v7744
      %v8369 = vunpack.c.l.b16 %v7745
      %v8370 = vunpack.c.l.b16 %v7746
      %v8371 = vunpack.c.l.b16 %v7747
      %v8372 = vunpack.c.l.b16 %v7748
      %v8373 = vunpack.c.l.b16 %v7749
      %v8374 = vunpack.c.l.b16 %v7750
      %v8375 = vunpack.c.l.b16 %v7751
      %v8376 = vunpack.c.l.b16 %v7752
      %v8377 = vunpack.c.l.b16 %v7753
      %v8378 = vunpack.c.l.b16 %v7754
      %v8379 = vunpack.c.l.b16 %v7755
      %v8380 = vunpack.c.l.b16 %v7756
      %v8381 = vpack.c.b16 %v8350, %v8349
      %v8382 = vpack.c.b16 %v8352, %v8351
      %v8383 = vpack.c.b16 %v8354, %v8353
      %v8384 = vpack.c.b16 %v8356, %v8355
      %v8385 = vpack.c.b16 %v8358, %v8357
      %v8386 = vpack.c.b16 %v8360, %v8359
      %v8387 = vpack.c.b16 %v8362, %v8361
      %v8388 = vpack.c.b16 %v8364, %v8363
      %v8389 = vpack.c.b16 %v8366, %v8365
      %v8390 = vpack.c.b16 %v8368, %v8367
      %v8391 = vpack.c.b16 %v8370, %v8369
      %v8392 = vpack.c.b16 %v8372, %v8371
      %v8393 = vpack.c.b16 %v8374, %v8373
      %v8394 = vpack.c.b16 %v8376, %v8375
      %v8395 = vpack.c.b16 %v8378, %v8377
      %v8396 = vpack.c.b16 %v8380, %v8379
      %v8413 = vunpack.c.l.b16 %v7786
      %v8414 = vunpack.c.l.b16 %v7796
      %v8415 = vunpack.c.l.b16 %v7810
      %v8416 = vunpack.c.l.b16 %v7820
      %v8417 = vunpack.c.l.b16 %v7834
      %v8418 = vunpack.c.l.b16 %v7844
      %v8419 = vunpack.c.l.b16 %v7858
      %v8420 = vunpack.c.l.b16 %v7868
      %v8421 = vunpack.c.l.b16 %v7882
      %v8422 = vunpack.c.l.b16 %v7892
      %v8423 = vunpack.c.l.b16 %v7906
      %v8424 = vunpack.c.l.b16 %v7916
      %v8425 = vunpack.c.l.b16 %v7930
      %v8426 = vunpack.c.l.b16 %v7940
      %v8427 = vunpack.c.l.b16 %v7954
      %v8428 = vunpack.c.l.b16 %v7964
      %v8429 = vunpack.c.l.b16 %v7978
      %v8430 = vunpack.c.l.b16 %v7988
      %v8431 = vunpack.c.l.b16 %v8002
      %v8432 = vunpack.c.l.b16 %v8012
      %v8433 = vunpack.c.l.b16 %v8026
      %v8434 = vunpack.c.l.b16 %v8036
      %v8435 = vunpack.c.l.b16 %v8050
      %v8436 = vunpack.c.l.b16 %v8060
      %v8437 = vunpack.c.l.b16 %v8074
      %v8438 = vunpack.c.l.b16 %v8084
      %v8439 = vunpack.c.l.b16 %v8098
      %v8440 = vunpack.c.l.b16 %v8108
      %v8441 = vunpack.c.l.b16 %v8122
      %v8442 = vunpack.c.l.b16 %v8132
      %v8443 = vunpack.c.l.b16 %v8146
      %v8444 = vunpack.c.l.b16 %v8156
      %v8445 = vpack.c.b16 %v8414, %v8413
      %v8446 = vpack.c.b16 %v8416, %v8415
      %v8447 = vpack.c.b16 %v8418, %v8417
      %v8448 = vpack.c.b16 %v8420, %v8419
      %v8449 = vpack.c.b16 %v8422, %v8421
      %v8450 = vpack.c.b16 %v8424, %v8423
      %v8451 = vpack.c.b16 %v8426, %v8425
      %v8452 = vpack.c.b16 %v8428, %v8427
      %v8453 = vpack.c.b16 %v8430, %v8429
      %v8454 = vpack.c.b16 %v8432, %v8431
      %v8455 = vpack.c.b16 %v8434, %v8433
      %v8456 = vpack.c.b16 %v8436, %v8435
      %v8457 = vpack.c.b16 %v8438, %v8437
      %v8458 = vpack.c.b16 %v8440, %v8439
      %v8459 = vpack.c.b16 %v8442, %v8441
      %v8460 = vpack.c.b16 %v8444, %v8443
      %v8477 = vunpack.c.l.b16 %v8224
      %v8478 = vunpack.c.l.b16 %v8227
      %v8479 = vunpack.c.l.b16 %v8231
      %v8480 = vunpack.c.l.b16 %v8234
      %v8481 = vunpack.c.l.b16 %v8238
      %v8482 = vunpack.c.l.b16 %v8241
      %v8483 = vunpack.c.l.b16 %v8245
      %v8484 = vunpack.c.l.b16 %v8248
      %v8485 = vunpack.c.l.b16 %v8252
      %v8486 = vunpack.c.l.b16 %v8255
      %v8487 = vunpack.c.l.b16 %v8259
      %v8488 = vunpack.c.l.b16 %v8262
      %v8489 = vunpack.c.l.b16 %v8266
      %v8490 = vunpack.c.l.b16 %v8269
      %v8491 = vunpack.c.l.b16 %v8273
      %v8492 = vunpack.c.l.b16 %v8276
      %v8493 = vunpack.c.l.b16 %v8280
      %v8494 = vunpack.c.l.b16 %v8283
      %v8495 = vunpack.c.l.b16 %v8287
      %v8496 = vunpack.c.l.b16 %v8290
      %v8497 = vunpack.c.l.b16 %v8294
      %v8498 = vunpack.c.l.b16 %v8297
      %v8499 = vunpack.c.l.b16 %v8301
      %v8500 = vunpack.c.l.b16 %v8304
      %v8501 = vunpack.c.l.b16 %v8308
      %v8502 = vunpack.c.l.b16 %v8311
      %v8503 = vunpack.c.l.b16 %v8315
      %v8504 = vunpack.c.l.b16 %v8318
      %v8505 = vunpack.c.l.b16 %v8322
      %v8506 = vunpack.c.l.b16 %v8325
      %v8507 = vunpack.c.l.b16 %v8329
      %v8508 = vunpack.c.l.b16 %v8332
      %v8509 = vpack.c.b16 %v8478, %v8477
      %v8510 = vpack.c.b16 %v8480, %v8479
      %v8511 = vpack.c.b16 %v8482, %v8481
      %v8512 = vpack.c.b16 %v8484, %v8483
      %v8513 = vpack.c.b16 %v8486, %v8485
      %v8514 = vpack.c.b16 %v8488, %v8487
      %v8515 = vpack.c.b16 %v8490, %v8489
      %v8516 = vpack.c.b16 %v8492, %v8491
      %v8517 = vpack.c.b16 %v8494, %v8493
      %v8518 = vpack.c.b16 %v8496, %v8495
      %v8519 = vpack.c.b16 %v8498, %v8497
      %v8520 = vpack.c.b16 %v8500, %v8499
      %v8521 = vpack.c.b16 %v8502, %v8501
      %v8522 = vpack.c.b16 %v8504, %v8503
      %v8523 = vpack.c.b16 %v8506, %v8505
      %v8524 = vpack.c.b16 %v8508, %v8507
      %s8541 = scalar_lea.vmem %s3, 384
      %v8542 = vld [vmem:[%s8541] sm:$0xf]
      %v8543 = vld [vmem:[%s8541 + $0x4] sm:$0xf]
      %v8544 = vld [vmem:[%s8541 + $0x8] sm:$0xf]
      %v8545 = vld [vmem:[%s8541 + $0xc] sm:$0xf]
      %v8546 = vld [vmem:[%s8541 + $0x10] sm:$0xf]
      %v8547 = vld [vmem:[%s8541 + $0x14] sm:$0xf]
      %v8548 = vld [vmem:[%s8541 + $0x18] sm:$0xf]
      %v8549 = vld [vmem:[%s8541 + $0x1c] sm:$0xf]
      %v8550 = vld [vmem:[%s8541 + $0x20] sm:$0xf]
      %v8551 = vld [vmem:[%s8541 + $0x24] sm:$0xf]
      %v8552 = vld [vmem:[%s8541 + $0x28] sm:$0xf]
      %v8553 = vld [vmem:[%s8541 + $0x2c] sm:$0xf]
      %v8554 = vld [vmem:[%s8541 + $0x30] sm:$0xf]
      %v8555 = vld [vmem:[%s8541 + $0x34] sm:$0xf]
      %v8556 = vld [vmem:[%s8541 + $0x38] sm:$0xf]
      %v8557 = vld [vmem:[%s8541 + $0x3c] sm:$0xf]
      %v8558 = vld [vmem:[%s8541 + $0x40] sm:$0xf]
      %v8559 = vld [vmem:[%s8541 + $0x44] sm:$0xf]
      %v8560 = vld [vmem:[%s8541 + $0x48] sm:$0xf]
      %v8561 = vld [vmem:[%s8541 + $0x4c] sm:$0xf]
      %v8562 = vld [vmem:[%s8541 + $0x50] sm:$0xf]
      %v8563 = vld [vmem:[%s8541 + $0x54] sm:$0xf]
      %v8564 = vld [vmem:[%s8541 + $0x58] sm:$0xf]
      %v8565 = vld [vmem:[%s8541 + $0x5c] sm:$0xf]
      %v8566 = vld [vmem:[%s8541 + $0x60] sm:$0xf]
      %v8567 = vld [vmem:[%s8541 + $0x64] sm:$0xf]
      %v8568 = vld [vmem:[%s8541 + $0x68] sm:$0xf]
      %v8569 = vld [vmem:[%s8541 + $0x6c] sm:$0xf]
      %v8570 = vld [vmem:[%s8541 + $0x70] sm:$0xf]
      %v8571 = vld [vmem:[%s8541 + $0x74] sm:$0xf]
      %v8572 = vld [vmem:[%s8541 + $0x78] sm:$0xf]
      %v8573 = vld [vmem:[%s8541 + $0x7c] sm:$0xf]
      %v8574 = vld [vmem:[%s8541 + $0x80] sm:$0xf]
      %v8575 = vld [vmem:[%s8541 + $0x84] sm:$0xf]
      %v8576 = vld [vmem:[%s8541 + $0x88] sm:$0xf]
      %v8577 = vld [vmem:[%s8541 + $0x8c] sm:$0xf]
      %v8578 = vld [vmem:[%s8541 + $0x90] sm:$0xf]
      %v8579 = vld [vmem:[%s8541 + $0x94] sm:$0xf]
      %v8580 = vld [vmem:[%s8541 + $0x98] sm:$0xf]
      %v8581 = vld [vmem:[%s8541 + $0x9c] sm:$0xf]
      %v8582 = vld [vmem:[%s8541 + $0xa0] sm:$0xf]
      %v8583 = vld [vmem:[%s8541 + $0xa4] sm:$0xf]
      %v8584 = vld [vmem:[%s8541 + $0xa8] sm:$0xf]
      %v8585 = vld [vmem:[%s8541 + $0xac] sm:$0xf]
      %v8586 = vld [vmem:[%s8541 + $0xb0] sm:$0xf]
      %v8587 = vld [vmem:[%s8541 + $0xb4] sm:$0xf]
      %v8588 = vld [vmem:[%s8541 + $0xb8] sm:$0xf]
      %v8589 = vld [vmem:[%s8541 + $0xbc] sm:$0xf]
      %v8638 = vunpack.c.l.b16 %v8542
      %v8639 = vunpack.c.l.b16 %v8543
      %v8640 = vunpack.c.l.b16 %v8544
      %v8641 = vunpack.c.l.b16 %v8545
      %v8642 = vunpack.c.l.b16 %v8546
      %v8643 = vunpack.c.l.b16 %v8547
      %v8644 = vunpack.c.l.b16 %v8548
      %v8645 = vunpack.c.l.b16 %v8549
      %v8646 = vunpack.c.l.b16 %v8550
      %v8647 = vunpack.c.l.b16 %v8551
      %v8648 = vunpack.c.l.b16 %v8552
      %v8649 = vunpack.c.l.b16 %v8553
      %v8650 = vunpack.c.l.b16 %v8554
      %v8651 = vunpack.c.l.b16 %v8555
      %v8652 = vunpack.c.l.b16 %v8556
      %v8653 = vunpack.c.l.b16 %v8557
      %v8654 = vunpack.c.l.b16 %v8558
      %v8655 = vunpack.c.l.b16 %v8559
      %v8656 = vunpack.c.l.b16 %v8560
      %v8657 = vunpack.c.l.b16 %v8561
      %v8658 = vunpack.c.l.b16 %v8562
      %v8659 = vunpack.c.l.b16 %v8563
      %v8660 = vunpack.c.l.b16 %v8564
      %v8661 = vunpack.c.l.b16 %v8565
      %v8662 = vunpack.c.l.b16 %v8566
      %v8663 = vunpack.c.l.b16 %v8567
      %v8664 = vunpack.c.l.b16 %v8568
      %v8665 = vunpack.c.l.b16 %v8569
      %v8666 = vunpack.c.l.b16 %v8570
      %v8667 = vunpack.c.l.b16 %v8571
      %v8668 = vunpack.c.l.b16 %v8572
      %v8669 = vunpack.c.l.b16 %v8573
      %v8670 = vunpack.c.l.b16 %v8574
      %v8671 = vunpack.c.l.b16 %v8575
      %v8672 = vunpack.c.l.b16 %v8576
      %v8673 = vunpack.c.l.b16 %v8577
      %v8674 = vunpack.c.l.b16 %v8578
      %v8675 = vunpack.c.l.b16 %v8579
      %v8676 = vunpack.c.l.b16 %v8580
      %v8677 = vunpack.c.l.b16 %v8581
      %v8678 = vunpack.c.l.b16 %v8582
      %v8679 = vunpack.c.l.b16 %v8583
      %v8680 = vunpack.c.l.b16 %v8584
      %v8681 = vunpack.c.l.b16 %v8585
      %v8682 = vunpack.c.l.b16 %v8586
      %v8683 = vunpack.c.l.b16 %v8587
      %v8684 = vunpack.c.l.b16 %v8588
      %v8685 = vunpack.c.l.b16 %v8589
      %v8686 = vpack.c.b16 %v8639, %v8638
      %v8687 = vpack.c.b16 %v8641, %v8640
      %v8688 = vpack.c.b16 %v8643, %v8642
      %v8689 = vpack.c.b16 %v8645, %v8644
      %v8690 = vpack.c.b16 %v8647, %v8646
      %v8691 = vpack.c.b16 %v8649, %v8648
      %v8692 = vpack.c.b16 %v8651, %v8650
      %v8693 = vpack.c.b16 %v8653, %v8652
      %v8694 = vpack.c.b16 %v8655, %v8654
      %v8695 = vpack.c.b16 %v8657, %v8656
      %v8696 = vpack.c.b16 %v8659, %v8658
      %v8697 = vpack.c.b16 %v8661, %v8660
      %v8698 = vpack.c.b16 %v8663, %v8662
      %v8699 = vpack.c.b16 %v8665, %v8664
      %v8700 = vpack.c.b16 %v8667, %v8666
      %v8701 = vpack.c.b16 %v8669, %v8668
      %v8702 = vpack.c.b16 %v8671, %v8670
      %v8703 = vpack.c.b16 %v8673, %v8672
      %v8704 = vpack.c.b16 %v8675, %v8674
      %v8705 = vpack.c.b16 %v8677, %v8676
      %v8706 = vpack.c.b16 %v8679, %v8678
      %v8707 = vpack.c.b16 %v8681, %v8680
      %v8708 = vpack.c.b16 %v8683, %v8682
      %v8709 = vpack.c.b16 %v8685, %v8684
      %8734 = vmatprep.subr.bf16.mxu0 0
      %8735 = vmatpush1.bf16.msra.mxu0 %v8693
      %8736 = vmatprep.subr.bf16.mxu0 0
      %8737 = vmatpush1.bf16.msra.mxu0 %v8692
      %8738 = vmatprep.subr.bf16.mxu0 0
      %8739 = vmatpush1.bf16.msra.mxu0 %v8691
      %8740 = vmatprep.subr.bf16.mxu0 0
      %8741 = vmatpush1.bf16.msra.mxu0 %v8690
      %8742 = vmatprep.subr.bf16.mxu0 0
      %8743 = vmatpush1.bf16.msra.mxu0 %v8689
      %8744 = vmatprep.subr.bf16.mxu0 0
      %8745 = vmatpush1.bf16.msra.mxu0 %v8688
      %8746 = vmatprep.subr.bf16.mxu0 0
      %8747 = vmatpush1.bf16.msra.mxu0 %v8687
      %8748 = vmatprep.subr.bf16.mxu0 0
      %8749 = vmatpush1.bf16.msra.mxu0 %v8686
      %8750 = vmatprep.subr.bf16.mxu0 0
      %8751 = vmatpush2.bf16.msra.mxu0 %v8701
      %8752 = vmatprep.subr.bf16.mxu0 0
      %8753 = vmatpush2.bf16.msra.mxu0 %v8700
      %8754 = vmatprep.subr.bf16.mxu0 0
      %8755 = vmatpush2.bf16.msra.mxu0 %v8699
      %8756 = vmatprep.subr.bf16.mxu0 0
      %8757 = vmatpush2.bf16.msra.mxu0 %v8698
      %8758 = vmatprep.subr.bf16.mxu0 0
      %8759 = vmatpush2.bf16.msra.mxu0 %v8697
      %8760 = vmatprep.subr.bf16.mxu0 0
      %8761 = vmatpush2.bf16.msra.mxu0 %v8696
      %8762 = vmatprep.subr.bf16.mxu0 0
      %8763 = vmatpush2.bf16.msra.mxu0 %v8695
      %8764 = vmatprep.subr.bf16.mxu0 0
      %8765 = vmatpush2.bf16.msra.mxu0 %v8694
      %8766 = vmatprep.mubr.bf16.mxu0 %v8445
      %8767 = vmatmul.mubr.bf16.gmra.mxu0 %v8381
      %v8768 = vpop.f32.mrf.mxu0
      %v8769 = vadd.f32 0.0, %v8768
      %v8770 = vpop.f32.mrf.mxu0
      %v8771 = vpop.f32.mrf.mxu0
      %v8772 = vadd.f32 0.0, %v8771
      %v8773 = vpop.f32.mrf.mxu0
      %8774 = vmatprep.mubr.bf16.mxu0 %v8446
      %8775 = vmatmul.mubr.bf16.gmra.mxu0 %v8382
      %v8776 = vpop.f32.mrf.mxu0
      %v8777 = vadd.f32 0.0, %v8776
      %v8778 = vpop.f32.mrf.mxu0
      %v8779 = vpop.f32.mrf.mxu0
      %v8780 = vadd.f32 0.0, %v8779
      %v8781 = vpop.f32.mrf.mxu0
      %8782 = vmatprep.mubr.bf16.mxu0 %v8447
      %8783 = vmatmul.mubr.bf16.gmra.mxu0 %v8383
      %v8784 = vpop.f32.mrf.mxu0
      %v8785 = vadd.f32 0.0, %v8784
      %v8786 = vpop.f32.mrf.mxu0
      %v8787 = vpop.f32.mrf.mxu0
      %v8788 = vadd.f32 0.0, %v8787
      %v8789 = vpop.f32.mrf.mxu0
      %8790 = vmatprep.mubr.bf16.mxu0 %v8448
      %8791 = vmatmul.mubr.bf16.gmra.mxu0 %v8384
      %v8792 = vpop.f32.mrf.mxu0
      %v8793 = vadd.f32 0.0, %v8792
      %v8794 = vpop.f32.mrf.mxu0
      %v8795 = vpop.f32.mrf.mxu0
      %v8796 = vadd.f32 0.0, %v8795
      %v8797 = vpop.f32.mrf.mxu0
      %8798 = vmatprep.mubr.bf16.mxu0 %v8449
      %8799 = vmatmul.mubr.bf16.gmra.mxu0 %v8385
      %v8800 = vpop.f32.mrf.mxu0
      %v8801 = vadd.f32 0.0, %v8800
      %v8802 = vpop.f32.mrf.mxu0
      %v8803 = vpop.f32.mrf.mxu0
      %v8804 = vadd.f32 0.0, %v8803
      %v8805 = vpop.f32.mrf.mxu0
      %8806 = vmatprep.mubr.bf16.mxu0 %v8450
      %8807 = vmatmul.mubr.bf16.gmra.mxu0 %v8386
      %v8808 = vpop.f32.mrf.mxu0
      %v8809 = vadd.f32 0.0, %v8808
      %v8810 = vpop.f32.mrf.mxu0
      %v8811 = vpop.f32.mrf.mxu0
      %v8812 = vadd.f32 0.0, %v8811
      %v8813 = vpop.f32.mrf.mxu0
      %8814 = vmatprep.mubr.bf16.mxu0 %v8451
      %8815 = vmatmul.mubr.bf16.gmra.mxu0 %v8387
      %v8816 = vpop.f32.mrf.mxu0
      %v8817 = vadd.f32 0.0, %v8816
      %v8818 = vpop.f32.mrf.mxu0
      %v8819 = vpop.f32.mrf.mxu0
      %v8820 = vadd.f32 0.0, %v8819
      %v8821 = vpop.f32.mrf.mxu0
      %8822 = vmatprep.mubr.bf16.mxu0 %v8452
      %8823 = vmatmul.mubr.bf16.gmra.mxu0 %v8388
      %v8824 = vpop.f32.mrf.mxu0
      %v8825 = vadd.f32 0.0, %v8824
      %v8826 = vpop.f32.mrf.mxu0
      %v8827 = vpop.f32.mrf.mxu0
      %v8828 = vadd.f32 0.0, %v8827
      %v8829 = vpop.f32.mrf.mxu0
      %8830 = vmatprep.mubr.bf16.mxu0 %v8453
      %8831 = vmatmul.mubr.bf16.gmra.mxu0 %v8389
      %v8832 = vpop.f32.mrf.mxu0
      %v8833 = vadd.f32 0.0, %v8832
      %v8834 = vpop.f32.mrf.mxu0
      %v8835 = vpop.f32.mrf.mxu0
      %v8836 = vadd.f32 0.0, %v8835
      %v8837 = vpop.f32.mrf.mxu0
      %8838 = vmatprep.mubr.bf16.mxu0 %v8454
      %8839 = vmatmul.mubr.bf16.gmra.mxu0 %v8390
      %v8840 = vpop.f32.mrf.mxu0
      %v8841 = vadd.f32 0.0, %v8840
      %v8842 = vpop.f32.mrf.mxu0
      %v8843 = vpop.f32.mrf.mxu0
      %v8844 = vadd.f32 0.0, %v8843
      %v8845 = vpop.f32.mrf.mxu0
      %8846 = vmatprep.mubr.bf16.mxu0 %v8455
      %8847 = vmatmul.mubr.bf16.gmra.mxu0 %v8391
      %v8848 = vpop.f32.mrf.mxu0
      %v8849 = vadd.f32 0.0, %v8848
      %v8850 = vpop.f32.mrf.mxu0
      %v8851 = vpop.f32.mrf.mxu0
      %v8852 = vadd.f32 0.0, %v8851
      %v8853 = vpop.f32.mrf.mxu0
      %8854 = vmatprep.mubr.bf16.mxu0 %v8456
      %8855 = vmatmul.mubr.bf16.gmra.mxu0 %v8392
      %v8856 = vpop.f32.mrf.mxu0
      %v8857 = vadd.f32 0.0, %v8856
      %v8858 = vpop.f32.mrf.mxu0
      %v8859 = vpop.f32.mrf.mxu0
      %v8860 = vadd.f32 0.0, %v8859
      %v8861 = vpop.f32.mrf.mxu0
      %8862 = vmatprep.mubr.bf16.mxu0 %v8457
      %8863 = vmatmul.mubr.bf16.gmra.mxu0 %v8393
      %v8864 = vpop.f32.mrf.mxu0
      %v8865 = vadd.f32 0.0, %v8864
      %v8866 = vpop.f32.mrf.mxu0
      %v8867 = vpop.f32.mrf.mxu0
      %v8868 = vadd.f32 0.0, %v8867
      %v8869 = vpop.f32.mrf.mxu0
      %8870 = vmatprep.mubr.bf16.mxu0 %v8458
      %8871 = vmatmul.mubr.bf16.gmra.mxu0 %v8394
      %v8872 = vpop.f32.mrf.mxu0
      %v8873 = vadd.f32 0.0, %v8872
      %v8874 = vpop.f32.mrf.mxu0
      %v8875 = vpop.f32.mrf.mxu0
      %v8876 = vadd.f32 0.0, %v8875
      %v8877 = vpop.f32.mrf.mxu0
      %8878 = vmatprep.mubr.bf16.mxu0 %v8459
      %8879 = vmatmul.mubr.bf16.gmra.mxu0 %v8395
      %v8880 = vpop.f32.mrf.mxu0
      %v8881 = vadd.f32 0.0, %v8880
      %v8882 = vpop.f32.mrf.mxu0
      %v8883 = vpop.f32.mrf.mxu0
      %v8884 = vadd.f32 0.0, %v8883
      %v8885 = vpop.f32.mrf.mxu0
      %8886 = vmatprep.mubr.bf16.mxu0 %v8460
      %8887 = vmatmul.mubr.bf16.gmra.mxu0 %v8396
      %v8888 = vpop.f32.mrf.mxu0
      %v8889 = vadd.f32 0.0, %v8888
      %v8890 = vpop.f32.mrf.mxu0
      %v8891 = vpop.f32.mrf.mxu0
      %v8892 = vadd.f32 0.0, %v8891
      %v8893 = vpop.f32.mrf.mxu0
      %8894 = vdwg.mxu0
      %8895 = vmatprep.subr.bf16.mxu0 0
      %8896 = vmatpush1.bf16.msra.mxu0 %v8709
      %8897 = vmatprep.subr.bf16.mxu0 0
      %8898 = vmatpush1.bf16.msra.mxu0 %v8708
      %8899 = vmatprep.subr.bf16.mxu0 0
      %8900 = vmatpush1.bf16.msra.mxu0 %v8707
      %8901 = vmatprep.subr.bf16.mxu0 0
      %8902 = vmatpush1.bf16.msra.mxu0 %v8706
      %8903 = vmatprep.subr.bf16.mxu0 0
      %8904 = vmatpush1.bf16.msra.mxu0 %v8705
      %8905 = vmatprep.subr.bf16.mxu0 0
      %8906 = vmatpush1.bf16.msra.mxu0 %v8704
      %8907 = vmatprep.subr.bf16.mxu0 0
      %8908 = vmatpush1.bf16.msra.mxu0 %v8703
      %8909 = vmatprep.subr.bf16.mxu0 0
      %8910 = vmatpush1.bf16.msra.mxu0 %v8702
      %8911 = vmatprep.subr.bf16.mxu0 0
      %8912 = vmatpush2.bf16.msra.mxu0 0
      %8913 = vmatprep.subr.bf16.mxu0 0
      %8914 = vmatpush2.bf16.msra.mxu0 0
      %8915 = vmatprep.subr.bf16.mxu0 0
      %8916 = vmatpush2.bf16.msra.mxu0 0
      %8917 = vmatprep.subr.bf16.mxu0 0
      %8918 = vmatpush2.bf16.msra.mxu0 0
      %8919 = vmatprep.subr.bf16.mxu0 0
      %8920 = vmatpush2.bf16.msra.mxu0 0
      %8921 = vmatprep.subr.bf16.mxu0 0
      %8922 = vmatpush2.bf16.msra.mxu0 0
      %8923 = vmatprep.subr.bf16.mxu0 0
      %8924 = vmatpush2.bf16.msra.mxu0 0
      %8925 = vmatprep.subr.bf16.mxu0 0
      %8926 = vmatpush2.bf16.msra.mxu0 0
      %8927 = vmatprep.mubr.bf16.mxu0 0
      %8928 = vmatmul.mubr.bf16.gmra.mxu0 %v8509
      %v8929 = vpop.f32.mrf.mxu0
      %v8930 = vadd.f32 %v8769, %v8929
      %v8931 = vpop.f32.mrf.mxu0
      %v8932 = vpop.f32.mrf.mxu0
      %v8933 = vadd.f32 %v8772, %v8932
      %v8934 = vpop.f32.mrf.mxu0
      %8935 = vmatprep.mubr.bf16.mxu0 0
      %8936 = vmatmul.mubr.bf16.gmra.mxu0 %v8510
      %v8937 = vpop.f32.mrf.mxu0
      %v8938 = vadd.f32 %v8777, %v8937
      %v8939 = vpop.f32.mrf.mxu0
      %v8940 = vpop.f32.mrf.mxu0
      %v8941 = vadd.f32 %v8780, %v8940
      %v8942 = vpop.f32.mrf.mxu0
      %8943 = vmatprep.mubr.bf16.mxu0 0
      %8944 = vmatmul.mubr.bf16.gmra.mxu0 %v8511
      %v8945 = vpop.f32.mrf.mxu0
      %v8946 = vadd.f32 %v8785, %v8945
      %v8947 = vpop.f32.mrf.mxu0
      %v8948 = vpop.f32.mrf.mxu0
      %v8949 = vadd.f32 %v8788, %v8948
      %v8950 = vpop.f32.mrf.mxu0
      %8951 = vmatprep.mubr.bf16.mxu0 0
      %8952 = vmatmul.mubr.bf16.gmra.mxu0 %v8512
      %v8953 = vpop.f32.mrf.mxu0
      %v8954 = vadd.f32 %v8793, %v8953
      %v8955 = vpop.f32.mrf.mxu0
      %v8956 = vpop.f32.mrf.mxu0
      %v8957 = vadd.f32 %v8796, %v8956
      %v8958 = vpop.f32.mrf.mxu0
      %8959 = vmatprep.mubr.bf16.mxu0 0
      %8960 = vmatmul.mubr.bf16.gmra.mxu0 %v8513
      %v8961 = vpop.f32.mrf.mxu0
      %v8962 = vadd.f32 %v8801, %v8961
      %v8963 = vpop.f32.mrf.mxu0
      %v8964 = vpop.f32.mrf.mxu0
      %v8965 = vadd.f32 %v8804, %v8964
      %v8966 = vpop.f32.mrf.mxu0
      %8967 = vmatprep.mubr.bf16.mxu0 0
      %8968 = vmatmul.mubr.bf16.gmra.mxu0 %v8514
      %v8969 = vpop.f32.mrf.mxu0
      %v8970 = vadd.f32 %v8809, %v8969
      %v8971 = vpop.f32.mrf.mxu0
      %v8972 = vpop.f32.mrf.mxu0
      %v8973 = vadd.f32 %v8812, %v8972
      %v8974 = vpop.f32.mrf.mxu0
      %8975 = vmatprep.mubr.bf16.mxu0 0
      %8976 = vmatmul.mubr.bf16.gmra.mxu0 %v8515
      %v8977 = vpop.f32.mrf.mxu0
      %v8978 = vadd.f32 %v8817, %v8977
      %v8979 = vpop.f32.mrf.mxu0
      %v8980 = vpop.f32.mrf.mxu0
      %v8981 = vadd.f32 %v8820, %v8980
      %v8982 = vpop.f32.mrf.mxu0
      %8983 = vmatprep.mubr.bf16.mxu0 0
      %8984 = vmatmul.mubr.bf16.gmra.mxu0 %v8516
      %v8985 = vpop.f32.mrf.mxu0
      %v8986 = vadd.f32 %v8825, %v8985
      %v8987 = vpop.f32.mrf.mxu0
      %v8988 = vpop.f32.mrf.mxu0
      %v8989 = vadd.f32 %v8828, %v8988
      %v8990 = vpop.f32.mrf.mxu0
      %8991 = vmatprep.mubr.bf16.mxu0 0
      %8992 = vmatmul.mubr.bf16.gmra.mxu0 %v8517
      %v8993 = vpop.f32.mrf.mxu0
      %v8994 = vadd.f32 %v8833, %v8993
      %v8995 = vpop.f32.mrf.mxu0
      %v8996 = vpop.f32.mrf.mxu0
      %v8997 = vadd.f32 %v8836, %v8996
      %v8998 = vpop.f32.mrf.mxu0
      %8999 = vmatprep.mubr.bf16.mxu0 0
      %9000 = vmatmul.mubr.bf16.gmra.mxu0 %v8518
      %v9001 = vpop.f32.mrf.mxu0
      %v9002 = vadd.f32 %v8841, %v9001
      %v9003 = vpop.f32.mrf.mxu0
      %v9004 = vpop.f32.mrf.mxu0
      %v9005 = vadd.f32 %v8844, %v9004
      %v9006 = vpop.f32.mrf.mxu0
      %9007 = vmatprep.mubr.bf16.mxu0 0
      %9008 = vmatmul.mubr.bf16.gmra.mxu0 %v8519
      %v9009 = vpop.f32.mrf.mxu0
      %v9010 = vadd.f32 %v8849, %v9009
      %v9011 = vpop.f32.mrf.mxu0
      %v9012 = vpop.f32.mrf.mxu0
      %v9013 = vadd.f32 %v8852, %v9012
      %v9014 = vpop.f32.mrf.mxu0
      %9015 = vmatprep.mubr.bf16.mxu0 0
      %9016 = vmatmul.mubr.bf16.gmra.mxu0 %v8520
      %v9017 = vpop.f32.mrf.mxu0
      %v9018 = vadd.f32 %v8857, %v9017
      %v9019 = vpop.f32.mrf.mxu0
      %v9020 = vpop.f32.mrf.mxu0
      %v9021 = vadd.f32 %v8860, %v9020
      %v9022 = vpop.f32.mrf.mxu0
      %9023 = vmatprep.mubr.bf16.mxu0 0
      %9024 = vmatmul.mubr.bf16.gmra.mxu0 %v8521
      %v9025 = vpop.f32.mrf.mxu0
      %v9026 = vadd.f32 %v8865, %v9025
      %v9027 = vpop.f32.mrf.mxu0
      %v9028 = vpop.f32.mrf.mxu0
      %v9029 = vadd.f32 %v8868, %v9028
      %v9030 = vpop.f32.mrf.mxu0
      %9031 = vmatprep.mubr.bf16.mxu0 0
      %9032 = vmatmul.mubr.bf16.gmra.mxu0 %v8522
      %v9033 = vpop.f32.mrf.mxu0
      %v9034 = vadd.f32 %v8873, %v9033
      %v9035 = vpop.f32.mrf.mxu0
      %v9036 = vpop.f32.mrf.mxu0
      %v9037 = vadd.f32 %v8876, %v9036
      %v9038 = vpop.f32.mrf.mxu0
      %9039 = vmatprep.mubr.bf16.mxu0 0
      %9040 = vmatmul.mubr.bf16.gmra.mxu0 %v8523
      %v9041 = vpop.f32.mrf.mxu0
      %v9042 = vadd.f32 %v8881, %v9041
      %v9043 = vpop.f32.mrf.mxu0
      %v9044 = vpop.f32.mrf.mxu0
      %v9045 = vadd.f32 %v8884, %v9044
      %v9046 = vpop.f32.mrf.mxu0
      %9047 = vmatprep.mubr.bf16.mxu0 0
      %9048 = vmatmul.mubr.bf16.gmra.mxu0 %v8524
      %v9049 = vpop.f32.mrf.mxu0
      %v9050 = vadd.f32 %v8889, %v9049
      %v9051 = vpop.f32.mrf.mxu0
      %v9052 = vpop.f32.mrf.mxu0
      %v9053 = vadd.f32 %v8892, %v9052
      %v9054 = vpop.f32.mrf.mxu0
      %9055 = vdwg.mxu0
      %v9056 = vadd.f32 %v7692, %v8930
      %v9057 = vadd.f32 %v7693, %v8933
      %v9058 = vadd.f32 %v7694, %v8938
      %v9059 = vadd.f32 %v7695, %v8941
      %v9060 = vadd.f32 %v7696, %v8946
      %v9061 = vadd.f32 %v7697, %v8949
      %v9062 = vadd.f32 %v7698, %v8954
      %v9063 = vadd.f32 %v7699, %v8957
      %v9064 = vadd.f32 %v7700, %v8962
      %v9065 = vadd.f32 %v7701, %v8965
      %v9066 = vadd.f32 %v7702, %v8970
      %v9067 = vadd.f32 %v7703, %v8973
      %v9068 = vadd.f32 %v7704, %v8978
      %v9069 = vadd.f32 %v7705, %v8981
      %v9070 = vadd.f32 %v7706, %v8986
      %v9071 = vadd.f32 %v7707, %v8989
      %v9072 = vadd.f32 %v7708, %v8994
      %v9073 = vadd.f32 %v7709, %v8997
      %v9074 = vadd.f32 %v7710, %v9002
      %v9075 = vadd.f32 %v7711, %v9005
      %v9076 = vadd.f32 %v7712, %v9010
      %v9077 = vadd.f32 %v7713, %v9013
      %v9078 = vadd.f32 %v7714, %v9018
      %v9079 = vadd.f32 %v7715, %v9021
      %v9080 = vadd.f32 %v7716, %v9026
      %v9081 = vadd.f32 %v7717, %v9029
      %v9082 = vadd.f32 %v7718, %v9034
      %v9083 = vadd.f32 %v7719, %v9037
      %v9084 = vadd.f32 %v7720, %v9042
      %v9085 = vadd.f32 %v7721, %v9045
      %v9086 = vadd.f32 %v7722, %v9050
      %v9087 = vadd.f32 %v7723, %v9053
      %v9088 = vld [vmem:[%s1623] sm:$0xf]
      %v9089 = vld [vmem:[%s1623 + $0x4] sm:$0xf]
      %v9090 = vld [vmem:[%s1623 + $0x8] sm:$0x1]
      %v9091 = vld [vmem:[%s1623 + $0xc] sm:$0xf]
      %v9092 = vld [vmem:[%s1623 + $0x10] sm:$0xf]
      %v9093 = vld [vmem:[%s1623 + $0x14] sm:$0x1]
      %v9094 = vld [vmem:[%s1623 + $0x18] sm:$0xf]
      %v9095 = vld [vmem:[%s1623 + $0x1c] sm:$0xf]
      %v9096 = vld [vmem:[%s1623 + $0x20] sm:$0x1]
      %v9097 = vld [vmem:[%s1623 + $0x24] sm:$0xf]
      %v9098 = vld [vmem:[%s1623 + $0x28] sm:$0xf]
      %v9099 = vld [vmem:[%s1623 + $0x2c] sm:$0x1]
      %v9100 = vld [vmem:[%s1623 + $0x30] sm:$0xf]
      %v9101 = vld [vmem:[%s1623 + $0x34] sm:$0xf]
      %v9102 = vld [vmem:[%s1623 + $0x38] sm:$0x1]
      %v9103 = vld [vmem:[%s1623 + $0x3c] sm:$0xf]
      %v9104 = vld [vmem:[%s1623 + $0x40] sm:$0xf]
      %v9105 = vld [vmem:[%s1623 + $0x44] sm:$0x1]
      %v9106 = vld [vmem:[%s1623 + $0x48] sm:$0xf]
      %v9107 = vld [vmem:[%s1623 + $0x4c] sm:$0xf]
      %v9108 = vld [vmem:[%s1623 + $0x50] sm:$0x1]
      %v9109 = vld [vmem:[%s1623 + $0x54] sm:$0xf]
      %v9110 = vld [vmem:[%s1623 + $0x58] sm:$0xf]
      %v9111 = vld [vmem:[%s1623 + $0x5c] sm:$0x1]
      %v9112 = vld [vmem:[%s1623 + $0x60] sm:$0xf]
      %v9113 = vld [vmem:[%s1623 + $0x64] sm:$0xf]
      %v9114 = vld [vmem:[%s1623 + $0x68] sm:$0x1]
      %v9115 = vld [vmem:[%s1623 + $0x6c] sm:$0xf]
      %v9116 = vld [vmem:[%s1623 + $0x70] sm:$0xf]
      %v9117 = vld [vmem:[%s1623 + $0x74] sm:$0x1]
      %v9118 = vld [vmem:[%s1623 + $0x78] sm:$0xf]
      %v9119 = vld [vmem:[%s1623 + $0x7c] sm:$0xf]
      %v9120 = vld [vmem:[%s1623 + $0x80] sm:$0x1]
      %v9121 = vld [vmem:[%s1623 + $0x84] sm:$0xf]
      %v9122 = vld [vmem:[%s1623 + $0x88] sm:$0xf]
      %v9123 = vld [vmem:[%s1623 + $0x8c] sm:$0x1]
      %v9124 = vld [vmem:[%s1623 + $0x90] sm:$0xf]
      %v9125 = vld [vmem:[%s1623 + $0x94] sm:$0xf]
      %v9126 = vld [vmem:[%s1623 + $0x98] sm:$0x1]
      %v9127 = vld [vmem:[%s1623 + $0x9c] sm:$0xf]
      %v9128 = vld [vmem:[%s1623 + $0xa0] sm:$0xf]
      %v9129 = vld [vmem:[%s1623 + $0xa4] sm:$0x1]
      %v9130 = vld [vmem:[%s1623 + $0xa8] sm:$0xf]
      %v9131 = vld [vmem:[%s1623 + $0xac] sm:$0xf]
      %v9132 = vld [vmem:[%s1623 + $0xb0] sm:$0x1]
      %v9133 = vld [vmem:[%s1623 + $0xb4] sm:$0xf]
      %v9134 = vld [vmem:[%s1623 + $0xb8] sm:$0xf]
      %v9135 = vld [vmem:[%s1623 + $0xbc] sm:$0x1]
      %v9137 = vshrl.u32 %v9088, 16
      %v9139 = vrot.slane %v9137, 4
      %v9140 = vshll.u32 %v9088, 16
      %v9142 = vrot.slane %v9140, 5
      %v9143 = vor.u32 %v9139, %v9142
      %v9144 = vrot.slane %v9143, 4
      %v9146 = vshll.u32 %v9089, 16
      %v9148 = vrot.slane %v9146, 5
      %v9149 = vsel %vm330, %v9144, %v9148
      %v9150 = vshrl.u32 %v9089, 16
      %v9152 = vrot.slane %v9150, 4
      %v9153 = vor.u32 %v9152, %v9148
      %v9154 = vrot.slane %v9153, 4
      %v9156 = vshll.u32 %v9090, 16
      %v9158 = vrot.slane %v9156, 5
      %v9159 = vsel %vm330, %v9154, %v9158
      %v9161 = vshrl.u32 %v9091, 16
      %v9163 = vrot.slane %v9161, 4
      %v9164 = vshll.u32 %v9091, 16
      %v9166 = vrot.slane %v9164, 5
      %v9167 = vor.u32 %v9163, %v9166
      %v9168 = vrot.slane %v9167, 4
      %v9170 = vshll.u32 %v9092, 16
      %v9172 = vrot.slane %v9170, 5
      %v9173 = vsel %vm330, %v9168, %v9172
      %v9174 = vshrl.u32 %v9092, 16
      %v9176 = vrot.slane %v9174, 4
      %v9177 = vor.u32 %v9176, %v9172
      %v9178 = vrot.slane %v9177, 4
      %v9180 = vshll.u32 %v9093, 16
      %v9182 = vrot.slane %v9180, 5
      %v9183 = vsel %vm330, %v9178, %v9182
      %v9185 = vshrl.u32 %v9094, 16
      %v9187 = vrot.slane %v9185, 4
      %v9188 = vshll.u32 %v9094, 16
      %v9190 = vrot.slane %v9188, 5
      %v9191 = vor.u32 %v9187, %v9190
      %v9192 = vrot.slane %v9191, 4
      %v9194 = vshll.u32 %v9095, 16
      %v9196 = vrot.slane %v9194, 5
      %v9197 = vsel %vm330, %v9192, %v9196
      %v9198 = vshrl.u32 %v9095, 16
      %v9200 = vrot.slane %v9198, 4
      %v9201 = vor.u32 %v9200, %v9196
      %v9202 = vrot.slane %v9201, 4
      %v9204 = vshll.u32 %v9096, 16
      %v9206 = vrot.slane %v9204, 5
      %v9207 = vsel %vm330, %v9202, %v9206
      %v9209 = vshrl.u32 %v9097, 16
      %v9211 = vrot.slane %v9209, 4
      %v9212 = vshll.u32 %v9097, 16
      %v9214 = vrot.slane %v9212, 5
      %v9215 = vor.u32 %v9211, %v9214
      %v9216 = vrot.slane %v9215, 4
      %v9218 = vshll.u32 %v9098, 16
      %v9220 = vrot.slane %v9218, 5
      %v9221 = vsel %vm330, %v9216, %v9220
      %v9222 = vshrl.u32 %v9098, 16
      %v9224 = vrot.slane %v9222, 4
      %v9225 = vor.u32 %v9224, %v9220
      %v9226 = vrot.slane %v9225, 4
      %v9228 = vshll.u32 %v9099, 16
      %v9230 = vrot.slane %v9228, 5
      %v9231 = vsel %vm330, %v9226, %v9230
      %v9233 = vshrl.u32 %v9100, 16
      %v9235 = vrot.slane %v9233, 4
      %v9236 = vshll.u32 %v9100, 16
      %v9238 = vrot.slane %v9236, 5
      %v9239 = vor.u32 %v9235, %v9238
      %v9240 = vrot.slane %v9239, 4
      %v9242 = vshll.u32 %v9101, 16
      %v9244 = vrot.slane %v9242, 5
      %v9245 = vsel %vm330, %v9240, %v9244
      %v9246 = vshrl.u32 %v9101, 16
      %v9248 = vrot.slane %v9246, 4
      %v9249 = vor.u32 %v9248, %v9244
      %v9250 = vrot.slane %v9249, 4
      %v9252 = vshll.u32 %v9102, 16
      %v9254 = vrot.slane %v9252, 5
      %v9255 = vsel %vm330, %v9250, %v9254
      %v9257 = vshrl.u32 %v9103, 16
      %v9259 = vrot.slane %v9257, 4
      %v9260 = vshll.u32 %v9103, 16
      %v9262 = vrot.slane %v9260, 5
      %v9263 = vor.u32 %v9259, %v9262
      %v9264 = vrot.slane %v9263, 4
      %v9266 = vshll.u32 %v9104, 16
      %v9268 = vrot.slane %v9266, 5
      %v9269 = vsel %vm330, %v9264, %v9268
      %v9270 = vshrl.u32 %v9104, 16
      %v9272 = vrot.slane %v9270, 4
      %v9273 = vor.u32 %v9272, %v9268
      %v9274 = vrot.slane %v9273, 4
      %v9276 = vshll.u32 %v9105, 16
      %v9278 = vrot.slane %v9276, 5
      %v9279 = vsel %vm330, %v9274, %v9278
      %v9281 = vshrl.u32 %v9106, 16
      %v9283 = vrot.slane %v9281, 4
      %v9284 = vshll.u32 %v9106, 16
      %v9286 = vrot.slane %v9284, 5
      %v9287 = vor.u32 %v9283, %v9286
      %v9288 = vrot.slane %v9287, 4
      %v9290 = vshll.u32 %v9107, 16
      %v9292 = vrot.slane %v9290, 5
      %v9293 = vsel %vm330, %v9288, %v9292
      %v9294 = vshrl.u32 %v9107, 16
      %v9296 = vrot.slane %v9294, 4
      %v9297 = vor.u32 %v9296, %v9292
      %v9298 = vrot.slane %v9297, 4
      %v9300 = vshll.u32 %v9108, 16
      %v9302 = vrot.slane %v9300, 5
      %v9303 = vsel %vm330, %v9298, %v9302
      %v9305 = vshrl.u32 %v9109, 16
      %v9307 = vrot.slane %v9305, 4
      %v9308 = vshll.u32 %v9109, 16
      %v9310 = vrot.slane %v9308, 5
      %v9311 = vor.u32 %v9307, %v9310
      %v9312 = vrot.slane %v9311, 4
      %v9314 = vshll.u32 %v9110, 16
      %v9316 = vrot.slane %v9314, 5
      %v9317 = vsel %vm330, %v9312, %v9316
      %v9318 = vshrl.u32 %v9110, 16
      %v9320 = vrot.slane %v9318, 4
      %v9321 = vor.u32 %v9320, %v9316
      %v9322 = vrot.slane %v9321, 4
      %v9324 = vshll.u32 %v9111, 16
      %v9326 = vrot.slane %v9324, 5
      %v9327 = vsel %vm330, %v9322, %v9326
      %v9329 = vshrl.u32 %v9112, 16
      %v9331 = vrot.slane %v9329, 4
      %v9332 = vshll.u32 %v9112, 16
      %v9334 = vrot.slane %v9332, 5
      %v9335 = vor.u32 %v9331, %v9334
      %v9336 = vrot.slane %v9335, 4
      %v9338 = vshll.u32 %v9113, 16
      %v9340 = vrot.slane %v9338, 5
      %v9341 = vsel %vm330, %v9336, %v9340
      %v9342 = vshrl.u32 %v9113, 16
      %v9344 = vrot.slane %v9342, 4
      %v9345 = vor.u32 %v9344, %v9340
      %v9346 = vrot.slane %v9345, 4
      %v9348 = vshll.u32 %v9114, 16
      %v9350 = vrot.slane %v9348, 5
      %v9351 = vsel %vm330, %v9346, %v9350
      %v9353 = vshrl.u32 %v9115, 16
      %v9355 = vrot.slane %v9353, 4
      %v9356 = vshll.u32 %v9115, 16
      %v9358 = vrot.slane %v9356, 5
      %v9359 = vor.u32 %v9355, %v9358
      %v9360 = vrot.slane %v9359, 4
      %v9362 = vshll.u32 %v9116, 16
      %v9364 = vrot.slane %v9362, 5
      %v9365 = vsel %vm330, %v9360, %v9364
      %v9366 = vshrl.u32 %v9116, 16
      %v9368 = vrot.slane %v9366, 4
      %v9369 = vor.u32 %v9368, %v9364
      %v9370 = vrot.slane %v9369, 4
      %v9372 = vshll.u32 %v9117, 16
      %v9374 = vrot.slane %v9372, 5
      %v9375 = vsel %vm330, %v9370, %v9374
      %v9377 = vshrl.u32 %v9118, 16
      %v9379 = vrot.slane %v9377, 4
      %v9380 = vshll.u32 %v9118, 16
      %v9382 = vrot.slane %v9380, 5
      %v9383 = vor.u32 %v9379, %v9382
      %v9384 = vrot.slane %v9383, 4
      %v9386 = vshll.u32 %v9119, 16
      %v9388 = vrot.slane %v9386, 5
      %v9389 = vsel %vm330, %v9384, %v9388
      %v9390 = vshrl.u32 %v9119, 16
      %v9392 = vrot.slane %v9390, 4
      %v9393 = vor.u32 %v9392, %v9388
      %v9394 = vrot.slane %v9393, 4
      %v9396 = vshll.u32 %v9120, 16
      %v9398 = vrot.slane %v9396, 5
      %v9399 = vsel %vm330, %v9394, %v9398
      %v9401 = vshrl.u32 %v9121, 16
      %v9403 = vrot.slane %v9401, 4
      %v9404 = vshll.u32 %v9121, 16
      %v9406 = vrot.slane %v9404, 5
      %v9407 = vor.u32 %v9403, %v9406
      %v9408 = vrot.slane %v9407, 4
      %v9410 = vshll.u32 %v9122, 16
      %v9412 = vrot.slane %v9410, 5
      %v9413 = vsel %vm330, %v9408, %v9412
      %v9414 = vshrl.u32 %v9122, 16
      %v9416 = vrot.slane %v9414, 4
      %v9417 = vor.u32 %v9416, %v9412
      %v9418 = vrot.slane %v9417, 4
      %v9420 = vshll.u32 %v9123, 16
      %v9422 = vrot.slane %v9420, 5
      %v9423 = vsel %vm330, %v9418, %v9422
      %v9425 = vshrl.u32 %v9124, 16
      %v9427 = vrot.slane %v9425, 4
      %v9428 = vshll.u32 %v9124, 16
      %v9430 = vrot.slane %v9428, 5
      %v9431 = vor.u32 %v9427, %v9430
      %v9432 = vrot.slane %v9431, 4
      %v9434 = vshll.u32 %v9125, 16
      %v9436 = vrot.slane %v9434, 5
      %v9437 = vsel %vm330, %v9432, %v9436
      %v9438 = vshrl.u32 %v9125, 16
      %v9440 = vrot.slane %v9438, 4
      %v9441 = vor.u32 %v9440, %v9436
      %v9442 = vrot.slane %v9441, 4
      %v9444 = vshll.u32 %v9126, 16
      %v9446 = vrot.slane %v9444, 5
      %v9447 = vsel %vm330, %v9442, %v9446
      %v9449 = vshrl.u32 %v9127, 16
      %v9451 = vrot.slane %v9449, 4
      %v9452 = vshll.u32 %v9127, 16
      %v9454 = vrot.slane %v9452, 5
      %v9455 = vor.u32 %v9451, %v9454
      %v9456 = vrot.slane %v9455, 4
      %v9458 = vshll.u32 %v9128, 16
      %v9460 = vrot.slane %v9458, 5
      %v9461 = vsel %vm330, %v9456, %v9460
      %v9462 = vshrl.u32 %v9128, 16
      %v9464 = vrot.slane %v9462, 4
      %v9465 = vor.u32 %v9464, %v9460
      %v9466 = vrot.slane %v9465, 4
      %v9468 = vshll.u32 %v9129, 16
      %v9470 = vrot.slane %v9468, 5
      %v9471 = vsel %vm330, %v9466, %v9470
      %v9473 = vshrl.u32 %v9130, 16
      %v9475 = vrot.slane %v9473, 4
      %v9476 = vshll.u32 %v9130, 16
      %v9478 = vrot.slane %v9476, 5
      %v9479 = vor.u32 %v9475, %v9478
      %v9480 = vrot.slane %v9479, 4
      %v9482 = vshll.u32 %v9131, 16
      %v9484 = vrot.slane %v9482, 5
      %v9485 = vsel %vm330, %v9480, %v9484
      %v9486 = vshrl.u32 %v9131, 16
      %v9488 = vrot.slane %v9486, 4
      %v9489 = vor.u32 %v9488, %v9484
      %v9490 = vrot.slane %v9489, 4
      %v9492 = vshll.u32 %v9132, 16
      %v9494 = vrot.slane %v9492, 5
      %v9495 = vsel %vm330, %v9490, %v9494
      %v9497 = vshrl.u32 %v9133, 16
      %v9499 = vrot.slane %v9497, 4
      %v9500 = vshll.u32 %v9133, 16
      %v9502 = vrot.slane %v9500, 5
      %v9503 = vor.u32 %v9499, %v9502
      %v9504 = vrot.slane %v9503, 4
      %v9506 = vshll.u32 %v9134, 16
      %v9508 = vrot.slane %v9506, 5
      %v9509 = vsel %vm330, %v9504, %v9508
      %v9510 = vshrl.u32 %v9134, 16
      %v9512 = vrot.slane %v9510, 4
      %v9513 = vor.u32 %v9512, %v9508
      %v9514 = vrot.slane %v9513, 4
      %v9516 = vshll.u32 %v9135, 16
      %v9518 = vrot.slane %v9516, 5
      %v9519 = vsel %vm330, %v9514, %v9518
      %v9520 = vld [vmem:[%s5] sm:$0xf]
      %v9521 = vld [vmem:[%s5 + $0x4] sm:$0xf]
      %v9522 = vld [vmem:[%s5 + $0x8] sm:$0xf]
      %v9523 = vld [vmem:[%s5 + $0xc] sm:$0xf]
      %v9524 = vld [vmem:[%s5 + $0x10] sm:$0xf]
      %v9525 = vld [vmem:[%s5 + $0x14] sm:$0xf]
      %v9526 = vld [vmem:[%s5 + $0x18] sm:$0xf]
      %v9527 = vld [vmem:[%s5 + $0x1c] sm:$0xf]
      %v9528 = vld [vmem:[%s5 + $0x20] sm:$0xf]
      %v9529 = vld [vmem:[%s5 + $0x24] sm:$0xf]
      %v9530 = vld [vmem:[%s5 + $0x28] sm:$0xf]
      %v9531 = vld [vmem:[%s5 + $0x2c] sm:$0xf]
      %v9532 = vld [vmem:[%s5 + $0x30] sm:$0xf]
      %v9533 = vld [vmem:[%s5 + $0x34] sm:$0xf]
      %v9534 = vld [vmem:[%s5 + $0x38] sm:$0xf]
      %v9535 = vld [vmem:[%s5 + $0x3c] sm:$0xf]
      %v9536 = vunpack.c.l.b16 %v9149
      %v9537 = vunpack.c.l.b16 %v9159
      %v9538 = vunpack.c.l.b16 %v9173
      %v9539 = vunpack.c.l.b16 %v9183
      %v9540 = vunpack.c.l.b16 %v9197
      %v9541 = vunpack.c.l.b16 %v9207
      %v9542 = vunpack.c.l.b16 %v9221
      %v9543 = vunpack.c.l.b16 %v9231
      %v9544 = vunpack.c.l.b16 %v9245
      %v9545 = vunpack.c.l.b16 %v9255
      %v9546 = vunpack.c.l.b16 %v9269
      %v9547 = vunpack.c.l.b16 %v9279
      %v9548 = vunpack.c.l.b16 %v9293
      %v9549 = vunpack.c.l.b16 %v9303
      %v9550 = vunpack.c.l.b16 %v9317
      %v9551 = vunpack.c.l.b16 %v9327
      %v9552 = vunpack.c.l.b16 %v9341
      %v9553 = vunpack.c.l.b16 %v9351
      %v9554 = vunpack.c.l.b16 %v9365
      %v9555 = vunpack.c.l.b16 %v9375
      %v9556 = vunpack.c.l.b16 %v9389
      %v9557 = vunpack.c.l.b16 %v9399
      %v9558 = vunpack.c.l.b16 %v9413
      %v9559 = vunpack.c.l.b16 %v9423
      %v9560 = vunpack.c.l.b16 %v9437
      %v9561 = vunpack.c.l.b16 %v9447
      %v9562 = vunpack.c.l.b16 %v9461
      %v9563 = vunpack.c.l.b16 %v9471
      %v9564 = vunpack.c.l.b16 %v9485
      %v9565 = vunpack.c.l.b16 %v9495
      %v9566 = vunpack.c.l.b16 %v9509
      %v9567 = vunpack.c.l.b16 %v9519
      %v9568 = vpack.c.b16 %v9537, %v9536
      %v9569 = vpack.c.b16 %v9539, %v9538
      %v9570 = vpack.c.b16 %v9541, %v9540
      %v9571 = vpack.c.b16 %v9543, %v9542
      %v9572 = vpack.c.b16 %v9545, %v9544
      %v9573 = vpack.c.b16 %v9547, %v9546
      %v9574 = vpack.c.b16 %v9549, %v9548
      %v9575 = vpack.c.b16 %v9551, %v9550
      %v9576 = vpack.c.b16 %v9553, %v9552
      %v9577 = vpack.c.b16 %v9555, %v9554
      %v9578 = vpack.c.b16 %v9557, %v9556
      %v9579 = vpack.c.b16 %v9559, %v9558
      %v9580 = vpack.c.b16 %v9561, %v9560
      %v9581 = vpack.c.b16 %v9563, %v9562
      %v9582 = vpack.c.b16 %v9565, %v9564
      %v9583 = vpack.c.b16 %v9567, %v9566
      %v9616 = vunpack.c.l.b16 %v9520
      %v9617 = vunpack.c.l.b16 %v9521
      %v9618 = vunpack.c.l.b16 %v9522
      %v9619 = vunpack.c.l.b16 %v9523
      %v9620 = vunpack.c.l.b16 %v9524
      %v9621 = vunpack.c.l.b16 %v9525
      %v9622 = vunpack.c.l.b16 %v9526
      %v9623 = vunpack.c.l.b16 %v9527
      %v9624 = vunpack.c.l.b16 %v9528
      %v9625 = vunpack.c.l.b16 %v9529
      %v9626 = vunpack.c.l.b16 %v9530
      %v9627 = vunpack.c.l.b16 %v9531
      %v9628 = vunpack.c.l.b16 %v9532
      %v9629 = vunpack.c.l.b16 %v9533
      %v9630 = vunpack.c.l.b16 %v9534
      %v9631 = vunpack.c.l.b16 %v9535
      %v9632 = vpack.c.b16 %v9617, %v9616
      %v9633 = vpack.c.b16 %v9619, %v9618
      %v9634 = vpack.c.b16 %v9621, %v9620
      %v9635 = vpack.c.b16 %v9623, %v9622
      %v9636 = vpack.c.b16 %v9625, %v9624
      %v9637 = vpack.c.b16 %v9627, %v9626
      %v9638 = vpack.c.b16 %v9629, %v9628
      %v9639 = vpack.c.b16 %v9631, %v9630
      %9648 = vmatprep.subr.bf16.mxu0 0
      %9649 = vmatpush1.bf16.msra.mxu0 %v9639
      %9650 = vmatprep.subr.bf16.mxu0 0
      %9651 = vmatpush1.bf16.msra.mxu0 %v9638
      %9652 = vmatprep.subr.bf16.mxu0 0
      %9653 = vmatpush1.bf16.msra.mxu0 %v9637
      %9654 = vmatprep.subr.bf16.mxu0 0
      %9655 = vmatpush1.bf16.msra.mxu0 %v9636
      %9656 = vmatprep.subr.bf16.mxu0 0
      %9657 = vmatpush1.bf16.msra.mxu0 %v9635
      %9658 = vmatprep.subr.bf16.mxu0 0
      %9659 = vmatpush1.bf16.msra.mxu0 %v9634
      %9660 = vmatprep.subr.bf16.mxu0 0
      %9661 = vmatpush1.bf16.msra.mxu0 %v9633
      %9662 = vmatprep.subr.bf16.mxu0 0
      %9663 = vmatpush1.bf16.msra.mxu0 %v9632
      %9664 = vmatprep.subr.bf16.mxu0 0
      %9665 = vmatpush2.bf16.msra.mxu0 0
      %9666 = vmatprep.subr.bf16.mxu0 0
      %9667 = vmatpush2.bf16.msra.mxu0 0
      %9668 = vmatprep.subr.bf16.mxu0 0
      %9669 = vmatpush2.bf16.msra.mxu0 0
      %9670 = vmatprep.subr.bf16.mxu0 0
      %9671 = vmatpush2.bf16.msra.mxu0 0
      %9672 = vmatprep.subr.bf16.mxu0 0
      %9673 = vmatpush2.bf16.msra.mxu0 0
      %9674 = vmatprep.subr.bf16.mxu0 0
      %9675 = vmatpush2.bf16.msra.mxu0 0
      %9676 = vmatprep.subr.bf16.mxu0 0
      %9677 = vmatpush2.bf16.msra.mxu0 0
      %9678 = vmatprep.subr.bf16.mxu0 0
      %9679 = vmatpush2.bf16.msra.mxu0 0
      %9680 = vmatprep.mubr.bf16.mxu0 0
      %9681 = vmatmul.mubr.bf16.gmra.mxu0 %v9568
      %v9682 = vpop.f32.mrf.mxu0
      %v9683 = vadd.f32 0.0, %v9682
      %v9684 = vpop.f32.mrf.mxu0
      %v9685 = vpop.f32.mrf.mxu0
      %v9686 = vadd.f32 0.0, %v9685
      %v9687 = vpop.f32.mrf.mxu0
      %9688 = vmatprep.mubr.bf16.mxu0 0
      %9689 = vmatmul.mubr.bf16.gmra.mxu0 %v9569
      %v9690 = vpop.f32.mrf.mxu0
      %v9691 = vadd.f32 0.0, %v9690
      %v9692 = vpop.f32.mrf.mxu0
      %v9693 = vpop.f32.mrf.mxu0
      %v9694 = vadd.f32 0.0, %v9693
      %v9695 = vpop.f32.mrf.mxu0
      %9696 = vmatprep.mubr.bf16.mxu0 0
      %9697 = vmatmul.mubr.bf16.gmra.mxu0 %v9570
      %v9698 = vpop.f32.mrf.mxu0
      %v9699 = vadd.f32 0.0, %v9698
      %v9700 = vpop.f32.mrf.mxu0
      %v9701 = vpop.f32.mrf.mxu0
      %v9702 = vadd.f32 0.0, %v9701
      %v9703 = vpop.f32.mrf.mxu0
      %9704 = vmatprep.mubr.bf16.mxu0 0
      %9705 = vmatmul.mubr.bf16.gmra.mxu0 %v9571
      %v9706 = vpop.f32.mrf.mxu0
      %v9707 = vadd.f32 0.0, %v9706
      %v9708 = vpop.f32.mrf.mxu0
      %v9709 = vpop.f32.mrf.mxu0
      %v9710 = vadd.f32 0.0, %v9709
      %v9711 = vpop.f32.mrf.mxu0
      %9712 = vmatprep.mubr.bf16.mxu0 0
      %9713 = vmatmul.mubr.bf16.gmra.mxu0 %v9572
      %v9714 = vpop.f32.mrf.mxu0
      %v9715 = vadd.f32 0.0, %v9714
      %v9716 = vpop.f32.mrf.mxu0
      %v9717 = vpop.f32.mrf.mxu0
      %v9718 = vadd.f32 0.0, %v9717
      %v9719 = vpop.f32.mrf.mxu0
      %9720 = vmatprep.mubr.bf16.mxu0 0
      %9721 = vmatmul.mubr.bf16.gmra.mxu0 %v9573
      %v9722 = vpop.f32.mrf.mxu0
      %v9723 = vadd.f32 0.0, %v9722
      %v9724 = vpop.f32.mrf.mxu0
      %v9725 = vpop.f32.mrf.mxu0
      %v9726 = vadd.f32 0.0, %v9725
      %v9727 = vpop.f32.mrf.mxu0
      %9728 = vmatprep.mubr.bf16.mxu0 0
      %9729 = vmatmul.mubr.bf16.gmra.mxu0 %v9574
      %v9730 = vpop.f32.mrf.mxu0
      %v9731 = vadd.f32 0.0, %v9730
      %v9732 = vpop.f32.mrf.mxu0
      %v9733 = vpop.f32.mrf.mxu0
      %v9734 = vadd.f32 0.0, %v9733
      %v9735 = vpop.f32.mrf.mxu0
      %9736 = vmatprep.mubr.bf16.mxu0 0
      %9737 = vmatmul.mubr.bf16.gmra.mxu0 %v9575
      %v9738 = vpop.f32.mrf.mxu0
      %v9739 = vadd.f32 0.0, %v9738
      %v9740 = vpop.f32.mrf.mxu0
      %v9741 = vpop.f32.mrf.mxu0
      %v9742 = vadd.f32 0.0, %v9741
      %v9743 = vpop.f32.mrf.mxu0
      %9744 = vmatprep.mubr.bf16.mxu0 0
      %9745 = vmatmul.mubr.bf16.gmra.mxu0 %v9576
      %v9746 = vpop.f32.mrf.mxu0
      %v9747 = vadd.f32 0.0, %v9746
      %v9748 = vpop.f32.mrf.mxu0
      %v9749 = vpop.f32.mrf.mxu0
      %v9750 = vadd.f32 0.0, %v9749
      %v9751 = vpop.f32.mrf.mxu0
      %9752 = vmatprep.mubr.bf16.mxu0 0
      %9753 = vmatmul.mubr.bf16.gmra.mxu0 %v9577
      %v9754 = vpop.f32.mrf.mxu0
      %v9755 = vadd.f32 0.0, %v9754
      %v9756 = vpop.f32.mrf.mxu0
      %v9757 = vpop.f32.mrf.mxu0
      %v9758 = vadd.f32 0.0, %v9757
      %v9759 = vpop.f32.mrf.mxu0
      %9760 = vmatprep.mubr.bf16.mxu0 0
      %9761 = vmatmul.mubr.bf16.gmra.mxu0 %v9578
      %v9762 = vpop.f32.mrf.mxu0
      %v9763 = vadd.f32 0.0, %v9762
      %v9764 = vpop.f32.mrf.mxu0
      %v9765 = vpop.f32.mrf.mxu0
      %v9766 = vadd.f32 0.0, %v9765
      %v9767 = vpop.f32.mrf.mxu0
      %9768 = vmatprep.mubr.bf16.mxu0 0
      %9769 = vmatmul.mubr.bf16.gmra.mxu0 %v9579
      %v9770 = vpop.f32.mrf.mxu0
      %v9771 = vadd.f32 0.0, %v9770
      %v9772 = vpop.f32.mrf.mxu0
      %v9773 = vpop.f32.mrf.mxu0
      %v9774 = vadd.f32 0.0, %v9773
      %v9775 = vpop.f32.mrf.mxu0
      %9776 = vmatprep.mubr.bf16.mxu0 0
      %9777 = vmatmul.mubr.bf16.gmra.mxu0 %v9580
      %v9778 = vpop.f32.mrf.mxu0
      %v9779 = vadd.f32 0.0, %v9778
      %v9780 = vpop.f32.mrf.mxu0
      %v9781 = vpop.f32.mrf.mxu0
      %v9782 = vadd.f32 0.0, %v9781
      %v9783 = vpop.f32.mrf.mxu0
      %9784 = vmatprep.mubr.bf16.mxu0 0
      %9785 = vmatmul.mubr.bf16.gmra.mxu0 %v9581
      %v9786 = vpop.f32.mrf.mxu0
      %v9787 = vadd.f32 0.0, %v9786
      %v9788 = vpop.f32.mrf.mxu0
      %v9789 = vpop.f32.mrf.mxu0
      %v9790 = vadd.f32 0.0, %v9789
      %v9791 = vpop.f32.mrf.mxu0
      %9792 = vmatprep.mubr.bf16.mxu0 0
      %9793 = vmatmul.mubr.bf16.gmra.mxu0 %v9582
      %v9794 = vpop.f32.mrf.mxu0
      %v9795 = vadd.f32 0.0, %v9794
      %v9796 = vpop.f32.mrf.mxu0
      %v9797 = vpop.f32.mrf.mxu0
      %v9798 = vadd.f32 0.0, %v9797
      %v9799 = vpop.f32.mrf.mxu0
      %9800 = vmatprep.mubr.bf16.mxu0 0
      %9801 = vmatmul.mubr.bf16.gmra.mxu0 %v9583
      %v9802 = vpop.f32.mrf.mxu0
      %v9803 = vadd.f32 0.0, %v9802
      %v9804 = vpop.f32.mrf.mxu0
      %v9805 = vpop.f32.mrf.mxu0
      %v9806 = vadd.f32 0.0, %v9805
      %v9807 = vpop.f32.mrf.mxu0
      %9808 = vdwg.mxu0
      %v9809 = vadd.f32 %v9056, %v9683
      %v9810 = vadd.f32 %v9057, %v9686
      %v9811 = vadd.f32 %v9058, %v9691
      %v9812 = vadd.f32 %v9059, %v9694
      %v9813 = vadd.f32 %v9060, %v9699
      %v9814 = vadd.f32 %v9061, %v9702
      %v9815 = vadd.f32 %v9062, %v9707
      %v9816 = vadd.f32 %v9063, %v9710
      %v9817 = vadd.f32 %v9064, %v9715
      %v9818 = vadd.f32 %v9065, %v9718
      %v9819 = vadd.f32 %v9066, %v9723
      %v9820 = vadd.f32 %v9067, %v9726
      %v9821 = vadd.f32 %v9068, %v9731
      %v9822 = vadd.f32 %v9069, %v9734
      %v9823 = vadd.f32 %v9070, %v9739
      %v9824 = vadd.f32 %v9071, %v9742
      %v9825 = vadd.f32 %v9072, %v9747
      %v9826 = vadd.f32 %v9073, %v9750
      %v9827 = vadd.f32 %v9074, %v9755
      %v9828 = vadd.f32 %v9075, %v9758
      %v9829 = vadd.f32 %v9076, %v9763
      %v9830 = vadd.f32 %v9077, %v9766
      %v9831 = vadd.f32 %v9078, %v9771
      %v9832 = vadd.f32 %v9079, %v9774
      %v9833 = vadd.f32 %v9080, %v9779
      %v9834 = vadd.f32 %v9081, %v9782
      %v9835 = vadd.f32 %v9082, %v9787
      %v9836 = vadd.f32 %v9083, %v9790
      %v9837 = vadd.f32 %v9084, %v9795
      %v9838 = vadd.f32 %v9085, %v9798
      %v9839 = vadd.f32 %v9086, %v9803
      %v9840 = vadd.f32 %v9087, %v9806
      %v9841 = vld [vmem:[%s6] sm:$0x1]
      %v9843 = vlaneseq
      %v9844 = vshrl.u32 %v9843, 7
      %v9845 = vsub.s32 0, %v9844
      %v9846 = vrot.slane %v9841, %v9845
      %v9848 = vadd.f32 %v9809, %v9846
      %v9849 = vadd.f32 %v9810, %v9846
      %v9850 = vadd.f32 %v9811, %v9846
      %v9851 = vadd.f32 %v9812, %v9846
      %v9852 = vadd.f32 %v9813, %v9846
      %v9853 = vadd.f32 %v9814, %v9846
      %v9854 = vadd.f32 %v9815, %v9846
      %v9855 = vadd.f32 %v9816, %v9846
      %v9856 = vadd.f32 %v9817, %v9846
      %v9857 = vadd.f32 %v9818, %v9846
      %v9858 = vadd.f32 %v9819, %v9846
      %v9859 = vadd.f32 %v9820, %v9846
      %v9860 = vadd.f32 %v9821, %v9846
      %v9861 = vadd.f32 %v9822, %v9846
      %v9862 = vadd.f32 %v9823, %v9846
      %v9863 = vadd.f32 %v9824, %v9846
      %v9864 = vadd.f32 %v9825, %v9846
      %v9865 = vadd.f32 %v9826, %v9846
      %v9866 = vadd.f32 %v9827, %v9846
      %v9867 = vadd.f32 %v9828, %v9846
      %v9868 = vadd.f32 %v9829, %v9846
      %v9869 = vadd.f32 %v9830, %v9846
      %v9870 = vadd.f32 %v9831, %v9846
      %v9871 = vadd.f32 %v9832, %v9846
      %v9872 = vadd.f32 %v9833, %v9846
      %v9873 = vadd.f32 %v9834, %v9846
      %v9874 = vadd.f32 %v9835, %v9846
      %v9875 = vadd.f32 %v9836, %v9846
      %v9876 = vadd.f32 %v9837, %v9846
      %v9877 = vadd.f32 %v9838, %v9846
      %v9878 = vadd.f32 %v9839, %v9846
      %v9879 = vadd.f32 %v9840, %v9846
      %v9880 = vmax.f32 %v9848, 0.0
      %v9881 = vmax.f32 %v9849, 0.0
      %v9882 = vmax.f32 %v9850, 0.0
      %v9883 = vmax.f32 %v9851, 0.0
      %v9884 = vmax.f32 %v9852, 0.0
      %v9885 = vmax.f32 %v9853, 0.0
      %v9886 = vmax.f32 %v9854, 0.0
      %v9887 = vmax.f32 %v9855, 0.0
      %v9888 = vmax.f32 %v9856, 0.0
      %v9889 = vmax.f32 %v9857, 0.0
      %v9890 = vmax.f32 %v9858, 0.0
      %v9891 = vmax.f32 %v9859, 0.0
      %v9892 = vmax.f32 %v9860, 0.0
      %v9893 = vmax.f32 %v9861, 0.0
      %v9894 = vmax.f32 %v9862, 0.0
      %v9895 = vmax.f32 %v9863, 0.0
      %v9896 = vmax.f32 %v9864, 0.0
      %v9897 = vmax.f32 %v9865, 0.0
      %v9898 = vmax.f32 %v9866, 0.0
      %v9899 = vmax.f32 %v9867, 0.0
      %v9900 = vmax.f32 %v9868, 0.0
      %v9901 = vmax.f32 %v9869, 0.0
      %v9902 = vmax.f32 %v9870, 0.0
      %v9903 = vmax.f32 %v9871, 0.0
      %v9904 = vmax.f32 %v9872, 0.0
      %v9905 = vmax.f32 %v9873, 0.0
      %v9906 = vmax.f32 %v9874, 0.0
      %v9907 = vmax.f32 %v9875, 0.0
      %v9908 = vmax.f32 %v9876, 0.0
      %v9909 = vmax.f32 %v9877, 0.0
      %v9910 = vmax.f32 %v9878, 0.0
      %v9911 = vmax.f32 %v9879, 0.0
      %v9912 = vpack.c.bf16 %v9881, %v9880
      %v9913 = vpack.c.bf16 %v9883, %v9882
      %v9914 = vpack.c.bf16 %v9885, %v9884
      %v9915 = vpack.c.bf16 %v9887, %v9886
      %v9916 = vpack.c.bf16 %v9889, %v9888
      %v9917 = vpack.c.bf16 %v9891, %v9890
      %v9918 = vpack.c.bf16 %v9893, %v9892
      %v9919 = vpack.c.bf16 %v9895, %v9894
      %v9920 = vpack.c.bf16 %v9897, %v9896
      %v9921 = vpack.c.bf16 %v9899, %v9898
      %v9922 = vpack.c.bf16 %v9901, %v9900
      %v9923 = vpack.c.bf16 %v9903, %v9902
      %v9924 = vpack.c.bf16 %v9905, %v9904
      %v9925 = vpack.c.bf16 %v9907, %v9906
      %v9926 = vpack.c.bf16 %v9909, %v9908
      %v9927 = vpack.c.bf16 %v9911, %v9910
      %v9944 = vunpack.c.l.b16 %v9912
      %v9945 = vunpack.c.h.b16 %v9912
      %v9946 = vunpack.c.l.b16 %v9913
      %v9947 = vunpack.c.h.b16 %v9913
      %v9948 = vunpack.c.l.b16 %v9914
      %v9949 = vunpack.c.h.b16 %v9914
      %v9950 = vunpack.c.l.b16 %v9915
      %v9951 = vunpack.c.h.b16 %v9915
      %v9952 = vunpack.c.l.b16 %v9916
      %v9953 = vunpack.c.h.b16 %v9916
      %v9954 = vunpack.c.l.b16 %v9917
      %v9955 = vunpack.c.h.b16 %v9917
      %v9956 = vunpack.c.l.b16 %v9918
      %v9957 = vunpack.c.h.b16 %v9918
      %v9958 = vunpack.c.l.b16 %v9919
      %v9959 = vunpack.c.h.b16 %v9919
      %v9960 = vunpack.c.l.b16 %v9920
      %v9961 = vunpack.c.h.b16 %v9920
      %v9962 = vunpack.c.l.b16 %v9921
      %v9963 = vunpack.c.h.b16 %v9921
      %v9964 = vunpack.c.l.b16 %v9922
      %v9965 = vunpack.c.h.b16 %v9922
      %v9966 = vunpack.c.l.b16 %v9923
      %v9967 = vunpack.c.h.b16 %v9923
      %v9968 = vunpack.c.l.b16 %v9924
      %v9969 = vunpack.c.h.b16 %v9924
      %v9970 = vunpack.c.l.b16 %v9925
      %v9971 = vunpack.c.h.b16 %v9925
      %v9972 = vunpack.c.l.b16 %v9926
      %v9973 = vunpack.c.h.b16 %v9926
      %v9974 = vunpack.c.l.b16 %v9927
      %v9975 = vunpack.c.h.b16 %v9927
      %v9976 = vpack.c.b16 %v9944, %v9944
      %v9977 = vpack.c.b16 %v9945, %v9945
      %v9978 = vpack.c.b16 %v9946, %v9946
      %v9979 = vpack.c.b16 %v9947, %v9947
      %v9980 = vpack.c.b16 %v9948, %v9948
      %v9981 = vpack.c.b16 %v9949, %v9949
      %v9982 = vpack.c.b16 %v9950, %v9950
      %v9983 = vpack.c.b16 %v9951, %v9951
      %v9984 = vpack.c.b16 %v9952, %v9952
      %v9985 = vpack.c.b16 %v9953, %v9953
      %v9986 = vpack.c.b16 %v9954, %v9954
      %v9987 = vpack.c.b16 %v9955, %v9955
      %v9988 = vpack.c.b16 %v9956, %v9956
      %v9989 = vpack.c.b16 %v9957, %v9957
      %v9990 = vpack.c.b16 %v9958, %v9958
      %v9991 = vpack.c.b16 %v9959, %v9959
      %v9992 = vpack.c.b16 %v9960, %v9960
      %v9993 = vpack.c.b16 %v9961, %v9961
      %v9994 = vpack.c.b16 %v9962, %v9962
      %v9995 = vpack.c.b16 %v9963, %v9963
      %v9996 = vpack.c.b16 %v9964, %v9964
      %v9997 = vpack.c.b16 %v9965, %v9965
      %v9998 = vpack.c.b16 %v9966, %v9966
      %v9999 = vpack.c.b16 %v9967, %v9967
      %v10000 = vpack.c.b16 %v9968, %v9968
      %v10001 = vpack.c.b16 %v9969, %v9969
      %v10002 = vpack.c.b16 %v9970, %v9970
      %v10003 = vpack.c.b16 %v9971, %v9971
      %v10004 = vpack.c.b16 %v9972, %v9972
      %v10005 = vpack.c.b16 %v9973, %v9973
      %v10006 = vpack.c.b16 %v9974, %v9974
      %v10007 = vpack.c.b16 %v9975, %v9975
      %10040 = vst [vmem:[%s278] sm:$0xf] %v9976
      %10041 = vst [vmem:[%s278 + $0x4] sm:$0xf] %v9977
      %10042 = vst [vmem:[%s278 + $0x8] sm:$0xf] %v9978
      %10043 = vst [vmem:[%s278 + $0xc] sm:$0xf] %v9979
      %10044 = vst [vmem:[%s278 + $0x10] sm:$0xf] %v9980
      %10045 = vst [vmem:[%s278 + $0x14] sm:$0xf] %v9981
      %10046 = vst [vmem:[%s278 + $0x18] sm:$0xf] %v9982
      %10047 = vst [vmem:[%s278 + $0x1c] sm:$0xf] %v9983
      %10048 = vst [vmem:[%s278 + $0x20] sm:$0xf] %v9984
      %10049 = vst [vmem:[%s278 + $0x24] sm:$0xf] %v9985
      %10050 = vst [vmem:[%s278 + $0x28] sm:$0xf] %v9986
      %10051 = vst [vmem:[%s278 + $0x2c] sm:$0xf] %v9987
      %10052 = vst [vmem:[%s278 + $0x30] sm:$0xf] %v9988
      %10053 = vst [vmem:[%s278 + $0x34] sm:$0xf] %v9989
      %10054 = vst [vmem:[%s278 + $0x38] sm:$0xf] %v9990
      %10055 = vst [vmem:[%s278 + $0x3c] sm:$0xf] %v9991
      %10056 = vst [vmem:[%s278 + $0x40] sm:$0xf] %v9992
      %10057 = vst [vmem:[%s278 + $0x44] sm:$0xf] %v9993
      %10058 = vst [vmem:[%s278 + $0x48] sm:$0xf] %v9994
      %10059 = vst [vmem:[%s278 + $0x4c] sm:$0xf] %v9995
      %10060 = vst [vmem:[%s278 + $0x50] sm:$0xf] %v9996
      %10061 = vst [vmem:[%s278 + $0x54] sm:$0xf] %v9997
      %10062 = vst [vmem:[%s278 + $0x58] sm:$0xf] %v9998
      %10063 = vst [vmem:[%s278 + $0x5c] sm:$0xf] %v9999
      %10064 = vst [vmem:[%s278 + $0x60] sm:$0xf] %v10000
      %10065 = vst [vmem:[%s278 + $0x64] sm:$0xf] %v10001
      %10066 = vst [vmem:[%s278 + $0x68] sm:$0xf] %v10002
      %10067 = vst [vmem:[%s278 + $0x6c] sm:$0xf] %v10003
      %10068 = vst [vmem:[%s278 + $0x70] sm:$0xf] %v10004
      %10069 = vst [vmem:[%s278 + $0x74] sm:$0xf] %v10005
      %10070 = vst [vmem:[%s278 + $0x78] sm:$0xf] %v10006
      %10071 = vst [vmem:[%s278 + $0x7c] sm:$0xf] %v10007
      %p10072 = scmp.lt.s32.totalorder %s18, 1
      %s10073 = scalar_select %p10072, %s18, 1
      %s10074 = smul.addr %s10073, 32
      %s10075 = smul.addr %s10074, 4
      %s10076 = scalar_lea.vmem %s7, %s10075
      // Predicated region
      $region49: #{residual_block_forward.1} parent=47 // pred_check
        %p10077 = pneg %p188
      $region50: #{residual_block_forward.1} parent=47 // pred_check_branch
        %10079 = sbr.rel (%p10077) target = $region52
      $region51: #{residual_block_forward.1} parent=47 // pred_region
        _
      $region52: #{residual_block_forward.1} parent=47 // pred_fallthru
        _
    $region48: #{residual_block_forward.1} parent=5 // pred_fallthru
      _
    %p10080 = scmp.le.s32.totalorder 2, %s13
    // Predicated region
    $region53: #{residual_block_forward.1} parent=5 // pred_check
      %p10081 = pneg %p10080
    $region54: #{residual_block_forward.1} parent=5 // pred_check_branch
      %10083 = sbr.rel (%p10081) target = $region56
    $region55: #{residual_block_forward.1} parent=5 // pred_region
      %s10084 = ssub.s32 %s13, 2
      // Predicated region
      $region57: #{residual_block_forward.1} parent=55 // pred_check
        %p10085 = pneg %p194
      $region58: #{residual_block_forward.1} parent=55 // pred_check_branch
        %10087 = sbr.rel (%p10085) target = $region60
      $region59: #{residual_block_forward.1} parent=55 // pred_region
        %p10088 = scmp.lt.s32.totalorder %s19, 1
        %s10089 = scalar_select %p10088, %s19, 1
        %s10090 = smul.addr %s10089, 32
        %s10091 = smul.addr %s10090, 4
        %s10092 = scalar_lea.vmem %s7, %s10091
      $region60: #{residual_block_forward.1} parent=55 // pred_fallthru
        _
    $region56: #{residual_block_forward.1} parent=5 // pred_fallthru
      _
  $region6: #{residual_block_forward.1} parent=0 // loop_footer
    %s17 = sadd.s32 1, %s13
  $region7: #{residual_block_forward.1} parent=0 // loop_footer_branch
    %12 = sbr.rel target = $region3
  $region8: #{residual_block_forward.1} parent=0 // loop_exit
    _

</llo_original>
